<compile_context>
chip_gen: v6e
topology: v6e:2x2x1
jax: 0.10.0
libtpu: 0.0.40
codegen_flags: <defaults>
</compile_context>

<pallas_src>
import jax
import jax.numpy as jnp
from jax.experimental import pallas as pl
from jax.experimental.pallas import tpu as pltpu

F32 = jnp.float32
BF16 = jnp.bfloat16
_VMEM = pl.BlockSpec(memory_space=pltpu.MemorySpace.VMEM)


# --------------------------- in-kernel helpers ------------------------------ #

def _elu(y):
    # ELU(alpha=1); exp argument clamped to <=0 so the untaken branch never
    # produces inf / wasted large exponentials.
    return jnp.where(y > 0, y, jnp.exp(jnp.minimum(y, 0.0)) - 1.0)


def _conv1xk(x, w_ref, b_ref, *, K, dil, pad, act=None):
    """Batched Conv2d(1,K) as a single MXU matmul (im2col over the W axis).

    x:      (G, C, W) f32 value (G = independent rows, e.g. EEG electrodes).
    w_ref:  (O, C*K)  bf16 ref, column index q = k*C + c (BN scale pre-folded).
    b_ref:  (O, 1)    f32 ref (conv bias with BN shift pre-folded).
    Returns (G, O, W_out) f32,  W_out = W + 2*pad - dil*(K-1).
    """
    G, C, Wi = x.shape
    O, CK = w_ref.shape
    Wo = Wi + 2 * pad - dil * (K - 1)
    xb = x.astype(BF16)
    if pad > 0:
        z = jnp.zeros((G, C, pad), BF16)
        xb = jnp.concatenate([z, xb, z], axis=2)
    if K > 1:
        xcol = jnp.concatenate(
            [xb[:, :, k * dil:k * dil + Wo] for k in range(K)], axis=1)
    else:
        xcol = xb[:, :, :Wo]
    wb = jnp.broadcast_to(w_ref[...], (G, O, CK))
    y = jnp.einsum("goq,gqw->gow", wb, xcol, preferred_element_type=F32)
    y = y + b_ref[...][None]                       # (1, O, 1) broadcast
    if act == "elu":
        y = _elu(y)
    elif act == "relu":
        y = jnp.maximum(y, 0.0)
    return y


def _inception(x, base, wr, br, k1, k2, k3):
    """Inception_Block on (G, C, W); returns (G, C, W) (4 branches of C//4)."""
    conv = lambda i, t, K, pad: _conv1xk(t, wr(base + i), br(base + i),
                                         K=K, dil=1, pad=pad)
    p1, p2, p3 = (k1 - 1) // 2, (k2 - 1) // 2, (k3 - 1) // 2
    b1 = conv(0, x, k1, p1)
    b2 = conv(2, conv(1, x, k1, p1), k3, p3)
    b3 = conv(5, conv(4, conv(3, x, k1, p1), k2, p2), k2, p2)
    # avg_pool2d(kernel=(1,k2), stride=1, pad=(0,p2), count_include_pad=True):
    # true windowed mean (sum of shifted slices), depthwise — no CxC conv.
    G, C, Wi = x.shape
    z = jnp.zeros((G, C, p2), x.dtype)
    xp = jnp.concatenate([z, x, z], axis=2)
    ap = xp[:, :, 0:Wi]
    for j in range(1, k2):
        ap = ap + xp[:, :, j:j + Wi]
    ap = ap * (1.0 / k2)
    bp = conv(6, ap, k1, p1)
    # torch.cat([branch_pool, branch1_1, branch2_2, branch3_3], dim=1)
    return jnp.concatenate([bp, b1, b2, b3], axis=1)


# --------------------------- fused conv-trunk kernel ------------------------ #

def _make_features_kernel(*, H, f0, f1, kw, k2, kws, dil, W):
    pad31 = (kw - 1) * (dil - 2)

    def kernel(*refs):
        x_ref, o_ref = refs[0], refs[-1]
        p = refs[1:-1]
        wr = lambda i: p[2 * i]          # (O, C*K) bf16 weight matrices
        br = lambda i: p[2 * i + 1]      # (O, 1)   f32 fused biases

        x = x_ref[0]                                         # (H, 1, W) f32

        # conv_1 (+BN+ELU): same 1xK filters applied to every electrode row.
        a1 = _conv1xk(x, wr(0), br(0), K=kws, dil=1,
                      pad=(kws - 1) // 2, act="elu")          # (H, f0, W)

        # Residual_1 = Inception + add + ReLU.  (Dropout = identity, eval.)
        r1 = jnp.maximum(_inception(a1, 1, wr, br, kw, k2, kws) + a1, 0.0)

        # conv_2 (+BN+ELU): kernel (num_channel, 1) contracts the electrode
        # axis — sum of H small MXU matmuls.
        r1b = r1.astype(BF16)
        w2 = wr(8)                                            # (H, f0, f0)
        acc = jnp.zeros((f0, W), F32)
        for h in range(H):
            acc = acc + jnp.dot(w2[h], r1b[h], preferred_element_type=F32)
        a2 = _elu(acc + br(8)[...])                           # (f0, W)

        # conv_3_1 (dilated, +BN+ELU)
        a3 = _conv1xk(a2[None], wr(9), br(9), K=kw, dil=dil,
                      pad=pad31, act="elu")[0]                # (f1, W)

        # Residual_2
        r2 = jnp.maximum(
            _inception(a3[None], 10, wr, br, kw, k2, kws)[0] + a3, 0.0)

        # MaxPool2d((1,2)) stride 2: deinterleave even/odd columns with 0/1
        # selection matmuls on the MXU, then elementwise max.
        Wc = r2.shape[-1]
        Wp = Wc // 2
        rows = jax.lax.broadcasted_iota(jnp.int32, (Wc, Wp), 0)
        cols = jax.lax.broadcasted_iota(jnp.int32, (Wc, Wp), 1)
        sel_e = (rows == 2 * cols).astype(BF16)
        sel_o = (rows == 2 * cols + 1).astype(BF16)
        r2b = r2.astype(BF16)
        pooled = jnp.maximum(
            jnp.dot(r2b, sel_e, preferred_element_type=F32),
            jnp.dot(r2b, sel_o, preferred_element_type=F32))  # (f1, W//2)

        # conv_3_2 (dilated, +BN+ELU).  Trailing dropout = identity (eval).
        y = _conv1xk(pooled[None], wr(17), br(17), K=kw, dil=dil,
                     pad=pad31, act="elu")[0]                 # (f1, Wf)
        o_ref[0] = y

    return kernel


def features_forward(x, feat_params, cfg):
    """x: (B, num_channel, L) -> (B, 2*filters_n1, Wf); one pallas_call."""
    B, H, L = x.shape
    kw, kws = cfg["kernel_window"], cfg["kernel_window_ssvep"]
    dil = cfg["conv_3_dilation"]
    f0 = cfg["filters_n1"]
    f1 = 2 * f0
    k2 = (kw + kws) // 2
    pad31 = (kw - 1) * (dil - 2)
    Wf = L // 2 + 2 * pad31 - dil * (kw - 1)     # width after pool + conv_3_2

    x4 = x[:, :, None, :].astype(F32)            # (B, H, 1, L)

    kern = _make_features_kernel(H=H, f0=f0, f1=f1, kw=kw, k2=k2, kws=kws,
                                 dil=dil, W=L)

    in_specs = [pl.BlockSpec((1, H, 1, L), lambda b: (b, 0, 0, 0))]
    for a in feat_params:                        # weights: constant block index
        in_specs.append(pl.BlockSpec(a.shape, lambda b, _nd=a.ndim: (0,) * _nd))

    return pl.pallas_call(
        kern,
        out_shape=jax.ShapeDtypeStruct((B, f1, Wf), F32),
        grid=(B,),
        in_specs=in_specs,
        out_specs=pl.BlockSpec((1, f1, Wf), lambda b: (b, 0, 0)),
        compiler_params=pltpu.CompilerParams(
            dimension_semantics=("parallel",)),   # megacore split over batch
    )(x4, *feat_params)


# --------------------------- fused FC head kernel --------------------------- #

def _head_kernel(x_ref, w1, b1, w2, b2, w3, b3, w4, b4, o_ref):
    def fc(h, w_ref, b_ref, relu):
        y = jnp.dot(h.astype(BF16), w_ref[...],
                    preferred_element_type=F32) + b_ref[...]
        return jnp.maximum(y, 0.0) if relu else y

    h = fc(x_ref[...], w1, b1, True)
    h = fc(h, w2, b2, True)
    h = fc(h, w3, b3, True)
    z = fc(h, w4, b4, False)
    m = jnp.max(z, axis=-1, keepdims=True)
    lse = jnp.log(jnp.sum(jnp.exp(z - m), axis=-1, keepdims=True)) + m
    o_ref[...] = z - lse


def head_forward(flat, head_params):
    B = flat.shape[0]
    ncls = head_params[-1].shape[-1]
    return pl.pallas_call(
        _head_kernel,
        out_shape=jax.ShapeDtypeStruct((B, ncls), F32),
        in_specs=[_VMEM] * (1 + len(head_params)),
        out_specs=_VMEM,
    )(flat, *head_params)


# --------------------------- parameter preparation -------------------------- #

def prepare_params(P, cfg):
    """One-time (outside jit) weight prep: fold BN (eval mode) into conv
    weights/biases, reshape convs to (O, K*C_in) matmul form in bf16, and
    pre-transpose FC weights to (in, out) bf16."""
    eps = 1e-5

    def conv_mat(w, b, bn=None):
        O, C, _, K = w.shape
        wm = jnp.transpose(w[:, :, 0, :], (0, 2, 1)).reshape(O, K * C)
        wm = wm.astype(F32)
        b = b.astype(F32)
        if bn is not None:
            s = bn["gamma"] / jnp.sqrt(bn["var"] + eps)
            wm = wm * s[:, None]
            b = (b - bn["mean"]) * s + bn["beta"]
        return [wm.astype(BF16), b.reshape(O, 1)]

    def conv2_mat(w, b, bn):
        O, C, Hh, _ = w.shape
        s = bn["gamma"] / jnp.sqrt(bn["var"] + eps)
        wm = jnp.transpose(w[:, :, :, 0], (2, 0, 1)).astype(F32)   # (H, O, C)
        wm = wm * s[None, :, None]
        bb = (b.astype(F32) - bn["mean"]) * s + bn["beta"]
        return [wm.astype(BF16), bb.reshape(O, 1)]

    def inception_mats(ip):
        out = []
        for name in ("b1_1", "b2_1", "b2_2", "b3_1", "b3_2", "b3_3", "bp"):
            out += conv_mat(ip[name + "_w"], ip[name + "_b"])
        return out

    feat = []
    feat += conv_mat(P["conv1_w"], P["conv1_b"], P["bn1"])      # idx 0
    feat += inception_mats(P["res1"])                           # idx 1..7
    feat += conv2_mat(P["conv2_w"], P["conv2_b"], P["bn2"])     # idx 8
    feat += conv_mat(P["conv31_w"], P["conv31_b"], P["bn31"])   # idx 9
    feat += inception_mats(P["res2"])                           # idx 10..16
    feat += conv_mat(P["conv32_w"], P["conv32_b"], P["bn32"])   # idx 17

    head = []
    for name in ("fc1", "fc2", "fc3", "fc4"):
        head.append(jnp.transpose(P[name + "_w"]).astype(BF16))
        head.append(P[name + "_b"].reshape(1, -1).astype(F32))

    return {"feat": feat, "head": head}


def model_forward(x, prepped, cfg):
    feats = features_forward(x, prepped["feat"], cfg)   # (B, f1, Wf)
    flat = feats.reshape(feats.shape[0], -1)            # = torch .view(B, -1)
    return head_forward(flat, prepped["head"])


# --------------------------- parameter initialization ----------------------- #

def _rand(key, shape):
    return jax.random.normal(key, shape, F32) * 0.1


def _bn_init(c):
    # Fresh BatchNorm2d running stats (eval mode): gamma=1, beta=0, mean=0, var=1.
    return {"gamma": jnp.ones((c,), F32), "beta": jnp.zeros((c,), F32),
            "mean": jnp.zeros((c,), F32), "var": jnp.ones((c,), F32)}


def init_inception_params(key, in_ch, out_ch, k1, k2, k3):
    out = out_ch // 4
    ks = jax.random.split(key, 14)
    return {
        "b1_1_w": _rand(ks[0], (out, in_ch, 1, k1)),   "b1_1_b": _rand(ks[1], (out,)),
        "b2_1_w": _rand(ks[2], (in_ch, in_ch, 1, k1)), "b2_1_b": _rand(ks[3], (in_ch,)),
        "b2_2_w": _rand(ks[4], (out, in_ch, 1, k3)),   "b2_2_b": _rand(ks[5], (out,)),
        "b3_1_w": _rand(ks[6], (in_ch, in_ch, 1, k1)), "b3_1_b": _rand(ks[7], (in_ch,)),
        "b3_2_w": _rand(ks[8], (out, in_ch, 1, k2)),   "b3_2_b": _rand(ks[9], (out,)),
        "b3_3_w": _rand(ks[10], (out, out, 1, k2)),    "b3_3_b": _rand(ks[11], (out,)),
        "bp_w":   _rand(ks[12], (out, in_ch, 1, k1)),  "bp_b":   _rand(ks[13], (out,)),
    }


def init_params(key, cfg):
    nc, L = cfg["num_channel"], cfg["signal_length"]
    kws, kw = cfg["kernel_window_ssvep"], cfg["kernel_window"]
    f0 = cfg["filters_n1"]
    f1 = 2 * f0
    ncls = cfg["num_classes"]
    k2 = (kw + kws) // 2
    ks = jax.random.split(key, 18)
    return {
        "conv1_w": _rand(ks[0], (f0, 1, 1, kws)),  "conv1_b": _rand(ks[1], (f0,)),  "bn1": _bn_init(f0),
        "conv2_w": _rand(ks[2], (f0, f0, nc, 1)),  "conv2_b": _rand(ks[3], (f0,)),  "bn2": _bn_init(f0),
        "conv31_w": _rand(ks[4], (f1, f0, 1, kw)), "conv31_b": _rand(ks[5], (f1,)), "bn31": _bn_init(f1),
        "conv32_w": _rand(ks[6], (f1, f1, 1, kw)), "conv32_b": _rand(ks[7], (f1,)), "bn32": _bn_init(f1),
        "fc1_w": _rand(ks[8], (512, L * f1 // 2)), "fc1_b": _rand(ks[9], (512,)),
        "fc2_w": _rand(ks[10], (256, 512)),        "fc2_b": _rand(ks[11], (256,)),
        "fc3_w": _rand(ks[12], (128, 256)),        "fc3_b": _rand(ks[13], (128,)),
        "fc4_w": _rand(ks[14], (ncls, 128)),       "fc4_b": _rand(ks[15], (ncls,)),
        "res1": init_inception_params(ks[16], f0, f0, kw, k2, kws),
        "res2": init_inception_params(ks[17], f1, f1, kw, k2, kws),
    }


# --------------------------------- main -------------------------------------- #

if __name__ == "__main__":
    # Small but shape-consistent config (dilation=4 keeps the dilated convs
    # width-preserving and (kw+kws)//2 is odd so inception branches are "same").
    cfg = dict(num_channel=4, num_classes=4, signal_length=64,
               filters_n1=4, kernel_window_ssvep=9, kernel_window=5,
               conv_3_dilation=4)

    key = jax.random.PRNGKey(0)
    k_param, k_x = jax.random.split(key)
    params = init_params(k_param, cfg)
    prepped = prepare_params(params, cfg)   # one-time weight prep, outside jit
    x = jax.random.normal(k_x, (2, cfg["num_channel"], cfg["signal_length"]), F32)

    fwd = jax.jit(lambda xx, pp: model_forward(xx, pp, cfg))
    out = jax.block_until_ready(fwd(x, prepped))

    assert out.shape == (2, cfg["num_classes"])
    assert bool(jnp.all(jnp.isfinite(out)))
    # log_softmax rows exponentiate-sum to 1
    assert bool(jnp.allclose(jnp.sum(jnp.exp(out), axis=1), 1.0, atol=1e-4))
    print("KERNEL_OK")
</pallas_src>

<mosaic_0001>
module attributes {stable_mosaic.version = 11 : i64} {
  func.func @kernel(%arg0: i32, %arg1: memref<1x4x1x64xf32, #tpu.memory_space<vmem>>, %arg2: memref<4x9xbf16, #tpu.memory_space<vmem>>, %arg3: memref<4x1xf32, #tpu.memory_space<vmem>>, %arg4: memref<1x20xbf16, #tpu.memory_space<vmem>>, %arg5: memref<1x1xf32, #tpu.memory_space<vmem>>, %arg6: memref<4x20xbf16, #tpu.memory_space<vmem>>, %arg7: memref<4x1xf32, #tpu.memory_space<vmem>>, %arg8: memref<1x36xbf16, #tpu.memory_space<vmem>>, %arg9: memref<1x1xf32, #tpu.memory_space<vmem>>, %arg10: memref<4x20xbf16, #tpu.memory_space<vmem>>, %arg11: memref<4x1xf32, #tpu.memory_space<vmem>>, %arg12: memref<1x28xbf16, #tpu.memory_space<vmem>>, %arg13: memref<1x1xf32, #tpu.memory_space<vmem>>, %arg14: memref<1x7xbf16, #tpu.memory_space<vmem>>, %arg15: memref<1x1xf32, #tpu.memory_space<vmem>>, %arg16: memref<1x20xbf16, #tpu.memory_space<vmem>>, %arg17: memref<1x1xf32, #tpu.memory_space<vmem>>, %arg18: memref<4x4x4xbf16, #tpu.memory_space<vmem>>, %arg19: memref<4x1xf32, #tpu.memory_space<vmem>>, %arg20: memref<8x20xbf16, #tpu.memory_space<vmem>>, %arg21: memref<8x1xf32, #tpu.memory_space<vmem>>, %arg22: memref<2x40xbf16, #tpu.memory_space<vmem>>, %arg23: memref<2x1xf32, #tpu.memory_space<vmem>>, %arg24: memref<8x40xbf16, #tpu.memory_space<vmem>>, %arg25: memref<8x1xf32, #tpu.memory_space<vmem>>, %arg26: memref<2x72xbf16, #tpu.memory_space<vmem>>, %arg27: memref<2x1xf32, #tpu.memory_space<vmem>>, %arg28: memref<8x40xbf16, #tpu.memory_space<vmem>>, %arg29: memref<8x1xf32, #tpu.memory_space<vmem>>, %arg30: memref<2x56xbf16, #tpu.memory_space<vmem>>, %arg31: memref<2x1xf32, #tpu.memory_space<vmem>>, %arg32: memref<2x14xbf16, #tpu.memory_space<vmem>>, %arg33: memref<2x1xf32, #tpu.memory_space<vmem>>, %arg34: memref<2x40xbf16, #tpu.memory_space<vmem>>, %arg35: memref<2x1xf32, #tpu.memory_space<vmem>>, %arg36: memref<8x40xbf16, #tpu.memory_space<vmem>>, %arg37: memref<8x1xf32, #tpu.memory_space<vmem>>, %arg38: memref<1x8x32xf32, #tpu.memory_space<vmem>>) attributes {dimension_semantics = [#tpu.dimension_semantics<parallel>], iteration_bounds = array<i64: 2>, scalar_prefetch = 0 : i64, scratch_operands = 0 : i64, tpu.core_type = #tpu.core_type<tc>, window_params = [{transform_indices = @transform_0, window_bounds = array<i64: 1, 4, 1, 64>}, {pipeline_mode = #tpu.pipeline_mode<synchronous>, transform_indices = @transform_1, window_bounds = array<i64: 4, 9>}, {pipeline_mode = #tpu.pipeline_mode<synchronous>, transform_indices = @transform_2, window_bounds = array<i64: 4, 1>}, {pipeline_mode = #tpu.pipeline_mode<synchronous>, transform_indices = @transform_3, window_bounds = array<i64: 1, 20>}, {pipeline_mode = #tpu.pipeline_mode<synchronous>, transform_indices = @transform_4, window_bounds = array<i64: 1, 1>}, {pipeline_mode = #tpu.pipeline_mode<synchronous>, transform_indices = @transform_5, window_bounds = array<i64: 4, 20>}, {pipeline_mode = #tpu.pipeline_mode<synchronous>, transform_indices = @transform_6, window_bounds = array<i64: 4, 1>}, {pipeline_mode = #tpu.pipeline_mode<synchronous>, transform_indices = @transform_7, window_bounds = array<i64: 1, 36>}, {pipeline_mode = #tpu.pipeline_mode<synchronous>, transform_indices = @transform_8, window_bounds = array<i64: 1, 1>}, {pipeline_mode = #tpu.pipeline_mode<synchronous>, transform_indices = @transform_9, window_bounds = array<i64: 4, 20>}, {pipeline_mode = #tpu.pipeline_mode<synchronous>, transform_indices = @transform_10, window_bounds = array<i64: 4, 1>}, {pipeline_mode = #tpu.pipeline_mode<synchronous>, transform_indices = @transform_11, window_bounds = array<i64: 1, 28>}, {pipeline_mode = #tpu.pipeline_mode<synchronous>, transform_indices = @transform_12, window_bounds = array<i64: 1, 1>}, {pipeline_mode = #tpu.pipeline_mode<synchronous>, transform_indices = @transform_13, window_bounds = array<i64: 1, 7>}, {pipeline_mode = #tpu.pipeline_mode<synchronous>, transform_indices = @transform_14, window_bounds = array<i64: 1, 1>}, {pipeline_mode = #tpu.pipeline_mode<synchronous>, transform_indices = @transform_15, window_bounds = array<i64: 1, 20>}, {pipeline_mode = #tpu.pipeline_mode<synchronous>, transform_indices = @transform_16, window_bounds = array<i64: 1, 1>}, {pipeline_mode = #tpu.pipeline_mode<synchronous>, transform_indices = @transform_17, window_bounds = array<i64: 4, 4, 4>}, {pipeline_mode = #tpu.pipeline_mode<synchronous>, transform_indices = @transform_18, window_bounds = array<i64: 4, 1>}, {pipeline_mode = #tpu.pipeline_mode<synchronous>, transform_indices = @transform_19, window_bounds = array<i64: 8, 20>}, {pipeline_mode = #tpu.pipeline_mode<synchronous>, transform_indices = @transform_20, window_bounds = array<i64: 8, 1>}, {pipeline_mode = #tpu.pipeline_mode<synchronous>, transform_indices = @transform_21, window_bounds = array<i64: 2, 40>}, {pipeline_mode = #tpu.pipeline_mode<synchronous>, transform_indices = @transform_22, window_bounds = array<i64: 2, 1>}, {pipeline_mode = #tpu.pipeline_mode<synchronous>, transform_indices = @transform_23, window_bounds = array<i64: 8, 40>}, {pipeline_mode = #tpu.pipeline_mode<synchronous>, transform_indices = @transform_24, window_bounds = array<i64: 8, 1>}, {pipeline_mode = #tpu.pipeline_mode<synchronous>, transform_indices = @transform_25, window_bounds = array<i64: 2, 72>}, {pipeline_mode = #tpu.pipeline_mode<synchronous>, transform_indices = @transform_26, window_bounds = array<i64: 2, 1>}, {pipeline_mode = #tpu.pipeline_mode<synchronous>, transform_indices = @transform_27, window_bounds = array<i64: 8, 40>}, {pipeline_mode = #tpu.pipeline_mode<synchronous>, transform_indices = @transform_28, window_bounds = array<i64: 8, 1>}, {pipeline_mode = #tpu.pipeline_mode<synchronous>, transform_indices = @transform_29, window_bounds = array<i64: 2, 56>}, {pipeline_mode = #tpu.pipeline_mode<synchronous>, transform_indices = @transform_30, window_bounds = array<i64: 2, 1>}, {pipeline_mode = #tpu.pipeline_mode<synchronous>, transform_indices = @transform_31, window_bounds = array<i64: 2, 14>}, {pipeline_mode = #tpu.pipeline_mode<synchronous>, transform_indices = @transform_32, window_bounds = array<i64: 2, 1>}, {pipeline_mode = #tpu.pipeline_mode<synchronous>, transform_indices = @transform_33, window_bounds = array<i64: 2, 40>}, {pipeline_mode = #tpu.pipeline_mode<synchronous>, transform_indices = @transform_34, window_bounds = array<i64: 2, 1>}, {pipeline_mode = #tpu.pipeline_mode<synchronous>, transform_indices = @transform_35, window_bounds = array<i64: 8, 40>}, {pipeline_mode = #tpu.pipeline_mode<synchronous>, transform_indices = @transform_36, window_bounds = array<i64: 8, 1>}, {transform_indices = @transform_37, window_bounds = array<i64: 1, 8, 32>}]} {
    %c0 = arith.constant 0 : index
    %c0_0 = arith.constant 0 : index
    %c0_1 = arith.constant 0 : index
    %c0_2 = arith.constant 0 : index
    %0 = vector.load %arg1[%c0, %c0_0, %c0_1, %c0_2] : memref<1x4x1x64xf32, #tpu.memory_space<vmem>>, vector<1x4x1x64xf32>
    %1 = vector.shape_cast %0 : vector<1x4x1x64xf32> to vector<4x1x64xf32>
    %2 = arith.truncf %1 : vector<4x1x64xf32> to vector<4x1x64xbf16>
    %cst = arith.constant 0.000000e+00 : bf16
    %3 = vector.broadcast %cst : bf16 to vector<4x1x4xbf16>
    %4 = tpu.concatenate %3, %2, %3 in 2 : vector<4x1x4xbf16>, vector<4x1x64xbf16>, vector<4x1x4xbf16> -> vector<4x1x72xbf16>
    %5 = vector.extract_strided_slice %4 {offsets = [0, 0, 0], sizes = [4, 1, 64], strides = [1, 1, 1]} : vector<4x1x72xbf16> to vector<4x1x64xbf16>
    %6 = vector.extract_strided_slice %4 {offsets = [0, 0, 1], sizes = [4, 1, 64], strides = [1, 1, 1]} : vector<4x1x72xbf16> to vector<4x1x64xbf16>
    %7 = vector.extract_strided_slice %4 {offsets = [0, 0, 2], sizes = [4, 1, 64], strides = [1, 1, 1]} : vector<4x1x72xbf16> to vector<4x1x64xbf16>
    %8 = vector.extract_strided_slice %4 {offsets = [0, 0, 3], sizes = [4, 1, 64], strides = [1, 1, 1]} : vector<4x1x72xbf16> to vector<4x1x64xbf16>
    %9 = vector.extract_strided_slice %4 {offsets = [0, 0, 4], sizes = [4, 1, 64], strides = [1, 1, 1]} : vector<4x1x72xbf16> to vector<4x1x64xbf16>
    %10 = vector.extract_strided_slice %4 {offsets = [0, 0, 5], sizes = [4, 1, 64], strides = [1, 1, 1]} : vector<4x1x72xbf16> to vector<4x1x64xbf16>
    %11 = vector.extract_strided_slice %4 {offsets = [0, 0, 6], sizes = [4, 1, 64], strides = [1, 1, 1]} : vector<4x1x72xbf16> to vector<4x1x64xbf16>
    %12 = vector.extract_strided_slice %4 {offsets = [0, 0, 7], sizes = [4, 1, 64], strides = [1, 1, 1]} : vector<4x1x72xbf16> to vector<4x1x64xbf16>
    %13 = vector.extract_strided_slice %4 {offsets = [0, 0, 8], sizes = [4, 1, 64], strides = [1, 1, 1]} : vector<4x1x72xbf16> to vector<4x1x64xbf16>
    %14 = tpu.concatenate %5, %6, %7, %8, %9, %10, %11, %12, %13 in 1 : vector<4x1x64xbf16>, vector<4x1x64xbf16>, vector<4x1x64xbf16>, vector<4x1x64xbf16>, vector<4x1x64xbf16>, vector<4x1x64xbf16>, vector<4x1x64xbf16>, vector<4x1x64xbf16>, vector<4x1x64xbf16> -> vector<4x9x64xbf16>
    %c0_3 = arith.constant 0 : index
    %c0_4 = arith.constant 0 : index
    %15 = vector.load %arg2[%c0_3, %c0_4] : memref<4x9xbf16, #tpu.memory_space<vmem>>, vector<4x9xbf16>
    %16 = vector.shape_cast %15 : vector<4x9xbf16> to vector<1x4x9xbf16>
    %17 = vector.broadcast %16 : vector<1x4x9xbf16> to vector<4x4x9xbf16>
    "tpu.trace_start"() <{level = 10 : i32, message = "goq,gqw->gow"}> : () -> ()
    %cst_5 = arith.constant dense<0.000000e+00> : vector<4x4x64xf32>
    %18 = tpu.matmul %17, %14, %cst_5 {dimension_numbers = #tpu.dot_dimension_numbers<[2], [1], [1], [2], [0, 0, 0, 1, 1, 2], [0], [0]>} : vector<4x4x9xbf16>, vector<4x9x64xbf16>, vector<4x4x64xf32> -> vector<4x4x64xf32>
    "tpu.trace_stop"() : () -> ()
    %c0_6 = arith.constant 0 : index
    %c0_7 = arith.constant 0 : index
    %19 = vector.load %arg3[%c0_6, %c0_7] : memref<4x1xf32, #tpu.memory_space<vmem>>, vector<4x1xf32>
    %20 = vector.shape_cast %19 : vector<4x1xf32> to vector<1x4x1xf32>
    %21 = vector.broadcast %20 : vector<1x4x1xf32> to vector<4x4x64xf32>
    %22 = arith.addf %18, %21 : vector<4x4x64xf32>
    %cst_8 = arith.constant 0.000000e+00 : f32
    %23 = vector.broadcast %cst_8 : f32 to vector<4x4x64xf32>
    %24 = arith.cmpf ogt, %22, %23 : vector<4x4x64xf32>
    %cst_9 = arith.constant 0.000000e+00 : f32
    %25 = vector.broadcast %cst_9 : f32 to vector<4x4x64xf32>
    %26 = arith.minimumf %22, %25 : vector<4x4x64xf32>
    %27 = math.exp %26 : vector<4x4x64xf32>
    %cst_10 = arith.constant 1.000000e+00 : f32
    %28 = vector.broadcast %cst_10 : f32 to vector<4x4x64xf32>
    %29 = arith.subf %27, %28 : vector<4x4x64xf32>
    %30 = arith.select %24, %22, %29 : vector<4x4x64xi1>, vector<4x4x64xf32>
    %31 = arith.truncf %30 : vector<4x4x64xf32> to vector<4x4x64xbf16>
    %cst_11 = arith.constant 0.000000e+00 : bf16
    %32 = vector.broadcast %cst_11 : bf16 to vector<4x4x2xbf16>
    %33 = tpu.concatenate %32, %31, %32 in 2 : vector<4x4x2xbf16>, vector<4x4x64xbf16>, vector<4x4x2xbf16> -> vector<4x4x68xbf16>
    %34 = vector.extract_strided_slice %33 {offsets = [0, 0, 0], sizes = [4, 4, 64], strides = [1, 1, 1]} : vector<4x4x68xbf16> to vector<4x4x64xbf16>
    %35 = vector.extract_strided_slice %33 {offsets = [0, 0, 1], sizes = [4, 4, 64], strides = [1, 1, 1]} : vector<4x4x68xbf16> to vector<4x4x64xbf16>
    %36 = vector.extract_strided_slice %33 {offsets = [0, 0, 2], sizes = [4, 4, 64], strides = [1, 1, 1]} : vector<4x4x68xbf16> to vector<4x4x64xbf16>
    %37 = vector.extract_strided_slice %33 {offsets = [0, 0, 3], sizes = [4, 4, 64], strides = [1, 1, 1]} : vector<4x4x68xbf16> to vector<4x4x64xbf16>
    %38 = vector.extract_strided_slice %33 {offsets = [0, 0, 4], sizes = [4, 4, 64], strides = [1, 1, 1]} : vector<4x4x68xbf16> to vector<4x4x64xbf16>
    %39 = tpu.concatenate %34, %35, %36, %37, %38 in 1 : vector<4x4x64xbf16>, vector<4x4x64xbf16>, vector<4x4x64xbf16>, vector<4x4x64xbf16>, vector<4x4x64xbf16> -> vector<4x20x64xbf16>
    %c0_12 = arith.constant 0 : index
    %c0_13 = arith.constant 0 : index
    %40 = vector.load %arg4[%c0_12, %c0_13] : memref<1x20xbf16, #tpu.memory_space<vmem>>, vector<1x20xbf16>
    %41 = vector.shape_cast %40 : vector<1x20xbf16> to vector<1x1x20xbf16>
    %42 = vector.broadcast %41 : vector<1x1x20xbf16> to vector<4x1x20xbf16>
    "tpu.trace_start"() <{level = 10 : i32, message = "goq,gqw->gow"}> : () -> ()
    %cst_14 = arith.constant dense<0.000000e+00> : vector<4x1x64xf32>
    %43 = tpu.matmul %42, %39, %cst_14 {dimension_numbers = #tpu.dot_dimension_numbers<[2], [1], [1], [2], [0, 0, 0, 1, 1, 2], [0], [0]>} : vector<4x1x20xbf16>, vector<4x20x64xbf16>, vector<4x1x64xf32> -> vector<4x1x64xf32>
    "tpu.trace_stop"() : () -> ()
    %c0_15 = arith.constant 0 : index
    %c0_16 = arith.constant 0 : index
    %44 = vector.load %arg5[%c0_15, %c0_16] : memref<1x1xf32, #tpu.memory_space<vmem>>, vector<1x1xf32>
    %45 = vector.shape_cast %44 : vector<1x1xf32> to vector<1x1x1xf32>
    %46 = vector.broadcast %45 : vector<1x1x1xf32> to vector<4x1x64xf32>
    %47 = arith.addf %43, %46 : vector<4x1x64xf32>
    %48 = arith.truncf %30 : vector<4x4x64xf32> to vector<4x4x64xbf16>
    %cst_17 = arith.constant 0.000000e+00 : bf16
    %49 = vector.broadcast %cst_17 : bf16 to vector<4x4x2xbf16>
    %50 = tpu.concatenate %49, %48, %49 in 2 : vector<4x4x2xbf16>, vector<4x4x64xbf16>, vector<4x4x2xbf16> -> vector<4x4x68xbf16>
    %51 = vector.extract_strided_slice %50 {offsets = [0, 0, 0], sizes = [4, 4, 64], strides = [1, 1, 1]} : vector<4x4x68xbf16> to vector<4x4x64xbf16>
    %52 = vector.extract_strided_slice %50 {offsets = [0, 0, 1], sizes = [4, 4, 64], strides = [1, 1, 1]} : vector<4x4x68xbf16> to vector<4x4x64xbf16>
    %53 = vector.extract_strided_slice %50 {offsets = [0, 0, 2], sizes = [4, 4, 64], strides = [1, 1, 1]} : vector<4x4x68xbf16> to vector<4x4x64xbf16>
    %54 = vector.extract_strided_slice %50 {offsets = [0, 0, 3], sizes = [4, 4, 64], strides = [1, 1, 1]} : vector<4x4x68xbf16> to vector<4x4x64xbf16>
    %55 = vector.extract_strided_slice %50 {offsets = [0, 0, 4], sizes = [4, 4, 64], strides = [1, 1, 1]} : vector<4x4x68xbf16> to vector<4x4x64xbf16>
    %56 = tpu.concatenate %51, %52, %53, %54, %55 in 1 : vector<4x4x64xbf16>, vector<4x4x64xbf16>, vector<4x4x64xbf16>, vector<4x4x64xbf16>, vector<4x4x64xbf16> -> vector<4x20x64xbf16>
    %c0_18 = arith.constant 0 : index
    %c0_19 = arith.constant 0 : index
    %57 = vector.load %arg6[%c0_18, %c0_19] : memref<4x20xbf16, #tpu.memory_space<vmem>>, vector<4x20xbf16>
    %58 = vector.shape_cast %57 : vector<4x20xbf16> to vector<1x4x20xbf16>
    %59 = vector.broadcast %58 : vector<1x4x20xbf16> to vector<4x4x20xbf16>
    "tpu.trace_start"() <{level = 10 : i32, message = "goq,gqw->gow"}> : () -> ()
    %cst_20 = arith.constant dense<0.000000e+00> : vector<4x4x64xf32>
    %60 = tpu.matmul %59, %56, %cst_20 {dimension_numbers = #tpu.dot_dimension_numbers<[2], [1], [1], [2], [0, 0, 0, 1, 1, 2], [0], [0]>} : vector<4x4x20xbf16>, vector<4x20x64xbf16>, vector<4x4x64xf32> -> vector<4x4x64xf32>
    "tpu.trace_stop"() : () -> ()
    %c0_21 = arith.constant 0 : index
    %c0_22 = arith.constant 0 : index
    %61 = vector.load %arg7[%c0_21, %c0_22] : memref<4x1xf32, #tpu.memory_space<vmem>>, vector<4x1xf32>
    %62 = vector.shape_cast %61 : vector<4x1xf32> to vector<1x4x1xf32>
    %63 = vector.broadcast %62 : vector<1x4x1xf32> to vector<4x4x64xf32>
    %64 = arith.addf %60, %63 : vector<4x4x64xf32>
    %65 = arith.truncf %64 : vector<4x4x64xf32> to vector<4x4x64xbf16>
    %cst_23 = arith.constant 0.000000e+00 : bf16
    %66 = vector.broadcast %cst_23 : bf16 to vector<4x4x4xbf16>
    %67 = tpu.concatenate %66, %65, %66 in 2 : vector<4x4x4xbf16>, vector<4x4x64xbf16>, vector<4x4x4xbf16> -> vector<4x4x72xbf16>
    %68 = vector.extract_strided_slice %67 {offsets = [0, 0, 0], sizes = [4, 4, 64], strides = [1, 1, 1]} : vector<4x4x72xbf16> to vector<4x4x64xbf16>
    %69 = vector.extract_strided_slice %67 {offsets = [0, 0, 1], sizes = [4, 4, 64], strides = [1, 1, 1]} : vector<4x4x72xbf16> to vector<4x4x64xbf16>
    %70 = vector.extract_strided_slice %67 {offsets = [0, 0, 2], sizes = [4, 4, 64], strides = [1, 1, 1]} : vector<4x4x72xbf16> to vector<4x4x64xbf16>
    %71 = vector.extract_strided_slice %67 {offsets = [0, 0, 3], sizes = [4, 4, 64], strides = [1, 1, 1]} : vector<4x4x72xbf16> to vector<4x4x64xbf16>
    %72 = vector.extract_strided_slice %67 {offsets = [0, 0, 4], sizes = [4, 4, 64], strides = [1, 1, 1]} : vector<4x4x72xbf16> to vector<4x4x64xbf16>
    %73 = vector.extract_strided_slice %67 {offsets = [0, 0, 5], sizes = [4, 4, 64], strides = [1, 1, 1]} : vector<4x4x72xbf16> to vector<4x4x64xbf16>
    %74 = vector.extract_strided_slice %67 {offsets = [0, 0, 6], sizes = [4, 4, 64], strides = [1, 1, 1]} : vector<4x4x72xbf16> to vector<4x4x64xbf16>
    %75 = vector.extract_strided_slice %67 {offsets = [0, 0, 7], sizes = [4, 4, 64], strides = [1, 1, 1]} : vector<4x4x72xbf16> to vector<4x4x64xbf16>
    %76 = vector.extract_strided_slice %67 {offsets = [0, 0, 8], sizes = [4, 4, 64], strides = [1, 1, 1]} : vector<4x4x72xbf16> to vector<4x4x64xbf16>
    %77 = tpu.concatenate %68, %69, %70, %71, %72, %73, %74, %75, %76 in 1 : vector<4x4x64xbf16>, vector<4x4x64xbf16>, vector<4x4x64xbf16>, vector<4x4x64xbf16>, vector<4x4x64xbf16>, vector<4x4x64xbf16>, vector<4x4x64xbf16>, vector<4x4x64xbf16>, vector<4x4x64xbf16> -> vector<4x36x64xbf16>
    %c0_24 = arith.constant 0 : index
    %c0_25 = arith.constant 0 : index
    %78 = vector.load %arg8[%c0_24, %c0_25] : memref<1x36xbf16, #tpu.memory_space<vmem>>, vector<1x36xbf16>
    %79 = vector.shape_cast %78 : vector<1x36xbf16> to vector<1x1x36xbf16>
    %80 = vector.broadcast %79 : vector<1x1x36xbf16> to vector<4x1x36xbf16>
    "tpu.trace_start"() <{level = 10 : i32, message = "goq,gqw->gow"}> : () -> ()
    %cst_26 = arith.constant dense<0.000000e+00> : vector<4x1x64xf32>
    %81 = tpu.matmul %80, %77, %cst_26 {dimension_numbers = #tpu.dot_dimension_numbers<[2], [1], [1], [2], [0, 0, 0, 1, 1, 2], [0], [0]>} : vector<4x1x36xbf16>, vector<4x36x64xbf16>, vector<4x1x64xf32> -> vector<4x1x64xf32>
    "tpu.trace_stop"() : () -> ()
    %c0_27 = arith.constant 0 : index
    %c0_28 = arith.constant 0 : index
    %82 = vector.load %arg9[%c0_27, %c0_28] : memref<1x1xf32, #tpu.memory_space<vmem>>, vector<1x1xf32>
    %83 = vector.shape_cast %82 : vector<1x1xf32> to vector<1x1x1xf32>
    %84 = vector.broadcast %83 : vector<1x1x1xf32> to vector<4x1x64xf32>
    %85 = arith.addf %81, %84 : vector<4x1x64xf32>
    %86 = arith.truncf %30 : vector<4x4x64xf32> to vector<4x4x64xbf16>
    %cst_29 = arith.constant 0.000000e+00 : bf16
    %87 = vector.broadcast %cst_29 : bf16 to vector<4x4x2xbf16>
    %88 = tpu.concatenate %87, %86, %87 in 2 : vector<4x4x2xbf16>, vector<4x4x64xbf16>, vector<4x4x2xbf16> -> vector<4x4x68xbf16>
    %89 = vector.extract_strided_slice %88 {offsets = [0, 0, 0], sizes = [4, 4, 64], strides = [1, 1, 1]} : vector<4x4x68xbf16> to vector<4x4x64xbf16>
    %90 = vector.extract_strided_slice %88 {offsets = [0, 0, 1], sizes = [4, 4, 64], strides = [1, 1, 1]} : vector<4x4x68xbf16> to vector<4x4x64xbf16>
    %91 = vector.extract_strided_slice %88 {offsets = [0, 0, 2], sizes = [4, 4, 64], strides = [1, 1, 1]} : vector<4x4x68xbf16> to vector<4x4x64xbf16>
    %92 = vector.extract_strided_slice %88 {offsets = [0, 0, 3], sizes = [4, 4, 64], strides = [1, 1, 1]} : vector<4x4x68xbf16> to vector<4x4x64xbf16>
    %93 = vector.extract_strided_slice %88 {offsets = [0, 0, 4], sizes = [4, 4, 64], strides = [1, 1, 1]} : vector<4x4x68xbf16> to vector<4x4x64xbf16>
    %94 = tpu.concatenate %89, %90, %91, %92, %93 in 1 : vector<4x4x64xbf16>, vector<4x4x64xbf16>, vector<4x4x64xbf16>, vector<4x4x64xbf16>, vector<4x4x64xbf16> -> vector<4x20x64xbf16>
    %c0_30 = arith.constant 0 : index
    %c0_31 = arith.constant 0 : index
    %95 = vector.load %arg10[%c0_30, %c0_31] : memref<4x20xbf16, #tpu.memory_space<vmem>>, vector<4x20xbf16>
    %96 = vector.shape_cast %95 : vector<4x20xbf16> to vector<1x4x20xbf16>
    %97 = vector.broadcast %96 : vector<1x4x20xbf16> to vector<4x4x20xbf16>
    "tpu.trace_start"() <{level = 10 : i32, message = "goq,gqw->gow"}> : () -> ()
    %cst_32 = arith.constant dense<0.000000e+00> : vector<4x4x64xf32>
    %98 = tpu.matmul %97, %94, %cst_32 {dimension_numbers = #tpu.dot_dimension_numbers<[2], [1], [1], [2], [0, 0, 0, 1, 1, 2], [0], [0]>} : vector<4x4x20xbf16>, vector<4x20x64xbf16>, vector<4x4x64xf32> -> vector<4x4x64xf32>
    "tpu.trace_stop"() : () -> ()
    %c0_33 = arith.constant 0 : index
    %c0_34 = arith.constant 0 : index
    %99 = vector.load %arg11[%c0_33, %c0_34] : memref<4x1xf32, #tpu.memory_space<vmem>>, vector<4x1xf32>
    %100 = vector.shape_cast %99 : vector<4x1xf32> to vector<1x4x1xf32>
    %101 = vector.broadcast %100 : vector<1x4x1xf32> to vector<4x4x64xf32>
    %102 = arith.addf %98, %101 : vector<4x4x64xf32>
    %103 = arith.truncf %102 : vector<4x4x64xf32> to vector<4x4x64xbf16>
    %cst_35 = arith.constant 0.000000e+00 : bf16
    %104 = vector.broadcast %cst_35 : bf16 to vector<4x4x3xbf16>
    %105 = tpu.concatenate %104, %103, %104 in 2 : vector<4x4x3xbf16>, vector<4x4x64xbf16>, vector<4x4x3xbf16> -> vector<4x4x70xbf16>
    %106 = vector.extract_strided_slice %105 {offsets = [0, 0, 0], sizes = [4, 4, 64], strides = [1, 1, 1]} : vector<4x4x70xbf16> to vector<4x4x64xbf16>
    %107 = vector.extract_strided_slice %105 {offsets = [0, 0, 1], sizes = [4, 4, 64], strides = [1, 1, 1]} : vector<4x4x70xbf16> to vector<4x4x64xbf16>
    %108 = vector.extract_strided_slice %105 {offsets = [0, 0, 2], sizes = [4, 4, 64], strides = [1, 1, 1]} : vector<4x4x70xbf16> to vector<4x4x64xbf16>
    %109 = vector.extract_strided_slice %105 {offsets = [0, 0, 3], sizes = [4, 4, 64], strides = [1, 1, 1]} : vector<4x4x70xbf16> to vector<4x4x64xbf16>
    %110 = vector.extract_strided_slice %105 {offsets = [0, 0, 4], sizes = [4, 4, 64], strides = [1, 1, 1]} : vector<4x4x70xbf16> to vector<4x4x64xbf16>
    %111 = vector.extract_strided_slice %105 {offsets = [0, 0, 5], sizes = [4, 4, 64], strides = [1, 1, 1]} : vector<4x4x70xbf16> to vector<4x4x64xbf16>
    %112 = vector.extract_strided_slice %105 {offsets = [0, 0, 6], sizes = [4, 4, 64], strides = [1, 1, 1]} : vector<4x4x70xbf16> to vector<4x4x64xbf16>
    %113 = tpu.concatenate %106, %107, %108, %109, %110, %111, %112 in 1 : vector<4x4x64xbf16>, vector<4x4x64xbf16>, vector<4x4x64xbf16>, vector<4x4x64xbf16>, vector<4x4x64xbf16>, vector<4x4x64xbf16>, vector<4x4x64xbf16> -> vector<4x28x64xbf16>
    %c0_36 = arith.constant 0 : index
    %c0_37 = arith.constant 0 : index
    %114 = vector.load %arg12[%c0_36, %c0_37] : memref<1x28xbf16, #tpu.memory_space<vmem>>, vector<1x28xbf16>
    %115 = vector.shape_cast %114 : vector<1x28xbf16> to vector<1x1x28xbf16>
    %116 = vector.broadcast %115 : vector<1x1x28xbf16> to vector<4x1x28xbf16>
    "tpu.trace_start"() <{level = 10 : i32, message = "goq,gqw->gow"}> : () -> ()
    %cst_38 = arith.constant dense<0.000000e+00> : vector<4x1x64xf32>
    %117 = tpu.matmul %116, %113, %cst_38 {dimension_numbers = #tpu.dot_dimension_numbers<[2], [1], [1], [2], [0, 0, 0, 1, 1, 2], [0], [0]>} : vector<4x1x28xbf16>, vector<4x28x64xbf16>, vector<4x1x64xf32> -> vector<4x1x64xf32>
    "tpu.trace_stop"() : () -> ()
    %c0_39 = arith.constant 0 : index
    %c0_40 = arith.constant 0 : index
    %118 = vector.load %arg13[%c0_39, %c0_40] : memref<1x1xf32, #tpu.memory_space<vmem>>, vector<1x1xf32>
    %119 = vector.shape_cast %118 : vector<1x1xf32> to vector<1x1x1xf32>
    %120 = vector.broadcast %119 : vector<1x1x1xf32> to vector<4x1x64xf32>
    %121 = arith.addf %117, %120 : vector<4x1x64xf32>
    %122 = arith.truncf %121 : vector<4x1x64xf32> to vector<4x1x64xbf16>
    %cst_41 = arith.constant 0.000000e+00 : bf16
    %123 = vector.broadcast %cst_41 : bf16 to vector<4x1x3xbf16>
    %124 = tpu.concatenate %123, %122, %123 in 2 : vector<4x1x3xbf16>, vector<4x1x64xbf16>, vector<4x1x3xbf16> -> vector<4x1x70xbf16>
    %125 = vector.extract_strided_slice %124 {offsets = [0, 0, 0], sizes = [4, 1, 64], strides = [1, 1, 1]} : vector<4x1x70xbf16> to vector<4x1x64xbf16>
    %126 = vector.extract_strided_slice %124 {offsets = [0, 0, 1], sizes = [4, 1, 64], strides = [1, 1, 1]} : vector<4x1x70xbf16> to vector<4x1x64xbf16>
    %127 = vector.extract_strided_slice %124 {offsets = [0, 0, 2], sizes = [4, 1, 64], strides = [1, 1, 1]} : vector<4x1x70xbf16> to vector<4x1x64xbf16>
    %128 = vector.extract_strided_slice %124 {offsets = [0, 0, 3], sizes = [4, 1, 64], strides = [1, 1, 1]} : vector<4x1x70xbf16> to vector<4x1x64xbf16>
    %129 = vector.extract_strided_slice %124 {offsets = [0, 0, 4], sizes = [4, 1, 64], strides = [1, 1, 1]} : vector<4x1x70xbf16> to vector<4x1x64xbf16>
    %130 = vector.extract_strided_slice %124 {offsets = [0, 0, 5], sizes = [4, 1, 64], strides = [1, 1, 1]} : vector<4x1x70xbf16> to vector<4x1x64xbf16>
    %131 = vector.extract_strided_slice %124 {offsets = [0, 0, 6], sizes = [4, 1, 64], strides = [1, 1, 1]} : vector<4x1x70xbf16> to vector<4x1x64xbf16>
    %132 = tpu.concatenate %125, %126, %127, %128, %129, %130, %131 in 1 : vector<4x1x64xbf16>, vector<4x1x64xbf16>, vector<4x1x64xbf16>, vector<4x1x64xbf16>, vector<4x1x64xbf16>, vector<4x1x64xbf16>, vector<4x1x64xbf16> -> vector<4x7x64xbf16>
    %c0_42 = arith.constant 0 : index
    %c0_43 = arith.constant 0 : index
    %133 = vector.load %arg14[%c0_42, %c0_43] : memref<1x7xbf16, #tpu.memory_space<vmem>>, vector<1x7xbf16>
    %134 = vector.shape_cast %133 : vector<1x7xbf16> to vector<1x1x7xbf16>
    %135 = vector.broadcast %134 : vector<1x1x7xbf16> to vector<4x1x7xbf16>
    "tpu.trace_start"() <{level = 10 : i32, message = "goq,gqw->gow"}> : () -> ()
    %cst_44 = arith.constant dense<0.000000e+00> : vector<4x1x64xf32>
    %136 = tpu.matmul %135, %132, %cst_44 {dimension_numbers = #tpu.dot_dimension_numbers<[2], [1], [1], [2], [0, 0, 0, 1, 1, 2], [0], [0]>} : vector<4x1x7xbf16>, vector<4x7x64xbf16>, vector<4x1x64xf32> -> vector<4x1x64xf32>
    "tpu.trace_stop"() : () -> ()
    %c0_45 = arith.constant 0 : index
    %c0_46 = arith.constant 0 : index
    %137 = vector.load %arg15[%c0_45, %c0_46] : memref<1x1xf32, #tpu.memory_space<vmem>>, vector<1x1xf32>
    %138 = vector.shape_cast %137 : vector<1x1xf32> to vector<1x1x1xf32>
    %139 = vector.broadcast %138 : vector<1x1x1xf32> to vector<4x1x64xf32>
    %140 = arith.addf %136, %139 : vector<4x1x64xf32>
    %cst_47 = arith.constant 0.000000e+00 : f32
    %141 = vector.broadcast %cst_47 : f32 to vector<4x4x3xf32>
    %142 = tpu.concatenate %141, %30, %141 in 2 : vector<4x4x3xf32>, vector<4x4x64xf32>, vector<4x4x3xf32> -> vector<4x4x70xf32>
    %143 = vector.extract_strided_slice %142 {offsets = [0, 0, 0], sizes = [4, 4, 64], strides = [1, 1, 1]} : vector<4x4x70xf32> to vector<4x4x64xf32>
    %144 = vector.extract_strided_slice %142 {offsets = [0, 0, 1], sizes = [4, 4, 64], strides = [1, 1, 1]} : vector<4x4x70xf32> to vector<4x4x64xf32>
    %145 = arith.addf %143, %144 : vector<4x4x64xf32>
    %146 = vector.extract_strided_slice %142 {offsets = [0, 0, 2], sizes = [4, 4, 64], strides = [1, 1, 1]} : vector<4x4x70xf32> to vector<4x4x64xf32>
    %147 = arith.addf %145, %146 : vector<4x4x64xf32>
    %148 = vector.extract_strided_slice %142 {offsets = [0, 0, 3], sizes = [4, 4, 64], strides = [1, 1, 1]} : vector<4x4x70xf32> to vector<4x4x64xf32>
    %149 = arith.addf %147, %148 : vector<4x4x64xf32>
    %150 = vector.extract_strided_slice %142 {offsets = [0, 0, 4], sizes = [4, 4, 64], strides = [1, 1, 1]} : vector<4x4x70xf32> to vector<4x4x64xf32>
    %151 = arith.addf %149, %150 : vector<4x4x64xf32>
    %152 = vector.extract_strided_slice %142 {offsets = [0, 0, 5], sizes = [4, 4, 64], strides = [1, 1, 1]} : vector<4x4x70xf32> to vector<4x4x64xf32>
    %153 = arith.addf %151, %152 : vector<4x4x64xf32>
    %154 = vector.extract_strided_slice %142 {offsets = [0, 0, 6], sizes = [4, 4, 64], strides = [1, 1, 1]} : vector<4x4x70xf32> to vector<4x4x64xf32>
    %155 = arith.addf %153, %154 : vector<4x4x64xf32>
    %cst_48 = arith.constant 0.142857149 : f32
    %156 = vector.broadcast %cst_48 : f32 to vector<4x4x64xf32>
    %157 = arith.mulf %155, %156 : vector<4x4x64xf32>
    %158 = arith.truncf %157 : vector<4x4x64xf32> to vector<4x4x64xbf16>
    %cst_49 = arith.constant 0.000000e+00 : bf16
    %159 = vector.broadcast %cst_49 : bf16 to vector<4x4x2xbf16>
    %160 = tpu.concatenate %159, %158, %159 in 2 : vector<4x4x2xbf16>, vector<4x4x64xbf16>, vector<4x4x2xbf16> -> vector<4x4x68xbf16>
    %161 = vector.extract_strided_slice %160 {offsets = [0, 0, 0], sizes = [4, 4, 64], strides = [1, 1, 1]} : vector<4x4x68xbf16> to vector<4x4x64xbf16>
    %162 = vector.extract_strided_slice %160 {offsets = [0, 0, 1], sizes = [4, 4, 64], strides = [1, 1, 1]} : vector<4x4x68xbf16> to vector<4x4x64xbf16>
    %163 = vector.extract_strided_slice %160 {offsets = [0, 0, 2], sizes = [4, 4, 64], strides = [1, 1, 1]} : vector<4x4x68xbf16> to vector<4x4x64xbf16>
    %164 = vector.extract_strided_slice %160 {offsets = [0, 0, 3], sizes = [4, 4, 64], strides = [1, 1, 1]} : vector<4x4x68xbf16> to vector<4x4x64xbf16>
    %165 = vector.extract_strided_slice %160 {offsets = [0, 0, 4], sizes = [4, 4, 64], strides = [1, 1, 1]} : vector<4x4x68xbf16> to vector<4x4x64xbf16>
    %166 = tpu.concatenate %161, %162, %163, %164, %165 in 1 : vector<4x4x64xbf16>, vector<4x4x64xbf16>, vector<4x4x64xbf16>, vector<4x4x64xbf16>, vector<4x4x64xbf16> -> vector<4x20x64xbf16>
    %c0_50 = arith.constant 0 : index
    %c0_51 = arith.constant 0 : index
    %167 = vector.load %arg16[%c0_50, %c0_51] : memref<1x20xbf16, #tpu.memory_space<vmem>>, vector<1x20xbf16>
    %168 = vector.shape_cast %167 : vector<1x20xbf16> to vector<1x1x20xbf16>
    %169 = vector.broadcast %168 : vector<1x1x20xbf16> to vector<4x1x20xbf16>
    "tpu.trace_start"() <{level = 10 : i32, message = "goq,gqw->gow"}> : () -> ()
    %cst_52 = arith.constant dense<0.000000e+00> : vector<4x1x64xf32>
    %170 = tpu.matmul %169, %166, %cst_52 {dimension_numbers = #tpu.dot_dimension_numbers<[2], [1], [1], [2], [0, 0, 0, 1, 1, 2], [0], [0]>} : vector<4x1x20xbf16>, vector<4x20x64xbf16>, vector<4x1x64xf32> -> vector<4x1x64xf32>
    "tpu.trace_stop"() : () -> ()
    %c0_53 = arith.constant 0 : index
    %c0_54 = arith.constant 0 : index
    %171 = vector.load %arg17[%c0_53, %c0_54] : memref<1x1xf32, #tpu.memory_space<vmem>>, vector<1x1xf32>
    %172 = vector.shape_cast %171 : vector<1x1xf32> to vector<1x1x1xf32>
    %173 = vector.broadcast %172 : vector<1x1x1xf32> to vector<4x1x64xf32>
    %174 = arith.addf %170, %173 : vector<4x1x64xf32>
    %175 = tpu.concatenate %174, %47, %85, %140 in 1 : vector<4x1x64xf32>, vector<4x1x64xf32>, vector<4x1x64xf32>, vector<4x1x64xf32> -> vector<4x4x64xf32>
    %176 = arith.addf %175, %30 : vector<4x4x64xf32>
    %cst_55 = arith.constant 0.000000e+00 : f32
    %177 = vector.broadcast %cst_55 : f32 to vector<4x4x64xf32>
    %178 = arith.maximumf %176, %177 : vector<4x4x64xf32>
    %179 = arith.truncf %178 : vector<4x4x64xf32> to vector<4x4x64xbf16>
    %cst_56 = arith.constant 0.000000e+00 : f32
    %180 = vector.broadcast %cst_56 : f32 to vector<4x64xf32>
    %c0_57 = arith.constant 0 : index
    %c0_58 = arith.constant 0 : index
    %c0_59 = arith.constant 0 : index
    %181 = vector.load %arg18[%c0_57, %c0_58, %c0_59] : memref<4x4x4xbf16, #tpu.memory_space<vmem>>, vector<1x4x4xbf16>
    %182 = vector.shape_cast %181 : vector<1x4x4xbf16> to vector<4x4xbf16>
    %183 = vector.extract_strided_slice %179 {offsets = [0, 0, 0], sizes = [1, 4, 64], strides = [1, 1, 1]} : vector<4x4x64xbf16> to vector<1x4x64xbf16>
    %184 = vector.shape_cast %183 : vector<1x4x64xbf16> to vector<4x64xbf16>
    %cst_60 = arith.constant dense<0.000000e+00> : vector<4x64xf32>
    %185 = tpu.matmul %182, %184, %cst_60 {dimension_numbers = #tpu.dot_dimension_numbers<[1], [0], [0], [1], [0, 0, 1, 1], [], []>} : vector<4x4xbf16>, vector<4x64xbf16>, vector<4x64xf32> -> vector<4x64xf32>
    %186 = arith.addf %180, %185 : vector<4x64xf32>
    %c1 = arith.constant 1 : index
    %c0_61 = arith.constant 0 : index
    %c0_62 = arith.constant 0 : index
    %187 = vector.load %arg18[%c1, %c0_61, %c0_62] : memref<4x4x4xbf16, #tpu.memory_space<vmem>>, vector<1x4x4xbf16>
    %188 = vector.shape_cast %187 : vector<1x4x4xbf16> to vector<4x4xbf16>
    %189 = vector.extract_strided_slice %179 {offsets = [1, 0, 0], sizes = [1, 4, 64], strides = [1, 1, 1]} : vector<4x4x64xbf16> to vector<1x4x64xbf16>
    %190 = vector.shape_cast %189 : vector<1x4x64xbf16> to vector<4x64xbf16>
    %cst_63 = arith.constant dense<0.000000e+00> : vector<4x64xf32>
    %191 = tpu.matmul %188, %190, %cst_63 {dimension_numbers = #tpu.dot_dimension_numbers<[1], [0], [0], [1], [0, 0, 1, 1], [], []>} : vector<4x4xbf16>, vector<4x64xbf16>, vector<4x64xf32> -> vector<4x64xf32>
    %192 = arith.addf %186, %191 : vector<4x64xf32>
    %c2 = arith.constant 2 : index
    %c0_64 = arith.constant 0 : index
    %c0_65 = arith.constant 0 : index
    %193 = vector.load %arg18[%c2, %c0_64, %c0_65] : memref<4x4x4xbf16, #tpu.memory_space<vmem>>, vector<1x4x4xbf16>
    %194 = vector.shape_cast %193 : vector<1x4x4xbf16> to vector<4x4xbf16>
    %195 = vector.extract_strided_slice %179 {offsets = [2, 0, 0], sizes = [1, 4, 64], strides = [1, 1, 1]} : vector<4x4x64xbf16> to vector<1x4x64xbf16>
    %196 = vector.shape_cast %195 : vector<1x4x64xbf16> to vector<4x64xbf16>
    %cst_66 = arith.constant dense<0.000000e+00> : vector<4x64xf32>
    %197 = tpu.matmul %194, %196, %cst_66 {dimension_numbers = #tpu.dot_dimension_numbers<[1], [0], [0], [1], [0, 0, 1, 1], [], []>} : vector<4x4xbf16>, vector<4x64xbf16>, vector<4x64xf32> -> vector<4x64xf32>
    %198 = arith.addf %192, %197 : vector<4x64xf32>
    %c3 = arith.constant 3 : index
    %c0_67 = arith.constant 0 : index
    %c0_68 = arith.constant 0 : index
    %199 = vector.load %arg18[%c3, %c0_67, %c0_68] : memref<4x4x4xbf16, #tpu.memory_space<vmem>>, vector<1x4x4xbf16>
    %200 = vector.shape_cast %199 : vector<1x4x4xbf16> to vector<4x4xbf16>
    %201 = vector.extract_strided_slice %179 {offsets = [3, 0, 0], sizes = [1, 4, 64], strides = [1, 1, 1]} : vector<4x4x64xbf16> to vector<1x4x64xbf16>
    %202 = vector.shape_cast %201 : vector<1x4x64xbf16> to vector<4x64xbf16>
    %cst_69 = arith.constant dense<0.000000e+00> : vector<4x64xf32>
    %203 = tpu.matmul %200, %202, %cst_69 {dimension_numbers = #tpu.dot_dimension_numbers<[1], [0], [0], [1], [0, 0, 1, 1], [], []>} : vector<4x4xbf16>, vector<4x64xbf16>, vector<4x64xf32> -> vector<4x64xf32>
    %204 = arith.addf %198, %203 : vector<4x64xf32>
    %c0_70 = arith.constant 0 : index
    %c0_71 = arith.constant 0 : index
    %205 = vector.load %arg19[%c0_70, %c0_71] : memref<4x1xf32, #tpu.memory_space<vmem>>, vector<4x1xf32>
    %206 = vector.broadcast %205 : vector<4x1xf32> to vector<4x64xf32>
    %207 = arith.addf %204, %206 : vector<4x64xf32>
    %cst_72 = arith.constant 0.000000e+00 : f32
    %208 = vector.broadcast %cst_72 : f32 to vector<4x64xf32>
    %209 = arith.cmpf ogt, %207, %208 : vector<4x64xf32>
    %cst_73 = arith.constant 0.000000e+00 : f32
    %210 = vector.broadcast %cst_73 : f32 to vector<4x64xf32>
    %211 = arith.minimumf %207, %210 : vector<4x64xf32>
    %212 = math.exp %211 : vector<4x64xf32>
    %cst_74 = arith.constant 1.000000e+00 : f32
    %213 = vector.broadcast %cst_74 : f32 to vector<4x64xf32>
    %214 = arith.subf %212, %213 : vector<4x64xf32>
    %215 = arith.select %209, %207, %214 : vector<4x64xi1>, vector<4x64xf32>
    %216 = vector.shape_cast %215 : vector<4x64xf32> to vector<1x4x64xf32>
    %217 = arith.truncf %216 : vector<1x4x64xf32> to vector<1x4x64xbf16>
    %cst_75 = arith.constant 0.000000e+00 : bf16
    %218 = vector.broadcast %cst_75 : bf16 to vector<1x4x8xbf16>
    %219 = tpu.concatenate %218, %217, %218 in 2 : vector<1x4x8xbf16>, vector<1x4x64xbf16>, vector<1x4x8xbf16> -> vector<1x4x80xbf16>
    %220 = vector.extract_strided_slice %219 {offsets = [0, 0, 0], sizes = [1, 4, 64], strides = [1, 1, 1]} : vector<1x4x80xbf16> to vector<1x4x64xbf16>
    %221 = vector.extract_strided_slice %219 {offsets = [0, 0, 4], sizes = [1, 4, 64], strides = [1, 1, 1]} : vector<1x4x80xbf16> to vector<1x4x64xbf16>
    %222 = vector.extract_strided_slice %219 {offsets = [0, 0, 8], sizes = [1, 4, 64], strides = [1, 1, 1]} : vector<1x4x80xbf16> to vector<1x4x64xbf16>
    %223 = vector.extract_strided_slice %219 {offsets = [0, 0, 12], sizes = [1, 4, 64], strides = [1, 1, 1]} : vector<1x4x80xbf16> to vector<1x4x64xbf16>
    %224 = vector.extract_strided_slice %219 {offsets = [0, 0, 16], sizes = [1, 4, 64], strides = [1, 1, 1]} : vector<1x4x80xbf16> to vector<1x4x64xbf16>
    %225 = tpu.concatenate %220, %221, %222, %223, %224 in 1 : vector<1x4x64xbf16>, vector<1x4x64xbf16>, vector<1x4x64xbf16>, vector<1x4x64xbf16>, vector<1x4x64xbf16> -> vector<1x20x64xbf16>
    %c0_76 = arith.constant 0 : index
    %c0_77 = arith.constant 0 : index
    %226 = vector.load %arg20[%c0_76, %c0_77] : memref<8x20xbf16, #tpu.memory_space<vmem>>, vector<8x20xbf16>
    %227 = vector.shape_cast %226 : vector<8x20xbf16> to vector<1x8x20xbf16>
    "tpu.trace_start"() <{level = 10 : i32, message = "goq,gqw->gow"}> : () -> ()
    %cst_78 = arith.constant dense<0.000000e+00> : vector<1x8x64xf32>
    %228 = tpu.matmul %227, %225, %cst_78 {dimension_numbers = #tpu.dot_dimension_numbers<[2], [1], [1], [2], [0, 0, 0, 1, 1, 2], [0], [0]>} : vector<1x8x20xbf16>, vector<1x20x64xbf16>, vector<1x8x64xf32> -> vector<1x8x64xf32>
    "tpu.trace_stop"() : () -> ()
    %c0_79 = arith.constant 0 : index
    %c0_80 = arith.constant 0 : index
    %229 = vector.load %arg21[%c0_79, %c0_80] : memref<8x1xf32, #tpu.memory_space<vmem>>, vector<8x1xf32>
    %230 = vector.shape_cast %229 : vector<8x1xf32> to vector<1x8x1xf32>
    %231 = vector.broadcast %230 : vector<1x8x1xf32> to vector<1x8x64xf32>
    %232 = arith.addf %228, %231 : vector<1x8x64xf32>
    %cst_81 = arith.constant 0.000000e+00 : f32
    %233 = vector.broadcast %cst_81 : f32 to vector<1x8x64xf32>
    %234 = arith.cmpf ogt, %232, %233 : vector<1x8x64xf32>
    %cst_82 = arith.constant 0.000000e+00 : f32
    %235 = vector.broadcast %cst_82 : f32 to vector<1x8x64xf32>
    %236 = arith.minimumf %232, %235 : vector<1x8x64xf32>
    %237 = math.exp %236 : vector<1x8x64xf32>
    %cst_83 = arith.constant 1.000000e+00 : f32
    %238 = vector.broadcast %cst_83 : f32 to vector<1x8x64xf32>
    %239 = arith.subf %237, %238 : vector<1x8x64xf32>
    %240 = arith.select %234, %232, %239 : vector<1x8x64xi1>, vector<1x8x64xf32>
    %241 = vector.shape_cast %240 : vector<1x8x64xf32> to vector<8x64xf32>
    %242 = vector.shape_cast %241 : vector<8x64xf32> to vector<1x8x64xf32>
    %243 = arith.truncf %242 : vector<1x8x64xf32> to vector<1x8x64xbf16>
    %cst_84 = arith.constant 0.000000e+00 : bf16
    %244 = vector.broadcast %cst_84 : bf16 to vector<1x8x2xbf16>
    %245 = tpu.concatenate %244, %243, %244 in 2 : vector<1x8x2xbf16>, vector<1x8x64xbf16>, vector<1x8x2xbf16> -> vector<1x8x68xbf16>
    %246 = vector.extract_strided_slice %245 {offsets = [0, 0, 0], sizes = [1, 8, 64], strides = [1, 1, 1]} : vector<1x8x68xbf16> to vector<1x8x64xbf16>
    %247 = vector.extract_strided_slice %245 {offsets = [0, 0, 1], sizes = [1, 8, 64], strides = [1, 1, 1]} : vector<1x8x68xbf16> to vector<1x8x64xbf16>
    %248 = vector.extract_strided_slice %245 {offsets = [0, 0, 2], sizes = [1, 8, 64], strides = [1, 1, 1]} : vector<1x8x68xbf16> to vector<1x8x64xbf16>
    %249 = vector.extract_strided_slice %245 {offsets = [0, 0, 3], sizes = [1, 8, 64], strides = [1, 1, 1]} : vector<1x8x68xbf16> to vector<1x8x64xbf16>
    %250 = vector.extract_strided_slice %245 {offsets = [0, 0, 4], sizes = [1, 8, 64], strides = [1, 1, 1]} : vector<1x8x68xbf16> to vector<1x8x64xbf16>
    %251 = tpu.concatenate %246, %247, %248, %249, %250 in 1 : vector<1x8x64xbf16>, vector<1x8x64xbf16>, vector<1x8x64xbf16>, vector<1x8x64xbf16>, vector<1x8x64xbf16> -> vector<1x40x64xbf16>
    %c0_85 = arith.constant 0 : index
    %c0_86 = arith.constant 0 : index
    %252 = vector.load %arg22[%c0_85, %c0_86] : memref<2x40xbf16, #tpu.memory_space<vmem>>, vector<2x40xbf16>
    %253 = vector.shape_cast %252 : vector<2x40xbf16> to vector<1x2x40xbf16>
    "tpu.trace_start"() <{level = 10 : i32, message = "goq,gqw->gow"}> : () -> ()
    %cst_87 = arith.constant dense<0.000000e+00> : vector<1x2x64xf32>
    %254 = tpu.matmul %253, %251, %cst_87 {dimension_numbers = #tpu.dot_dimension_numbers<[2], [1], [1], [2], [0, 0, 0, 1, 1, 2], [0], [0]>} : vector<1x2x40xbf16>, vector<1x40x64xbf16>, vector<1x2x64xf32> -> vector<1x2x64xf32>
    "tpu.trace_stop"() : () -> ()
    %c0_88 = arith.constant 0 : index
    %c0_89 = arith.constant 0 : index
    %255 = vector.load %arg23[%c0_88, %c0_89] : memref<2x1xf32, #tpu.memory_space<vmem>>, vector<2x1xf32>
    %256 = vector.shape_cast %255 : vector<2x1xf32> to vector<1x2x1xf32>
    %257 = vector.broadcast %256 : vector<1x2x1xf32> to vector<1x2x64xf32>
    %258 = arith.addf %254, %257 : vector<1x2x64xf32>
    %259 = arith.truncf %242 : vector<1x8x64xf32> to vector<1x8x64xbf16>
    %cst_90 = arith.constant 0.000000e+00 : bf16
    %260 = vector.broadcast %cst_90 : bf16 to vector<1x8x2xbf16>
    %261 = tpu.concatenate %260, %259, %260 in 2 : vector<1x8x2xbf16>, vector<1x8x64xbf16>, vector<1x8x2xbf16> -> vector<1x8x68xbf16>
    %262 = vector.extract_strided_slice %261 {offsets = [0, 0, 0], sizes = [1, 8, 64], strides = [1, 1, 1]} : vector<1x8x68xbf16> to vector<1x8x64xbf16>
    %263 = vector.extract_strided_slice %261 {offsets = [0, 0, 1], sizes = [1, 8, 64], strides = [1, 1, 1]} : vector<1x8x68xbf16> to vector<1x8x64xbf16>
    %264 = vector.extract_strided_slice %261 {offsets = [0, 0, 2], sizes = [1, 8, 64], strides = [1, 1, 1]} : vector<1x8x68xbf16> to vector<1x8x64xbf16>
    %265 = vector.extract_strided_slice %261 {offsets = [0, 0, 3], sizes = [1, 8, 64], strides = [1, 1, 1]} : vector<1x8x68xbf16> to vector<1x8x64xbf16>
    %266 = vector.extract_strided_slice %261 {offsets = [0, 0, 4], sizes = [1, 8, 64], strides = [1, 1, 1]} : vector<1x8x68xbf16> to vector<1x8x64xbf16>
    %267 = tpu.concatenate %262, %263, %264, %265, %266 in 1 : vector<1x8x64xbf16>, vector<1x8x64xbf16>, vector<1x8x64xbf16>, vector<1x8x64xbf16>, vector<1x8x64xbf16> -> vector<1x40x64xbf16>
    %c0_91 = arith.constant 0 : index
    %c0_92 = arith.constant 0 : index
    %268 = vector.load %arg24[%c0_91, %c0_92] : memref<8x40xbf16, #tpu.memory_space<vmem>>, vector<8x40xbf16>
    %269 = vector.shape_cast %268 : vector<8x40xbf16> to vector<1x8x40xbf16>
    "tpu.trace_start"() <{level = 10 : i32, message = "goq,gqw->gow"}> : () -> ()
    %cst_93 = arith.constant dense<0.000000e+00> : vector<1x8x64xf32>
    %270 = tpu.matmul %269, %267, %cst_93 {dimension_numbers = #tpu.dot_dimension_numbers<[2], [1], [1], [2], [0, 0, 0, 1, 1, 2], [0], [0]>} : vector<1x8x40xbf16>, vector<1x40x64xbf16>, vector<1x8x64xf32> -> vector<1x8x64xf32>
    "tpu.trace_stop"() : () -> ()
    %c0_94 = arith.constant 0 : index
    %c0_95 = arith.constant 0 : index
    %271 = vector.load %arg25[%c0_94, %c0_95] : memref<8x1xf32, #tpu.memory_space<vmem>>, vector<8x1xf32>
    %272 = vector.shape_cast %271 : vector<8x1xf32> to vector<1x8x1xf32>
    %273 = vector.broadcast %272 : vector<1x8x1xf32> to vector<1x8x64xf32>
    %274 = arith.addf %270, %273 : vector<1x8x64xf32>
    %275 = arith.truncf %274 : vector<1x8x64xf32> to vector<1x8x64xbf16>
    %cst_96 = arith.constant 0.000000e+00 : bf16
    %276 = vector.broadcast %cst_96 : bf16 to vector<1x8x4xbf16>
    %277 = tpu.concatenate %276, %275, %276 in 2 : vector<1x8x4xbf16>, vector<1x8x64xbf16>, vector<1x8x4xbf16> -> vector<1x8x72xbf16>
    %278 = vector.extract_strided_slice %277 {offsets = [0, 0, 0], sizes = [1, 8, 64], strides = [1, 1, 1]} : vector<1x8x72xbf16> to vector<1x8x64xbf16>
    %279 = vector.extract_strided_slice %277 {offsets = [0, 0, 1], sizes = [1, 8, 64], strides = [1, 1, 1]} : vector<1x8x72xbf16> to vector<1x8x64xbf16>
    %280 = vector.extract_strided_slice %277 {offsets = [0, 0, 2], sizes = [1, 8, 64], strides = [1, 1, 1]} : vector<1x8x72xbf16> to vector<1x8x64xbf16>
    %281 = vector.extract_strided_slice %277 {offsets = [0, 0, 3], sizes = [1, 8, 64], strides = [1, 1, 1]} : vector<1x8x72xbf16> to vector<1x8x64xbf16>
    %282 = vector.extract_strided_slice %277 {offsets = [0, 0, 4], sizes = [1, 8, 64], strides = [1, 1, 1]} : vector<1x8x72xbf16> to vector<1x8x64xbf16>
    %283 = vector.extract_strided_slice %277 {offsets = [0, 0, 5], sizes = [1, 8, 64], strides = [1, 1, 1]} : vector<1x8x72xbf16> to vector<1x8x64xbf16>
    %284 = vector.extract_strided_slice %277 {offsets = [0, 0, 6], sizes = [1, 8, 64], strides = [1, 1, 1]} : vector<1x8x72xbf16> to vector<1x8x64xbf16>
    %285 = vector.extract_strided_slice %277 {offsets = [0, 0, 7], sizes = [1, 8, 64], strides = [1, 1, 1]} : vector<1x8x72xbf16> to vector<1x8x64xbf16>
    %286 = vector.extract_strided_slice %277 {offsets = [0, 0, 8], sizes = [1, 8, 64], strides = [1, 1, 1]} : vector<1x8x72xbf16> to vector<1x8x64xbf16>
    %287 = tpu.concatenate %278, %279, %280, %281, %282, %283, %284, %285, %286 in 1 : vector<1x8x64xbf16>, vector<1x8x64xbf16>, vector<1x8x64xbf16>, vector<1x8x64xbf16>, vector<1x8x64xbf16>, vector<1x8x64xbf16>, vector<1x8x64xbf16>, vector<1x8x64xbf16>, vector<1x8x64xbf16> -> vector<1x72x64xbf16>
    %c0_97 = arith.constant 0 : index
    %c0_98 = arith.constant 0 : index
    %288 = vector.load %arg26[%c0_97, %c0_98] : memref<2x72xbf16, #tpu.memory_space<vmem>>, vector<2x72xbf16>
    %289 = vector.shape_cast %288 : vector<2x72xbf16> to vector<1x2x72xbf16>
    "tpu.trace_start"() <{level = 10 : i32, message = "goq,gqw->gow"}> : () -> ()
    %cst_99 = arith.constant dense<0.000000e+00> : vector<1x2x64xf32>
    %290 = tpu.matmul %289, %287, %cst_99 {dimension_numbers = #tpu.dot_dimension_numbers<[2], [1], [1], [2], [0, 0, 0, 1, 1, 2], [0], [0]>} : vector<1x2x72xbf16>, vector<1x72x64xbf16>, vector<1x2x64xf32> -> vector<1x2x64xf32>
    "tpu.trace_stop"() : () -> ()
    %c0_100 = arith.constant 0 : index
    %c0_101 = arith.constant 0 : index
    %291 = vector.load %arg27[%c0_100, %c0_101] : memref<2x1xf32, #tpu.memory_space<vmem>>, vector<2x1xf32>
    %292 = vector.shape_cast %291 : vector<2x1xf32> to vector<1x2x1xf32>
    %293 = vector.broadcast %292 : vector<1x2x1xf32> to vector<1x2x64xf32>
    %294 = arith.addf %290, %293 : vector<1x2x64xf32>
    %295 = arith.truncf %242 : vector<1x8x64xf32> to vector<1x8x64xbf16>
    %cst_102 = arith.constant 0.000000e+00 : bf16
    %296 = vector.broadcast %cst_102 : bf16 to vector<1x8x2xbf16>
    %297 = tpu.concatenate %296, %295, %296 in 2 : vector<1x8x2xbf16>, vector<1x8x64xbf16>, vector<1x8x2xbf16> -> vector<1x8x68xbf16>
    %298 = vector.extract_strided_slice %297 {offsets = [0, 0, 0], sizes = [1, 8, 64], strides = [1, 1, 1]} : vector<1x8x68xbf16> to vector<1x8x64xbf16>
    %299 = vector.extract_strided_slice %297 {offsets = [0, 0, 1], sizes = [1, 8, 64], strides = [1, 1, 1]} : vector<1x8x68xbf16> to vector<1x8x64xbf16>
    %300 = vector.extract_strided_slice %297 {offsets = [0, 0, 2], sizes = [1, 8, 64], strides = [1, 1, 1]} : vector<1x8x68xbf16> to vector<1x8x64xbf16>
    %301 = vector.extract_strided_slice %297 {offsets = [0, 0, 3], sizes = [1, 8, 64], strides = [1, 1, 1]} : vector<1x8x68xbf16> to vector<1x8x64xbf16>
    %302 = vector.extract_strided_slice %297 {offsets = [0, 0, 4], sizes = [1, 8, 64], strides = [1, 1, 1]} : vector<1x8x68xbf16> to vector<1x8x64xbf16>
    %303 = tpu.concatenate %298, %299, %300, %301, %302 in 1 : vector<1x8x64xbf16>, vector<1x8x64xbf16>, vector<1x8x64xbf16>, vector<1x8x64xbf16>, vector<1x8x64xbf16> -> vector<1x40x64xbf16>
    %c0_103 = arith.constant 0 : index
    %c0_104 = arith.constant 0 : index
    %304 = vector.load %arg28[%c0_103, %c0_104] : memref<8x40xbf16, #tpu.memory_space<vmem>>, vector<8x40xbf16>
    %305 = vector.shape_cast %304 : vector<8x40xbf16> to vector<1x8x40xbf16>
    "tpu.trace_start"() <{level = 10 : i32, message = "goq,gqw->gow"}> : () -> ()
    %cst_105 = arith.constant dense<0.000000e+00> : vector<1x8x64xf32>
    %306 = tpu.matmul %305, %303, %cst_105 {dimension_numbers = #tpu.dot_dimension_numbers<[2], [1], [1], [2], [0, 0, 0, 1, 1, 2], [0], [0]>} : vector<1x8x40xbf16>, vector<1x40x64xbf16>, vector<1x8x64xf32> -> vector<1x8x64xf32>
    "tpu.trace_stop"() : () -> ()
    %c0_106 = arith.constant 0 : index
    %c0_107 = arith.constant 0 : index
    %307 = vector.load %arg29[%c0_106, %c0_107] : memref<8x1xf32, #tpu.memory_space<vmem>>, vector<8x1xf32>
    %308 = vector.shape_cast %307 : vector<8x1xf32> to vector<1x8x1xf32>
    %309 = vector.broadcast %308 : vector<1x8x1xf32> to vector<1x8x64xf32>
    %310 = arith.addf %306, %309 : vector<1x8x64xf32>
    %311 = arith.truncf %310 : vector<1x8x64xf32> to vector<1x8x64xbf16>
    %cst_108 = arith.constant 0.000000e+00 : bf16
    %312 = vector.broadcast %cst_108 : bf16 to vector<1x8x3xbf16>
    %313 = tpu.concatenate %312, %311, %312 in 2 : vector<1x8x3xbf16>, vector<1x8x64xbf16>, vector<1x8x3xbf16> -> vector<1x8x70xbf16>
    %314 = vector.extract_strided_slice %313 {offsets = [0, 0, 0], sizes = [1, 8, 64], strides = [1, 1, 1]} : vector<1x8x70xbf16> to vector<1x8x64xbf16>
    %315 = vector.extract_strided_slice %313 {offsets = [0, 0, 1], sizes = [1, 8, 64], strides = [1, 1, 1]} : vector<1x8x70xbf16> to vector<1x8x64xbf16>
    %316 = vector.extract_strided_slice %313 {offsets = [0, 0, 2], sizes = [1, 8, 64], strides = [1, 1, 1]} : vector<1x8x70xbf16> to vector<1x8x64xbf16>
    %317 = vector.extract_strided_slice %313 {offsets = [0, 0, 3], sizes = [1, 8, 64], strides = [1, 1, 1]} : vector<1x8x70xbf16> to vector<1x8x64xbf16>
    %318 = vector.extract_strided_slice %313 {offsets = [0, 0, 4], sizes = [1, 8, 64], strides = [1, 1, 1]} : vector<1x8x70xbf16> to vector<1x8x64xbf16>
    %319 = vector.extract_strided_slice %313 {offsets = [0, 0, 5], sizes = [1, 8, 64], strides = [1, 1, 1]} : vector<1x8x70xbf16> to vector<1x8x64xbf16>
    %320 = vector.extract_strided_slice %313 {offsets = [0, 0, 6], sizes = [1, 8, 64], strides = [1, 1, 1]} : vector<1x8x70xbf16> to vector<1x8x64xbf16>
    %321 = tpu.concatenate %314, %315, %316, %317, %318, %319, %320 in 1 : vector<1x8x64xbf16>, vector<1x8x64xbf16>, vector<1x8x64xbf16>, vector<1x8x64xbf16>, vector<1x8x64xbf16>, vector<1x8x64xbf16>, vector<1x8x64xbf16> -> vector<1x56x64xbf16>
    %c0_109 = arith.constant 0 : index
    %c0_110 = arith.constant 0 : index
    %322 = vector.load %arg30[%c0_109, %c0_110] : memref<2x56xbf16, #tpu.memory_space<vmem>>, vector<2x56xbf16>
    %323 = vector.shape_cast %322 : vector<2x56xbf16> to vector<1x2x56xbf16>
    "tpu.trace_start"() <{level = 10 : i32, message = "goq,gqw->gow"}> : () -> ()
    %cst_111 = arith.constant dense<0.000000e+00> : vector<1x2x64xf32>
    %324 = tpu.matmul %323, %321, %cst_111 {dimension_numbers = #tpu.dot_dimension_numbers<[2], [1], [1], [2], [0, 0, 0, 1, 1, 2], [0], [0]>} : vector<1x2x56xbf16>, vector<1x56x64xbf16>, vector<1x2x64xf32> -> vector<1x2x64xf32>
    "tpu.trace_stop"() : () -> ()
    %c0_112 = arith.constant 0 : index
    %c0_113 = arith.constant 0 : index
    %325 = vector.load %arg31[%c0_112, %c0_113] : memref<2x1xf32, #tpu.memory_space<vmem>>, vector<2x1xf32>
    %326 = vector.shape_cast %325 : vector<2x1xf32> to vector<1x2x1xf32>
    %327 = vector.broadcast %326 : vector<1x2x1xf32> to vector<1x2x64xf32>
    %328 = arith.addf %324, %327 : vector<1x2x64xf32>
    %329 = arith.truncf %328 : vector<1x2x64xf32> to vector<1x2x64xbf16>
    %cst_114 = arith.constant 0.000000e+00 : bf16
    %330 = vector.broadcast %cst_114 : bf16 to vector<1x2x3xbf16>
    %331 = tpu.concatenate %330, %329, %330 in 2 : vector<1x2x3xbf16>, vector<1x2x64xbf16>, vector<1x2x3xbf16> -> vector<1x2x70xbf16>
    %332 = vector.extract_strided_slice %331 {offsets = [0, 0, 0], sizes = [1, 2, 64], strides = [1, 1, 1]} : vector<1x2x70xbf16> to vector<1x2x64xbf16>
    %333 = vector.extract_strided_slice %331 {offsets = [0, 0, 1], sizes = [1, 2, 64], strides = [1, 1, 1]} : vector<1x2x70xbf16> to vector<1x2x64xbf16>
    %334 = vector.extract_strided_slice %331 {offsets = [0, 0, 2], sizes = [1, 2, 64], strides = [1, 1, 1]} : vector<1x2x70xbf16> to vector<1x2x64xbf16>
    %335 = vector.extract_strided_slice %331 {offsets = [0, 0, 3], sizes = [1, 2, 64], strides = [1, 1, 1]} : vector<1x2x70xbf16> to vector<1x2x64xbf16>
    %336 = vector.extract_strided_slice %331 {offsets = [0, 0, 4], sizes = [1, 2, 64], strides = [1, 1, 1]} : vector<1x2x70xbf16> to vector<1x2x64xbf16>
    %337 = vector.extract_strided_slice %331 {offsets = [0, 0, 5], sizes = [1, 2, 64], strides = [1, 1, 1]} : vector<1x2x70xbf16> to vector<1x2x64xbf16>
    %338 = vector.extract_strided_slice %331 {offsets = [0, 0, 6], sizes = [1, 2, 64], strides = [1, 1, 1]} : vector<1x2x70xbf16> to vector<1x2x64xbf16>
    %339 = tpu.concatenate %332, %333, %334, %335, %336, %337, %338 in 1 : vector<1x2x64xbf16>, vector<1x2x64xbf16>, vector<1x2x64xbf16>, vector<1x2x64xbf16>, vector<1x2x64xbf16>, vector<1x2x64xbf16>, vector<1x2x64xbf16> -> vector<1x14x64xbf16>
    %c0_115 = arith.constant 0 : index
    %c0_116 = arith.constant 0 : index
    %340 = vector.load %arg32[%c0_115, %c0_116] : memref<2x14xbf16, #tpu.memory_space<vmem>>, vector<2x14xbf16>
    %341 = vector.shape_cast %340 : vector<2x14xbf16> to vector<1x2x14xbf16>
    "tpu.trace_start"() <{level = 10 : i32, message = "goq,gqw->gow"}> : () -> ()
    %cst_117 = arith.constant dense<0.000000e+00> : vector<1x2x64xf32>
    %342 = tpu.matmul %341, %339, %cst_117 {dimension_numbers = #tpu.dot_dimension_numbers<[2], [1], [1], [2], [0, 0, 0, 1, 1, 2], [0], [0]>} : vector<1x2x14xbf16>, vector<1x14x64xbf16>, vector<1x2x64xf32> -> vector<1x2x64xf32>
    "tpu.trace_stop"() : () -> ()
    %c0_118 = arith.constant 0 : index
    %c0_119 = arith.constant 0 : index
    %343 = vector.load %arg33[%c0_118, %c0_119] : memref<2x1xf32, #tpu.memory_space<vmem>>, vector<2x1xf32>
    %344 = vector.shape_cast %343 : vector<2x1xf32> to vector<1x2x1xf32>
    %345 = vector.broadcast %344 : vector<1x2x1xf32> to vector<1x2x64xf32>
    %346 = arith.addf %342, %345 : vector<1x2x64xf32>
    %cst_120 = arith.constant 0.000000e+00 : f32
    %347 = vector.broadcast %cst_120 : f32 to vector<1x8x3xf32>
    %348 = tpu.concatenate %347, %242, %347 in 2 : vector<1x8x3xf32>, vector<1x8x64xf32>, vector<1x8x3xf32> -> vector<1x8x70xf32>
    %349 = vector.extract_strided_slice %348 {offsets = [0, 0, 0], sizes = [1, 8, 64], strides = [1, 1, 1]} : vector<1x8x70xf32> to vector<1x8x64xf32>
    %350 = vector.extract_strided_slice %348 {offsets = [0, 0, 1], sizes = [1, 8, 64], strides = [1, 1, 1]} : vector<1x8x70xf32> to vector<1x8x64xf32>
    %351 = arith.addf %349, %350 : vector<1x8x64xf32>
    %352 = vector.extract_strided_slice %348 {offsets = [0, 0, 2], sizes = [1, 8, 64], strides = [1, 1, 1]} : vector<1x8x70xf32> to vector<1x8x64xf32>
    %353 = arith.addf %351, %352 : vector<1x8x64xf32>
    %354 = vector.extract_strided_slice %348 {offsets = [0, 0, 3], sizes = [1, 8, 64], strides = [1, 1, 1]} : vector<1x8x70xf32> to vector<1x8x64xf32>
    %355 = arith.addf %353, %354 : vector<1x8x64xf32>
    %356 = vector.extract_strided_slice %348 {offsets = [0, 0, 4], sizes = [1, 8, 64], strides = [1, 1, 1]} : vector<1x8x70xf32> to vector<1x8x64xf32>
    %357 = arith.addf %355, %356 : vector<1x8x64xf32>
    %358 = vector.extract_strided_slice %348 {offsets = [0, 0, 5], sizes = [1, 8, 64], strides = [1, 1, 1]} : vector<1x8x70xf32> to vector<1x8x64xf32>
    %359 = arith.addf %357, %358 : vector<1x8x64xf32>
    %360 = vector.extract_strided_slice %348 {offsets = [0, 0, 6], sizes = [1, 8, 64], strides = [1, 1, 1]} : vector<1x8x70xf32> to vector<1x8x64xf32>
    %361 = arith.addf %359, %360 : vector<1x8x64xf32>
    %cst_121 = arith.constant 0.142857149 : f32
    %362 = vector.broadcast %cst_121 : f32 to vector<1x8x64xf32>
    %363 = arith.mulf %361, %362 : vector<1x8x64xf32>
    %364 = arith.truncf %363 : vector<1x8x64xf32> to vector<1x8x64xbf16>
    %cst_122 = arith.constant 0.000000e+00 : bf16
    %365 = vector.broadcast %cst_122 : bf16 to vector<1x8x2xbf16>
    %366 = tpu.concatenate %365, %364, %365 in 2 : vector<1x8x2xbf16>, vector<1x8x64xbf16>, vector<1x8x2xbf16> -> vector<1x8x68xbf16>
    %367 = vector.extract_strided_slice %366 {offsets = [0, 0, 0], sizes = [1, 8, 64], strides = [1, 1, 1]} : vector<1x8x68xbf16> to vector<1x8x64xbf16>
    %368 = vector.extract_strided_slice %366 {offsets = [0, 0, 1], sizes = [1, 8, 64], strides = [1, 1, 1]} : vector<1x8x68xbf16> to vector<1x8x64xbf16>
    %369 = vector.extract_strided_slice %366 {offsets = [0, 0, 2], sizes = [1, 8, 64], strides = [1, 1, 1]} : vector<1x8x68xbf16> to vector<1x8x64xbf16>
    %370 = vector.extract_strided_slice %366 {offsets = [0, 0, 3], sizes = [1, 8, 64], strides = [1, 1, 1]} : vector<1x8x68xbf16> to vector<1x8x64xbf16>
    %371 = vector.extract_strided_slice %366 {offsets = [0, 0, 4], sizes = [1, 8, 64], strides = [1, 1, 1]} : vector<1x8x68xbf16> to vector<1x8x64xbf16>
    %372 = tpu.concatenate %367, %368, %369, %370, %371 in 1 : vector<1x8x64xbf16>, vector<1x8x64xbf16>, vector<1x8x64xbf16>, vector<1x8x64xbf16>, vector<1x8x64xbf16> -> vector<1x40x64xbf16>
    %c0_123 = arith.constant 0 : index
    %c0_124 = arith.constant 0 : index
    %373 = vector.load %arg34[%c0_123, %c0_124] : memref<2x40xbf16, #tpu.memory_space<vmem>>, vector<2x40xbf16>
    %374 = vector.shape_cast %373 : vector<2x40xbf16> to vector<1x2x40xbf16>
    "tpu.trace_start"() <{level = 10 : i32, message = "goq,gqw->gow"}> : () -> ()
    %cst_125 = arith.constant dense<0.000000e+00> : vector<1x2x64xf32>
    %375 = tpu.matmul %374, %372, %cst_125 {dimension_numbers = #tpu.dot_dimension_numbers<[2], [1], [1], [2], [0, 0, 0, 1, 1, 2], [0], [0]>} : vector<1x2x40xbf16>, vector<1x40x64xbf16>, vector<1x2x64xf32> -> vector<1x2x64xf32>
    "tpu.trace_stop"() : () -> ()
    %c0_126 = arith.constant 0 : index
    %c0_127 = arith.constant 0 : index
    %376 = vector.load %arg35[%c0_126, %c0_127] : memref<2x1xf32, #tpu.memory_space<vmem>>, vector<2x1xf32>
    %377 = vector.shape_cast %376 : vector<2x1xf32> to vector<1x2x1xf32>
    %378 = vector.broadcast %377 : vector<1x2x1xf32> to vector<1x2x64xf32>
    %379 = arith.addf %375, %378 : vector<1x2x64xf32>
    %380 = tpu.concatenate %379, %258, %294, %346 in 1 : vector<1x2x64xf32>, vector<1x2x64xf32>, vector<1x2x64xf32>, vector<1x2x64xf32> -> vector<1x8x64xf32>
    %381 = vector.shape_cast %380 : vector<1x8x64xf32> to vector<8x64xf32>
    %382 = arith.addf %381, %241 : vector<8x64xf32>
    %cst_128 = arith.constant 0.000000e+00 : f32
    %383 = vector.broadcast %cst_128 : f32 to vector<8x64xf32>
    %384 = arith.maximumf %382, %383 : vector<8x64xf32>
    %385 = tpu.iota {dimensions = array<i32: 0>} : vector<64x32xi32>
    %386 = tpu.iota {dimensions = array<i32: 1>} : vector<64x32xi32>
    %c2_i32 = arith.constant 2 : i32
    %387 = vector.broadcast %c2_i32 : i32 to vector<64x32xi32>
    %388 = arith.muli %387, %386 : vector<64x32xi32>
    %389 = arith.cmpi eq, %385, %388 : vector<64x32xi32>
    %390 = arith.extui %389 : vector<64x32xi1> to vector<64x32xi32>
    %391 = arith.sitofp %390 : vector<64x32xi32> to vector<64x32xf32>
    %392 = arith.truncf %391 : vector<64x32xf32> to vector<64x32xbf16>
    %c2_i32_129 = arith.constant 2 : i32
    %393 = vector.broadcast %c2_i32_129 : i32 to vector<64x32xi32>
    %394 = arith.muli %393, %386 : vector<64x32xi32>
    %c1_i32 = arith.constant 1 : i32
    %395 = vector.broadcast %c1_i32 : i32 to vector<64x32xi32>
    %396 = arith.addi %394, %395 : vector<64x32xi32>
    %397 = arith.cmpi eq, %385, %396 : vector<64x32xi32>
    %398 = arith.extui %397 : vector<64x32xi1> to vector<64x32xi32>
    %399 = arith.sitofp %398 : vector<64x32xi32> to vector<64x32xf32>
    %400 = arith.truncf %399 : vector<64x32xf32> to vector<64x32xbf16>
    %401 = arith.truncf %384 : vector<8x64xf32> to vector<8x64xbf16>
    %cst_130 = arith.constant dense<0.000000e+00> : vector<8x32xf32>
    %402 = tpu.matmul %401, %392, %cst_130 {dimension_numbers = #tpu.dot_dimension_numbers<[1], [0], [0], [1], [0, 0, 1, 1], [], []>} : vector<8x64xbf16>, vector<64x32xbf16>, vector<8x32xf32> -> vector<8x32xf32>
    %cst_131 = arith.constant dense<0.000000e+00> : vector<8x32xf32>
    %403 = tpu.matmul %401, %400, %cst_131 {dimension_numbers = #tpu.dot_dimension_numbers<[1], [0], [0], [1], [0, 0, 1, 1], [], []>} : vector<8x64xbf16>, vector<64x32xbf16>, vector<8x32xf32> -> vector<8x32xf32>
    %404 = arith.maximumf %402, %403 : vector<8x32xf32>
    %405 = vector.shape_cast %404 : vector<8x32xf32> to vector<1x8x32xf32>
    %406 = arith.truncf %405 : vector<1x8x32xf32> to vector<1x8x32xbf16>
    %cst_132 = arith.constant 0.000000e+00 : bf16
    %407 = vector.broadcast %cst_132 : bf16 to vector<1x8x8xbf16>
    %408 = tpu.concatenate %407, %406, %407 in 2 : vector<1x8x8xbf16>, vector<1x8x32xbf16>, vector<1x8x8xbf16> -> vector<1x8x48xbf16>
    %409 = vector.extract_strided_slice %408 {offsets = [0, 0, 0], sizes = [1, 8, 32], strides = [1, 1, 1]} : vector<1x8x48xbf16> to vector<1x8x32xbf16>
    %410 = vector.extract_strided_slice %408 {offsets = [0, 0, 4], sizes = [1, 8, 32], strides = [1, 1, 1]} : vector<1x8x48xbf16> to vector<1x8x32xbf16>
    %411 = vector.extract_strided_slice %408 {offsets = [0, 0, 8], sizes = [1, 8, 32], strides = [1, 1, 1]} : vector<1x8x48xbf16> to vector<1x8x32xbf16>
    %412 = vector.extract_strided_slice %408 {offsets = [0, 0, 12], sizes = [1, 8, 32], strides = [1, 1, 1]} : vector<1x8x48xbf16> to vector<1x8x32xbf16>
    %413 = vector.extract_strided_slice %408 {offsets = [0, 0, 16], sizes = [1, 8, 32], strides = [1, 1, 1]} : vector<1x8x48xbf16> to vector<1x8x32xbf16>
    %414 = tpu.concatenate %409, %410, %411, %412, %413 in 1 : vector<1x8x32xbf16>, vector<1x8x32xbf16>, vector<1x8x32xbf16>, vector<1x8x32xbf16>, vector<1x8x32xbf16> -> vector<1x40x32xbf16>
    %c0_133 = arith.constant 0 : index
    %c0_134 = arith.constant 0 : index
    %415 = vector.load %arg36[%c0_133, %c0_134] : memref<8x40xbf16, #tpu.memory_space<vmem>>, vector<8x40xbf16>
    %416 = vector.shape_cast %415 : vector<8x40xbf16> to vector<1x8x40xbf16>
    "tpu.trace_start"() <{level = 10 : i32, message = "goq,gqw->gow"}> : () -> ()
    %cst_135 = arith.constant dense<0.000000e+00> : vector<1x8x32xf32>
    %417 = tpu.matmul %416, %414, %cst_135 {dimension_numbers = #tpu.dot_dimension_numbers<[2], [1], [1], [2], [0, 0, 0, 1, 1, 2], [0], [0]>} : vector<1x8x40xbf16>, vector<1x40x32xbf16>, vector<1x8x32xf32> -> vector<1x8x32xf32>
    "tpu.trace_stop"() : () -> ()
    %c0_136 = arith.constant 0 : index
    %c0_137 = arith.constant 0 : index
    %418 = vector.load %arg37[%c0_136, %c0_137] : memref<8x1xf32, #tpu.memory_space<vmem>>, vector<8x1xf32>
    %419 = vector.shape_cast %418 : vector<8x1xf32> to vector<1x8x1xf32>
    %420 = vector.broadcast %419 : vector<1x8x1xf32> to vector<1x8x32xf32>
    %421 = arith.addf %417, %420 : vector<1x8x32xf32>
    %cst_138 = arith.constant 0.000000e+00 : f32
    %422 = vector.broadcast %cst_138 : f32 to vector<1x8x32xf32>
    %423 = arith.cmpf ogt, %421, %422 : vector<1x8x32xf32>
    %cst_139 = arith.constant 0.000000e+00 : f32
    %424 = vector.broadcast %cst_139 : f32 to vector<1x8x32xf32>
    %425 = arith.minimumf %421, %424 : vector<1x8x32xf32>
    %426 = math.exp %425 : vector<1x8x32xf32>
    %cst_140 = arith.constant 1.000000e+00 : f32
    %427 = vector.broadcast %cst_140 : f32 to vector<1x8x32xf32>
    %428 = arith.subf %426, %427 : vector<1x8x32xf32>
    %429 = arith.select %423, %421, %428 : vector<1x8x32xi1>, vector<1x8x32xf32>
    %430 = vector.shape_cast %429 : vector<1x8x32xf32> to vector<8x32xf32>
    %c0_141 = arith.constant 0 : index
    %c0_142 = arith.constant 0 : index
    %c0_143 = arith.constant 0 : index
    %431 = vector.load %arg38[%c0_141, %c0_142, %c0_143] : memref<1x8x32xf32, #tpu.memory_space<vmem>>, vector<1x8x32xf32>
    %432 = vector.shape_cast %431 : vector<1x8x32xf32> to vector<8x32xf32>
    %433 = vector.shape_cast %430 : vector<8x32xf32> to vector<1x8x32xf32>
    tpu.vector_store %arg38[%c0_141, %c0_142, %c0_143], %433 {strides = array<i32>} : memref<1x8x32xf32, #tpu.memory_space<vmem>>, vector<1x8x32xf32>,
    return
  }
  func.func @transform_0(%arg0: i32) -> (i32, i32, i32, i32) {
    %c0_i32 = arith.constant 0 : i32
    %c0_i32_0 = arith.constant 0 : i32
    %c0_i32_1 = arith.constant 0 : i32
    %c0_i32_2 = arith.constant 0 : i32
    return %arg0, %c0_i32, %c0_i32_0, %c0_i32_1 : i32, i32, i32, i32
  }
  func.func @transform_1(%arg0: i32) -> (i32, i32) {
    %c0_i32 = arith.constant 0 : i32
    %c0_i32_0 = arith.constant 0 : i32
    %c0_i32_1 = arith.constant 0 : i32
    return %c0_i32, %c0_i32_0 : i32, i32
  }
  func.func @transform_2(%arg0: i32) -> (i32, i32) {
    %c0_i32 = arith.constant 0 : i32
    %c0_i32_0 = arith.constant 0 : i32
    %c0_i32_1 = arith.constant 0 : i32
    return %c0_i32, %c0_i32_0 : i32, i32
  }
  func.func @transform_3(%arg0: i32) -> (i32, i32) {
    %c0_i32 = arith.constant 0 : i32
    %c0_i32_0 = arith.constant 0 : i32
    %c0_i32_1 = arith.constant 0 : i32
    return %c0_i32, %c0_i32_0 : i32, i32
  }
  func.func @transform_4(%arg0: i32) -> (i32, i32) {
    %c0_i32 = arith.constant 0 : i32
    %c0_i32_0 = arith.constant 0 : i32
    %c0_i32_1 = arith.constant 0 : i32
    return %c0_i32, %c0_i32_0 : i32, i32
  }
  func.func @transform_5(%arg0: i32) -> (i32, i32) {
    %c0_i32 = arith.constant 0 : i32
    %c0_i32_0 = arith.constant 0 : i32
    %c0_i32_1 = arith.constant 0 : i32
    return %c0_i32, %c0_i32_0 : i32, i32
  }
  func.func @transform_6(%arg0: i32) -> (i32, i32) {
    %c0_i32 = arith.constant 0 : i32
    %c0_i32_0 = arith.constant 0 : i32
    %c0_i32_1 = arith.constant 0 : i32
    return %c0_i32, %c0_i32_0 : i32, i32
  }
  func.func @transform_7(%arg0: i32) -> (i32, i32) {
    %c0_i32 = arith.constant 0 : i32
    %c0_i32_0 = arith.constant 0 : i32
    %c0_i32_1 = arith.constant 0 : i32
    return %c0_i32, %c0_i32_0 : i32, i32
  }
  func.func @transform_8(%arg0: i32) -> (i32, i32) {
    %c0_i32 = arith.constant 0 : i32
    %c0_i32_0 = arith.constant 0 : i32
    %c0_i32_1 = arith.constant 0 : i32
    return %c0_i32, %c0_i32_0 : i32, i32
  }
  func.func @transform_9(%arg0: i32) -> (i32, i32) {
    %c0_i32 = arith.constant 0 : i32
    %c0_i32_0 = arith.constant 0 : i32
    %c0_i32_1 = arith.constant 0 : i32
    return %c0_i32, %c0_i32_0 : i32, i32
  }
  func.func @transform_10(%arg0: i32) -> (i32, i32) {
    %c0_i32 = arith.constant 0 : i32
    %c0_i32_0 = arith.constant 0 : i32
    %c0_i32_1 = arith.constant 0 : i32
    return %c0_i32, %c0_i32_0 : i32, i32
  }
  func.func @transform_11(%arg0: i32) -> (i32, i32) {
    %c0_i32 = arith.constant 0 : i32
    %c0_i32_0 = arith.constant 0 : i32
    %c0_i32_1 = arith.constant 0 : i32
    return %c0_i32, %c0_i32_0 : i32, i32
  }
  func.func @transform_12(%arg0: i32) -> (i32, i32) {
    %c0_i32 = arith.constant 0 : i32
    %c0_i32_0 = arith.constant 0 : i32
    %c0_i32_1 = arith.constant 0 : i32
    return %c0_i32, %c0_i32_0 : i32, i32
  }
  func.func @transform_13(%arg0: i32) -> (i32, i32) {
    %c0_i32 = arith.constant 0 : i32
    %c0_i32_0 = arith.constant 0 : i32
    %c0_i32_1 = arith.constant 0 : i32
    return %c0_i32, %c0_i32_0 : i32, i32
  }
  func.func @transform_14(%arg0: i32) -> (i32, i32) {
    %c0_i32 = arith.constant 0 : i32
    %c0_i32_0 = arith.constant 0 : i32
    %c0_i32_1 = arith.constant 0 : i32
    return %c0_i32, %c0_i32_0 : i32, i32
  }
  func.func @transform_15(%arg0: i32) -> (i32, i32) {
    %c0_i32 = arith.constant 0 : i32
    %c0_i32_0 = arith.constant 0 : i32
    %c0_i32_1 = arith.constant 0 : i32
    return %c0_i32, %c0_i32_0 : i32, i32
  }
  func.func @transform_16(%arg0: i32) -> (i32, i32) {
    %c0_i32 = arith.constant 0 : i32
    %c0_i32_0 = arith.constant 0 : i32
    %c0_i32_1 = arith.constant 0 : i32
    return %c0_i32, %c0_i32_0 : i32, i32
  }
  func.func @transform_17(%arg0: i32) -> (i32, i32, i32) {
    %c0_i32 = arith.constant 0 : i32
    %c0_i32_0 = arith.constant 0 : i32
    %c0_i32_1 = arith.constant 0 : i32
    %c0_i32_2 = arith.constant 0 : i32
    return %c0_i32, %c0_i32_0, %c0_i32_1 : i32, i32, i32
  }
  func.func @transform_18(%arg0: i32) -> (i32, i32) {
    %c0_i32 = arith.constant 0 : i32
    %c0_i32_0 = arith.constant 0 : i32
    %c0_i32_1 = arith.constant 0 : i32
    return %c0_i32, %c0_i32_0 : i32, i32
  }
  func.func @transform_19(%arg0: i32) -> (i32, i32) {
    %c0_i32 = arith.constant 0 : i32
    %c0_i32_0 = arith.constant 0 : i32
    %c0_i32_1 = arith.constant 0 : i32
    return %c0_i32, %c0_i32_0 : i32, i32
  }
  func.func @transform_20(%arg0: i32) -> (i32, i32) {
    %c0_i32 = arith.constant 0 : i32
    %c0_i32_0 = arith.constant 0 : i32
    %c0_i32_1 = arith.constant 0 : i32
    return %c0_i32, %c0_i32_0 : i32, i32
  }
  func.func @transform_21(%arg0: i32) -> (i32, i32) {
    %c0_i32 = arith.constant 0 : i32
    %c0_i32_0 = arith.constant 0 : i32
    %c0_i32_1 = arith.constant 0 : i32
    return %c0_i32, %c0_i32_0 : i32, i32
  }
  func.func @transform_22(%arg0: i32) -> (i32, i32) {
    %c0_i32 = arith.constant 0 : i32
    %c0_i32_0 = arith.constant 0 : i32
    %c0_i32_1 = arith.constant 0 : i32
    return %c0_i32, %c0_i32_0 : i32, i32
  }
  func.func @transform_23(%arg0: i32) -> (i32, i32) {
    %c0_i32 = arith.constant 0 : i32
    %c0_i32_0 = arith.constant 0 : i32
    %c0_i32_1 = arith.constant 0 : i32
    return %c0_i32, %c0_i32_0 : i32, i32
  }
  func.func @transform_24(%arg0: i32) -> (i32, i32) {
    %c0_i32 = arith.constant 0 : i32
    %c0_i32_0 = arith.constant 0 : i32
    %c0_i32_1 = arith.constant 0 : i32
    return %c0_i32, %c0_i32_0 : i32, i32
  }
  func.func @transform_25(%arg0: i32) -> (i32, i32) {
    %c0_i32 = arith.constant 0 : i32
    %c0_i32_0 = arith.constant 0 : i32
    %c0_i32_1 = arith.constant 0 : i32
    return %c0_i32, %c0_i32_0 : i32, i32
  }
  func.func @transform_26(%arg0: i32) -> (i32, i32) {
    %c0_i32 = arith.constant 0 : i32
    %c0_i32_0 = arith.constant 0 : i32
    %c0_i32_1 = arith.constant 0 : i32
    return %c0_i32, %c0_i32_0 : i32, i32
  }
  func.func @transform_27(%arg0: i32) -> (i32, i32) {
    %c0_i32 = arith.constant 0 : i32
    %c0_i32_0 = arith.constant 0 : i32
    %c0_i32_1 = arith.constant 0 : i32
    return %c0_i32, %c0_i32_0 : i32, i32
  }
  func.func @transform_28(%arg0: i32) -> (i32, i32) {
    %c0_i32 = arith.constant 0 : i32
    %c0_i32_0 = arith.constant 0 : i32
    %c0_i32_1 = arith.constant 0 : i32
    return %c0_i32, %c0_i32_0 : i32, i32
  }
  func.func @transform_29(%arg0: i32) -> (i32, i32) {
    %c0_i32 = arith.constant 0 : i32
    %c0_i32_0 = arith.constant 0 : i32
    %c0_i32_1 = arith.constant 0 : i32
    return %c0_i32, %c0_i32_0 : i32, i32
  }
  func.func @transform_30(%arg0: i32) -> (i32, i32) {
    %c0_i32 = arith.constant 0 : i32
    %c0_i32_0 = arith.constant 0 : i32
    %c0_i32_1 = arith.constant 0 : i32
    return %c0_i32, %c0_i32_0 : i32, i32
  }
  func.func @transform_31(%arg0: i32) -> (i32, i32) {
    %c0_i32 = arith.constant 0 : i32
    %c0_i32_0 = arith.constant 0 : i32
    %c0_i32_1 = arith.constant 0 : i32
    return %c0_i32, %c0_i32_0 : i32, i32
  }
  func.func @transform_32(%arg0: i32) -> (i32, i32) {
    %c0_i32 = arith.constant 0 : i32
    %c0_i32_0 = arith.constant 0 : i32
    %c0_i32_1 = arith.constant 0 : i32
    return %c0_i32, %c0_i32_0 : i32, i32
  }
  func.func @transform_33(%arg0: i32) -> (i32, i32) {
    %c0_i32 = arith.constant 0 : i32
    %c0_i32_0 = arith.constant 0 : i32
    %c0_i32_1 = arith.constant 0 : i32
    return %c0_i32, %c0_i32_0 : i32, i32
  }
  func.func @transform_34(%arg0: i32) -> (i32, i32) {
    %c0_i32 = arith.constant 0 : i32
    %c0_i32_0 = arith.constant 0 : i32
    %c0_i32_1 = arith.constant 0 : i32
    return %c0_i32, %c0_i32_0 : i32, i32
  }
  func.func @transform_35(%arg0: i32) -> (i32, i32) {
    %c0_i32 = arith.constant 0 : i32
    %c0_i32_0 = arith.constant 0 : i32
    %c0_i32_1 = arith.constant 0 : i32
    return %c0_i32, %c0_i32_0 : i32, i32
  }
  func.func @transform_36(%arg0: i32) -> (i32, i32) {
    %c0_i32 = arith.constant 0 : i32
    %c0_i32_0 = arith.constant 0 : i32
    %c0_i32_1 = arith.constant 0 : i32
    return %c0_i32, %c0_i32_0 : i32, i32
  }
  func.func @transform_37(%arg0: i32) -> (i32, i32, i32) {
    %c0_i32 = arith.constant 0 : i32
    %c0_i32_0 = arith.constant 0 : i32
    %c0_i32_1 = arith.constant 0 : i32
    return %arg0, %c0_i32, %c0_i32_0 : i32, i32, i32
  }
}

module attributes {stable_mosaic.version = 11 : i64} {
  func.func @_head_kernel(%arg0: memref<2x256xf32, #tpu.memory_space<vmem>>, %arg1: memref<256x512xbf16, #tpu.memory_space<vmem>>, %arg2: memref<1x512xf32, #tpu.memory_space<vmem>>, %arg3: memref<512x256xbf16, #tpu.memory_space<vmem>>, %arg4: memref<1x256xf32, #tpu.memory_space<vmem>>, %arg5: memref<256x128xbf16, #tpu.memory_space<vmem>>, %arg6: memref<1x128xf32, #tpu.memory_space<vmem>>, %arg7: memref<128x4xbf16, #tpu.memory_space<vmem>>, %arg8: memref<1x4xf32, #tpu.memory_space<vmem>>, %arg9: memref<2x4xf32, #tpu.memory_space<vmem>>) attributes {dimension_semantics = [], scalar_prefetch = 0 : i64, scratch_operands = 0 : i64, tpu.core_type = #tpu.core_type<tc>} {
    %c0 = arith.constant 0 : index
    %c0_0 = arith.constant 0 : index
    %0 = vector.load %arg0[%c0, %c0_0] : memref<2x256xf32, #tpu.memory_space<vmem>>, vector<2x256xf32>
    %1 = arith.truncf %0 : vector<2x256xf32> to vector<2x256xbf16>
    %c0_1 = arith.constant 0 : index
    %c0_2 = arith.constant 0 : index
    %2 = vector.load %arg1[%c0_1, %c0_2] : memref<256x512xbf16, #tpu.memory_space<vmem>>, vector<256x512xbf16>
    %cst = arith.constant dense<0.000000e+00> : vector<2x512xf32>
    %3 = tpu.matmul %1, %2, %cst {dimension_numbers = #tpu.dot_dimension_numbers<[1], [0], [0], [1], [0, 0, 1, 1], [], []>} : vector<2x256xbf16>, vector<256x512xbf16>, vector<2x512xf32> -> vector<2x512xf32>
    %c0_3 = arith.constant 0 : index
    %c0_4 = arith.constant 0 : index
    %4 = vector.load %arg2[%c0_3, %c0_4] : memref<1x512xf32, #tpu.memory_space<vmem>>, vector<1x512xf32>
    %5 = vector.broadcast %4 : vector<1x512xf32> to vector<2x512xf32>
    %6 = arith.addf %3, %5 : vector<2x512xf32>
    %cst_5 = arith.constant 0.000000e+00 : f32
    %7 = vector.broadcast %cst_5 : f32 to vector<2x512xf32>
    %8 = arith.maximumf %6, %7 : vector<2x512xf32>
    %9 = arith.truncf %8 : vector<2x512xf32> to vector<2x512xbf16>
    %c0_6 = arith.constant 0 : index
    %c0_7 = arith.constant 0 : index
    %10 = vector.load %arg3[%c0_6, %c0_7] : memref<512x256xbf16, #tpu.memory_space<vmem>>, vector<512x256xbf16>
    %cst_8 = arith.constant dense<0.000000e+00> : vector<2x256xf32>
    %11 = tpu.matmul %9, %10, %cst_8 {dimension_numbers = #tpu.dot_dimension_numbers<[1], [0], [0], [1], [0, 0, 1, 1], [], []>} : vector<2x512xbf16>, vector<512x256xbf16>, vector<2x256xf32> -> vector<2x256xf32>
    %c0_9 = arith.constant 0 : index
    %c0_10 = arith.constant 0 : index
    %12 = vector.load %arg4[%c0_9, %c0_10] : memref<1x256xf32, #tpu.memory_space<vmem>>, vector<1x256xf32>
    %13 = vector.broadcast %12 : vector<1x256xf32> to vector<2x256xf32>
    %14 = arith.addf %11, %13 : vector<2x256xf32>
    %cst_11 = arith.constant 0.000000e+00 : f32
    %15 = vector.broadcast %cst_11 : f32 to vector<2x256xf32>
    %16 = arith.maximumf %14, %15 : vector<2x256xf32>
    %17 = arith.truncf %16 : vector<2x256xf32> to vector<2x256xbf16>
    %c0_12 = arith.constant 0 : index
    %c0_13 = arith.constant 0 : index
    %18 = vector.load %arg5[%c0_12, %c0_13] : memref<256x128xbf16, #tpu.memory_space<vmem>>, vector<256x128xbf16>
    %cst_14 = arith.constant dense<0.000000e+00> : vector<2x128xf32>
    %19 = tpu.matmul %17, %18, %cst_14 {dimension_numbers = #tpu.dot_dimension_numbers<[1], [0], [0], [1], [0, 0, 1, 1], [], []>} : vector<2x256xbf16>, vector<256x128xbf16>, vector<2x128xf32> -> vector<2x128xf32>
    %c0_15 = arith.constant 0 : index
    %c0_16 = arith.constant 0 : index
    %20 = vector.load %arg6[%c0_15, %c0_16] : memref<1x128xf32, #tpu.memory_space<vmem>>, vector<1x128xf32>
    %21 = vector.broadcast %20 : vector<1x128xf32> to vector<2x128xf32>
    %22 = arith.addf %19, %21 : vector<2x128xf32>
    %cst_17 = arith.constant 0.000000e+00 : f32
    %23 = vector.broadcast %cst_17 : f32 to vector<2x128xf32>
    %24 = arith.maximumf %22, %23 : vector<2x128xf32>
    %25 = arith.truncf %24 : vector<2x128xf32> to vector<2x128xbf16>
    %c0_18 = arith.constant 0 : index
    %c0_19 = arith.constant 0 : index
    %26 = vector.load %arg7[%c0_18, %c0_19] : memref<128x4xbf16, #tpu.memory_space<vmem>>, vector<128x4xbf16>
    %cst_20 = arith.constant dense<0.000000e+00> : vector<2x4xf32>
    %27 = tpu.matmul %25, %26, %cst_20 {dimension_numbers = #tpu.dot_dimension_numbers<[1], [0], [0], [1], [0, 0, 1, 1], [], []>} : vector<2x128xbf16>, vector<128x4xbf16>, vector<2x4xf32> -> vector<2x4xf32>
    %c0_21 = arith.constant 0 : index
    %c0_22 = arith.constant 0 : index
    %28 = vector.load %arg8[%c0_21, %c0_22] : memref<1x4xf32, #tpu.memory_space<vmem>>, vector<1x4xf32>
    %29 = vector.broadcast %28 : vector<1x4xf32> to vector<2x4xf32>
    %30 = arith.addf %27, %29 : vector<2x4xf32>
    %cst_23 = arith.constant dense<0xFF800000> : vector<2xf32>
    %31 = vector.multi_reduction <maximumf>, %30, %cst_23 [1] : vector<2x4xf32> to vector<2xf32>
    %32 = vector.shape_cast %31 : vector<2xf32> to vector<2x1xf32>
    %33 = vector.broadcast %32 : vector<2x1xf32> to vector<2x4xf32>
    %34 = arith.subf %30, %33 : vector<2x4xf32>
    %35 = math.exp %34 : vector<2x4xf32>
    %cst_24 = arith.constant dense<0.000000e+00> : vector<2xf32>
    %36 = vector.multi_reduction <add>, %35, %cst_24 [1] : vector<2x4xf32> to vector<2xf32>
    %37 = vector.shape_cast %36 : vector<2xf32> to vector<2x1xf32>
    %38 = math.log %37 : vector<2x1xf32>
    %39 = arith.addf %38, %32 : vector<2x1xf32>
    %40 = vector.broadcast %39 : vector<2x1xf32> to vector<2x4xf32>
    %41 = arith.subf %30, %40 : vector<2x4xf32>
    %c0_25 = arith.constant 0 : index
    %c0_26 = arith.constant 0 : index
    %42 = vector.load %arg9[%c0_25, %c0_26] : memref<2x4xf32, #tpu.memory_space<vmem>>, vector<2x4xf32>
    tpu.vector_store %arg9[%c0_25, %c0_26], %41 {strides = array<i32>} : memref<2x4xf32, #tpu.memory_space<vmem>>, vector<2x4xf32>,
    return
  }
}

</mosaic_0001>

<llo_original>
// kernel: _lambda_.3
$region0: #{_lambda_.3}
  #allocation0 [shape = 'u32[]', space=smem, size = 0x4, offset = 0x4, fixed_abs, tag = 'smem constant byte address 0x4 - core index']
  #allocation1 [shape = 'u32[144,128]{1,0:T(1,128)}', space=vmem, size = 0x12000, scoped, tag = 'internal scratch']
  %s0 = inlined_call_operand.vmem [shape: f32[2,256], index: 0, kind: input, shape index: {}]
  %s1 = inlined_call_operand.hbm [shape: bf16[256,512], index: 1, kind: input, shape index: {}]
  %s2 = inlined_call_operand.vmem [shape: f32[1,512], index: 2, kind: input, shape index: {}]
  %s3 = inlined_call_operand.hbm [shape: bf16[512,256], index: 3, kind: input, shape index: {}]
  %s4 = inlined_call_operand.vmem [shape: f32[1,256], index: 4, kind: input, shape index: {}]
  %s5 = inlined_call_operand.vmem [shape: bf16[256,128], index: 5, kind: input, shape index: {}]
  %s6 = inlined_call_operand.vmem [shape: f32[1,128], index: 6, kind: input, shape index: {}]
  %s7 = inlined_call_operand.vmem [shape: bf16[128,4], index: 7, kind: input, shape index: {}]
  %s8 = inlined_call_operand.vmem [shape: f32[1,4], index: 8, kind: input, shape index: {}]
  %s9 = inlined_call_operand.hbm [shape: f32[2,4], index: 9, kind: output, shape index: {}]
  %s10 = sld [smem:[#allocation0]]
  $region54: #{_lambda_.3} parent=0
    _
  %s12 = ssub.s32 1, %s10
  %s13 = scalar_select 0, %s12, %s10
  $region1: #{_lambda_.3} parent=0
    #allocation2 [shape = 'u8[262144]{0}', space=vmem, size = 0x40000, scoped, tag = 'input window, operand 1, single buffered']
    #allocation3 [shape = 's32[1]{0}', space=sflag, size = 0x4, scoped, tag = 'scoped memory for _lambda_.3']
    #allocation4 [shape = 's32[1]{0}', space=sflag, size = 0x4, scoped, tag = 'scoped memory for _lambda_.3']
    #allocation5 [shape = 'u8[262144]{0}', space=vmem, size = 0x40000, scoped, tag = 'input window, operand 3, single buffered']
    #allocation6 [shape = 's32[1]{0}', space=sflag, size = 0x4, scoped, tag = 'scoped memory for _lambda_.3']
    #allocation7 [shape = 'u8[1024]{0}', space=vmem, size = 0x400, scoped, tag = 'output window, operand 0, single buffered']
    %14 = vsyncpa [#allocation3], 0
    %15 = vsyncpa [#allocation6], 0
    %16 = vsyncpa [#allocation4], 0
    // Predicated region
    $region2: #{_lambda_.3} parent=1 // pred_check
      _
    $region3: #{_lambda_.3} parent=1 // pred_check_branch
      %18 = sbr.rel (0) target = $region5
    $region4: #{_lambda_.3} parent=1 // pred_region
      _
    $region5: #{_lambda_.3} parent=1 // pred_fallthru
      _
    // Predicated region
    $region6: #{_lambda_.3} parent=1 // pred_check
      _
    $region7: #{_lambda_.3} parent=1 // pred_check_branch
      %20 = sbr.rel (0) target = $region9
    $region8: #{_lambda_.3} parent=1 // pred_region
      %s22 = ssub.s32 8192, 8192
      %23 = vsyncadd [#allocation3], %s22
      %s24 = sshll.u32 [#allocation2], 4
      %s25 = int_to_ptr.vmem [resolvable:$true] %s24
      %30 = dma.hbm_to_vmem [thread:$0]  %s1, 8192, %s25, [#allocation3], 256, 256, 16
    $region9: #{_lambda_.3} parent=1 // pred_fallthru
      _
    // Predicated region
    $region10: #{_lambda_.3} parent=1 // pred_check
      _
    $region11: #{_lambda_.3} parent=1 // pred_check_branch
      %32 = sbr.rel (0) target = $region13
    $region12: #{_lambda_.3} parent=1 // pred_region
      _
    $region13: #{_lambda_.3} parent=1 // pred_fallthru
      _
    // Predicated region
    $region14: #{_lambda_.3} parent=1 // pred_check
      _
    $region15: #{_lambda_.3} parent=1 // pred_check_branch
      %34 = sbr.rel (0) target = $region17
    $region16: #{_lambda_.3} parent=1 // pred_region
      %s36 = ssub.s32 8192, 8192
      %37 = vsyncadd [#allocation6], %s36
      %s38 = sshll.u32 [#allocation5], 4
      %s39 = int_to_ptr.vmem [resolvable:$true] %s38
      %44 = dma.hbm_to_vmem [thread:$0]  %s3, 8192, %s39, [#allocation6], 128, 128, 8
    $region17: #{_lambda_.3} parent=1 // pred_fallthru
      _
    // Predicated region
    $region18: #{_lambda_.3} parent=1 // pred_check
      _
    $region19: #{_lambda_.3} parent=1 // pred_check_branch
      %46 = sbr.rel (0) target = $region21
    $region20: #{_lambda_.3} parent=1 // pred_region
      _
    $region21: #{_lambda_.3} parent=1 // pred_fallthru
      _
    // Predicated region
    $region22: #{_lambda_.3} parent=1 // pred_check
      _
    $region23: #{_lambda_.3} parent=1 // pred_check_branch
      %48 = sbr.rel (0) target = $region25
    $region24: #{_lambda_.3} parent=1 // pred_region
      _
    $region25: #{_lambda_.3} parent=1 // pred_fallthru
      _
    // Predicated region
    $region26: #{_lambda_.3} parent=1 // pred_check
      _
    $region27: #{_lambda_.3} parent=1 // pred_check_branch
      %50 = sbr.rel (0) target = $region29
    $region28: #{_lambda_.3} parent=1 // pred_region
      _
    $region29: #{_lambda_.3} parent=1 // pred_fallthru
      _
    // Predicated region
    $region30: #{_lambda_.3} parent=1 // pred_check
      _
    $region31: #{_lambda_.3} parent=1 // pred_check_branch
      %52 = sbr.rel (0) target = $region33
    $region32: #{_lambda_.3} parent=1 // pred_region
      _
    $region33: #{_lambda_.3} parent=1 // pred_fallthru
      _
    // Predicated region
    $region34: #{_lambda_.3} parent=1 // pred_check
      _
    $region35: #{_lambda_.3} parent=1 // pred_check_branch
      %54 = sbr.rel (0) target = $region37
    $region36: #{_lambda_.3} parent=1 // pred_region
      _
    $region37: #{_lambda_.3} parent=1 // pred_fallthru
      _
    // Predicated region
    $region38: #{_lambda_.3} parent=1 // pred_check
      _
    $region39: #{_lambda_.3} parent=1 // pred_check_branch
      %56 = sbr.rel (0) target = $region41
    $region40: #{_lambda_.3} parent=1 // pred_region
      %57 = dma.done [#allocation3], 8192
    $region41: #{_lambda_.3} parent=1 // pred_fallthru
      _
    // Predicated region
    $region42: #{_lambda_.3} parent=1 // pred_check
      _
    $region43: #{_lambda_.3} parent=1 // pred_check_branch
      %59 = sbr.rel (0) target = $region45
    $region44: #{_lambda_.3} parent=1 // pred_region
      %60 = dma.done [#allocation6], 8192
    $region45: #{_lambda_.3} parent=1 // pred_fallthru
      _
    %v62 = vld [vmem:[%s0] sm:$0xf]
    %v65 = vunpack.c.l.s4 1983009808
    %v66 = vunpack.c.0.s8 %v65
    %v67 = vlaneseq
    %v68 = vshrl.u32 %v67, 7
    %v69 = vsub.s32 %v66, %v68
    %v70 = vrot.slane %v62, %v69
    %v71 = vcombine.high %v70, %v70
    %v74 = vpack.c.bf16 %v70, %v70
    %v75 = vpack.c.bf16 %v71, %v71
    %v76 = vld [vmem:[#allocation2] sm:$0xff]
    %v77 = vld [vmem:[#allocation2 + $0x8] sm:$0xff]
    %v78 = vld [vmem:[#allocation2 + $0x10] sm:$0xff]
    %v79 = vld [vmem:[#allocation2 + $0x18] sm:$0xff]
    %v80 = vld [vmem:[#allocation2 + $0x20] sm:$0xff]
    %v81 = vld [vmem:[#allocation2 + $0x28] sm:$0xff]
    %v82 = vld [vmem:[#allocation2 + $0x30] sm:$0xff]
    %v83 = vld [vmem:[#allocation2 + $0x38] sm:$0xff]
    %v84 = vld [vmem:[#allocation2 + $0x40] sm:$0xff]
    %v85 = vld [vmem:[#allocation2 + $0x48] sm:$0xff]
    %v86 = vld [vmem:[#allocation2 + $0x50] sm:$0xff]
    %v87 = vld [vmem:[#allocation2 + $0x58] sm:$0xff]
    %v88 = vld [vmem:[#allocation2 + $0x60] sm:$0xff]
    %v89 = vld [vmem:[#allocation2 + $0x68] sm:$0xff]
    %v90 = vld [vmem:[#allocation2 + $0x70] sm:$0xff]
    %v91 = vld [vmem:[#allocation2 + $0x78] sm:$0xff]
    %v92 = vld [vmem:[#allocation2 + $0x80] sm:$0xff]
    %v93 = vld [vmem:[#allocation2 + $0x88] sm:$0xff]
    %v94 = vld [vmem:[#allocation2 + $0x90] sm:$0xff]
    %v95 = vld [vmem:[#allocation2 + $0x98] sm:$0xff]
    %v96 = vld [vmem:[#allocation2 + $0xa0] sm:$0xff]
    %v97 = vld [vmem:[#allocation2 + $0xa8] sm:$0xff]
    %v98 = vld [vmem:[#allocation2 + $0xb0] sm:$0xff]
    %v99 = vld [vmem:[#allocation2 + $0xb8] sm:$0xff]
    %v100 = vld [vmem:[#allocation2 + $0xc0] sm:$0xff]
    %v101 = vld [vmem:[#allocation2 + $0xc8] sm:$0xff]
    %v102 = vld [vmem:[#allocation2 + $0xd0] sm:$0xff]
    %v103 = vld [vmem:[#allocation2 + $0xd8] sm:$0xff]
    %v104 = vld [vmem:[#allocation2 + $0xe0] sm:$0xff]
    %v105 = vld [vmem:[#allocation2 + $0xe8] sm:$0xff]
    %v106 = vld [vmem:[#allocation2 + $0xf0] sm:$0xff]
    %v107 = vld [vmem:[#allocation2 + $0xf8] sm:$0xff]
    %v108 = vld [vmem:[#allocation2 + $0x100] sm:$0xff]
    %v109 = vld [vmem:[#allocation2 + $0x108] sm:$0xff]
    %v110 = vld [vmem:[#allocation2 + $0x110] sm:$0xff]
    %v111 = vld [vmem:[#allocation2 + $0x118] sm:$0xff]
    %v112 = vld [vmem:[#allocation2 + $0x120] sm:$0xff]
    %v113 = vld [vmem:[#allocation2 + $0x128] sm:$0xff]
    %v114 = vld [vmem:[#allocation2 + $0x130] sm:$0xff]
    %v115 = vld [vmem:[#allocation2 + $0x138] sm:$0xff]
    %v116 = vld [vmem:[#allocation2 + $0x140] sm:$0xff]
    %v117 = vld [vmem:[#allocation2 + $0x148] sm:$0xff]
    %v118 = vld [vmem:[#allocation2 + $0x150] sm:$0xff]
    %v119 = vld [vmem:[#allocation2 + $0x158] sm:$0xff]
    %v120 = vld [vmem:[#allocation2 + $0x160] sm:$0xff]
    %v121 = vld [vmem:[#allocation2 + $0x168] sm:$0xff]
    %v122 = vld [vmem:[#allocation2 + $0x170] sm:$0xff]
    %v123 = vld [vmem:[#allocation2 + $0x178] sm:$0xff]
    %v124 = vld [vmem:[#allocation2 + $0x180] sm:$0xff]
    %v125 = vld [vmem:[#allocation2 + $0x188] sm:$0xff]
    %v126 = vld [vmem:[#allocation2 + $0x190] sm:$0xff]
    %v127 = vld [vmem:[#allocation2 + $0x198] sm:$0xff]
    %v128 = vld [vmem:[#allocation2 + $0x1a0] sm:$0xff]
    %v129 = vld [vmem:[#allocation2 + $0x1a8] sm:$0xff]
    %v130 = vld [vmem:[#allocation2 + $0x1b0] sm:$0xff]
    %v131 = vld [vmem:[#allocation2 + $0x1b8] sm:$0xff]
    %v132 = vld [vmem:[#allocation2 + $0x1c0] sm:$0xff]
    %v133 = vld [vmem:[#allocation2 + $0x1c8] sm:$0xff]
    %v134 = vld [vmem:[#allocation2 + $0x1d0] sm:$0xff]
    %v135 = vld [vmem:[#allocation2 + $0x1d8] sm:$0xff]
    %v136 = vld [vmem:[#allocation2 + $0x1e0] sm:$0xff]
    %v137 = vld [vmem:[#allocation2 + $0x1e8] sm:$0xff]
    %v138 = vld [vmem:[#allocation2 + $0x1f0] sm:$0xff]
    %v139 = vld [vmem:[#allocation2 + $0x1f8] sm:$0xff]
    %v140 = vld [vmem:[%s2] sm:$0xf]
    %v142 = vlaneseq
    %v143 = vshrl.u32 %v142, 7
    %v144 = vsub.s32 0, %v143
    %v145 = vrot.slane %v140, %v144
    %v146 = vlaneseq
    %v147 = vshrl.u32 %v146, 7
    %v148 = vsub.s32 1, %v147
    %v149 = vrot.slane %v140, %v148
    %v150 = vlaneseq
    %v151 = vshrl.u32 %v150, 7
    %v152 = vsub.s32 2, %v151
    %v153 = vrot.slane %v140, %v152
    %v154 = vlaneseq
    %v155 = vshrl.u32 %v154, 7
    %v156 = vsub.s32 3, %v155
    %v157 = vrot.slane %v140, %v156
    %v226 = vunpack.c.l.b16 %v76
    %v227 = vunpack.c.h.b16 %v76
    %v228 = vunpack.c.l.b16 %v77
    %v229 = vunpack.c.h.b16 %v77
    %v230 = vunpack.c.l.b16 %v78
    %v231 = vunpack.c.h.b16 %v78
    %v232 = vunpack.c.l.b16 %v79
    %v233 = vunpack.c.h.b16 %v79
    %v234 = vunpack.c.l.b16 %v80
    %v235 = vunpack.c.h.b16 %v80
    %v236 = vunpack.c.l.b16 %v81
    %v237 = vunpack.c.h.b16 %v81
    %v238 = vunpack.c.l.b16 %v82
    %v239 = vunpack.c.h.b16 %v82
    %v240 = vunpack.c.l.b16 %v83
    %v241 = vunpack.c.h.b16 %v83
    %v242 = vunpack.c.l.b16 %v84
    %v243 = vunpack.c.h.b16 %v84
    %v244 = vunpack.c.l.b16 %v85
    %v245 = vunpack.c.h.b16 %v85
    %v246 = vunpack.c.l.b16 %v86
    %v247 = vunpack.c.h.b16 %v86
    %v248 = vunpack.c.l.b16 %v87
    %v249 = vunpack.c.h.b16 %v87
    %v250 = vunpack.c.l.b16 %v88
    %v251 = vunpack.c.h.b16 %v88
    %v252 = vunpack.c.l.b16 %v89
    %v253 = vunpack.c.h.b16 %v89
    %v254 = vunpack.c.l.b16 %v90
    %v255 = vunpack.c.h.b16 %v90
    %v256 = vunpack.c.l.b16 %v91
    %v257 = vunpack.c.h.b16 %v91
    %v258 = vunpack.c.l.b16 %v92
    %v259 = vunpack.c.h.b16 %v92
    %v260 = vunpack.c.l.b16 %v93
    %v261 = vunpack.c.h.b16 %v93
    %v262 = vunpack.c.l.b16 %v94
    %v263 = vunpack.c.h.b16 %v94
    %v264 = vunpack.c.l.b16 %v95
    %v265 = vunpack.c.h.b16 %v95
    %v266 = vunpack.c.l.b16 %v96
    %v267 = vunpack.c.h.b16 %v96
    %v268 = vunpack.c.l.b16 %v97
    %v269 = vunpack.c.h.b16 %v97
    %v270 = vunpack.c.l.b16 %v98
    %v271 = vunpack.c.h.b16 %v98
    %v272 = vunpack.c.l.b16 %v99
    %v273 = vunpack.c.h.b16 %v99
    %v274 = vunpack.c.l.b16 %v100
    %v275 = vunpack.c.h.b16 %v100
    %v276 = vunpack.c.l.b16 %v101
    %v277 = vunpack.c.h.b16 %v101
    %v278 = vunpack.c.l.b16 %v102
    %v279 = vunpack.c.h.b16 %v102
    %v280 = vunpack.c.l.b16 %v103
    %v281 = vunpack.c.h.b16 %v103
    %v282 = vunpack.c.l.b16 %v104
    %v283 = vunpack.c.h.b16 %v104
    %v284 = vunpack.c.l.b16 %v105
    %v285 = vunpack.c.h.b16 %v105
    %v286 = vunpack.c.l.b16 %v106
    %v287 = vunpack.c.h.b16 %v106
    %v288 = vunpack.c.l.b16 %v107
    %v289 = vunpack.c.h.b16 %v107
    %v290 = vunpack.c.l.b16 %v108
    %v291 = vunpack.c.h.b16 %v108
    %v292 = vunpack.c.l.b16 %v109
    %v293 = vunpack.c.h.b16 %v109
    %v294 = vunpack.c.l.b16 %v110
    %v295 = vunpack.c.h.b16 %v110
    %v296 = vunpack.c.l.b16 %v111
    %v297 = vunpack.c.h.b16 %v111
    %v298 = vunpack.c.l.b16 %v112
    %v299 = vunpack.c.h.b16 %v112
    %v300 = vunpack.c.l.b16 %v113
    %v301 = vunpack.c.h.b16 %v113
    %v302 = vunpack.c.l.b16 %v114
    %v303 = vunpack.c.h.b16 %v114
    %v304 = vunpack.c.l.b16 %v115
    %v305 = vunpack.c.h.b16 %v115
    %v306 = vunpack.c.l.b16 %v116
    %v307 = vunpack.c.h.b16 %v116
    %v308 = vunpack.c.l.b16 %v117
    %v309 = vunpack.c.h.b16 %v117
    %v310 = vunpack.c.l.b16 %v118
    %v311 = vunpack.c.h.b16 %v118
    %v312 = vunpack.c.l.b16 %v119
    %v313 = vunpack.c.h.b16 %v119
    %v314 = vunpack.c.l.b16 %v120
    %v315 = vunpack.c.h.b16 %v120
    %v316 = vunpack.c.l.b16 %v121
    %v317 = vunpack.c.h.b16 %v121
    %v318 = vunpack.c.l.b16 %v122
    %v319 = vunpack.c.h.b16 %v122
    %v320 = vunpack.c.l.b16 %v123
    %v321 = vunpack.c.h.b16 %v123
    %v322 = vunpack.c.l.b16 %v124
    %v323 = vunpack.c.h.b16 %v124
    %v324 = vunpack.c.l.b16 %v125
    %v325 = vunpack.c.h.b16 %v125
    %v326 = vunpack.c.l.b16 %v126
    %v327 = vunpack.c.h.b16 %v126
    %v328 = vunpack.c.l.b16 %v127
    %v329 = vunpack.c.h.b16 %v127
    %v330 = vunpack.c.l.b16 %v128
    %v331 = vunpack.c.h.b16 %v128
    %v332 = vunpack.c.l.b16 %v129
    %v333 = vunpack.c.h.b16 %v129
    %v334 = vunpack.c.l.b16 %v130
    %v335 = vunpack.c.h.b16 %v130
    %v336 = vunpack.c.l.b16 %v131
    %v337 = vunpack.c.h.b16 %v131
    %v338 = vunpack.c.l.b16 %v132
    %v339 = vunpack.c.h.b16 %v132
    %v340 = vunpack.c.l.b16 %v133
    %v341 = vunpack.c.h.b16 %v133
    %v342 = vunpack.c.l.b16 %v134
    %v343 = vunpack.c.h.b16 %v134
    %v344 = vunpack.c.l.b16 %v135
    %v345 = vunpack.c.h.b16 %v135
    %v346 = vunpack.c.l.b16 %v136
    %v347 = vunpack.c.h.b16 %v136
    %v348 = vunpack.c.l.b16 %v137
    %v349 = vunpack.c.h.b16 %v137
    %v350 = vunpack.c.l.b16 %v138
    %v351 = vunpack.c.h.b16 %v138
    %v352 = vunpack.c.l.b16 %v139
    %v353 = vunpack.c.h.b16 %v139
    %v354 = vpack.c.b16 %v230, %v226
    %v355 = vpack.c.b16 %v231, %v227
    %v356 = vpack.c.b16 %v232, %v228
    %v357 = vpack.c.b16 %v233, %v229
    %v358 = vpack.c.b16 %v238, %v234
    %v359 = vpack.c.b16 %v239, %v235
    %v360 = vpack.c.b16 %v240, %v236
    %v361 = vpack.c.b16 %v241, %v237
    %v362 = vpack.c.b16 %v246, %v242
    %v363 = vpack.c.b16 %v247, %v243
    %v364 = vpack.c.b16 %v248, %v244
    %v365 = vpack.c.b16 %v249, %v245
    %v366 = vpack.c.b16 %v254, %v250
    %v367 = vpack.c.b16 %v255, %v251
    %v368 = vpack.c.b16 %v256, %v252
    %v369 = vpack.c.b16 %v257, %v253
    %v370 = vpack.c.b16 %v262, %v258
    %v371 = vpack.c.b16 %v263, %v259
    %v372 = vpack.c.b16 %v264, %v260
    %v373 = vpack.c.b16 %v265, %v261
    %v374 = vpack.c.b16 %v270, %v266
    %v375 = vpack.c.b16 %v271, %v267
    %v376 = vpack.c.b16 %v272, %v268
    %v377 = vpack.c.b16 %v273, %v269
    %v378 = vpack.c.b16 %v278, %v274
    %v379 = vpack.c.b16 %v279, %v275
    %v380 = vpack.c.b16 %v280, %v276
    %v381 = vpack.c.b16 %v281, %v277
    %v382 = vpack.c.b16 %v286, %v282
    %v383 = vpack.c.b16 %v287, %v283
    %v384 = vpack.c.b16 %v288, %v284
    %v385 = vpack.c.b16 %v289, %v285
    %v386 = vpack.c.b16 %v294, %v290
    %v387 = vpack.c.b16 %v295, %v291
    %v388 = vpack.c.b16 %v296, %v292
    %v389 = vpack.c.b16 %v297, %v293
    %v390 = vpack.c.b16 %v302, %v298
    %v391 = vpack.c.b16 %v303, %v299
    %v392 = vpack.c.b16 %v304, %v300
    %v393 = vpack.c.b16 %v305, %v301
    %v394 = vpack.c.b16 %v310, %v306
    %v395 = vpack.c.b16 %v311, %v307
    %v396 = vpack.c.b16 %v312, %v308
    %v397 = vpack.c.b16 %v313, %v309
    %v398 = vpack.c.b16 %v318, %v314
    %v399 = vpack.c.b16 %v319, %v315
    %v400 = vpack.c.b16 %v320, %v316
    %v401 = vpack.c.b16 %v321, %v317
    %v402 = vpack.c.b16 %v326, %v322
    %v403 = vpack.c.b16 %v327, %v323
    %v404 = vpack.c.b16 %v328, %v324
    %v405 = vpack.c.b16 %v329, %v325
    %v406 = vpack.c.b16 %v334, %v330
    %v407 = vpack.c.b16 %v335, %v331
    %v408 = vpack.c.b16 %v336, %v332
    %v409 = vpack.c.b16 %v337, %v333
    %v410 = vpack.c.b16 %v342, %v338
    %v411 = vpack.c.b16 %v343, %v339
    %v412 = vpack.c.b16 %v344, %v340
    %v413 = vpack.c.b16 %v345, %v341
    %v414 = vpack.c.b16 %v350, %v346
    %v415 = vpack.c.b16 %v351, %v347
    %v416 = vpack.c.b16 %v352, %v348
    %v417 = vpack.c.b16 %v353, %v349
    %482 = vmatprep.subr.bf16.mxu0 %v383
    %483 = vmatpush1.bf16.msra.mxu0 %v382
    %484 = vmatprep.subr.bf16.mxu0 %v379
    %485 = vmatpush1.bf16.msra.mxu0 %v378
    %486 = vmatprep.subr.bf16.mxu0 %v375
    %487 = vmatpush1.bf16.msra.mxu0 %v374
    %488 = vmatprep.subr.bf16.mxu0 %v371
    %489 = vmatpush1.bf16.msra.mxu0 %v370
    %490 = vmatprep.subr.bf16.mxu0 %v367
    %491 = vmatpush1.bf16.msra.mxu0 %v366
    %492 = vmatprep.subr.bf16.mxu0 %v363
    %493 = vmatpush1.bf16.msra.mxu0 %v362
    %494 = vmatprep.subr.bf16.mxu0 %v359
    %495 = vmatpush1.bf16.msra.mxu0 %v358
    %496 = vmatprep.subr.bf16.mxu0 %v355
    %497 = vmatpush1.bf16.msra.mxu0 %v354
    %498 = vmatprep.subr.bf16.mxu0 %v415
    %499 = vmatpush2.bf16.msra.mxu0 %v414
    %500 = vmatprep.subr.bf16.mxu0 %v411
    %501 = vmatpush2.bf16.msra.mxu0 %v410
    %502 = vmatprep.subr.bf16.mxu0 %v407
    %503 = vmatpush2.bf16.msra.mxu0 %v406
    %504 = vmatprep.subr.bf16.mxu0 %v403
    %505 = vmatpush2.bf16.msra.mxu0 %v402
    %506 = vmatprep.subr.bf16.mxu0 %v399
    %507 = vmatpush2.bf16.msra.mxu0 %v398
    %508 = vmatprep.subr.bf16.mxu0 %v395
    %509 = vmatpush2.bf16.msra.mxu0 %v394
    %510 = vmatprep.subr.bf16.mxu0 %v391
    %511 = vmatpush2.bf16.msra.mxu0 %v390
    %512 = vmatprep.subr.bf16.mxu0 %v387
    %513 = vmatpush2.bf16.msra.mxu0 %v386
    %514 = vmatprep.mubr.bf16.mxu0 %v75
    %515 = vmatmul.mubr.bf16.gmra.mxu0 %v74
    %v516 = vpop.f32.mrf.mxu0
    %v517 = vadd.f32 %v145, %v516
    %v518 = vpop.f32.mrf.mxu0
    %v519 = vadd.f32 %v149, %v518
    %v520 = vpop.f32.mrf.mxu0
    %v521 = vpop.f32.mrf.mxu0
    %522 = vdwg.mxu0
    %523 = vmatprep.subr.bf16.mxu0 %v385
    %524 = vmatpush1.bf16.msra.mxu0 %v384
    %525 = vmatprep.subr.bf16.mxu0 %v381
    %526 = vmatpush1.bf16.msra.mxu0 %v380
    %527 = vmatprep.subr.bf16.mxu0 %v377
    %528 = vmatpush1.bf16.msra.mxu0 %v376
    %529 = vmatprep.subr.bf16.mxu0 %v373
    %530 = vmatpush1.bf16.msra.mxu0 %v372
    %531 = vmatprep.subr.bf16.mxu0 %v369
    %532 = vmatpush1.bf16.msra.mxu0 %v368
    %533 = vmatprep.subr.bf16.mxu0 %v365
    %534 = vmatpush1.bf16.msra.mxu0 %v364
    %535 = vmatprep.subr.bf16.mxu0 %v361
    %536 = vmatpush1.bf16.msra.mxu0 %v360
    %537 = vmatprep.subr.bf16.mxu0 %v357
    %538 = vmatpush1.bf16.msra.mxu0 %v356
    %539 = vmatprep.subr.bf16.mxu0 %v417
    %540 = vmatpush2.bf16.msra.mxu0 %v416
    %541 = vmatprep.subr.bf16.mxu0 %v413
    %542 = vmatpush2.bf16.msra.mxu0 %v412
    %543 = vmatprep.subr.bf16.mxu0 %v409
    %544 = vmatpush2.bf16.msra.mxu0 %v408
    %545 = vmatprep.subr.bf16.mxu0 %v405
    %546 = vmatpush2.bf16.msra.mxu0 %v404
    %547 = vmatprep.subr.bf16.mxu0 %v401
    %548 = vmatpush2.bf16.msra.mxu0 %v400
    %549 = vmatprep.subr.bf16.mxu0 %v397
    %550 = vmatpush2.bf16.msra.mxu0 %v396
    %551 = vmatprep.subr.bf16.mxu0 %v393
    %552 = vmatpush2.bf16.msra.mxu0 %v392
    %553 = vmatprep.subr.bf16.mxu0 %v389
    %554 = vmatpush2.bf16.msra.mxu0 %v388
    %555 = vmatprep.mubr.bf16.mxu0 %v75
    %556 = vmatmul.mubr.bf16.gmra.mxu0 %v74
    %v557 = vpop.f32.mrf.mxu0
    %v558 = vadd.f32 %v153, %v557
    %v559 = vpop.f32.mrf.mxu0
    %v560 = vadd.f32 %v157, %v559
    %v561 = vpop.f32.mrf.mxu0
    %v562 = vpop.f32.mrf.mxu0
    %563 = vdwg.mxu0
    %v564 = vmax.f32 %v517, 0.0
    %v565 = vmax.f32 %v519, 0.0
    %v566 = vmax.f32 %v558, 0.0
    %v567 = vmax.f32 %v560, 0.0
    %v568 = vpack.c.bf16 %v564, %v564
    %v569 = vpack.c.bf16 %v565, %v565
    %v570 = vpack.c.bf16 %v566, %v566
    %v571 = vpack.c.bf16 %v567, %v567
    %v572 = vld [vmem:[#allocation5] sm:$0xff]
    %v573 = vld [vmem:[#allocation5 + $0x8] sm:$0xff]
    %v574 = vld [vmem:[#allocation5 + $0x10] sm:$0xff]
    %v575 = vld [vmem:[#allocation5 + $0x18] sm:$0xff]
    %v576 = vld [vmem:[#allocation5 + $0x20] sm:$0xff]
    %v577 = vld [vmem:[#allocation5 + $0x28] sm:$0xff]
    %v578 = vld [vmem:[#allocation5 + $0x30] sm:$0xff]
    %v579 = vld [vmem:[#allocation5 + $0x38] sm:$0xff]
    %v580 = vld [vmem:[#allocation5 + $0x40] sm:$0xff]
    %v581 = vld [vmem:[#allocation5 + $0x48] sm:$0xff]
    %v582 = vld [vmem:[#allocation5 + $0x50] sm:$0xff]
    %v583 = vld [vmem:[#allocation5 + $0x58] sm:$0xff]
    %v584 = vld [vmem:[#allocation5 + $0x60] sm:$0xff]
    %v585 = vld [vmem:[#allocation5 + $0x68] sm:$0xff]
    %v586 = vld [vmem:[#allocation5 + $0x70] sm:$0xff]
    %v587 = vld [vmem:[#allocation5 + $0x78] sm:$0xff]
    %v588 = vld [vmem:[#allocation5 + $0x80] sm:$0xff]
    %v589 = vld [vmem:[#allocation5 + $0x88] sm:$0xff]
    %v590 = vld [vmem:[#allocation5 + $0x90] sm:$0xff]
    %v591 = vld [vmem:[#allocation5 + $0x98] sm:$0xff]
    %v592 = vld [vmem:[#allocation5 + $0xa0] sm:$0xff]
    %v593 = vld [vmem:[#allocation5 + $0xa8] sm:$0xff]
    %v594 = vld [vmem:[#allocation5 + $0xb0] sm:$0xff]
    %v595 = vld [vmem:[#allocation5 + $0xb8] sm:$0xff]
    %v596 = vld [vmem:[#allocation5 + $0xc0] sm:$0xff]
    %v597 = vld [vmem:[#allocation5 + $0xc8] sm:$0xff]
    %v598 = vld [vmem:[#allocation5 + $0xd0] sm:$0xff]
    %v599 = vld [vmem:[#allocation5 + $0xd8] sm:$0xff]
    %v600 = vld [vmem:[#allocation5 + $0xe0] sm:$0xff]
    %v601 = vld [vmem:[#allocation5 + $0xe8] sm:$0xff]
    %v602 = vld [vmem:[#allocation5 + $0xf0] sm:$0xff]
    %v603 = vld [vmem:[#allocation5 + $0xf8] sm:$0xff]
    %v604 = vld [vmem:[#allocation5 + $0x100] sm:$0xff]
    %v605 = vld [vmem:[#allocation5 + $0x108] sm:$0xff]
    %v606 = vld [vmem:[#allocation5 + $0x110] sm:$0xff]
    %v607 = vld [vmem:[#allocation5 + $0x118] sm:$0xff]
    %v608 = vld [vmem:[#allocation5 + $0x120] sm:$0xff]
    %v609 = vld [vmem:[#allocation5 + $0x128] sm:$0xff]
    %v610 = vld [vmem:[#allocation5 + $0x130] sm:$0xff]
    %v611 = vld [vmem:[#allocation5 + $0x138] sm:$0xff]
    %v612 = vld [vmem:[#allocation5 + $0x140] sm:$0xff]
    %v613 = vld [vmem:[#allocation5 + $0x148] sm:$0xff]
    %v614 = vld [vmem:[#allocation5 + $0x150] sm:$0xff]
    %v615 = vld [vmem:[#allocation5 + $0x158] sm:$0xff]
    %v616 = vld [vmem:[#allocation5 + $0x160] sm:$0xff]
    %v617 = vld [vmem:[#allocation5 + $0x168] sm:$0xff]
    %v618 = vld [vmem:[#allocation5 + $0x170] sm:$0xff]
    %v619 = vld [vmem:[#allocation5 + $0x178] sm:$0xff]
    %v620 = vld [vmem:[#allocation5 + $0x180] sm:$0xff]
    %v621 = vld [vmem:[#allocation5 + $0x188] sm:$0xff]
    %v622 = vld [vmem:[#allocation5 + $0x190] sm:$0xff]
    %v623 = vld [vmem:[#allocation5 + $0x198] sm:$0xff]
    %v624 = vld [vmem:[#allocation5 + $0x1a0] sm:$0xff]
    %v625 = vld [vmem:[#allocation5 + $0x1a8] sm:$0xff]
    %v626 = vld [vmem:[#allocation5 + $0x1b0] sm:$0xff]
    %v627 = vld [vmem:[#allocation5 + $0x1b8] sm:$0xff]
    %v628 = vld [vmem:[#allocation5 + $0x1c0] sm:$0xff]
    %v629 = vld [vmem:[#allocation5 + $0x1c8] sm:$0xff]
    %v630 = vld [vmem:[#allocation5 + $0x1d0] sm:$0xff]
    %v631 = vld [vmem:[#allocation5 + $0x1d8] sm:$0xff]
    %v632 = vld [vmem:[#allocation5 + $0x1e0] sm:$0xff]
    %v633 = vld [vmem:[#allocation5 + $0x1e8] sm:$0xff]
    %v634 = vld [vmem:[#allocation5 + $0x1f0] sm:$0xff]
    %v635 = vld [vmem:[#allocation5 + $0x1f8] sm:$0xff]
    %v636 = vld [vmem:[%s4] sm:$0x3]
    %v638 = vlaneseq
    %v639 = vshrl.u32 %v638, 7
    %v640 = vsub.s32 0, %v639
    %v641 = vrot.slane %v636, %v640
    %v642 = vlaneseq
    %v643 = vshrl.u32 %v642, 7
    %v644 = vsub.s32 1, %v643
    %v645 = vrot.slane %v636, %v644
    %v712 = vunpack.c.l.b16 %v572
    %v713 = vunpack.c.h.b16 %v572
    %v714 = vunpack.c.l.b16 %v573
    %v715 = vunpack.c.h.b16 %v573
    %v716 = vunpack.c.l.b16 %v574
    %v717 = vunpack.c.h.b16 %v574
    %v718 = vunpack.c.l.b16 %v575
    %v719 = vunpack.c.h.b16 %v575
    %v720 = vunpack.c.l.b16 %v576
    %v721 = vunpack.c.h.b16 %v576
    %v722 = vunpack.c.l.b16 %v577
    %v723 = vunpack.c.h.b16 %v577
    %v724 = vunpack.c.l.b16 %v578
    %v725 = vunpack.c.h.b16 %v578
    %v726 = vunpack.c.l.b16 %v579
    %v727 = vunpack.c.h.b16 %v579
    %v728 = vunpack.c.l.b16 %v580
    %v729 = vunpack.c.h.b16 %v580
    %v730 = vunpack.c.l.b16 %v581
    %v731 = vunpack.c.h.b16 %v581
    %v732 = vunpack.c.l.b16 %v582
    %v733 = vunpack.c.h.b16 %v582
    %v734 = vunpack.c.l.b16 %v583
    %v735 = vunpack.c.h.b16 %v583
    %v736 = vunpack.c.l.b16 %v584
    %v737 = vunpack.c.h.b16 %v584
    %v738 = vunpack.c.l.b16 %v585
    %v739 = vunpack.c.h.b16 %v585
    %v740 = vunpack.c.l.b16 %v586
    %v741 = vunpack.c.h.b16 %v586
    %v742 = vunpack.c.l.b16 %v587
    %v743 = vunpack.c.h.b16 %v587
    %v744 = vunpack.c.l.b16 %v588
    %v745 = vunpack.c.h.b16 %v588
    %v746 = vunpack.c.l.b16 %v589
    %v747 = vunpack.c.h.b16 %v589
    %v748 = vunpack.c.l.b16 %v590
    %v749 = vunpack.c.h.b16 %v590
    %v750 = vunpack.c.l.b16 %v591
    %v751 = vunpack.c.h.b16 %v591
    %v752 = vunpack.c.l.b16 %v592
    %v753 = vunpack.c.h.b16 %v592
    %v754 = vunpack.c.l.b16 %v593
    %v755 = vunpack.c.h.b16 %v593
    %v756 = vunpack.c.l.b16 %v594
    %v757 = vunpack.c.h.b16 %v594
    %v758 = vunpack.c.l.b16 %v595
    %v759 = vunpack.c.h.b16 %v595
    %v760 = vunpack.c.l.b16 %v596
    %v761 = vunpack.c.h.b16 %v596
    %v762 = vunpack.c.l.b16 %v597
    %v763 = vunpack.c.h.b16 %v597
    %v764 = vunpack.c.l.b16 %v598
    %v765 = vunpack.c.h.b16 %v598
    %v766 = vunpack.c.l.b16 %v599
    %v767 = vunpack.c.h.b16 %v599
    %v768 = vunpack.c.l.b16 %v600
    %v769 = vunpack.c.h.b16 %v600
    %v770 = vunpack.c.l.b16 %v601
    %v771 = vunpack.c.h.b16 %v601
    %v772 = vunpack.c.l.b16 %v602
    %v773 = vunpack.c.h.b16 %v602
    %v774 = vunpack.c.l.b16 %v603
    %v775 = vunpack.c.h.b16 %v603
    %v776 = vunpack.c.l.b16 %v604
    %v777 = vunpack.c.h.b16 %v604
    %v778 = vunpack.c.l.b16 %v605
    %v779 = vunpack.c.h.b16 %v605
    %v780 = vunpack.c.l.b16 %v606
    %v781 = vunpack.c.h.b16 %v606
    %v782 = vunpack.c.l.b16 %v607
    %v783 = vunpack.c.h.b16 %v607
    %v784 = vunpack.c.l.b16 %v608
    %v785 = vunpack.c.h.b16 %v608
    %v786 = vunpack.c.l.b16 %v609
    %v787 = vunpack.c.h.b16 %v609
    %v788 = vunpack.c.l.b16 %v610
    %v789 = vunpack.c.h.b16 %v610
    %v790 = vunpack.c.l.b16 %v611
    %v791 = vunpack.c.h.b16 %v611
    %v792 = vunpack.c.l.b16 %v612
    %v793 = vunpack.c.h.b16 %v612
    %v794 = vunpack.c.l.b16 %v613
    %v795 = vunpack.c.h.b16 %v613
    %v796 = vunpack.c.l.b16 %v614
    %v797 = vunpack.c.h.b16 %v614
    %v798 = vunpack.c.l.b16 %v615
    %v799 = vunpack.c.h.b16 %v615
    %v800 = vunpack.c.l.b16 %v616
    %v801 = vunpack.c.h.b16 %v616
    %v802 = vunpack.c.l.b16 %v617
    %v803 = vunpack.c.h.b16 %v617
    %v804 = vunpack.c.l.b16 %v618
    %v805 = vunpack.c.h.b16 %v618
    %v806 = vunpack.c.l.b16 %v619
    %v807 = vunpack.c.h.b16 %v619
    %v808 = vunpack.c.l.b16 %v620
    %v809 = vunpack.c.h.b16 %v620
    %v810 = vunpack.c.l.b16 %v621
    %v811 = vunpack.c.h.b16 %v621
    %v812 = vunpack.c.l.b16 %v622
    %v813 = vunpack.c.h.b16 %v622
    %v814 = vunpack.c.l.b16 %v623
    %v815 = vunpack.c.h.b16 %v623
    %v816 = vunpack.c.l.b16 %v624
    %v817 = vunpack.c.h.b16 %v624
    %v818 = vunpack.c.l.b16 %v625
    %v819 = vunpack.c.h.b16 %v625
    %v820 = vunpack.c.l.b16 %v626
    %v821 = vunpack.c.h.b16 %v626
    %v822 = vunpack.c.l.b16 %v627
    %v823 = vunpack.c.h.b16 %v627
    %v824 = vunpack.c.l.b16 %v628
    %v825 = vunpack.c.h.b16 %v628
    %v826 = vunpack.c.l.b16 %v629
    %v827 = vunpack.c.h.b16 %v629
    %v828 = vunpack.c.l.b16 %v630
    %v829 = vunpack.c.h.b16 %v630
    %v830 = vunpack.c.l.b16 %v631
    %v831 = vunpack.c.h.b16 %v631
    %v832 = vunpack.c.l.b16 %v632
    %v833 = vunpack.c.h.b16 %v632
    %v834 = vunpack.c.l.b16 %v633
    %v835 = vunpack.c.h.b16 %v633
    %v836 = vunpack.c.l.b16 %v634
    %v837 = vunpack.c.h.b16 %v634
    %v838 = vunpack.c.l.b16 %v635
    %v839 = vunpack.c.h.b16 %v635
    %v840 = vpack.c.b16 %v714, %v712
    %v841 = vpack.c.b16 %v715, %v713
    %v842 = vpack.c.b16 %v718, %v716
    %v843 = vpack.c.b16 %v719, %v717
    %v844 = vpack.c.b16 %v722, %v720
    %v845 = vpack.c.b16 %v723, %v721
    %v846 = vpack.c.b16 %v726, %v724
    %v847 = vpack.c.b16 %v727, %v725
    %v848 = vpack.c.b16 %v730, %v728
    %v849 = vpack.c.b16 %v731, %v729
    %v850 = vpack.c.b16 %v734, %v732
    %v851 = vpack.c.b16 %v735, %v733
    %v852 = vpack.c.b16 %v738, %v736
    %v853 = vpack.c.b16 %v739, %v737
    %v854 = vpack.c.b16 %v742, %v740
    %v855 = vpack.c.b16 %v743, %v741
    %v856 = vpack.c.b16 %v746, %v744
    %v857 = vpack.c.b16 %v747, %v745
    %v858 = vpack.c.b16 %v750, %v748
    %v859 = vpack.c.b16 %v751, %v749
    %v860 = vpack.c.b16 %v754, %v752
    %v861 = vpack.c.b16 %v755, %v753
    %v862 = vpack.c.b16 %v758, %v756
    %v863 = vpack.c.b16 %v759, %v757
    %v864 = vpack.c.b16 %v762, %v760
    %v865 = vpack.c.b16 %v763, %v761
    %v866 = vpack.c.b16 %v766, %v764
    %v867 = vpack.c.b16 %v767, %v765
    %v868 = vpack.c.b16 %v770, %v768
    %v869 = vpack.c.b16 %v771, %v769
    %v870 = vpack.c.b16 %v774, %v772
    %v871 = vpack.c.b16 %v775, %v773
    %v872 = vpack.c.b16 %v778, %v776
    %v873 = vpack.c.b16 %v779, %v777
    %v874 = vpack.c.b16 %v782, %v780
    %v875 = vpack.c.b16 %v783, %v781
    %v876 = vpack.c.b16 %v786, %v784
    %v877 = vpack.c.b16 %v787, %v785
    %v878 = vpack.c.b16 %v790, %v788
    %v879 = vpack.c.b16 %v791, %v789
    %v880 = vpack.c.b16 %v794, %v792
    %v881 = vpack.c.b16 %v795, %v793
    %v882 = vpack.c.b16 %v798, %v796
    %v883 = vpack.c.b16 %v799, %v797
    %v884 = vpack.c.b16 %v802, %v800
    %v885 = vpack.c.b16 %v803, %v801
    %v886 = vpack.c.b16 %v806, %v804
    %v887 = vpack.c.b16 %v807, %v805
    %v888 = vpack.c.b16 %v810, %v808
    %v889 = vpack.c.b16 %v811, %v809
    %v890 = vpack.c.b16 %v814, %v812
    %v891 = vpack.c.b16 %v815, %v813
    %v892 = vpack.c.b16 %v818, %v816
    %v893 = vpack.c.b16 %v819, %v817
    %v894 = vpack.c.b16 %v822, %v820
    %v895 = vpack.c.b16 %v823, %v821
    %v896 = vpack.c.b16 %v826, %v824
    %v897 = vpack.c.b16 %v827, %v825
    %v898 = vpack.c.b16 %v830, %v828
    %v899 = vpack.c.b16 %v831, %v829
    %v900 = vpack.c.b16 %v834, %v832
    %v901 = vpack.c.b16 %v835, %v833
    %v902 = vpack.c.b16 %v838, %v836
    %v903 = vpack.c.b16 %v839, %v837
    %968 = vmatprep.subr.bf16.mxu0 %v855
    %969 = vmatpush1.bf16.msra.mxu0 %v854
    %970 = vmatprep.subr.bf16.mxu0 %v853
    %971 = vmatpush1.bf16.msra.mxu0 %v852
    %972 = vmatprep.subr.bf16.mxu0 %v851
    %973 = vmatpush1.bf16.msra.mxu0 %v850
    %974 = vmatprep.subr.bf16.mxu0 %v849
    %975 = vmatpush1.bf16.msra.mxu0 %v848
    %976 = vmatprep.subr.bf16.mxu0 %v847
    %977 = vmatpush1.bf16.msra.mxu0 %v846
    %978 = vmatprep.subr.bf16.mxu0 %v845
    %979 = vmatpush1.bf16.msra.mxu0 %v844
    %980 = vmatprep.subr.bf16.mxu0 %v843
    %981 = vmatpush1.bf16.msra.mxu0 %v842
    %982 = vmatprep.subr.bf16.mxu0 %v841
    %983 = vmatpush1.bf16.msra.mxu0 %v840
    %984 = vmatprep.subr.bf16.mxu0 %v871
    %985 = vmatpush2.bf16.msra.mxu0 %v870
    %986 = vmatprep.subr.bf16.mxu0 %v869
    %987 = vmatpush2.bf16.msra.mxu0 %v868
    %988 = vmatprep.subr.bf16.mxu0 %v867
    %989 = vmatpush2.bf16.msra.mxu0 %v866
    %990 = vmatprep.subr.bf16.mxu0 %v865
    %991 = vmatpush2.bf16.msra.mxu0 %v864
    %992 = vmatprep.subr.bf16.mxu0 %v863
    %993 = vmatpush2.bf16.msra.mxu0 %v862
    %994 = vmatprep.subr.bf16.mxu0 %v861
    %995 = vmatpush2.bf16.msra.mxu0 %v860
    %996 = vmatprep.subr.bf16.mxu0 %v859
    %997 = vmatpush2.bf16.msra.mxu0 %v858
    %998 = vmatprep.subr.bf16.mxu0 %v857
    %999 = vmatpush2.bf16.msra.mxu0 %v856
    %1000 = vmatprep.mubr.bf16.mxu0 %v569
    %1001 = vmatmul.mubr.bf16.gmra.mxu0 %v568
    %v1002 = vpop.f32.mrf.mxu0
    %v1003 = vadd.f32 %v641, %v1002
    %v1004 = vpop.f32.mrf.mxu0
    %v1005 = vadd.f32 %v645, %v1004
    %v1006 = vpop.f32.mrf.mxu0
    %v1007 = vpop.f32.mrf.mxu0
    %1008 = vdwg.mxu0
    %1009 = vmatprep.subr.bf16.mxu0 %v887
    %1010 = vmatpush1.bf16.msra.mxu0 %v886
    %1011 = vmatprep.subr.bf16.mxu0 %v885
    %1012 = vmatpush1.bf16.msra.mxu0 %v884
    %1013 = vmatprep.subr.bf16.mxu0 %v883
    %1014 = vmatpush1.bf16.msra.mxu0 %v882
    %1015 = vmatprep.subr.bf16.mxu0 %v881
    %1016 = vmatpush1.bf16.msra.mxu0 %v880
    %1017 = vmatprep.subr.bf16.mxu0 %v879
    %1018 = vmatpush1.bf16.msra.mxu0 %v878
    %1019 = vmatprep.subr.bf16.mxu0 %v877
    %1020 = vmatpush1.bf16.msra.mxu0 %v876
    %1021 = vmatprep.subr.bf16.mxu0 %v875
    %1022 = vmatpush1.bf16.msra.mxu0 %v874
    %1023 = vmatprep.subr.bf16.mxu0 %v873
    %1024 = vmatpush1.bf16.msra.mxu0 %v872
    %1025 = vmatprep.subr.bf16.mxu0 %v903
    %1026 = vmatpush2.bf16.msra.mxu0 %v902
    %1027 = vmatprep.subr.bf16.mxu0 %v901
    %1028 = vmatpush2.bf16.msra.mxu0 %v900
    %1029 = vmatprep.subr.bf16.mxu0 %v899
    %1030 = vmatpush2.bf16.msra.mxu0 %v898
    %1031 = vmatprep.subr.bf16.mxu0 %v897
    %1032 = vmatpush2.bf16.msra.mxu0 %v896
    %1033 = vmatprep.subr.bf16.mxu0 %v895
    %1034 = vmatpush2.bf16.msra.mxu0 %v894
    %1035 = vmatprep.subr.bf16.mxu0 %v893
    %1036 = vmatpush2.bf16.msra.mxu0 %v892
    %1037 = vmatprep.subr.bf16.mxu0 %v891
    %1038 = vmatpush2.bf16.msra.mxu0 %v890
    %1039 = vmatprep.subr.bf16.mxu0 %v889
    %1040 = vmatpush2.bf16.msra.mxu0 %v888
    %1041 = vmatprep.mubr.bf16.mxu0 %v571
    %1042 = vmatmul.mubr.bf16.gmra.mxu0 %v570
    %v1043 = vpop.f32.mrf.mxu0
    %v1044 = vadd.f32 %v1003, %v1043
    %v1045 = vpop.f32.mrf.mxu0
    %v1046 = vadd.f32 %v1005, %v1045
    %v1047 = vpop.f32.mrf.mxu0
    %v1048 = vpop.f32.mrf.mxu0
    %1049 = vdwg.mxu0
    %v1050 = vmax.f32 %v1044, 0.0
    %v1051 = vmax.f32 %v1046, 0.0
    %v1052 = vpack.c.bf16 %v1050, %v1050
    %v1053 = vpack.c.bf16 %v1051, %v1051
    %v1054 = vld [vmem:[%s5] sm:$0xf]
    %v1055 = vld [vmem:[%s5 + $0x4] sm:$0xf]
    %v1056 = vld [vmem:[%s5 + $0x8] sm:$0xf]
    %v1057 = vld [vmem:[%s5 + $0xc] sm:$0xf]
    %v1058 = vld [vmem:[%s5 + $0x10] sm:$0xf]
    %v1059 = vld [vmem:[%s5 + $0x14] sm:$0xf]
    %v1060 = vld [vmem:[%s5 + $0x18] sm:$0xf]
    %v1061 = vld [vmem:[%s5 + $0x1c] sm:$0xf]
    %v1062 = vld [vmem:[%s5 + $0x20] sm:$0xf]
    %v1063 = vld [vmem:[%s5 + $0x24] sm:$0xf]
    %v1064 = vld [vmem:[%s5 + $0x28] sm:$0xf]
    %v1065 = vld [vmem:[%s5 + $0x2c] sm:$0xf]
    %v1066 = vld [vmem:[%s5 + $0x30] sm:$0xf]
    %v1067 = vld [vmem:[%s5 + $0x34] sm:$0xf]
    %v1068 = vld [vmem:[%s5 + $0x38] sm:$0xf]
    %v1069 = vld [vmem:[%s5 + $0x3c] sm:$0xf]
    %v1070 = vld [vmem:[%s5 + $0x40] sm:$0xf]
    %v1071 = vld [vmem:[%s5 + $0x44] sm:$0xf]
    %v1072 = vld [vmem:[%s5 + $0x48] sm:$0xf]
    %v1073 = vld [vmem:[%s5 + $0x4c] sm:$0xf]
    %v1074 = vld [vmem:[%s5 + $0x50] sm:$0xf]
    %v1075 = vld [vmem:[%s5 + $0x54] sm:$0xf]
    %v1076 = vld [vmem:[%s5 + $0x58] sm:$0xf]
    %v1077 = vld [vmem:[%s5 + $0x5c] sm:$0xf]
    %v1078 = vld [vmem:[%s5 + $0x60] sm:$0xf]
    %v1079 = vld [vmem:[%s5 + $0x64] sm:$0xf]
    %v1080 = vld [vmem:[%s5 + $0x68] sm:$0xf]
    %v1081 = vld [vmem:[%s5 + $0x6c] sm:$0xf]
    %v1082 = vld [vmem:[%s5 + $0x70] sm:$0xf]
    %v1083 = vld [vmem:[%s5 + $0x74] sm:$0xf]
    %v1084 = vld [vmem:[%s5 + $0x78] sm:$0xf]
    %v1085 = vld [vmem:[%s5 + $0x7c] sm:$0xf]
    %v1086 = vld [vmem:[%s6] sm:$0x1]
    %v1088 = vlaneseq
    %v1089 = vshrl.u32 %v1088, 7
    %v1090 = vsub.s32 0, %v1089
    %v1091 = vrot.slane %v1086, %v1090
    %v1125 = vunpack.c.l.b16 %v1054
    %v1126 = vunpack.c.l.b16 %v1055
    %v1127 = vunpack.c.l.b16 %v1056
    %v1128 = vunpack.c.l.b16 %v1057
    %v1129 = vunpack.c.l.b16 %v1058
    %v1130 = vunpack.c.l.b16 %v1059
    %v1131 = vunpack.c.l.b16 %v1060
    %v1132 = vunpack.c.l.b16 %v1061
    %v1133 = vunpack.c.l.b16 %v1062
    %v1134 = vunpack.c.l.b16 %v1063
    %v1135 = vunpack.c.l.b16 %v1064
    %v1136 = vunpack.c.l.b16 %v1065
    %v1137 = vunpack.c.l.b16 %v1066
    %v1138 = vunpack.c.l.b16 %v1067
    %v1139 = vunpack.c.l.b16 %v1068
    %v1140 = vunpack.c.l.b16 %v1069
    %v1141 = vunpack.c.l.b16 %v1070
    %v1142 = vunpack.c.l.b16 %v1071
    %v1143 = vunpack.c.l.b16 %v1072
    %v1144 = vunpack.c.l.b16 %v1073
    %v1145 = vunpack.c.l.b16 %v1074
    %v1146 = vunpack.c.l.b16 %v1075
    %v1147 = vunpack.c.l.b16 %v1076
    %v1148 = vunpack.c.l.b16 %v1077
    %v1149 = vunpack.c.l.b16 %v1078
    %v1150 = vunpack.c.l.b16 %v1079
    %v1151 = vunpack.c.l.b16 %v1080
    %v1152 = vunpack.c.l.b16 %v1081
    %v1153 = vunpack.c.l.b16 %v1082
    %v1154 = vunpack.c.l.b16 %v1083
    %v1155 = vunpack.c.l.b16 %v1084
    %v1156 = vunpack.c.l.b16 %v1085
    %v1157 = vpack.c.b16 %v1126, %v1125
    %v1158 = vpack.c.b16 %v1128, %v1127
    %v1159 = vpack.c.b16 %v1130, %v1129
    %v1160 = vpack.c.b16 %v1132, %v1131
    %v1161 = vpack.c.b16 %v1134, %v1133
    %v1162 = vpack.c.b16 %v1136, %v1135
    %v1163 = vpack.c.b16 %v1138, %v1137
    %v1164 = vpack.c.b16 %v1140, %v1139
    %v1165 = vpack.c.b16 %v1142, %v1141
    %v1166 = vpack.c.b16 %v1144, %v1143
    %v1167 = vpack.c.b16 %v1146, %v1145
    %v1168 = vpack.c.b16 %v1148, %v1147
    %v1169 = vpack.c.b16 %v1150, %v1149
    %v1170 = vpack.c.b16 %v1152, %v1151
    %v1171 = vpack.c.b16 %v1154, %v1153
    %v1172 = vpack.c.b16 %v1156, %v1155
    %1189 = vmatprep.subr.bf16.mxu0 0
    %1190 = vmatpush1.bf16.msra.mxu0 %v1164
    %1191 = vmatprep.subr.bf16.mxu0 0
    %1192 = vmatpush1.bf16.msra.mxu0 %v1163
    %1193 = vmatprep.subr.bf16.mxu0 0
    %1194 = vmatpush1.bf16.msra.mxu0 %v1162
    %1195 = vmatprep.subr.bf16.mxu0 0
    %1196 = vmatpush1.bf16.msra.mxu0 %v1161
    %1197 = vmatprep.subr.bf16.mxu0 0
    %1198 = vmatpush1.bf16.msra.mxu0 %v1160
    %1199 = vmatprep.subr.bf16.mxu0 0
    %1200 = vmatpush1.bf16.msra.mxu0 %v1159
    %1201 = vmatprep.subr.bf16.mxu0 0
    %1202 = vmatpush1.bf16.msra.mxu0 %v1158
    %1203 = vmatprep.subr.bf16.mxu0 0
    %1204 = vmatpush1.bf16.msra.mxu0 %v1157
    %1205 = vmatprep.subr.bf16.mxu0 0
    %1206 = vmatpush2.bf16.msra.mxu0 %v1172
    %1207 = vmatprep.subr.bf16.mxu0 0
    %1208 = vmatpush2.bf16.msra.mxu0 %v1171
    %1209 = vmatprep.subr.bf16.mxu0 0
    %1210 = vmatpush2.bf16.msra.mxu0 %v1170
    %1211 = vmatprep.subr.bf16.mxu0 0
    %1212 = vmatpush2.bf16.msra.mxu0 %v1169
    %1213 = vmatprep.subr.bf16.mxu0 0
    %1214 = vmatpush2.bf16.msra.mxu0 %v1168
    %1215 = vmatprep.subr.bf16.mxu0 0
    %1216 = vmatpush2.bf16.msra.mxu0 %v1167
    %1217 = vmatprep.subr.bf16.mxu0 0
    %1218 = vmatpush2.bf16.msra.mxu0 %v1166
    %1219 = vmatprep.subr.bf16.mxu0 0
    %1220 = vmatpush2.bf16.msra.mxu0 %v1165
    %1221 = vmatprep.mubr.bf16.mxu0 %v1053
    %1222 = vmatmul.mubr.bf16.gmra.mxu0 %v1052
    %v1223 = vpop.f32.mrf.mxu0
    %v1224 = vadd.f32 %v1091, %v1223
    %v1225 = vpop.f32.mrf.mxu0
    %v1226 = vpop.f32.mrf.mxu0
    %v1227 = vpop.f32.mrf.mxu0
    %1228 = vdwg.mxu0
    %v1229 = vmax.f32 %v1224, 0.0
    %v1230 = vpack.c.bf16 %v1229, %v1229
    %v1231 = vld [vmem:[%s7] sm:$0xf]
    %v1232 = vld [vmem:[%s7 + $0x4] sm:$0xf]
    %v1233 = vld [vmem:[%s7 + $0x8] sm:$0xf]
    %v1234 = vld [vmem:[%s7 + $0xc] sm:$0xf]
    %v1235 = vld [vmem:[%s7 + $0x10] sm:$0xf]
    %v1236 = vld [vmem:[%s7 + $0x14] sm:$0xf]
    %v1237 = vld [vmem:[%s7 + $0x18] sm:$0xf]
    %v1238 = vld [vmem:[%s7 + $0x1c] sm:$0xf]
    %v1239 = vld [vmem:[%s7 + $0x20] sm:$0xf]
    %v1240 = vld [vmem:[%s7 + $0x24] sm:$0xf]
    %v1241 = vld [vmem:[%s7 + $0x28] sm:$0xf]
    %v1242 = vld [vmem:[%s7 + $0x2c] sm:$0xf]
    %v1243 = vld [vmem:[%s7 + $0x30] sm:$0xf]
    %v1244 = vld [vmem:[%s7 + $0x34] sm:$0xf]
    %v1245 = vld [vmem:[%s7 + $0x38] sm:$0xf]
    %v1246 = vld [vmem:[%s7 + $0x3c] sm:$0xf]
    %v1247 = vld [vmem:[%s8] sm:$0x1]
    %v1249 = vlaneseq
    %v1250 = vshrl.u32 %v1249, 7
    %v1251 = vsub.s32 0, %v1250
    %v1252 = vrot.slane %v1247, %v1251
    %v1270 = vunpack.c.l.b16 %v1231
    %v1271 = vunpack.c.l.b16 %v1232
    %v1272 = vunpack.c.l.b16 %v1233
    %v1273 = vunpack.c.l.b16 %v1234
    %v1274 = vunpack.c.l.b16 %v1235
    %v1275 = vunpack.c.l.b16 %v1236
    %v1276 = vunpack.c.l.b16 %v1237
    %v1277 = vunpack.c.l.b16 %v1238
    %v1278 = vunpack.c.l.b16 %v1239
    %v1279 = vunpack.c.l.b16 %v1240
    %v1280 = vunpack.c.l.b16 %v1241
    %v1281 = vunpack.c.l.b16 %v1242
    %v1282 = vunpack.c.l.b16 %v1243
    %v1283 = vunpack.c.l.b16 %v1244
    %v1284 = vunpack.c.l.b16 %v1245
    %v1285 = vunpack.c.l.b16 %v1246
    %v1286 = vpack.c.b16 %v1271, %v1270
    %v1287 = vpack.c.b16 %v1273, %v1272
    %v1288 = vpack.c.b16 %v1275, %v1274
    %v1289 = vpack.c.b16 %v1277, %v1276
    %v1290 = vpack.c.b16 %v1279, %v1278
    %v1291 = vpack.c.b16 %v1281, %v1280
    %v1292 = vpack.c.b16 %v1283, %v1282
    %v1293 = vpack.c.b16 %v1285, %v1284
    %1302 = vmatprep.subr.bf16.mxu0 0
    %1303 = vmatpush1.bf16.msra.mxu0 %v1293
    %1304 = vmatprep.subr.bf16.mxu0 0
    %1305 = vmatpush1.bf16.msra.mxu0 %v1292
    %1306 = vmatprep.subr.bf16.mxu0 0
    %1307 = vmatpush1.bf16.msra.mxu0 %v1291
    %1308 = vmatprep.subr.bf16.mxu0 0
    %1309 = vmatpush1.bf16.msra.mxu0 %v1290
    %1310 = vmatprep.subr.bf16.mxu0 0
    %1311 = vmatpush1.bf16.msra.mxu0 %v1289
    %1312 = vmatprep.subr.bf16.mxu0 0
    %1313 = vmatpush1.bf16.msra.mxu0 %v1288
    %1314 = vmatprep.subr.bf16.mxu0 0
    %1315 = vmatpush1.bf16.msra.mxu0 %v1287
    %1316 = vmatprep.subr.bf16.mxu0 0
    %1317 = vmatpush1.bf16.msra.mxu0 %v1286
    %1318 = vmatprep.subr.bf16.mxu0 0
    %1319 = vmatpush2.bf16.msra.mxu0 0
    %1320 = vmatprep.subr.bf16.mxu0 0
    %1321 = vmatpush2.bf16.msra.mxu0 0
    %1322 = vmatprep.subr.bf16.mxu0 0
    %1323 = vmatpush2.bf16.msra.mxu0 0
    %1324 = vmatprep.subr.bf16.mxu0 0
    %1325 = vmatpush2.bf16.msra.mxu0 0
    %1326 = vmatprep.subr.bf16.mxu0 0
    %1327 = vmatpush2.bf16.msra.mxu0 0
    %1328 = vmatprep.subr.bf16.mxu0 0
    %1329 = vmatpush2.bf16.msra.mxu0 0
    %1330 = vmatprep.subr.bf16.mxu0 0
    %1331 = vmatpush2.bf16.msra.mxu0 0
    %1332 = vmatprep.subr.bf16.mxu0 0
    %1333 = vmatpush2.bf16.msra.mxu0 0
    %1334 = vmatprep.mubr.bf16.mxu0 0
    %1335 = vmatmul.mubr.bf16.gmra.mxu0 %v1230
    %v1336 = vpop.f32.mrf.mxu0
    %v1337 = vadd.f32 %v1252, %v1336
    %v1338 = vpop.f32.mrf.mxu0
    %v1339 = vpop.f32.mrf.mxu0
    %v1340 = vpop.f32.mrf.mxu0
    %1341 = vdwg.mxu0
    %vm1342 = vcmask 25600
    %v1343 = vsel %vm1342, %v1337, -inf
    %1344 = vmax.xlane.f32.xlu0 %v1343
    %v1345 = vpop.xlane.xlu0 %1344
    %v1346 = vsub.f32 %v1337, %v1345
    %v1347 = vmul.f32 %v1346, 1.442695
    %v1348 = vpow.pop %v1347
    %v1349 = vsel %vm1342, %v1348, 0.0
    %1350 = vadd.xlane.f32.xlu0 %v1349
    %v1351 = vpop.xlane.xlu0 %1350
    %v1352 = vlog2.pop %v1351
    %v1353 = vmul.f32 %v1352, 0.6931472
    %v1354 = vadd.f32 %v1353, %v1345
    %v1355 = vsub.f32 %v1337, %v1354
    %1356 = vst.msk [vmem:[#allocation7] sm:$0x3] %vm1342, %v1355
    // Predicated region
    $region46: #{_lambda_.3} parent=1 // pred_check
      _
    $region47: #{_lambda_.3} parent=1 // pred_check_branch
      %1358 = sbr.rel (0) target = $region49
    $region48: #{_lambda_.3} parent=1 // pred_region
      %s1360 = ssub.s32 32, 32
      %1361 = vsyncadd [#allocation4], %s1360
      %s1363 = sshll.u32 [#allocation7], 4
      %s1364 = int_to_ptr.vmem [resolvable:$true] %s1363
      %1366 = dma.vmem_to_hbm [thread:$0]  %s1364, 32, %s9, [#allocation4]
    $region49: #{_lambda_.3} parent=1 // pred_fallthru
      _
    // Predicated region
    $region50: #{_lambda_.3} parent=1 // pred_check
      _
    $region51: #{_lambda_.3} parent=1 // pred_check_branch
      %1368 = sbr.rel (0) target = $region53
    $region52: #{_lambda_.3} parent=1 // pred_region
      %1369 = dma.done [#allocation4], 32
    $region53: #{_lambda_.3} parent=1 // pred_fallthru
      _
    %1370 = vsyncpa [#allocation3], 1
    %1371 = vsyncpa [#allocation6], 1
    %1372 = vsyncpa [#allocation4], 1

// kernel: _lambda_.2
$region0: #{_lambda_.2}
  #allocation0 [shape = 'u32[]', space=smem, size = 0x4, offset = 0x4, fixed_abs, tag = 'smem constant byte address 0x4 - core index']
  #allocation1 [shape = 'u32[144,128]{1,0:T(1,128)}', space=vmem, size = 0x12000, scoped, tag = 'internal scratch']
  #allocation2 [shape = 'f32[1,1]{1,0:T(1,128)S(1)}', space=vmem, size = 0x200, scoped, tag = 'scoped memory for _lambda_.2']
  #allocation3 [shape = 'f32[1,1]{1,0:T(1,128)S(1)}', space=vmem, size = 0x200, scoped, tag = 'scoped memory for _lambda_.2']
  #allocation4 [shape = 'f32[1,1]{1,0:T(1,128)S(1)}', space=vmem, size = 0x200, scoped, tag = 'scoped memory for _lambda_.2']
  #allocation5 [shape = 'f32[1,1]{1,0:T(1,128)S(1)}', space=vmem, size = 0x200, scoped, tag = 'scoped memory for _lambda_.2']
  #allocation6 [shape = 'f32[1,1]{1,0:T(1,128)S(1)}', space=vmem, size = 0x200, scoped, tag = 'scoped memory for _lambda_.2']
  %s0 = inlined_call_operand.smem [shape: u32[38], index: -1, kind: input, shape index: {}]
  %s1 = sld [smem:[%s0]]
  %s2 = scalar_lea.smem %s0, 1
  %s3 = sld [smem:[%s2]]
  %s4 = scalar_lea.smem %s0, 2
  %s5 = sld [smem:[%s4]]
  %s6 = scalar_lea.smem %s0, 3
  %s7 = sld [smem:[%s6]]
  %s8 = scalar_lea.smem %s0, 4
  %s9 = sld [smem:[%s8]]
  %s10 = scalar_lea.smem %s0, 5
  %s11 = sld [smem:[%s10]]
  %s12 = scalar_lea.smem %s0, 6
  %s13 = sld [smem:[%s12]]
  %s14 = scalar_lea.smem %s0, 7
  %s15 = sld [smem:[%s14]]
  %s16 = scalar_lea.smem %s0, 8
  %s17 = sld [smem:[%s16]]
  %s18 = scalar_lea.smem %s0, 9
  %s19 = sld [smem:[%s18]]
  %s20 = scalar_lea.smem %s0, 10
  %s21 = sld [smem:[%s20]]
  %s22 = scalar_lea.smem %s0, 11
  %s23 = sld [smem:[%s22]]
  %s24 = scalar_lea.smem %s0, 12
  %s25 = sld [smem:[%s24]]
  %s26 = scalar_lea.smem %s0, 13
  %s27 = sld [smem:[%s26]]
  %s28 = scalar_lea.smem %s0, 14
  %s29 = sld [smem:[%s28]]
  %s30 = scalar_lea.smem %s0, 15
  %s31 = sld [smem:[%s30]]
  %s32 = scalar_lea.smem %s0, 16
  %s33 = sld [smem:[%s32]]
  %s34 = scalar_lea.smem %s0, 17
  %s35 = sld [smem:[%s34]]
  %s36 = scalar_lea.smem %s0, 18
  %s37 = sld [smem:[%s36]]
  %s38 = scalar_lea.smem %s0, 19
  %s39 = sld [smem:[%s38]]
  %s40 = scalar_lea.smem %s0, 20
  %s41 = sld [smem:[%s40]]
  %s42 = scalar_lea.smem %s0, 21
  %s43 = sld [smem:[%s42]]
  %s44 = scalar_lea.smem %s0, 22
  %s45 = sld [smem:[%s44]]
  %s46 = scalar_lea.smem %s0, 23
  %s47 = sld [smem:[%s46]]
  %s48 = scalar_lea.smem %s0, 24
  %s49 = sld [smem:[%s48]]
  %s50 = scalar_lea.smem %s0, 25
  %s51 = sld [smem:[%s50]]
  %s52 = scalar_lea.smem %s0, 26
  %s53 = sld [smem:[%s52]]
  %s54 = scalar_lea.smem %s0, 27
  %s55 = sld [smem:[%s54]]
  %s56 = scalar_lea.smem %s0, 28
  %s57 = sld [smem:[%s56]]
  %s58 = scalar_lea.smem %s0, 29
  %s59 = sld [smem:[%s58]]
  %s60 = scalar_lea.smem %s0, 30
  %s61 = sld [smem:[%s60]]
  %s62 = scalar_lea.smem %s0, 31
  %s63 = sld [smem:[%s62]]
  %s64 = scalar_lea.smem %s0, 32
  %s65 = sld [smem:[%s64]]
  %s66 = scalar_lea.smem %s0, 33
  %s67 = sld [smem:[%s66]]
  %s68 = scalar_lea.smem %s0, 34
  %s69 = sld [smem:[%s68]]
  %s70 = scalar_lea.smem %s0, 35
  %s71 = sld [smem:[%s70]]
  %s72 = scalar_lea.smem %s0, 36
  %s73 = sld [smem:[%s72]]
  %s74 = scalar_lea.smem %s0, 37
  %s75 = sld [smem:[%s74]]
  %s76 = sld [smem:[#allocation0]]
  $region181: #{_lambda_.2} parent=0
    _
  %s78 = ssub.s32 1, %s76
  %s79 = scalar_select 0, %s78, %s76
  %v80 = vstv %s9
  %81 = vst [vmem:[#allocation2] sm:$0x1] %v80
  %v82 = vstv %s17
  %83 = vst [vmem:[#allocation3] sm:$0x1] %v82
  %v84 = vstv %s25
  %85 = vst [vmem:[#allocation4] sm:$0x1] %v84
  %v86 = vstv %s29
  %87 = vst [vmem:[#allocation5] sm:$0x1] %v86
  %v88 = vstv %s33
  %89 = vst [vmem:[#allocation6] sm:$0x1] %v88
  loop: start=0, step=1, limit=4
  $region2: #{_lambda_.2} parent=0 // loop_pre_header
    _
  $region3: #{_lambda_.2} parent=0 // loop_header
    %s91 = sphi 0, %s95
    %p92 = scmp.ge.s32.totalorder %s91, 4
    %s101 = sphi 0, %s103
    %s104 = sphi 0, %s101
    %s105 = sphi 0, %s104
    %s121 = sphi 0, %s105
    %s125 = sphi 0, %s125
    %s127 = sphi 0, %s125
    %s128 = sphi 0, %s127
    %s142 = sphi 0, %s128
    %s146 = sphi 0, %s146
    %s148 = sphi 0, %s146
    %s149 = sphi 0, %s148
    %s163 = sphi 0, %s149
    %s167 = sphi 0, %s167
    %s169 = sphi 0, %s167
    %s170 = sphi 0, %s169
    %s184 = sphi 0, %s170
    %s188 = sphi 0, %s188
    %s190 = sphi 0, %s188
    %s191 = sphi 0, %s190
    %s205 = sphi 0, %s191
    %s209 = sphi 0, %s209
    %s211 = sphi 0, %s209
    %s212 = sphi 0, %s211
    %s226 = sphi 0, %s212
    %s230 = sphi 0, %s230
    %s232 = sphi 0, %s230
    %s233 = sphi 0, %s232
    %s247 = sphi 0, %s233
    %s251 = sphi 0, %s251
    %s253 = sphi 0, %s251
    %s254 = sphi 0, %s253
    %s268 = sphi 0, %s254
    %s272 = sphi 0, %s272
    %s274 = sphi 0, %s272
    %s275 = sphi 0, %s274
    %s289 = sphi 0, %s275
    %s293 = sphi 0, %s293
    %s295 = sphi 0, %s293
    %s296 = sphi 0, %s295
    %s310 = sphi 0, %s296
    %s314 = sphi 0, %s314
    %s316 = sphi 0, %s314
    %s317 = sphi 0, %s316
    %s331 = sphi 0, %s317
    %s335 = sphi 0, %s335
    %s337 = sphi 0, %s335
    %s338 = sphi 0, %s337
    %s352 = sphi 0, %s338
    %s356 = sphi 0, %s356
    %s358 = sphi 0, %s356
    %s359 = sphi 0, %s358
    %s373 = sphi 0, %s359
    %s377 = sphi 0, %s377
    %s379 = sphi 0, %s377
    %s380 = sphi 0, %s379
    %s394 = sphi 0, %s380
    %s398 = sphi 0, %s398
    %s400 = sphi 0, %s398
    %s401 = sphi 0, %s400
    %s415 = sphi 0, %s401
    %s419 = sphi 0, %s419
    %s421 = sphi 0, %s419
    %s422 = sphi 0, %s421
    %s436 = sphi 0, %s422
    %s440 = sphi 0, %s440
    %s442 = sphi 0, %s440
    %s443 = sphi 0, %s442
    %s457 = sphi 0, %s443
    %s461 = sphi 0, %s461
    %s463 = sphi 0, %s461
    %s464 = sphi 0, %s463
    %s478 = sphi 0, %s464
    %s482 = sphi 0, %s482
    %s484 = sphi 0, %s482
    %s485 = sphi 0, %s484
    %s499 = sphi 0, %s485
    %s503 = sphi 0, %s503
    %s505 = sphi 0, %s503
    %s506 = sphi 0, %s505
    %s520 = sphi 0, %s506
    %s524 = sphi 0, %s524
    %s526 = sphi 0, %s524
    %s527 = sphi 0, %s526
    %s541 = sphi 0, %s527
    %s545 = sphi 0, %s545
    %s547 = sphi 0, %s545
    %s548 = sphi 0, %s547
    %s562 = sphi 0, %s548
    %s566 = sphi 0, %s566
    %s568 = sphi 0, %s566
    %s569 = sphi 0, %s568
    %s583 = sphi 0, %s569
    %s587 = sphi 0, %s587
    %s589 = sphi 0, %s587
    %s590 = sphi 0, %s589
    %s604 = sphi 0, %s590
    %s608 = sphi 0, %s608
    %s610 = sphi 0, %s608
    %s611 = sphi 0, %s610
    %s625 = sphi 0, %s611
    %s629 = sphi 0, %s629
    %s631 = sphi 0, %s629
    %s632 = sphi 0, %s631
    %s646 = sphi 0, %s632
    %s650 = sphi 0, %s650
    %s652 = sphi 0, %s650
    %s653 = sphi 0, %s652
    %s667 = sphi 0, %s653
    %s671 = sphi 0, %s671
    %s673 = sphi 0, %s671
    %s674 = sphi 0, %s673
    %s688 = sphi 0, %s674
    %s692 = sphi 0, %s692
    %s694 = sphi 0, %s692
    %s695 = sphi 0, %s694
    %s709 = sphi 0, %s695
    %s713 = sphi 0, %s713
    %s715 = sphi 0, %s713
    %s716 = sphi 0, %s715
    %s730 = sphi 0, %s716
    %s734 = sphi 0, %s734
    %s736 = sphi 0, %s734
    %s737 = sphi 0, %s736
    %s751 = sphi 0, %s737
    %s755 = sphi 0, %s755
    %s757 = sphi 0, %s755
    %s758 = sphi 0, %s757
    %s772 = sphi 0, %s758
    %s776 = sphi 0, %s776
    %s778 = sphi 0, %s776
    %s779 = sphi 0, %s778
    %s793 = sphi 0, %s779
    %s797 = sphi 0, %s797
    %s799 = sphi 0, %s797
    %s800 = sphi 0, %s799
    %s814 = sphi 0, %s800
    %s818 = sphi 0, %s818
    %s820 = sphi 0, %s818
    %s821 = sphi 0, %s820
    %s835 = sphi 0, %s821
    %s839 = sphi 0, %s839
    %s841 = sphi 0, %s839
    %s842 = sphi 0, %s841
    %s856 = sphi 0, %s842
    %s860 = sphi 0, %s860
    %s862 = sphi 0, %s860
    %s863 = sphi 0, %s862
    %s877 = sphi 0, %s863
    %s883 = sphi 0, %s885
    %s886 = sphi 0, %s883
    %s887 = sphi 0, %s886
    %s903 = sphi 0, %s887
  $region4: #{_lambda_.2} parent=0 // loop_header_branch
    %94 = sbr.rel (%p92) target = $region8
  $region5: #{_lambda_.2} parent=0 // loop_body
    %s96 = ssub.s32 %s91, 1
    %s97 = ssub.s32 %s91, 2
    %s98 = sadd.s32 %s91, 1
    %s99 = ssub.s32 %s91, %s98
    %p100 = scmp.eq.s32.totalorder %s99, 0
    %s102 = sadd.s32 %s101, 1
    %s103 = scalar_select %p100, %s101, %s102
    %p106 = pneg %p100
    %p107 = scmp.eq.s32.totalorder %s91, 1
    %p108 = por %p106, %p107
    %p109 = scmp.ne.s32.totalorder %s101, %s104
    %p110 = scmp.eq.s32.totalorder %s91, 0
    %p111 = por %p109, %p110
    %p112 = scmp.ne.s32.totalorder %s101, %s104
    %p113 = scmp.eq.s32.totalorder %s96, 1
    %p114 = por %p112, %p113
    %p115 = scmp.ne.s32.totalorder %s104, %s105
    %p116 = scmp.eq.s32.totalorder %s96, 0
    %p117 = por %p115, %p116
    %p118 = scmp.ne.s32.totalorder %s104, %s105
    %p119 = scmp.eq.s32.totalorder %s97, 1
    %p120 = por %p118, %p119
    %p122 = scmp.ne.s32.totalorder %s105, %s121
    %p123 = scmp.eq.s32.totalorder %s97, 0
    %p124 = por %p122, %p123
    %s126 = sadd.s32 %s125, 1
    %p129 = scmp.eq.s32.totalorder %s91, 1
    %p130 = scmp.ne.s32.totalorder %s125, %s127
    %p131 = scmp.eq.s32.totalorder %s91, 0
    %p132 = por %p130, %p131
    %p133 = scmp.ne.s32.totalorder %s125, %s127
    %p134 = scmp.eq.s32.totalorder %s96, 1
    %p135 = por %p133, %p134
    %p136 = scmp.ne.s32.totalorder %s127, %s128
    %p137 = scmp.eq.s32.totalorder %s96, 0
    %p138 = por %p136, %p137
    %p139 = scmp.ne.s32.totalorder %s127, %s128
    %p140 = scmp.eq.s32.totalorder %s97, 1
    %p141 = por %p139, %p140
    %p143 = scmp.ne.s32.totalorder %s128, %s142
    %p144 = scmp.eq.s32.totalorder %s97, 0
    %p145 = por %p143, %p144
    %s147 = sadd.s32 %s146, 1
    %p150 = scmp.eq.s32.totalorder %s91, 1
    %p151 = scmp.ne.s32.totalorder %s146, %s148
    %p152 = scmp.eq.s32.totalorder %s91, 0
    %p153 = por %p151, %p152
    %p154 = scmp.ne.s32.totalorder %s146, %s148
    %p155 = scmp.eq.s32.totalorder %s96, 1
    %p156 = por %p154, %p155
    %p157 = scmp.ne.s32.totalorder %s148, %s149
    %p158 = scmp.eq.s32.totalorder %s96, 0
    %p159 = por %p157, %p158
    %p160 = scmp.ne.s32.totalorder %s148, %s149
    %p161 = scmp.eq.s32.totalorder %s97, 1
    %p162 = por %p160, %p161
    %p164 = scmp.ne.s32.totalorder %s149, %s163
    %p165 = scmp.eq.s32.totalorder %s97, 0
    %p166 = por %p164, %p165
    %s168 = sadd.s32 %s167, 1
    %p171 = scmp.eq.s32.totalorder %s91, 1
    %p172 = scmp.ne.s32.totalorder %s167, %s169
    %p173 = scmp.eq.s32.totalorder %s91, 0
    %p174 = por %p172, %p173
    %p175 = scmp.ne.s32.totalorder %s167, %s169
    %p176 = scmp.eq.s32.totalorder %s96, 1
    %p177 = por %p175, %p176
    %p178 = scmp.ne.s32.totalorder %s169, %s170
    %p179 = scmp.eq.s32.totalorder %s96, 0
    %p180 = por %p178, %p179
    %p181 = scmp.ne.s32.totalorder %s169, %s170
    %p182 = scmp.eq.s32.totalorder %s97, 1
    %p183 = por %p181, %p182
    %p185 = scmp.ne.s32.totalorder %s170, %s184
    %p186 = scmp.eq.s32.totalorder %s97, 0
    %p187 = por %p185, %p186
    %s189 = sadd.s32 %s188, 1
    %p192 = scmp.eq.s32.totalorder %s91, 1
    %p193 = scmp.ne.s32.totalorder %s188, %s190
    %p194 = scmp.eq.s32.totalorder %s91, 0
    %p195 = por %p193, %p194
    %p196 = scmp.ne.s32.totalorder %s188, %s190
    %p197 = scmp.eq.s32.totalorder %s96, 1
    %p198 = por %p196, %p197
    %p199 = scmp.ne.s32.totalorder %s190, %s191
    %p200 = scmp.eq.s32.totalorder %s96, 0
    %p201 = por %p199, %p200
    %p202 = scmp.ne.s32.totalorder %s190, %s191
    %p203 = scmp.eq.s32.totalorder %s97, 1
    %p204 = por %p202, %p203
    %p206 = scmp.ne.s32.totalorder %s191, %s205
    %p207 = scmp.eq.s32.totalorder %s97, 0
    %p208 = por %p206, %p207
    %s210 = sadd.s32 %s209, 1
    %p213 = scmp.eq.s32.totalorder %s91, 1
    %p214 = scmp.ne.s32.totalorder %s209, %s211
    %p215 = scmp.eq.s32.totalorder %s91, 0
    %p216 = por %p214, %p215
    %p217 = scmp.ne.s32.totalorder %s209, %s211
    %p218 = scmp.eq.s32.totalorder %s96, 1
    %p219 = por %p217, %p218
    %p220 = scmp.ne.s32.totalorder %s211, %s212
    %p221 = scmp.eq.s32.totalorder %s96, 0
    %p222 = por %p220, %p221
    %p223 = scmp.ne.s32.totalorder %s211, %s212
    %p224 = scmp.eq.s32.totalorder %s97, 1
    %p225 = por %p223, %p224
    %p227 = scmp.ne.s32.totalorder %s212, %s226
    %p228 = scmp.eq.s32.totalorder %s97, 0
    %p229 = por %p227, %p228
    %s231 = sadd.s32 %s230, 1
    %p234 = scmp.eq.s32.totalorder %s91, 1
    %p235 = scmp.ne.s32.totalorder %s230, %s232
    %p236 = scmp.eq.s32.totalorder %s91, 0
    %p237 = por %p235, %p236
    %p238 = scmp.ne.s32.totalorder %s230, %s232
    %p239 = scmp.eq.s32.totalorder %s96, 1
    %p240 = por %p238, %p239
    %p241 = scmp.ne.s32.totalorder %s232, %s233
    %p242 = scmp.eq.s32.totalorder %s96, 0
    %p243 = por %p241, %p242
    %p244 = scmp.ne.s32.totalorder %s232, %s233
    %p245 = scmp.eq.s32.totalorder %s97, 1
    %p246 = por %p244, %p245
    %p248 = scmp.ne.s32.totalorder %s233, %s247
    %p249 = scmp.eq.s32.totalorder %s97, 0
    %p250 = por %p248, %p249
    %s252 = sadd.s32 %s251, 1
    %p255 = scmp.eq.s32.totalorder %s91, 1
    %p256 = scmp.ne.s32.totalorder %s251, %s253
    %p257 = scmp.eq.s32.totalorder %s91, 0
    %p258 = por %p256, %p257
    %p259 = scmp.ne.s32.totalorder %s251, %s253
    %p260 = scmp.eq.s32.totalorder %s96, 1
    %p261 = por %p259, %p260
    %p262 = scmp.ne.s32.totalorder %s253, %s254
    %p263 = scmp.eq.s32.totalorder %s96, 0
    %p264 = por %p262, %p263
    %p265 = scmp.ne.s32.totalorder %s253, %s254
    %p266 = scmp.eq.s32.totalorder %s97, 1
    %p267 = por %p265, %p266
    %p269 = scmp.ne.s32.totalorder %s254, %s268
    %p270 = scmp.eq.s32.totalorder %s97, 0
    %p271 = por %p269, %p270
    %s273 = sadd.s32 %s272, 1
    %p276 = scmp.eq.s32.totalorder %s91, 1
    %p277 = scmp.ne.s32.totalorder %s272, %s274
    %p278 = scmp.eq.s32.totalorder %s91, 0
    %p279 = por %p277, %p278
    %p280 = scmp.ne.s32.totalorder %s272, %s274
    %p281 = scmp.eq.s32.totalorder %s96, 1
    %p282 = por %p280, %p281
    %p283 = scmp.ne.s32.totalorder %s274, %s275
    %p284 = scmp.eq.s32.totalorder %s96, 0
    %p285 = por %p283, %p284
    %p286 = scmp.ne.s32.totalorder %s274, %s275
    %p287 = scmp.eq.s32.totalorder %s97, 1
    %p288 = por %p286, %p287
    %p290 = scmp.ne.s32.totalorder %s275, %s289
    %p291 = scmp.eq.s32.totalorder %s97, 0
    %p292 = por %p290, %p291
    %s294 = sadd.s32 %s293, 1
    %p297 = scmp.eq.s32.totalorder %s91, 1
    %p298 = scmp.ne.s32.totalorder %s293, %s295
    %p299 = scmp.eq.s32.totalorder %s91, 0
    %p300 = por %p298, %p299
    %p301 = scmp.ne.s32.totalorder %s293, %s295
    %p302 = scmp.eq.s32.totalorder %s96, 1
    %p303 = por %p301, %p302
    %p304 = scmp.ne.s32.totalorder %s295, %s296
    %p305 = scmp.eq.s32.totalorder %s96, 0
    %p306 = por %p304, %p305
    %p307 = scmp.ne.s32.totalorder %s295, %s296
    %p308 = scmp.eq.s32.totalorder %s97, 1
    %p309 = por %p307, %p308
    %p311 = scmp.ne.s32.totalorder %s296, %s310
    %p312 = scmp.eq.s32.totalorder %s97, 0
    %p313 = por %p311, %p312
    %s315 = sadd.s32 %s314, 1
    %p318 = scmp.eq.s32.totalorder %s91, 1
    %p319 = scmp.ne.s32.totalorder %s314, %s316
    %p320 = scmp.eq.s32.totalorder %s91, 0
    %p321 = por %p319, %p320
    %p322 = scmp.ne.s32.totalorder %s314, %s316
    %p323 = scmp.eq.s32.totalorder %s96, 1
    %p324 = por %p322, %p323
    %p325 = scmp.ne.s32.totalorder %s316, %s317
    %p326 = scmp.eq.s32.totalorder %s96, 0
    %p327 = por %p325, %p326
    %p328 = scmp.ne.s32.totalorder %s316, %s317
    %p329 = scmp.eq.s32.totalorder %s97, 1
    %p330 = por %p328, %p329
    %p332 = scmp.ne.s32.totalorder %s317, %s331
    %p333 = scmp.eq.s32.totalorder %s97, 0
    %p334 = por %p332, %p333
    %s336 = sadd.s32 %s335, 1
    %p339 = scmp.eq.s32.totalorder %s91, 1
    %p340 = scmp.ne.s32.totalorder %s335, %s337
    %p341 = scmp.eq.s32.totalorder %s91, 0
    %p342 = por %p340, %p341
    %p343 = scmp.ne.s32.totalorder %s335, %s337
    %p344 = scmp.eq.s32.totalorder %s96, 1
    %p345 = por %p343, %p344
    %p346 = scmp.ne.s32.totalorder %s337, %s338
    %p347 = scmp.eq.s32.totalorder %s96, 0
    %p348 = por %p346, %p347
    %p349 = scmp.ne.s32.totalorder %s337, %s338
    %p350 = scmp.eq.s32.totalorder %s97, 1
    %p351 = por %p349, %p350
    %p353 = scmp.ne.s32.totalorder %s338, %s352
    %p354 = scmp.eq.s32.totalorder %s97, 0
    %p355 = por %p353, %p354
    %s357 = sadd.s32 %s356, 1
    %p360 = scmp.eq.s32.totalorder %s91, 1
    %p361 = scmp.ne.s32.totalorder %s356, %s358
    %p362 = scmp.eq.s32.totalorder %s91, 0
    %p363 = por %p361, %p362
    %p364 = scmp.ne.s32.totalorder %s356, %s358
    %p365 = scmp.eq.s32.totalorder %s96, 1
    %p366 = por %p364, %p365
    %p367 = scmp.ne.s32.totalorder %s358, %s359
    %p368 = scmp.eq.s32.totalorder %s96, 0
    %p369 = por %p367, %p368
    %p370 = scmp.ne.s32.totalorder %s358, %s359
    %p371 = scmp.eq.s32.totalorder %s97, 1
    %p372 = por %p370, %p371
    %p374 = scmp.ne.s32.totalorder %s359, %s373
    %p375 = scmp.eq.s32.totalorder %s97, 0
    %p376 = por %p374, %p375
    %s378 = sadd.s32 %s377, 1
    %p381 = scmp.eq.s32.totalorder %s91, 1
    %p382 = scmp.ne.s32.totalorder %s377, %s379
    %p383 = scmp.eq.s32.totalorder %s91, 0
    %p384 = por %p382, %p383
    %p385 = scmp.ne.s32.totalorder %s377, %s379
    %p386 = scmp.eq.s32.totalorder %s96, 1
    %p387 = por %p385, %p386
    %p388 = scmp.ne.s32.totalorder %s379, %s380
    %p389 = scmp.eq.s32.totalorder %s96, 0
    %p390 = por %p388, %p389
    %p391 = scmp.ne.s32.totalorder %s379, %s380
    %p392 = scmp.eq.s32.totalorder %s97, 1
    %p393 = por %p391, %p392
    %p395 = scmp.ne.s32.totalorder %s380, %s394
    %p396 = scmp.eq.s32.totalorder %s97, 0
    %p397 = por %p395, %p396
    %s399 = sadd.s32 %s398, 1
    %p402 = scmp.eq.s32.totalorder %s91, 1
    %p403 = scmp.ne.s32.totalorder %s398, %s400
    %p404 = scmp.eq.s32.totalorder %s91, 0
    %p405 = por %p403, %p404
    %p406 = scmp.ne.s32.totalorder %s398, %s400
    %p407 = scmp.eq.s32.totalorder %s96, 1
    %p408 = por %p406, %p407
    %p409 = scmp.ne.s32.totalorder %s400, %s401
    %p410 = scmp.eq.s32.totalorder %s96, 0
    %p411 = por %p409, %p410
    %p412 = scmp.ne.s32.totalorder %s400, %s401
    %p413 = scmp.eq.s32.totalorder %s97, 1
    %p414 = por %p412, %p413
    %p416 = scmp.ne.s32.totalorder %s401, %s415
    %p417 = scmp.eq.s32.totalorder %s97, 0
    %p418 = por %p416, %p417
    %s420 = sadd.s32 %s419, 1
    %p423 = scmp.eq.s32.totalorder %s91, 1
    %p424 = scmp.ne.s32.totalorder %s419, %s421
    %p425 = scmp.eq.s32.totalorder %s91, 0
    %p426 = por %p424, %p425
    %p427 = scmp.ne.s32.totalorder %s419, %s421
    %p428 = scmp.eq.s32.totalorder %s96, 1
    %p429 = por %p427, %p428
    %p430 = scmp.ne.s32.totalorder %s421, %s422
    %p431 = scmp.eq.s32.totalorder %s96, 0
    %p432 = por %p430, %p431
    %p433 = scmp.ne.s32.totalorder %s421, %s422
    %p434 = scmp.eq.s32.totalorder %s97, 1
    %p435 = por %p433, %p434
    %p437 = scmp.ne.s32.totalorder %s422, %s436
    %p438 = scmp.eq.s32.totalorder %s97, 0
    %p439 = por %p437, %p438
    %s441 = sadd.s32 %s440, 1
    %p444 = scmp.eq.s32.totalorder %s91, 1
    %p445 = scmp.ne.s32.totalorder %s440, %s442
    %p446 = scmp.eq.s32.totalorder %s91, 0
    %p447 = por %p445, %p446
    %p448 = scmp.ne.s32.totalorder %s440, %s442
    %p449 = scmp.eq.s32.totalorder %s96, 1
    %p450 = por %p448, %p449
    %p451 = scmp.ne.s32.totalorder %s442, %s443
    %p452 = scmp.eq.s32.totalorder %s96, 0
    %p453 = por %p451, %p452
    %p454 = scmp.ne.s32.totalorder %s442, %s443
    %p455 = scmp.eq.s32.totalorder %s97, 1
    %p456 = por %p454, %p455
    %p458 = scmp.ne.s32.totalorder %s443, %s457
    %p459 = scmp.eq.s32.totalorder %s97, 0
    %p460 = por %p458, %p459
    %s462 = sadd.s32 %s461, 1
    %p465 = scmp.eq.s32.totalorder %s91, 1
    %p466 = scmp.ne.s32.totalorder %s461, %s463
    %p467 = scmp.eq.s32.totalorder %s91, 0
    %p468 = por %p466, %p467
    %p469 = scmp.ne.s32.totalorder %s461, %s463
    %p470 = scmp.eq.s32.totalorder %s96, 1
    %p471 = por %p469, %p470
    %p472 = scmp.ne.s32.totalorder %s463, %s464
    %p473 = scmp.eq.s32.totalorder %s96, 0
    %p474 = por %p472, %p473
    %p475 = scmp.ne.s32.totalorder %s463, %s464
    %p476 = scmp.eq.s32.totalorder %s97, 1
    %p477 = por %p475, %p476
    %p479 = scmp.ne.s32.totalorder %s464, %s478
    %p480 = scmp.eq.s32.totalorder %s97, 0
    %p481 = por %p479, %p480
    %s483 = sadd.s32 %s482, 1
    %p486 = scmp.eq.s32.totalorder %s91, 1
    %p487 = scmp.ne.s32.totalorder %s482, %s484
    %p488 = scmp.eq.s32.totalorder %s91, 0
    %p489 = por %p487, %p488
    %p490 = scmp.ne.s32.totalorder %s482, %s484
    %p491 = scmp.eq.s32.totalorder %s96, 1
    %p492 = por %p490, %p491
    %p493 = scmp.ne.s32.totalorder %s484, %s485
    %p494 = scmp.eq.s32.totalorder %s96, 0
    %p495 = por %p493, %p494
    %p496 = scmp.ne.s32.totalorder %s484, %s485
    %p497 = scmp.eq.s32.totalorder %s97, 1
    %p498 = por %p496, %p497
    %p500 = scmp.ne.s32.totalorder %s485, %s499
    %p501 = scmp.eq.s32.totalorder %s97, 0
    %p502 = por %p500, %p501
    %s504 = sadd.s32 %s503, 1
    %p507 = scmp.eq.s32.totalorder %s91, 1
    %p508 = scmp.ne.s32.totalorder %s503, %s505
    %p509 = scmp.eq.s32.totalorder %s91, 0
    %p510 = por %p508, %p509
    %p511 = scmp.ne.s32.totalorder %s503, %s505
    %p512 = scmp.eq.s32.totalorder %s96, 1
    %p513 = por %p511, %p512
    %p514 = scmp.ne.s32.totalorder %s505, %s506
    %p515 = scmp.eq.s32.totalorder %s96, 0
    %p516 = por %p514, %p515
    %p517 = scmp.ne.s32.totalorder %s505, %s506
    %p518 = scmp.eq.s32.totalorder %s97, 1
    %p519 = por %p517, %p518
    %p521 = scmp.ne.s32.totalorder %s506, %s520
    %p522 = scmp.eq.s32.totalorder %s97, 0
    %p523 = por %p521, %p522
    %s525 = sadd.s32 %s524, 1
    %p528 = scmp.eq.s32.totalorder %s91, 1
    %p529 = scmp.ne.s32.totalorder %s524, %s526
    %p530 = scmp.eq.s32.totalorder %s91, 0
    %p531 = por %p529, %p530
    %p532 = scmp.ne.s32.totalorder %s524, %s526
    %p533 = scmp.eq.s32.totalorder %s96, 1
    %p534 = por %p532, %p533
    %p535 = scmp.ne.s32.totalorder %s526, %s527
    %p536 = scmp.eq.s32.totalorder %s96, 0
    %p537 = por %p535, %p536
    %p538 = scmp.ne.s32.totalorder %s526, %s527
    %p539 = scmp.eq.s32.totalorder %s97, 1
    %p540 = por %p538, %p539
    %p542 = scmp.ne.s32.totalorder %s527, %s541
    %p543 = scmp.eq.s32.totalorder %s97, 0
    %p544 = por %p542, %p543
    %s546 = sadd.s32 %s545, 1
    %p549 = scmp.eq.s32.totalorder %s91, 1
    %p550 = scmp.ne.s32.totalorder %s545, %s547
    %p551 = scmp.eq.s32.totalorder %s91, 0
    %p552 = por %p550, %p551
    %p553 = scmp.ne.s32.totalorder %s545, %s547
    %p554 = scmp.eq.s32.totalorder %s96, 1
    %p555 = por %p553, %p554
    %p556 = scmp.ne.s32.totalorder %s547, %s548
    %p557 = scmp.eq.s32.totalorder %s96, 0
    %p558 = por %p556, %p557
    %p559 = scmp.ne.s32.totalorder %s547, %s548
    %p560 = scmp.eq.s32.totalorder %s97, 1
    %p561 = por %p559, %p560
    %p563 = scmp.ne.s32.totalorder %s548, %s562
    %p564 = scmp.eq.s32.totalorder %s97, 0
    %p565 = por %p563, %p564
    %s567 = sadd.s32 %s566, 1
    %p570 = scmp.eq.s32.totalorder %s91, 1
    %p571 = scmp.ne.s32.totalorder %s566, %s568
    %p572 = scmp.eq.s32.totalorder %s91, 0
    %p573 = por %p571, %p572
    %p574 = scmp.ne.s32.totalorder %s566, %s568
    %p575 = scmp.eq.s32.totalorder %s96, 1
    %p576 = por %p574, %p575
    %p577 = scmp.ne.s32.totalorder %s568, %s569
    %p578 = scmp.eq.s32.totalorder %s96, 0
    %p579 = por %p577, %p578
    %p580 = scmp.ne.s32.totalorder %s568, %s569
    %p581 = scmp.eq.s32.totalorder %s97, 1
    %p582 = por %p580, %p581
    %p584 = scmp.ne.s32.totalorder %s569, %s583
    %p585 = scmp.eq.s32.totalorder %s97, 0
    %p586 = por %p584, %p585
    %s588 = sadd.s32 %s587, 1
    %p591 = scmp.eq.s32.totalorder %s91, 1
    %p592 = scmp.ne.s32.totalorder %s587, %s589
    %p593 = scmp.eq.s32.totalorder %s91, 0
    %p594 = por %p592, %p593
    %p595 = scmp.ne.s32.totalorder %s587, %s589
    %p596 = scmp.eq.s32.totalorder %s96, 1
    %p597 = por %p595, %p596
    %p598 = scmp.ne.s32.totalorder %s589, %s590
    %p599 = scmp.eq.s32.totalorder %s96, 0
    %p600 = por %p598, %p599
    %p601 = scmp.ne.s32.totalorder %s589, %s590
    %p602 = scmp.eq.s32.totalorder %s97, 1
    %p603 = por %p601, %p602
    %p605 = scmp.ne.s32.totalorder %s590, %s604
    %p606 = scmp.eq.s32.totalorder %s97, 0
    %p607 = por %p605, %p606
    %s609 = sadd.s32 %s608, 1
    %p612 = scmp.eq.s32.totalorder %s91, 1
    %p613 = scmp.ne.s32.totalorder %s608, %s610
    %p614 = scmp.eq.s32.totalorder %s91, 0
    %p615 = por %p613, %p614
    %p616 = scmp.ne.s32.totalorder %s608, %s610
    %p617 = scmp.eq.s32.totalorder %s96, 1
    %p618 = por %p616, %p617
    %p619 = scmp.ne.s32.totalorder %s610, %s611
    %p620 = scmp.eq.s32.totalorder %s96, 0
    %p621 = por %p619, %p620
    %p622 = scmp.ne.s32.totalorder %s610, %s611
    %p623 = scmp.eq.s32.totalorder %s97, 1
    %p624 = por %p622, %p623
    %p626 = scmp.ne.s32.totalorder %s611, %s625
    %p627 = scmp.eq.s32.totalorder %s97, 0
    %p628 = por %p626, %p627
    %s630 = sadd.s32 %s629, 1
    %p633 = scmp.eq.s32.totalorder %s91, 1
    %p634 = scmp.ne.s32.totalorder %s629, %s631
    %p635 = scmp.eq.s32.totalorder %s91, 0
    %p636 = por %p634, %p635
    %p637 = scmp.ne.s32.totalorder %s629, %s631
    %p638 = scmp.eq.s32.totalorder %s96, 1
    %p639 = por %p637, %p638
    %p640 = scmp.ne.s32.totalorder %s631, %s632
    %p641 = scmp.eq.s32.totalorder %s96, 0
    %p642 = por %p640, %p641
    %p643 = scmp.ne.s32.totalorder %s631, %s632
    %p644 = scmp.eq.s32.totalorder %s97, 1
    %p645 = por %p643, %p644
    %p647 = scmp.ne.s32.totalorder %s632, %s646
    %p648 = scmp.eq.s32.totalorder %s97, 0
    %p649 = por %p647, %p648
    %s651 = sadd.s32 %s650, 1
    %p654 = scmp.eq.s32.totalorder %s91, 1
    %p655 = scmp.ne.s32.totalorder %s650, %s652
    %p656 = scmp.eq.s32.totalorder %s91, 0
    %p657 = por %p655, %p656
    %p658 = scmp.ne.s32.totalorder %s650, %s652
    %p659 = scmp.eq.s32.totalorder %s96, 1
    %p660 = por %p658, %p659
    %p661 = scmp.ne.s32.totalorder %s652, %s653
    %p662 = scmp.eq.s32.totalorder %s96, 0
    %p663 = por %p661, %p662
    %p664 = scmp.ne.s32.totalorder %s652, %s653
    %p665 = scmp.eq.s32.totalorder %s97, 1
    %p666 = por %p664, %p665
    %p668 = scmp.ne.s32.totalorder %s653, %s667
    %p669 = scmp.eq.s32.totalorder %s97, 0
    %p670 = por %p668, %p669
    %s672 = sadd.s32 %s671, 1
    %p675 = scmp.eq.s32.totalorder %s91, 1
    %p676 = scmp.ne.s32.totalorder %s671, %s673
    %p677 = scmp.eq.s32.totalorder %s91, 0
    %p678 = por %p676, %p677
    %p679 = scmp.ne.s32.totalorder %s671, %s673
    %p680 = scmp.eq.s32.totalorder %s96, 1
    %p681 = por %p679, %p680
    %p682 = scmp.ne.s32.totalorder %s673, %s674
    %p683 = scmp.eq.s32.totalorder %s96, 0
    %p684 = por %p682, %p683
    %p685 = scmp.ne.s32.totalorder %s673, %s674
    %p686 = scmp.eq.s32.totalorder %s97, 1
    %p687 = por %p685, %p686
    %p689 = scmp.ne.s32.totalorder %s674, %s688
    %p690 = scmp.eq.s32.totalorder %s97, 0
    %p691 = por %p689, %p690
    %s693 = sadd.s32 %s692, 1
    %p696 = scmp.eq.s32.totalorder %s91, 1
    %p697 = scmp.ne.s32.totalorder %s692, %s694
    %p698 = scmp.eq.s32.totalorder %s91, 0
    %p699 = por %p697, %p698
    %p700 = scmp.ne.s32.totalorder %s692, %s694
    %p701 = scmp.eq.s32.totalorder %s96, 1
    %p702 = por %p700, %p701
    %p703 = scmp.ne.s32.totalorder %s694, %s695
    %p704 = scmp.eq.s32.totalorder %s96, 0
    %p705 = por %p703, %p704
    %p706 = scmp.ne.s32.totalorder %s694, %s695
    %p707 = scmp.eq.s32.totalorder %s97, 1
    %p708 = por %p706, %p707
    %p710 = scmp.ne.s32.totalorder %s695, %s709
    %p711 = scmp.eq.s32.totalorder %s97, 0
    %p712 = por %p710, %p711
    %s714 = sadd.s32 %s713, 1
    %p717 = scmp.eq.s32.totalorder %s91, 1
    %p718 = scmp.ne.s32.totalorder %s713, %s715
    %p719 = scmp.eq.s32.totalorder %s91, 0
    %p720 = por %p718, %p719
    %p721 = scmp.ne.s32.totalorder %s713, %s715
    %p722 = scmp.eq.s32.totalorder %s96, 1
    %p723 = por %p721, %p722
    %p724 = scmp.ne.s32.totalorder %s715, %s716
    %p725 = scmp.eq.s32.totalorder %s96, 0
    %p726 = por %p724, %p725
    %p727 = scmp.ne.s32.totalorder %s715, %s716
    %p728 = scmp.eq.s32.totalorder %s97, 1
    %p729 = por %p727, %p728
    %p731 = scmp.ne.s32.totalorder %s716, %s730
    %p732 = scmp.eq.s32.totalorder %s97, 0
    %p733 = por %p731, %p732
    %s735 = sadd.s32 %s734, 1
    %p738 = scmp.eq.s32.totalorder %s91, 1
    %p739 = scmp.ne.s32.totalorder %s734, %s736
    %p740 = scmp.eq.s32.totalorder %s91, 0
    %p741 = por %p739, %p740
    %p742 = scmp.ne.s32.totalorder %s734, %s736
    %p743 = scmp.eq.s32.totalorder %s96, 1
    %p744 = por %p742, %p743
    %p745 = scmp.ne.s32.totalorder %s736, %s737
    %p746 = scmp.eq.s32.totalorder %s96, 0
    %p747 = por %p745, %p746
    %p748 = scmp.ne.s32.totalorder %s736, %s737
    %p749 = scmp.eq.s32.totalorder %s97, 1
    %p750 = por %p748, %p749
    %p752 = scmp.ne.s32.totalorder %s737, %s751
    %p753 = scmp.eq.s32.totalorder %s97, 0
    %p754 = por %p752, %p753
    %s756 = sadd.s32 %s755, 1
    %p759 = scmp.eq.s32.totalorder %s91, 1
    %p760 = scmp.ne.s32.totalorder %s755, %s757
    %p761 = scmp.eq.s32.totalorder %s91, 0
    %p762 = por %p760, %p761
    %p763 = scmp.ne.s32.totalorder %s755, %s757
    %p764 = scmp.eq.s32.totalorder %s96, 1
    %p765 = por %p763, %p764
    %p766 = scmp.ne.s32.totalorder %s757, %s758
    %p767 = scmp.eq.s32.totalorder %s96, 0
    %p768 = por %p766, %p767
    %p769 = scmp.ne.s32.totalorder %s757, %s758
    %p770 = scmp.eq.s32.totalorder %s97, 1
    %p771 = por %p769, %p770
    %p773 = scmp.ne.s32.totalorder %s758, %s772
    %p774 = scmp.eq.s32.totalorder %s97, 0
    %p775 = por %p773, %p774
    %s777 = sadd.s32 %s776, 1
    %p780 = scmp.eq.s32.totalorder %s91, 1
    %p781 = scmp.ne.s32.totalorder %s776, %s778
    %p782 = scmp.eq.s32.totalorder %s91, 0
    %p783 = por %p781, %p782
    %p784 = scmp.ne.s32.totalorder %s776, %s778
    %p785 = scmp.eq.s32.totalorder %s96, 1
    %p786 = por %p784, %p785
    %p787 = scmp.ne.s32.totalorder %s778, %s779
    %p788 = scmp.eq.s32.totalorder %s96, 0
    %p789 = por %p787, %p788
    %p790 = scmp.ne.s32.totalorder %s778, %s779
    %p791 = scmp.eq.s32.totalorder %s97, 1
    %p792 = por %p790, %p791
    %p794 = scmp.ne.s32.totalorder %s779, %s793
    %p795 = scmp.eq.s32.totalorder %s97, 0
    %p796 = por %p794, %p795
    %s798 = sadd.s32 %s797, 1
    %p801 = scmp.eq.s32.totalorder %s91, 1
    %p802 = scmp.ne.s32.totalorder %s797, %s799
    %p803 = scmp.eq.s32.totalorder %s91, 0
    %p804 = por %p802, %p803
    %p805 = scmp.ne.s32.totalorder %s797, %s799
    %p806 = scmp.eq.s32.totalorder %s96, 1
    %p807 = por %p805, %p806
    %p808 = scmp.ne.s32.totalorder %s799, %s800
    %p809 = scmp.eq.s32.totalorder %s96, 0
    %p810 = por %p808, %p809
    %p811 = scmp.ne.s32.totalorder %s799, %s800
    %p812 = scmp.eq.s32.totalorder %s97, 1
    %p813 = por %p811, %p812
    %p815 = scmp.ne.s32.totalorder %s800, %s814
    %p816 = scmp.eq.s32.totalorder %s97, 0
    %p817 = por %p815, %p816
    %s819 = sadd.s32 %s818, 1
    %p822 = scmp.eq.s32.totalorder %s91, 1
    %p823 = scmp.ne.s32.totalorder %s818, %s820
    %p824 = scmp.eq.s32.totalorder %s91, 0
    %p825 = por %p823, %p824
    %p826 = scmp.ne.s32.totalorder %s818, %s820
    %p827 = scmp.eq.s32.totalorder %s96, 1
    %p828 = por %p826, %p827
    %p829 = scmp.ne.s32.totalorder %s820, %s821
    %p830 = scmp.eq.s32.totalorder %s96, 0
    %p831 = por %p829, %p830
    %p832 = scmp.ne.s32.totalorder %s820, %s821
    %p833 = scmp.eq.s32.totalorder %s97, 1
    %p834 = por %p832, %p833
    %p836 = scmp.ne.s32.totalorder %s821, %s835
    %p837 = scmp.eq.s32.totalorder %s97, 0
    %p838 = por %p836, %p837
    %s840 = sadd.s32 %s839, 1
    %p843 = scmp.eq.s32.totalorder %s91, 1
    %p844 = scmp.ne.s32.totalorder %s839, %s841
    %p845 = scmp.eq.s32.totalorder %s91, 0
    %p846 = por %p844, %p845
    %p847 = scmp.ne.s32.totalorder %s839, %s841
    %p848 = scmp.eq.s32.totalorder %s96, 1
    %p849 = por %p847, %p848
    %p850 = scmp.ne.s32.totalorder %s841, %s842
    %p851 = scmp.eq.s32.totalorder %s96, 0
    %p852 = por %p850, %p851
    %p853 = scmp.ne.s32.totalorder %s841, %s842
    %p854 = scmp.eq.s32.totalorder %s97, 1
    %p855 = por %p853, %p854
    %p857 = scmp.ne.s32.totalorder %s842, %s856
    %p858 = scmp.eq.s32.totalorder %s97, 0
    %p859 = por %p857, %p858
    %s861 = sadd.s32 %s860, 1
    %p864 = scmp.eq.s32.totalorder %s91, 1
    %p865 = scmp.ne.s32.totalorder %s860, %s862
    %p866 = scmp.eq.s32.totalorder %s91, 0
    %p867 = por %p865, %p866
    %p868 = scmp.ne.s32.totalorder %s860, %s862
    %p869 = scmp.eq.s32.totalorder %s96, 1
    %p870 = por %p868, %p869
    %p871 = scmp.ne.s32.totalorder %s862, %s863
    %p872 = scmp.eq.s32.totalorder %s96, 0
    %p873 = por %p871, %p872
    %p874 = scmp.ne.s32.totalorder %s862, %s863
    %p875 = scmp.eq.s32.totalorder %s97, 1
    %p876 = por %p874, %p875
    %p878 = scmp.ne.s32.totalorder %s863, %s877
    %p879 = scmp.eq.s32.totalorder %s97, 0
    %p880 = por %p878, %p879
    %s881 = ssub.s32 %s91, %s98
    %p882 = scmp.eq.s32.totalorder %s881, 0
    %s884 = sadd.s32 %s883, 1
    %s885 = scalar_select %p882, %s883, %s884
    %p888 = pneg %p882
    %p889 = scmp.eq.s32.totalorder %s91, 1
    %p890 = por %p888, %p889
    %p891 = scmp.ne.s32.totalorder %s883, %s886
    %p892 = scmp.eq.s32.totalorder %s91, 0
    %p893 = por %p891, %p892
    %p894 = scmp.ne.s32.totalorder %s883, %s886
    %p895 = scmp.eq.s32.totalorder %s96, 1
    %p896 = por %p894, %p895
    %p897 = scmp.ne.s32.totalorder %s886, %s887
    %p898 = scmp.eq.s32.totalorder %s96, 0
    %p899 = por %p897, %p898
    %p900 = scmp.ne.s32.totalorder %s886, %s887
    %p901 = scmp.eq.s32.totalorder %s97, 1
    %p902 = por %p900, %p901
    %p904 = scmp.ne.s32.totalorder %s887, %s903
    %p905 = scmp.eq.s32.totalorder %s97, 0
    %p906 = por %p904, %p905
    %p907 = scmp.le.s32.totalorder 1, %s91
    %p908 = scmp.lt.s32.totalorder %s91, 3
    %p909 = pnand %p907, %p908
    %p910 = pneg %p909
    // Predicated region
    $region9: #{_lambda_.2} parent=5 // pred_check
      _
    $region10: #{_lambda_.2} parent=5 // pred_check_branch
      %912 = sbr.rel (%p909) target = $region12
    $region11: #{_lambda_.2} parent=5 // pred_region
      %s913 = ssub.s32 %s91, 1
      // Predicated region
      $region13: #{_lambda_.2} parent=11 // pred_check
        %p914 = pneg %p138
      $region14: #{_lambda_.2} parent=11 // pred_check_branch
        %916 = sbr.rel (%p914) target = $region16
      $region15: #{_lambda_.2} parent=11 // pred_region
        _
      $region16: #{_lambda_.2} parent=11 // pred_fallthru
        _
      // Predicated region
      $region17: #{_lambda_.2} parent=11 // pred_check
        %p917 = pneg %p159
      $region18: #{_lambda_.2} parent=11 // pred_check_branch
        %919 = sbr.rel (%p917) target = $region20
      $region19: #{_lambda_.2} parent=11 // pred_region
        _
      $region20: #{_lambda_.2} parent=11 // pred_fallthru
        _
      // Predicated region
      $region21: #{_lambda_.2} parent=11 // pred_check
        %p920 = pneg %p180
      $region22: #{_lambda_.2} parent=11 // pred_check_branch
        %922 = sbr.rel (%p920) target = $region24
      $region23: #{_lambda_.2} parent=11 // pred_region
        _
      $region24: #{_lambda_.2} parent=11 // pred_fallthru
        _
      // Predicated region
      $region25: #{_lambda_.2} parent=11 // pred_check
        %p923 = pneg %p201
      $region26: #{_lambda_.2} parent=11 // pred_check_branch
        %925 = sbr.rel (%p923) target = $region28
      $region27: #{_lambda_.2} parent=11 // pred_region
        _
      $region28: #{_lambda_.2} parent=11 // pred_fallthru
        _
      // Predicated region
      $region29: #{_lambda_.2} parent=11 // pred_check
        %p926 = pneg %p222
      $region30: #{_lambda_.2} parent=11 // pred_check_branch
        %928 = sbr.rel (%p926) target = $region32
      $region31: #{_lambda_.2} parent=11 // pred_region
        _
      $region32: #{_lambda_.2} parent=11 // pred_fallthru
        _
      // Predicated region
      $region33: #{_lambda_.2} parent=11 // pred_check
        %p929 = pneg %p243
      $region34: #{_lambda_.2} parent=11 // pred_check_branch
        %931 = sbr.rel (%p929) target = $region36
      $region35: #{_lambda_.2} parent=11 // pred_region
        _
      $region36: #{_lambda_.2} parent=11 // pred_fallthru
        _
      // Predicated region
      $region37: #{_lambda_.2} parent=11 // pred_check
        %p932 = pneg %p264
      $region38: #{_lambda_.2} parent=11 // pred_check_branch
        %934 = sbr.rel (%p932) target = $region40
      $region39: #{_lambda_.2} parent=11 // pred_region
        _
      $region40: #{_lambda_.2} parent=11 // pred_fallthru
        _
      // Predicated region
      $region41: #{_lambda_.2} parent=11 // pred_check
        %p935 = pneg %p285
      $region42: #{_lambda_.2} parent=11 // pred_check_branch
        %937 = sbr.rel (%p935) target = $region44
      $region43: #{_lambda_.2} parent=11 // pred_region
        _
      $region44: #{_lambda_.2} parent=11 // pred_fallthru
        _
      // Predicated region
      $region45: #{_lambda_.2} parent=11 // pred_check
        %p938 = pneg %p306
      $region46: #{_lambda_.2} parent=11 // pred_check_branch
        %940 = sbr.rel (%p938) target = $region48
      $region47: #{_lambda_.2} parent=11 // pred_region
        _
      $region48: #{_lambda_.2} parent=11 // pred_fallthru
        _
      // Predicated region
      $region49: #{_lambda_.2} parent=11 // pred_check
        %p941 = pneg %p327
      $region50: #{_lambda_.2} parent=11 // pred_check_branch
        %943 = sbr.rel (%p941) target = $region52
      $region51: #{_lambda_.2} parent=11 // pred_region
        _
      $region52: #{_lambda_.2} parent=11 // pred_fallthru
        _
      // Predicated region
      $region53: #{_lambda_.2} parent=11 // pred_check
        %p944 = pneg %p348
      $region54: #{_lambda_.2} parent=11 // pred_check_branch
        %946 = sbr.rel (%p944) target = $region56
      $region55: #{_lambda_.2} parent=11 // pred_region
        _
      $region56: #{_lambda_.2} parent=11 // pred_fallthru
        _
      // Predicated region
      $region57: #{_lambda_.2} parent=11 // pred_check
        %p947 = pneg %p369
      $region58: #{_lambda_.2} parent=11 // pred_check_branch
        %949 = sbr.rel (%p947) target = $region60
      $region59: #{_lambda_.2} parent=11 // pred_region
        _
      $region60: #{_lambda_.2} parent=11 // pred_fallthru
        _
      // Predicated region
      $region61: #{_lambda_.2} parent=11 // pred_check
        %p950 = pneg %p390
      $region62: #{_lambda_.2} parent=11 // pred_check_branch
        %952 = sbr.rel (%p950) target = $region64
      $region63: #{_lambda_.2} parent=11 // pred_region
        _
      $region64: #{_lambda_.2} parent=11 // pred_fallthru
        _
      // Predicated region
      $region65: #{_lambda_.2} parent=11 // pred_check
        %p953 = pneg %p411
      $region66: #{_lambda_.2} parent=11 // pred_check_branch
        %955 = sbr.rel (%p953) target = $region68
      $region67: #{_lambda_.2} parent=11 // pred_region
        _
      $region68: #{_lambda_.2} parent=11 // pred_fallthru
        _
      // Predicated region
      $region69: #{_lambda_.2} parent=11 // pred_check
        %p956 = pneg %p432
      $region70: #{_lambda_.2} parent=11 // pred_check_branch
        %958 = sbr.rel (%p956) target = $region72
      $region71: #{_lambda_.2} parent=11 // pred_region
        _
      $region72: #{_lambda_.2} parent=11 // pred_fallthru
        _
      // Predicated region
      $region73: #{_lambda_.2} parent=11 // pred_check
        %p959 = pneg %p453
      $region74: #{_lambda_.2} parent=11 // pred_check_branch
        %961 = sbr.rel (%p959) target = $region76
      $region75: #{_lambda_.2} parent=11 // pred_region
        _
      $region76: #{_lambda_.2} parent=11 // pred_fallthru
        _
      // Predicated region
      $region77: #{_lambda_.2} parent=11 // pred_check
        %p962 = pneg %p474
      $region78: #{_lambda_.2} parent=11 // pred_check_branch
        %964 = sbr.rel (%p962) target = $region80
      $region79: #{_lambda_.2} parent=11 // pred_region
        _
      $region80: #{_lambda_.2} parent=11 // pred_fallthru
        _
      // Predicated region
      $region81: #{_lambda_.2} parent=11 // pred_check
        %p965 = pneg %p495
      $region82: #{_lambda_.2} parent=11 // pred_check_branch
        %967 = sbr.rel (%p965) target = $region84
      $region83: #{_lambda_.2} parent=11 // pred_region
        _
      $region84: #{_lambda_.2} parent=11 // pred_fallthru
        _
      // Predicated region
      $region85: #{_lambda_.2} parent=11 // pred_check
        %p968 = pneg %p516
      $region86: #{_lambda_.2} parent=11 // pred_check_branch
        %970 = sbr.rel (%p968) target = $region88
      $region87: #{_lambda_.2} parent=11 // pred_region
        _
      $region88: #{_lambda_.2} parent=11 // pred_fallthru
        _
      // Predicated region
      $region89: #{_lambda_.2} parent=11 // pred_check
        %p971 = pneg %p537
      $region90: #{_lambda_.2} parent=11 // pred_check_branch
        %973 = sbr.rel (%p971) target = $region92
      $region91: #{_lambda_.2} parent=11 // pred_region
        _
      $region92: #{_lambda_.2} parent=11 // pred_fallthru
        _
      // Predicated region
      $region93: #{_lambda_.2} parent=11 // pred_check
        %p974 = pneg %p558
      $region94: #{_lambda_.2} parent=11 // pred_check_branch
        %976 = sbr.rel (%p974) target = $region96
      $region95: #{_lambda_.2} parent=11 // pred_region
        _
      $region96: #{_lambda_.2} parent=11 // pred_fallthru
        _
      // Predicated region
      $region97: #{_lambda_.2} parent=11 // pred_check
        %p977 = pneg %p579
      $region98: #{_lambda_.2} parent=11 // pred_check_branch
        %979 = sbr.rel (%p977) target = $region100
      $region99: #{_lambda_.2} parent=11 // pred_region
        _
      $region100: #{_lambda_.2} parent=11 // pred_fallthru
        _
      // Predicated region
      $region101: #{_lambda_.2} parent=11 // pred_check
        %p980 = pneg %p600
      $region102: #{_lambda_.2} parent=11 // pred_check_branch
        %982 = sbr.rel (%p980) target = $region104
      $region103: #{_lambda_.2} parent=11 // pred_region
        _
      $region104: #{_lambda_.2} parent=11 // pred_fallthru
        _
      // Predicated region
      $region105: #{_lambda_.2} parent=11 // pred_check
        %p983 = pneg %p621
      $region106: #{_lambda_.2} parent=11 // pred_check_branch
        %985 = sbr.rel (%p983) target = $region108
      $region107: #{_lambda_.2} parent=11 // pred_region
        _
      $region108: #{_lambda_.2} parent=11 // pred_fallthru
        _
      // Predicated region
      $region109: #{_lambda_.2} parent=11 // pred_check
        %p986 = pneg %p642
      $region110: #{_lambda_.2} parent=11 // pred_check_branch
        %988 = sbr.rel (%p986) target = $region112
      $region111: #{_lambda_.2} parent=11 // pred_region
        _
      $region112: #{_lambda_.2} parent=11 // pred_fallthru
        _
      // Predicated region
      $region113: #{_lambda_.2} parent=11 // pred_check
        %p989 = pneg %p663
      $region114: #{_lambda_.2} parent=11 // pred_check_branch
        %991 = sbr.rel (%p989) target = $region116
      $region115: #{_lambda_.2} parent=11 // pred_region
        _
      $region116: #{_lambda_.2} parent=11 // pred_fallthru
        _
      // Predicated region
      $region117: #{_lambda_.2} parent=11 // pred_check
        %p992 = pneg %p684
      $region118: #{_lambda_.2} parent=11 // pred_check_branch
        %994 = sbr.rel (%p992) target = $region120
      $region119: #{_lambda_.2} parent=11 // pred_region
        _
      $region120: #{_lambda_.2} parent=11 // pred_fallthru
        _
      // Predicated region
      $region121: #{_lambda_.2} parent=11 // pred_check
        %p995 = pneg %p705
      $region122: #{_lambda_.2} parent=11 // pred_check_branch
        %997 = sbr.rel (%p995) target = $region124
      $region123: #{_lambda_.2} parent=11 // pred_region
        _
      $region124: #{_lambda_.2} parent=11 // pred_fallthru
        _
      // Predicated region
      $region125: #{_lambda_.2} parent=11 // pred_check
        %p998 = pneg %p726
      $region126: #{_lambda_.2} parent=11 // pred_check_branch
        %1000 = sbr.rel (%p998) target = $region128
      $region127: #{_lambda_.2} parent=11 // pred_region
        _
      $region128: #{_lambda_.2} parent=11 // pred_fallthru
        _
      // Predicated region
      $region129: #{_lambda_.2} parent=11 // pred_check
        %p1001 = pneg %p747
      $region130: #{_lambda_.2} parent=11 // pred_check_branch
        %1003 = sbr.rel (%p1001) target = $region132
      $region131: #{_lambda_.2} parent=11 // pred_region
        _
      $region132: #{_lambda_.2} parent=11 // pred_fallthru
        _
      // Predicated region
      $region133: #{_lambda_.2} parent=11 // pred_check
        %p1004 = pneg %p768
      $region134: #{_lambda_.2} parent=11 // pred_check_branch
        %1006 = sbr.rel (%p1004) target = $region136
      $region135: #{_lambda_.2} parent=11 // pred_region
        _
      $region136: #{_lambda_.2} parent=11 // pred_fallthru
        _
      // Predicated region
      $region137: #{_lambda_.2} parent=11 // pred_check
        %p1007 = pneg %p789
      $region138: #{_lambda_.2} parent=11 // pred_check_branch
        %1009 = sbr.rel (%p1007) target = $region140
      $region139: #{_lambda_.2} parent=11 // pred_region
        _
      $region140: #{_lambda_.2} parent=11 // pred_fallthru
        _
      // Predicated region
      $region141: #{_lambda_.2} parent=11 // pred_check
        %p1010 = pneg %p810
      $region142: #{_lambda_.2} parent=11 // pred_check_branch
        %1012 = sbr.rel (%p1010) target = $region144
      $region143: #{_lambda_.2} parent=11 // pred_region
        _
      $region144: #{_lambda_.2} parent=11 // pred_fallthru
        _
      // Predicated region
      $region145: #{_lambda_.2} parent=11 // pred_check
        %p1013 = pneg %p831
      $region146: #{_lambda_.2} parent=11 // pred_check_branch
        %1015 = sbr.rel (%p1013) target = $region148
      $region147: #{_lambda_.2} parent=11 // pred_region
        _
      $region148: #{_lambda_.2} parent=11 // pred_fallthru
        _
      // Predicated region
      $region149: #{_lambda_.2} parent=11 // pred_check
        %p1016 = pneg %p852
      $region150: #{_lambda_.2} parent=11 // pred_check_branch
        %1018 = sbr.rel (%p1016) target = $region152
      $region151: #{_lambda_.2} parent=11 // pred_region
        _
      $region152: #{_lambda_.2} parent=11 // pred_fallthru
        _
      // Predicated region
      $region153: #{_lambda_.2} parent=11 // pred_check
        %p1019 = pneg %p873
      $region154: #{_lambda_.2} parent=11 // pred_check_branch
        %1021 = sbr.rel (%p1019) target = $region156
      $region155: #{_lambda_.2} parent=11 // pred_region
        _
      $region156: #{_lambda_.2} parent=11 // pred_fallthru
        _
    $region12: #{_lambda_.2} parent=5 // pred_fallthru
      _
    %p1022 = scmp.lt.s32.totalorder %s91, 2
    // Predicated region
    $region157: #{_lambda_.2} parent=5 // pred_check
      %p1023 = pneg %p1022
    $region158: #{_lambda_.2} parent=5 // pred_check_branch
      %1025 = sbr.rel (%p1023) target = $region160
    $region159: #{_lambda_.2} parent=5 // pred_region
      // Predicated region
      $region161: #{_lambda_.2} parent=159 // pred_check
        %p1026 = pneg %p111
      $region162: #{_lambda_.2} parent=159 // pred_check_branch
        %1028 = sbr.rel (%p1026) target = $region164
      $region163: #{_lambda_.2} parent=159 // pred_region
        %p1029 = scmp.lt.s32.totalorder %s91, 1
        %s1030 = scalar_select %p1029, %s91, 1
        %s1031 = smul.addr %s1030, 4
        %s1032 = scalar_lea.vmem %s1, %s1031
      $region164: #{_lambda_.2} parent=159 // pred_fallthru
        _
    $region160: #{_lambda_.2} parent=5 // pred_fallthru
      _
    %p1033 = scmp.le.s32.totalorder 1, %s91
    %p1034 = scmp.lt.s32.totalorder %s91, 3
    %p1035 = pnand %p1033, %p1034
    %p1036 = pneg %p1035
    // Predicated region
    $region165: #{_lambda_.2} parent=5 // pred_check
      _
    $region166: #{_lambda_.2} parent=5 // pred_check_branch
      %1038 = sbr.rel (%p1035) target = $region168
    $region167: #{_lambda_.2} parent=5 // pred_region
      %s1039 = ssub.s32 %s91, 1
      %p1040 = scmp.lt.s32.totalorder %s96, 1
      %s1041 = scalar_select %p1040, %s96, 1
      %s1042 = smul.addr %s1041, 4
      %s1043 = scalar_lea.vmem %s1, %s1042
      %p1044 = pneg %p117
      %p1045 = pneg %p114
      %p1046 = pneg %p138
      %p1047 = pneg %p135
      %p1048 = pneg %p159
      %p1049 = pneg %p156
      %p1050 = pneg %p180
      %p1051 = pneg %p177
      %p1052 = pneg %p201
      %p1053 = pneg %p198
      %p1054 = pneg %p222
      %p1055 = pneg %p219
      %p1056 = pneg %p243
      %p1057 = pneg %p240
      %p1058 = pneg %p264
      %p1059 = pneg %p261
      %p1060 = pneg %p285
      %p1061 = pneg %p282
      %p1062 = pneg %p306
      %p1063 = pneg %p303
      %p1064 = pneg %p327
      %p1065 = pneg %p324
      %p1066 = pneg %p348
      %p1067 = pneg %p345
      %p1068 = pneg %p369
      %p1069 = pneg %p366
      %p1070 = pneg %p390
      %p1071 = pneg %p387
      %p1072 = pneg %p411
      %p1073 = pneg %p408
      %p1074 = pneg %p432
      %p1075 = pneg %p429
      %p1076 = pneg %p453
      %p1077 = pneg %p450
      %p1078 = pneg %p474
      %p1079 = pneg %p471
      %p1080 = pneg %p495
      %p1081 = pneg %p492
      %p1082 = pneg %p516
      %p1083 = pneg %p513
      %p1084 = pneg %p537
      %p1085 = pneg %p534
      %p1086 = pneg %p558
      %p1087 = pneg %p555
      %p1088 = pneg %p579
      %p1089 = pneg %p576
      %p1090 = pneg %p600
      %p1091 = pneg %p597
      %p1092 = pneg %p621
      %p1093 = pneg %p618
      %p1094 = pneg %p642
      %p1095 = pneg %p639
      %p1096 = pneg %p663
      %p1097 = pneg %p660
      %p1098 = pneg %p684
      %p1099 = pneg %p681
      %p1100 = pneg %p705
      %p1101 = pneg %p702
      %p1102 = pneg %p726
      %p1103 = pneg %p723
      %p1104 = pneg %p747
      %p1105 = pneg %p744
      %p1106 = pneg %p768
      %p1107 = pneg %p765
      %p1108 = pneg %p789
      %p1109 = pneg %p786
      %p1110 = pneg %p810
      %p1111 = pneg %p807
      %p1112 = pneg %p831
      %p1113 = pneg %p828
      %p1114 = pneg %p852
      %p1115 = pneg %p849
      %p1116 = pneg %p873
      %p1117 = pneg %p870
      %p1118 = pneg %p899
      %p1119 = pneg %p896
      %p1120 = scmp.lt.s32.totalorder %s96, 1
      %s1121 = scalar_select %p1120, %s96, 1
      %s1122 = smul.addr %s1121, 8
      %s1123 = scalar_lea.vmem %s75, %s1122
      %p1124 = scmp.lt.s32.totalorder %s96, 1
      %s1125 = scalar_select %p1124, %s96, 1
      %s1126 = smul.addr %s1125, 4
      %s1127 = scalar_lea.vmem %s1, %s1126
      %p1128 = scmp.lt.s32.totalorder %s96, 1
      %s1129 = scalar_select %p1128, %s96, 1
      %s1130 = smul.addr %s1129, 8
      %s1131 = scalar_lea.vmem %s75, %s1130
      %v1133 = vld [vmem:[%s1127] sm:$0x1]
      %v1134 = vld [vmem:[%s1127 + $0x1] sm:$0x1]
      %v1135 = vld [vmem:[%s1127 + $0x2] sm:$0x1]
      %v1136 = vld [vmem:[%s1127 + $0x3] sm:$0x1]
      %v1137 = vpack.c.bf16 %v1133, %v1133
      %v1138 = vpack.c.bf16 %v1134, %v1134
      %v1139 = vpack.c.bf16 %v1135, %v1135
      %v1140 = vpack.c.bf16 %v1136, %v1136
      %1145 = vrot.lane.b32.xlu0 %v1137, 4
      %v1146 = vpop.permute.xlu0 %1145
      %1147 = vrot.lane.b32.xlu0 %v1138, 4
      %v1148 = vpop.permute.xlu0 %1147
      %1149 = vrot.lane.b32.xlu0 %v1139, 4
      %v1150 = vpop.permute.xlu0 %1149
      %1151 = vrot.lane.b32.xlu0 %v1140, 4
      %v1152 = vpop.permute.xlu0 %1151
      %vm1153 = vcmask 31744
      %v1156 = vsel %vm1153, 0, %v1146
      %v1158 = vsel %vm1153, 0, %v1148
      %v1160 = vsel %vm1153, 0, %v1150
      %v1162 = vsel %vm1153, 0, %v1152
      %vm1163 = vcmask 556032
      %v1164 = vsel %vm1163, %v1156, 0
      %v1166 = vsel %vm1163, %v1158, 0
      %v1168 = vsel %vm1163, %v1160, 0
      %v1170 = vsel %vm1163, %v1162, 0
      %v1172 = vshll.u32 %v1164, 16
      %v1174 = vshll.u32 %v1166, 16
      %v1176 = vshll.u32 %v1168, 16
      %v1178 = vshll.u32 %v1170, 16
      %1180 = vrot.lane.b32.xlu0 %v1172, 127
      %v1181 = vpop.permute.xlu0 %1180
      %1182 = vrot.lane.b32.xlu0 %v1174, 127
      %v1183 = vpop.permute.xlu0 %1182
      %1184 = vrot.lane.b32.xlu0 %v1176, 127
      %v1185 = vpop.permute.xlu0 %1184
      %1186 = vrot.lane.b32.xlu0 %v1178, 127
      %v1187 = vpop.permute.xlu0 %1186
      %v1196 = vrot.slane %v1164, 7
      %v1197 = vrot.slane %v1166, 7
      %v1198 = vrot.slane %v1168, 7
      %v1199 = vrot.slane %v1170, 7
      %1200 = vrot.lane.b32.xlu0 %v1196, 126
      %v1201 = vpop.permute.xlu0 %1200
      %1202 = vrot.lane.b32.xlu0 %v1197, 126
      %v1203 = vpop.permute.xlu0 %1202
      %1204 = vrot.lane.b32.xlu0 %v1198, 126
      %v1205 = vpop.permute.xlu0 %1204
      %1206 = vrot.lane.b32.xlu0 %v1199, 126
      %v1207 = vpop.permute.xlu0 %1206
      %v1208 = vrot.slane %v1172, 7
      %v1209 = vrot.slane %v1174, 7
      %v1210 = vrot.slane %v1176, 7
      %v1211 = vrot.slane %v1178, 7
      %1212 = vrot.lane.b32.xlu0 %v1208, 125
      %v1213 = vpop.permute.xlu0 %1212
      %1214 = vrot.lane.b32.xlu0 %v1209, 125
      %v1215 = vpop.permute.xlu0 %1214
      %1216 = vrot.lane.b32.xlu0 %v1210, 125
      %v1217 = vpop.permute.xlu0 %1216
      %1218 = vrot.lane.b32.xlu0 %v1211, 125
      %v1219 = vpop.permute.xlu0 %1218
      %v1224 = vrot.slane %v1164, 6
      %v1225 = vrot.slane %v1166, 6
      %v1226 = vrot.slane %v1168, 6
      %v1227 = vrot.slane %v1170, 6
      %1228 = vrot.lane.b32.xlu0 %v1224, 124
      %v1229 = vpop.permute.xlu0 %1228
      %1230 = vrot.lane.b32.xlu0 %v1225, 124
      %v1231 = vpop.permute.xlu0 %1230
      %1232 = vrot.lane.b32.xlu0 %v1226, 124
      %v1233 = vpop.permute.xlu0 %1232
      %1234 = vrot.lane.b32.xlu0 %v1227, 124
      %v1235 = vpop.permute.xlu0 %1234
      %v1236 = vrot.slane %v1172, 6
      %v1237 = vrot.slane %v1174, 6
      %v1238 = vrot.slane %v1176, 6
      %v1239 = vrot.slane %v1178, 6
      %1240 = vrot.lane.b32.xlu0 %v1236, 123
      %v1241 = vpop.permute.xlu0 %1240
      %1242 = vrot.lane.b32.xlu0 %v1237, 123
      %v1243 = vpop.permute.xlu0 %1242
      %1244 = vrot.lane.b32.xlu0 %v1238, 123
      %v1245 = vpop.permute.xlu0 %1244
      %1246 = vrot.lane.b32.xlu0 %v1239, 123
      %v1247 = vpop.permute.xlu0 %1246
      %v1252 = vrot.slane %v1164, 5
      %v1253 = vrot.slane %v1166, 5
      %v1254 = vrot.slane %v1168, 5
      %v1255 = vrot.slane %v1170, 5
      %1256 = vrot.lane.b32.xlu0 %v1252, 122
      %v1257 = vpop.permute.xlu0 %1256
      %1258 = vrot.lane.b32.xlu0 %v1253, 122
      %v1259 = vpop.permute.xlu0 %1258
      %1260 = vrot.lane.b32.xlu0 %v1254, 122
      %v1261 = vpop.permute.xlu0 %1260
      %1262 = vrot.lane.b32.xlu0 %v1255, 122
      %v1263 = vpop.permute.xlu0 %1262
      %v1264 = vrot.slane %v1172, 5
      %v1265 = vrot.slane %v1174, 5
      %v1266 = vrot.slane %v1176, 5
      %v1267 = vrot.slane %v1178, 5
      %1268 = vrot.lane.b32.xlu0 %v1264, 121
      %v1269 = vpop.permute.xlu0 %1268
      %1270 = vrot.lane.b32.xlu0 %v1265, 121
      %v1271 = vpop.permute.xlu0 %1270
      %1272 = vrot.lane.b32.xlu0 %v1266, 121
      %v1273 = vpop.permute.xlu0 %1272
      %1274 = vrot.lane.b32.xlu0 %v1267, 121
      %v1275 = vpop.permute.xlu0 %1274
      %v1280 = vrot.slane %v1164, 4
      %v1281 = vrot.slane %v1166, 4
      %v1282 = vrot.slane %v1168, 4
      %v1283 = vrot.slane %v1170, 4
      %1284 = vrot.lane.b32.xlu0 %v1280, 120
      %v1285 = vpop.permute.xlu0 %1284
      %1286 = vrot.lane.b32.xlu0 %v1281, 120
      %v1287 = vpop.permute.xlu0 %1286
      %1288 = vrot.lane.b32.xlu0 %v1282, 120
      %v1289 = vpop.permute.xlu0 %1288
      %1290 = vrot.lane.b32.xlu0 %v1283, 120
      %v1291 = vpop.permute.xlu0 %1290
      %vm1292 = vcmask 1040384
      %vm1293 = vsmask.f32 256
      %vm1294 = vmand %vm1292, %vm1293
      %v1295 = vsel %vm1294, %v1164, %v1181
      %v1296 = vsel %vm1294, %v1166, %v1183
      %v1297 = vsel %vm1294, %v1168, %v1185
      %v1298 = vsel %vm1294, %v1170, %v1187
      %vm1299 = vcmask 1040384
      %v1302 = vsel %vm1299, %v1295, %v1201
      %v1306 = vsel %vm1299, %v1296, %v1203
      %v1310 = vsel %vm1299, %v1297, %v1205
      %v1314 = vsel %vm1299, %v1298, %v1207
      %vm1316 = vcmask 1041408
      %vm1317 = vsmask.f32 1280
      %vm1318 = vmand %vm1316, %vm1317
      %v1319 = vsel %vm1318, %v1302, %v1213
      %v1320 = vsel %vm1318, %v1306, %v1215
      %v1321 = vsel %vm1318, %v1310, %v1217
      %v1322 = vsel %vm1318, %v1314, %v1219
      %vm1323 = vcmask 1041408
      %v1326 = vsel %vm1323, %v1319, %v1229
      %v1330 = vsel %vm1323, %v1320, %v1231
      %v1334 = vsel %vm1323, %v1321, %v1233
      %v1338 = vsel %vm1323, %v1322, %v1235
      %vm1340 = vcmask 1042432
      %vm1341 = vsmask.f32 2304
      %vm1342 = vmand %vm1340, %vm1341
      %v1343 = vsel %vm1342, %v1326, %v1241
      %v1344 = vsel %vm1342, %v1330, %v1243
      %v1345 = vsel %vm1342, %v1334, %v1245
      %v1346 = vsel %vm1342, %v1338, %v1247
      %vm1347 = vcmask 1042432
      %v1350 = vsel %vm1347, %v1343, %v1257
      %v1354 = vsel %vm1347, %v1344, %v1259
      %v1358 = vsel %vm1347, %v1345, %v1261
      %v1362 = vsel %vm1347, %v1346, %v1263
      %vm1364 = vcmask 1043456
      %vm1365 = vsmask.f32 3328
      %vm1366 = vmand %vm1364, %vm1365
      %v1367 = vsel %vm1366, %v1350, %v1269
      %v1368 = vsel %vm1366, %v1354, %v1271
      %v1369 = vsel %vm1366, %v1358, %v1273
      %v1370 = vsel %vm1366, %v1362, %v1275
      %vm1371 = vcmask 1043456
      %v1374 = vsel %vm1371, %v1367, %v1285
      %v1377 = vsel %vm1371, %v1368, %v1287
      %v1380 = vsel %vm1371, %v1369, %v1289
      %v1383 = vsel %vm1371, %v1370, %v1291
      %v1384 = vld [vmem:[%s3] sm:$0x3]
      %v1385 = vld [vmem:[%s5] sm:$0xf]
      %1387 = vset.pattern.permute.xlu0 0
      %1388 = vperm.xlu0 %1387, %v1385
      %v1389 = vpop.permute.xlu0 %1388
      %vm1391 = vcmask 72704
      %v1393 = vsel %vm1391, %v1384, 0
      %vm1395 = vcmask 1044480
      %v1396 = vsel %vm1371, 4294967295, 65535
      %v1397 = vsel %vm1395, %v1396, 0
      %v1398 = vand.u32 %v1374, %v1397
      %1400 = vmatprep.subr.bf16.mxu0 0
      %1401 = vmatpush1.bf16.msra.mxu0 0
      %1402 = vmatprep.subr.bf16.mxu0 0
      %1403 = vmatpush1.bf16.msra.mxu0 0
      %1404 = vmatprep.subr.bf16.mxu0 0
      %1405 = vmatpush1.bf16.msra.mxu0 0
      %1406 = vmatprep.subr.bf16.mxu0 0
      %1407 = vmatpush1.bf16.msra.mxu0 0
      %1408 = vmatprep.subr.bf16.mxu0 0
      %1409 = vmatpush1.bf16.msra.mxu0 0
      %1410 = vmatprep.subr.bf16.mxu0 0
      %1411 = vmatpush1.bf16.msra.mxu0 0
      %1412 = vmatprep.subr.bf16.mxu0 0
      %1413 = vmatpush1.bf16.msra.mxu0 0
      %1414 = vmatprep.subr.bf16.mxu0 0
      %1415 = vmatpush1.bf16.msra.mxu0 %v1398
      %1416 = vmatprep.subr.bf16.mxu0 0
      %1417 = vmatpush2.bf16.msra.mxu0 0
      %1418 = vmatprep.subr.bf16.mxu0 0
      %1419 = vmatpush2.bf16.msra.mxu0 0
      %1420 = vmatprep.subr.bf16.mxu0 0
      %1421 = vmatpush2.bf16.msra.mxu0 0
      %1422 = vmatprep.subr.bf16.mxu0 0
      %1423 = vmatpush2.bf16.msra.mxu0 0
      %1424 = vmatprep.subr.bf16.mxu0 0
      %1425 = vmatpush2.bf16.msra.mxu0 0
      %1426 = vmatprep.subr.bf16.mxu0 0
      %1427 = vmatpush2.bf16.msra.mxu0 0
      %1428 = vmatprep.subr.bf16.mxu0 0
      %1429 = vmatpush2.bf16.msra.mxu0 0
      %1430 = vmatprep.subr.bf16.mxu0 0
      %1431 = vmatpush2.bf16.msra.mxu0 0
      %1432 = vmatprep.mubr.bf16.mxu0 0
      %1433 = vmatmul.mubr.bf16.gmra.mxu0 %v1393
      %v1434 = vpop.f32.mrf.mxu0
      %v1435 = vadd.f32 %v1389, %v1434
      %v1436 = vpop.f32.mrf.mxu0
      %v1437 = vpop.f32.mrf.mxu0
      %v1438 = vpop.f32.mrf.mxu0
      %1439 = vdwg.mxu0
      %v1440 = vand.u32 %v1377, %v1397
      %1442 = vmatprep.subr.bf16.mxu0 0
      %1443 = vmatpush1.bf16.msra.mxu0 0
      %1444 = vmatprep.subr.bf16.mxu0 0
      %1445 = vmatpush1.bf16.msra.mxu0 0
      %1446 = vmatprep.subr.bf16.mxu0 0
      %1447 = vmatpush1.bf16.msra.mxu0 0
      %1448 = vmatprep.subr.bf16.mxu0 0
      %1449 = vmatpush1.bf16.msra.mxu0 0
      %1450 = vmatprep.subr.bf16.mxu0 0
      %1451 = vmatpush1.bf16.msra.mxu0 0
      %1452 = vmatprep.subr.bf16.mxu0 0
      %1453 = vmatpush1.bf16.msra.mxu0 0
      %1454 = vmatprep.subr.bf16.mxu0 0
      %1455 = vmatpush1.bf16.msra.mxu0 0
      %1456 = vmatprep.subr.bf16.mxu0 0
      %1457 = vmatpush1.bf16.msra.mxu0 %v1440
      %1458 = vmatprep.subr.bf16.mxu0 0
      %1459 = vmatpush2.bf16.msra.mxu0 0
      %1460 = vmatprep.subr.bf16.mxu0 0
      %1461 = vmatpush2.bf16.msra.mxu0 0
      %1462 = vmatprep.subr.bf16.mxu0 0
      %1463 = vmatpush2.bf16.msra.mxu0 0
      %1464 = vmatprep.subr.bf16.mxu0 0
      %1465 = vmatpush2.bf16.msra.mxu0 0
      %1466 = vmatprep.subr.bf16.mxu0 0
      %1467 = vmatpush2.bf16.msra.mxu0 0
      %1468 = vmatprep.subr.bf16.mxu0 0
      %1469 = vmatpush2.bf16.msra.mxu0 0
      %1470 = vmatprep.subr.bf16.mxu0 0
      %1471 = vmatpush2.bf16.msra.mxu0 0
      %1472 = vmatprep.subr.bf16.mxu0 0
      %1473 = vmatpush2.bf16.msra.mxu0 0
      %1474 = vmatprep.mubr.bf16.mxu0 0
      %1475 = vmatmul.mubr.bf16.gmra.mxu0 %v1393
      %v1476 = vpop.f32.mrf.mxu0
      %v1477 = vadd.f32 %v1389, %v1476
      %v1478 = vpop.f32.mrf.mxu0
      %v1479 = vpop.f32.mrf.mxu0
      %v1480 = vpop.f32.mrf.mxu0
      %1481 = vdwg.mxu0
      %v1482 = vand.u32 %v1380, %v1397
      %1484 = vmatprep.subr.bf16.mxu0 0
      %1485 = vmatpush1.bf16.msra.mxu0 0
      %1486 = vmatprep.subr.bf16.mxu0 0
      %1487 = vmatpush1.bf16.msra.mxu0 0
      %1488 = vmatprep.subr.bf16.mxu0 0
      %1489 = vmatpush1.bf16.msra.mxu0 0
      %1490 = vmatprep.subr.bf16.mxu0 0
      %1491 = vmatpush1.bf16.msra.mxu0 0
      %1492 = vmatprep.subr.bf16.mxu0 0
      %1493 = vmatpush1.bf16.msra.mxu0 0
      %1494 = vmatprep.subr.bf16.mxu0 0
      %1495 = vmatpush1.bf16.msra.mxu0 0
      %1496 = vmatprep.subr.bf16.mxu0 0
      %1497 = vmatpush1.bf16.msra.mxu0 0
      %1498 = vmatprep.subr.bf16.mxu0 0
      %1499 = vmatpush1.bf16.msra.mxu0 %v1482
      %1500 = vmatprep.subr.bf16.mxu0 0
      %1501 = vmatpush2.bf16.msra.mxu0 0
      %1502 = vmatprep.subr.bf16.mxu0 0
      %1503 = vmatpush2.bf16.msra.mxu0 0
      %1504 = vmatprep.subr.bf16.mxu0 0
      %1505 = vmatpush2.bf16.msra.mxu0 0
      %1506 = vmatprep.subr.bf16.mxu0 0
      %1507 = vmatpush2.bf16.msra.mxu0 0
      %1508 = vmatprep.subr.bf16.mxu0 0
      %1509 = vmatpush2.bf16.msra.mxu0 0
      %1510 = vmatprep.subr.bf16.mxu0 0
      %1511 = vmatpush2.bf16.msra.mxu0 0
      %1512 = vmatprep.subr.bf16.mxu0 0
      %1513 = vmatpush2.bf16.msra.mxu0 0
      %1514 = vmatprep.subr.bf16.mxu0 0
      %1515 = vmatpush2.bf16.msra.mxu0 0
      %1516 = vmatprep.mubr.bf16.mxu0 0
      %1517 = vmatmul.mubr.bf16.gmra.mxu0 %v1393
      %v1518 = vpop.f32.mrf.mxu0
      %v1519 = vadd.f32 %v1389, %v1518
      %v1520 = vpop.f32.mrf.mxu0
      %v1521 = vpop.f32.mrf.mxu0
      %v1522 = vpop.f32.mrf.mxu0
      %1523 = vdwg.mxu0
      %v1524 = vand.u32 %v1383, %v1397
      %1526 = vmatprep.subr.bf16.mxu0 0
      %1527 = vmatpush1.bf16.msra.mxu0 0
      %1528 = vmatprep.subr.bf16.mxu0 0
      %1529 = vmatpush1.bf16.msra.mxu0 0
      %1530 = vmatprep.subr.bf16.mxu0 0
      %1531 = vmatpush1.bf16.msra.mxu0 0
      %1532 = vmatprep.subr.bf16.mxu0 0
      %1533 = vmatpush1.bf16.msra.mxu0 0
      %1534 = vmatprep.subr.bf16.mxu0 0
      %1535 = vmatpush1.bf16.msra.mxu0 0
      %1536 = vmatprep.subr.bf16.mxu0 0
      %1537 = vmatpush1.bf16.msra.mxu0 0
      %1538 = vmatprep.subr.bf16.mxu0 0
      %1539 = vmatpush1.bf16.msra.mxu0 0
      %1540 = vmatprep.subr.bf16.mxu0 0
      %1541 = vmatpush1.bf16.msra.mxu0 %v1524
      %1542 = vmatprep.subr.bf16.mxu0 0
      %1543 = vmatpush2.bf16.msra.mxu0 0
      %1544 = vmatprep.subr.bf16.mxu0 0
      %1545 = vmatpush2.bf16.msra.mxu0 0
      %1546 = vmatprep.subr.bf16.mxu0 0
      %1547 = vmatpush2.bf16.msra.mxu0 0
      %1548 = vmatprep.subr.bf16.mxu0 0
      %1549 = vmatpush2.bf16.msra.mxu0 0
      %1550 = vmatprep.subr.bf16.mxu0 0
      %1551 = vmatpush2.bf16.msra.mxu0 0
      %1552 = vmatprep.subr.bf16.mxu0 0
      %1553 = vmatpush2.bf16.msra.mxu0 0
      %1554 = vmatprep.subr.bf16.mxu0 0
      %1555 = vmatpush2.bf16.msra.mxu0 0
      %1556 = vmatprep.subr.bf16.mxu0 0
      %1557 = vmatpush2.bf16.msra.mxu0 0
      %1558 = vmatprep.mubr.bf16.mxu0 0
      %1559 = vmatmul.mubr.bf16.gmra.mxu0 %v1393
      %v1560 = vpop.f32.mrf.mxu0
      %v1561 = vadd.f32 %v1389, %v1560
      %v1562 = vpop.f32.mrf.mxu0
      %v1563 = vpop.f32.mrf.mxu0
      %v1564 = vpop.f32.mrf.mxu0
      %1565 = vdwg.mxu0
      %vm1566 = vcmp.gt.f32.partialorder %v1435, 0.0
      %vm1567 = vcmp.gt.f32.partialorder %v1477, 0.0
      %vm1568 = vcmp.gt.f32.partialorder %v1519, 0.0
      %vm1569 = vcmp.gt.f32.partialorder %v1561, 0.0
      %v1570 = vmin.f32 %v1435, 0.0
      %v1571 = vmin.f32 %v1477, 0.0
      %v1572 = vmin.f32 %v1519, 0.0
      %v1573 = vmin.f32 %v1561, 0.0
      %v1574 = vmul.f32 %v1570, 1.442695
      %v1575 = vpow.pop %v1574
      %v1576 = vmul.f32 %v1571, 1.442695
      %v1577 = vpow.pop %v1576
      %v1578 = vmul.f32 %v1572, 1.442695
      %v1579 = vpow.pop %v1578
      %v1580 = vmul.f32 %v1573, 1.442695
      %v1581 = vpow.pop %v1580
      %v1582 = vsub.f32 %v1575, 1.0
      %v1583 = vsub.f32 %v1577, 1.0
      %v1584 = vsub.f32 %v1579, 1.0
      %v1585 = vsub.f32 %v1581, 1.0
      %v1586 = vsel %vm1566, %v1435, %v1582
      %v1587 = vsel %vm1567, %v1477, %v1583
      %v1588 = vsel %vm1568, %v1519, %v1584
      %v1589 = vsel %vm1569, %v1561, %v1585
      %v1590 = vpack.c.bf16 %v1586, %v1586
      %v1591 = vpack.c.bf16 %v1587, %v1587
      %v1592 = vpack.c.bf16 %v1588, %v1588
      %v1593 = vpack.c.bf16 %v1589, %v1589
      %1598 = vrot.lane.b32.xlu0 %v1590, 2
      %v1599 = vpop.permute.xlu0 %1598
      %1600 = vrot.lane.b32.xlu0 %v1591, 2
      %v1601 = vpop.permute.xlu0 %1600
      %1602 = vrot.lane.b32.xlu0 %v1592, 2
      %v1603 = vpop.permute.xlu0 %1602
      %1604 = vrot.lane.b32.xlu0 %v1593, 2
      %v1605 = vpop.permute.xlu0 %1604
      %vm1606 = vcmask 15360
      %v1608 = vsel %vm1606, 0, %v1599
      %v1610 = vsel %vm1606, 0, %v1601
      %v1612 = vsel %vm1606, 0, %v1603
      %v1614 = vsel %vm1606, 0, %v1605
      %vm1615 = vcmask 539648
      %v1616 = vsel %vm1615, %v1608, 0
      %v1617 = vsel %vm1615, %v1610, 0
      %v1618 = vsel %vm1615, %v1612, 0
      %v1619 = vsel %vm1615, %v1614, 0
      %v1624 = vrot.slane %v1616, 6
      %v1625 = vrot.slane %v1617, 6
      %v1626 = vrot.slane %v1618, 6
      %v1627 = vrot.slane %v1619, 6
      %1628 = vrot.lane.b32.xlu0 %v1624, 127
      %v1629 = vpop.permute.xlu0 %1628
      %1630 = vrot.lane.b32.xlu0 %v1625, 127
      %v1631 = vpop.permute.xlu0 %1630
      %1632 = vrot.lane.b32.xlu0 %v1626, 127
      %v1633 = vpop.permute.xlu0 %1632
      %1634 = vrot.lane.b32.xlu0 %v1627, 127
      %v1635 = vpop.permute.xlu0 %1634
      %v1636 = vrot.slane %v1616, 4
      %v1637 = vrot.slane %v1617, 4
      %v1638 = vrot.slane %v1618, 4
      %v1639 = vrot.slane %v1619, 4
      %1640 = vrot.lane.b32.xlu0 %v1636, 126
      %v1641 = vpop.permute.xlu0 %1640
      %1642 = vrot.lane.b32.xlu0 %v1637, 126
      %v1643 = vpop.permute.xlu0 %1642
      %1644 = vrot.lane.b32.xlu0 %v1638, 126
      %v1645 = vpop.permute.xlu0 %1644
      %1646 = vrot.lane.b32.xlu0 %v1639, 126
      %v1647 = vpop.permute.xlu0 %1646
      %v1648 = vrot.slane %v1616, 2
      %v1649 = vrot.slane %v1617, 2
      %v1650 = vrot.slane %v1618, 2
      %v1651 = vrot.slane %v1619, 2
      %1652 = vrot.lane.b32.xlu0 %v1648, 125
      %v1653 = vpop.permute.xlu0 %1652
      %1654 = vrot.lane.b32.xlu0 %v1649, 125
      %v1655 = vpop.permute.xlu0 %1654
      %1656 = vrot.lane.b32.xlu0 %v1650, 125
      %v1657 = vpop.permute.xlu0 %1656
      %1658 = vrot.lane.b32.xlu0 %v1651, 125
      %v1659 = vpop.permute.xlu0 %1658
      %1660 = vrot.lane.b32.xlu0 %v1616, 124
      %v1661 = vpop.permute.xlu0 %1660
      %1662 = vrot.lane.b32.xlu0 %v1617, 124
      %v1663 = vpop.permute.xlu0 %1662
      %1664 = vrot.lane.b32.xlu0 %v1618, 124
      %v1665 = vpop.permute.xlu0 %1664
      %1666 = vrot.lane.b32.xlu0 %v1619, 124
      %v1667 = vpop.permute.xlu0 %1666
      %v1669 = vsel %vm1323, %v1616, %v1629
      %v1671 = vsel %vm1323, %v1617, %v1631
      %v1673 = vsel %vm1323, %v1618, %v1633
      %v1675 = vsel %vm1323, %v1619, %v1635
      %v1677 = vsel %vm1371, %v1669, %v1641
      %v1679 = vsel %vm1371, %v1671, %v1643
      %v1681 = vsel %vm1371, %v1673, %v1645
      %v1683 = vsel %vm1371, %v1675, %v1647
      %vm1684 = vcmask 1045504
      %v1686 = vsel %vm1684, %v1677, %v1653
      %v1689 = vsel %vm1684, %v1679, %v1655
      %v1692 = vsel %vm1684, %v1681, %v1657
      %v1695 = vsel %vm1684, %v1683, %v1659
      %v1697 = vld [vmem:[%s7] sm:$0x1]
      %v1698 = vld [vmem:[#allocation2] sm:$0x1]
      %1700 = vset.pattern.permute.xlu0 0
      %1701 = vperm.xlu0 %1700, %v1698
      %v1702 = vpop.permute.xlu0 %1701
      %v1704 = vlaneseq
      %v1705 = vshrl.u32 %v1704, 7
      %v1706 = vsub.s32 0, %v1705
      %v1707 = vrot.slane %v1702, %v1706
      %vm1708 = vcmask 162816
      %v1710 = vsel %vm1708, %v1697, 0
      %v1713 = vsel %vm1323, %v1661, 0
      %1715 = vmatprep.subr.bf16.mxu0 0
      %1716 = vmatpush1.bf16.msra.mxu0 0
      %1717 = vmatprep.subr.bf16.mxu0 0
      %1718 = vmatpush1.bf16.msra.mxu0 0
      %1719 = vmatprep.subr.bf16.mxu0 0
      %1720 = vmatpush1.bf16.msra.mxu0 0
      %1721 = vmatprep.subr.bf16.mxu0 0
      %1722 = vmatpush1.bf16.msra.mxu0 0
      %1723 = vmatprep.subr.bf16.mxu0 0
      %1724 = vmatpush1.bf16.msra.mxu0 0
      %1725 = vmatprep.subr.bf16.mxu0 0
      %1726 = vmatpush1.bf16.msra.mxu0 0
      %1727 = vmatprep.subr.bf16.mxu0 0
      %1728 = vmatpush1.bf16.msra.mxu0 %v1713
      %1729 = vmatprep.subr.bf16.mxu0 0
      %1730 = vmatpush1.bf16.msra.mxu0 %v1686
      %1731 = vmatprep.subr.bf16.mxu0 0
      %1732 = vmatpush2.bf16.msra.mxu0 0
      %1733 = vmatprep.subr.bf16.mxu0 0
      %1734 = vmatpush2.bf16.msra.mxu0 0
      %1735 = vmatprep.subr.bf16.mxu0 0
      %1736 = vmatpush2.bf16.msra.mxu0 0
      %1737 = vmatprep.subr.bf16.mxu0 0
      %1738 = vmatpush2.bf16.msra.mxu0 0
      %1739 = vmatprep.subr.bf16.mxu0 0
      %1740 = vmatpush2.bf16.msra.mxu0 0
      %1741 = vmatprep.subr.bf16.mxu0 0
      %1742 = vmatpush2.bf16.msra.mxu0 0
      %1743 = vmatprep.subr.bf16.mxu0 0
      %1744 = vmatpush2.bf16.msra.mxu0 0
      %1745 = vmatprep.subr.bf16.mxu0 0
      %1746 = vmatpush2.bf16.msra.mxu0 0
      %1747 = vmatprep.mubr.bf16.mxu0 0
      %1748 = vmatmul.mubr.bf16.gmra.mxu0 %v1710
      %v1749 = vpop.f32.mrf.mxu0
      %v1750 = vadd.f32 %v1707, %v1749
      %v1751 = vpop.f32.mrf.mxu0
      %v1752 = vpop.f32.mrf.mxu0
      %v1753 = vpop.f32.mrf.mxu0
      %1754 = vdwg.mxu0
      %v1756 = vsel %vm1323, %v1663, 0
      %1758 = vmatprep.subr.bf16.mxu0 0
      %1759 = vmatpush1.bf16.msra.mxu0 0
      %1760 = vmatprep.subr.bf16.mxu0 0
      %1761 = vmatpush1.bf16.msra.mxu0 0
      %1762 = vmatprep.subr.bf16.mxu0 0
      %1763 = vmatpush1.bf16.msra.mxu0 0
      %1764 = vmatprep.subr.bf16.mxu0 0
      %1765 = vmatpush1.bf16.msra.mxu0 0
      %1766 = vmatprep.subr.bf16.mxu0 0
      %1767 = vmatpush1.bf16.msra.mxu0 0
      %1768 = vmatprep.subr.bf16.mxu0 0
      %1769 = vmatpush1.bf16.msra.mxu0 0
      %1770 = vmatprep.subr.bf16.mxu0 0
      %1771 = vmatpush1.bf16.msra.mxu0 %v1756
      %1772 = vmatprep.subr.bf16.mxu0 0
      %1773 = vmatpush1.bf16.msra.mxu0 %v1689
      %1774 = vmatprep.subr.bf16.mxu0 0
      %1775 = vmatpush2.bf16.msra.mxu0 0
      %1776 = vmatprep.subr.bf16.mxu0 0
      %1777 = vmatpush2.bf16.msra.mxu0 0
      %1778 = vmatprep.subr.bf16.mxu0 0
      %1779 = vmatpush2.bf16.msra.mxu0 0
      %1780 = vmatprep.subr.bf16.mxu0 0
      %1781 = vmatpush2.bf16.msra.mxu0 0
      %1782 = vmatprep.subr.bf16.mxu0 0
      %1783 = vmatpush2.bf16.msra.mxu0 0
      %1784 = vmatprep.subr.bf16.mxu0 0
      %1785 = vmatpush2.bf16.msra.mxu0 0
      %1786 = vmatprep.subr.bf16.mxu0 0
      %1787 = vmatpush2.bf16.msra.mxu0 0
      %1788 = vmatprep.subr.bf16.mxu0 0
      %1789 = vmatpush2.bf16.msra.mxu0 0
      %1790 = vmatprep.mubr.bf16.mxu0 0
      %1791 = vmatmul.mubr.bf16.gmra.mxu0 %v1710
      %v1792 = vpop.f32.mrf.mxu0
      %v1793 = vadd.f32 %v1707, %v1792
      %v1794 = vpop.f32.mrf.mxu0
      %v1795 = vpop.f32.mrf.mxu0
      %v1796 = vpop.f32.mrf.mxu0
      %1797 = vdwg.mxu0
      %v1799 = vsel %vm1323, %v1665, 0
      %1801 = vmatprep.subr.bf16.mxu0 0
      %1802 = vmatpush1.bf16.msra.mxu0 0
      %1803 = vmatprep.subr.bf16.mxu0 0
      %1804 = vmatpush1.bf16.msra.mxu0 0
      %1805 = vmatprep.subr.bf16.mxu0 0
      %1806 = vmatpush1.bf16.msra.mxu0 0
      %1807 = vmatprep.subr.bf16.mxu0 0
      %1808 = vmatpush1.bf16.msra.mxu0 0
      %1809 = vmatprep.subr.bf16.mxu0 0
      %1810 = vmatpush1.bf16.msra.mxu0 0
      %1811 = vmatprep.subr.bf16.mxu0 0
      %1812 = vmatpush1.bf16.msra.mxu0 0
      %1813 = vmatprep.subr.bf16.mxu0 0
      %1814 = vmatpush1.bf16.msra.mxu0 %v1799
      %1815 = vmatprep.subr.bf16.mxu0 0
      %1816 = vmatpush1.bf16.msra.mxu0 %v1692
      %1817 = vmatprep.subr.bf16.mxu0 0
      %1818 = vmatpush2.bf16.msra.mxu0 0
      %1819 = vmatprep.subr.bf16.mxu0 0
      %1820 = vmatpush2.bf16.msra.mxu0 0
      %1821 = vmatprep.subr.bf16.mxu0 0
      %1822 = vmatpush2.bf16.msra.mxu0 0
      %1823 = vmatprep.subr.bf16.mxu0 0
      %1824 = vmatpush2.bf16.msra.mxu0 0
      %1825 = vmatprep.subr.bf16.mxu0 0
      %1826 = vmatpush2.bf16.msra.mxu0 0
      %1827 = vmatprep.subr.bf16.mxu0 0
      %1828 = vmatpush2.bf16.msra.mxu0 0
      %1829 = vmatprep.subr.bf16.mxu0 0
      %1830 = vmatpush2.bf16.msra.mxu0 0
      %1831 = vmatprep.subr.bf16.mxu0 0
      %1832 = vmatpush2.bf16.msra.mxu0 0
      %1833 = vmatprep.mubr.bf16.mxu0 0
      %1834 = vmatmul.mubr.bf16.gmra.mxu0 %v1710
      %v1835 = vpop.f32.mrf.mxu0
      %v1836 = vadd.f32 %v1707, %v1835
      %v1837 = vpop.f32.mrf.mxu0
      %v1838 = vpop.f32.mrf.mxu0
      %v1839 = vpop.f32.mrf.mxu0
      %1840 = vdwg.mxu0
      %v1842 = vsel %vm1323, %v1667, 0
      %1844 = vmatprep.subr.bf16.mxu0 0
      %1845 = vmatpush1.bf16.msra.mxu0 0
      %1846 = vmatprep.subr.bf16.mxu0 0
      %1847 = vmatpush1.bf16.msra.mxu0 0
      %1848 = vmatprep.subr.bf16.mxu0 0
      %1849 = vmatpush1.bf16.msra.mxu0 0
      %1850 = vmatprep.subr.bf16.mxu0 0
      %1851 = vmatpush1.bf16.msra.mxu0 0
      %1852 = vmatprep.subr.bf16.mxu0 0
      %1853 = vmatpush1.bf16.msra.mxu0 0
      %1854 = vmatprep.subr.bf16.mxu0 0
      %1855 = vmatpush1.bf16.msra.mxu0 0
      %1856 = vmatprep.subr.bf16.mxu0 0
      %1857 = vmatpush1.bf16.msra.mxu0 %v1842
      %1858 = vmatprep.subr.bf16.mxu0 0
      %1859 = vmatpush1.bf16.msra.mxu0 %v1695
      %1860 = vmatprep.subr.bf16.mxu0 0
      %1861 = vmatpush2.bf16.msra.mxu0 0
      %1862 = vmatprep.subr.bf16.mxu0 0
      %1863 = vmatpush2.bf16.msra.mxu0 0
      %1864 = vmatprep.subr.bf16.mxu0 0
      %1865 = vmatpush2.bf16.msra.mxu0 0
      %1866 = vmatprep.subr.bf16.mxu0 0
      %1867 = vmatpush2.bf16.msra.mxu0 0
      %1868 = vmatprep.subr.bf16.mxu0 0
      %1869 = vmatpush2.bf16.msra.mxu0 0
      %1870 = vmatprep.subr.bf16.mxu0 0
      %1871 = vmatpush2.bf16.msra.mxu0 0
      %1872 = vmatprep.subr.bf16.mxu0 0
      %1873 = vmatpush2.bf16.msra.mxu0 0
      %1874 = vmatprep.subr.bf16.mxu0 0
      %1875 = vmatpush2.bf16.msra.mxu0 0
      %1876 = vmatprep.mubr.bf16.mxu0 0
      %1877 = vmatmul.mubr.bf16.gmra.mxu0 %v1710
      %v1878 = vpop.f32.mrf.mxu0
      %v1879 = vadd.f32 %v1707, %v1878
      %v1880 = vpop.f32.mrf.mxu0
      %v1881 = vpop.f32.mrf.mxu0
      %v1882 = vpop.f32.mrf.mxu0
      %1883 = vdwg.mxu0
      %v1884 = vld [vmem:[%s11] sm:$0x3]
      %v1885 = vld [vmem:[%s13] sm:$0xf]
      %1887 = vset.pattern.permute.xlu0 0
      %1888 = vperm.xlu0 %1887, %v1885
      %v1889 = vpop.permute.xlu0 %1888
      %v1892 = vsel %vm1708, %v1884, 0
      %1894 = vmatprep.subr.bf16.mxu0 0
      %1895 = vmatpush1.bf16.msra.mxu0 0
      %1896 = vmatprep.subr.bf16.mxu0 0
      %1897 = vmatpush1.bf16.msra.mxu0 0
      %1898 = vmatprep.subr.bf16.mxu0 0
      %1899 = vmatpush1.bf16.msra.mxu0 0
      %1900 = vmatprep.subr.bf16.mxu0 0
      %1901 = vmatpush1.bf16.msra.mxu0 0
      %1902 = vmatprep.subr.bf16.mxu0 0
      %1903 = vmatpush1.bf16.msra.mxu0 0
      %1904 = vmatprep.subr.bf16.mxu0 0
      %1905 = vmatpush1.bf16.msra.mxu0 0
      %1906 = vmatprep.subr.bf16.mxu0 0
      %1907 = vmatpush1.bf16.msra.mxu0 %v1713
      %1908 = vmatprep.subr.bf16.mxu0 0
      %1909 = vmatpush1.bf16.msra.mxu0 %v1686
      %1910 = vmatprep.subr.bf16.mxu0 0
      %1911 = vmatpush2.bf16.msra.mxu0 0
      %1912 = vmatprep.subr.bf16.mxu0 0
      %1913 = vmatpush2.bf16.msra.mxu0 0
      %1914 = vmatprep.subr.bf16.mxu0 0
      %1915 = vmatpush2.bf16.msra.mxu0 0
      %1916 = vmatprep.subr.bf16.mxu0 0
      %1917 = vmatpush2.bf16.msra.mxu0 0
      %1918 = vmatprep.subr.bf16.mxu0 0
      %1919 = vmatpush2.bf16.msra.mxu0 0
      %1920 = vmatprep.subr.bf16.mxu0 0
      %1921 = vmatpush2.bf16.msra.mxu0 0
      %1922 = vmatprep.subr.bf16.mxu0 0
      %1923 = vmatpush2.bf16.msra.mxu0 0
      %1924 = vmatprep.subr.bf16.mxu0 0
      %1925 = vmatpush2.bf16.msra.mxu0 0
      %1926 = vmatprep.mubr.bf16.mxu0 0
      %1927 = vmatmul.mubr.bf16.gmra.mxu0 %v1892
      %v1928 = vpop.f32.mrf.mxu0
      %v1929 = vadd.f32 %v1889, %v1928
      %v1930 = vpop.f32.mrf.mxu0
      %v1931 = vpop.f32.mrf.mxu0
      %v1932 = vpop.f32.mrf.mxu0
      %1933 = vdwg.mxu0
      %1934 = vmatprep.subr.bf16.mxu0 0
      %1935 = vmatpush1.bf16.msra.mxu0 0
      %1936 = vmatprep.subr.bf16.mxu0 0
      %1937 = vmatpush1.bf16.msra.mxu0 0
      %1938 = vmatprep.subr.bf16.mxu0 0
      %1939 = vmatpush1.bf16.msra.mxu0 0
      %1940 = vmatprep.subr.bf16.mxu0 0
      %1941 = vmatpush1.bf16.msra.mxu0 0
      %1942 = vmatprep.subr.bf16.mxu0 0
      %1943 = vmatpush1.bf16.msra.mxu0 0
      %1944 = vmatprep.subr.bf16.mxu0 0
      %1945 = vmatpush1.bf16.msra.mxu0 0
      %1946 = vmatprep.subr.bf16.mxu0 0
      %1947 = vmatpush1.bf16.msra.mxu0 %v1756
      %1948 = vmatprep.subr.bf16.mxu0 0
      %1949 = vmatpush1.bf16.msra.mxu0 %v1689
      %1950 = vmatprep.subr.bf16.mxu0 0
      %1951 = vmatpush2.bf16.msra.mxu0 0
      %1952 = vmatprep.subr.bf16.mxu0 0
      %1953 = vmatpush2.bf16.msra.mxu0 0
      %1954 = vmatprep.subr.bf16.mxu0 0
      %1955 = vmatpush2.bf16.msra.mxu0 0
      %1956 = vmatprep.subr.bf16.mxu0 0
      %1957 = vmatpush2.bf16.msra.mxu0 0
      %1958 = vmatprep.subr.bf16.mxu0 0
      %1959 = vmatpush2.bf16.msra.mxu0 0
      %1960 = vmatprep.subr.bf16.mxu0 0
      %1961 = vmatpush2.bf16.msra.mxu0 0
      %1962 = vmatprep.subr.bf16.mxu0 0
      %1963 = vmatpush2.bf16.msra.mxu0 0
      %1964 = vmatprep.subr.bf16.mxu0 0
      %1965 = vmatpush2.bf16.msra.mxu0 0
      %1966 = vmatprep.mubr.bf16.mxu0 0
      %1967 = vmatmul.mubr.bf16.gmra.mxu0 %v1892
      %v1968 = vpop.f32.mrf.mxu0
      %v1969 = vadd.f32 %v1889, %v1968
      %v1970 = vpop.f32.mrf.mxu0
      %v1971 = vpop.f32.mrf.mxu0
      %v1972 = vpop.f32.mrf.mxu0
      %1973 = vdwg.mxu0
      %1974 = vmatprep.subr.bf16.mxu0 0
      %1975 = vmatpush1.bf16.msra.mxu0 0
      %1976 = vmatprep.subr.bf16.mxu0 0
      %1977 = vmatpush1.bf16.msra.mxu0 0
      %1978 = vmatprep.subr.bf16.mxu0 0
      %1979 = vmatpush1.bf16.msra.mxu0 0
      %1980 = vmatprep.subr.bf16.mxu0 0
      %1981 = vmatpush1.bf16.msra.mxu0 0
      %1982 = vmatprep.subr.bf16.mxu0 0
      %1983 = vmatpush1.bf16.msra.mxu0 0
      %1984 = vmatprep.subr.bf16.mxu0 0
      %1985 = vmatpush1.bf16.msra.mxu0 0
      %1986 = vmatprep.subr.bf16.mxu0 0
      %1987 = vmatpush1.bf16.msra.mxu0 %v1799
      %1988 = vmatprep.subr.bf16.mxu0 0
      %1989 = vmatpush1.bf16.msra.mxu0 %v1692
      %1990 = vmatprep.subr.bf16.mxu0 0
      %1991 = vmatpush2.bf16.msra.mxu0 0
      %1992 = vmatprep.subr.bf16.mxu0 0
      %1993 = vmatpush2.bf16.msra.mxu0 0
      %1994 = vmatprep.subr.bf16.mxu0 0
      %1995 = vmatpush2.bf16.msra.mxu0 0
      %1996 = vmatprep.subr.bf16.mxu0 0
      %1997 = vmatpush2.bf16.msra.mxu0 0
      %1998 = vmatprep.subr.bf16.mxu0 0
      %1999 = vmatpush2.bf16.msra.mxu0 0
      %2000 = vmatprep.subr.bf16.mxu0 0
      %2001 = vmatpush2.bf16.msra.mxu0 0
      %2002 = vmatprep.subr.bf16.mxu0 0
      %2003 = vmatpush2.bf16.msra.mxu0 0
      %2004 = vmatprep.subr.bf16.mxu0 0
      %2005 = vmatpush2.bf16.msra.mxu0 0
      %2006 = vmatprep.mubr.bf16.mxu0 0
      %2007 = vmatmul.mubr.bf16.gmra.mxu0 %v1892
      %v2008 = vpop.f32.mrf.mxu0
      %v2009 = vadd.f32 %v1889, %v2008
      %v2010 = vpop.f32.mrf.mxu0
      %v2011 = vpop.f32.mrf.mxu0
      %v2012 = vpop.f32.mrf.mxu0
      %2013 = vdwg.mxu0
      %2014 = vmatprep.subr.bf16.mxu0 0
      %2015 = vmatpush1.bf16.msra.mxu0 0
      %2016 = vmatprep.subr.bf16.mxu0 0
      %2017 = vmatpush1.bf16.msra.mxu0 0
      %2018 = vmatprep.subr.bf16.mxu0 0
      %2019 = vmatpush1.bf16.msra.mxu0 0
      %2020 = vmatprep.subr.bf16.mxu0 0
      %2021 = vmatpush1.bf16.msra.mxu0 0
      %2022 = vmatprep.subr.bf16.mxu0 0
      %2023 = vmatpush1.bf16.msra.mxu0 0
      %2024 = vmatprep.subr.bf16.mxu0 0
      %2025 = vmatpush1.bf16.msra.mxu0 0
      %2026 = vmatprep.subr.bf16.mxu0 0
      %2027 = vmatpush1.bf16.msra.mxu0 %v1842
      %2028 = vmatprep.subr.bf16.mxu0 0
      %2029 = vmatpush1.bf16.msra.mxu0 %v1695
      %2030 = vmatprep.subr.bf16.mxu0 0
      %2031 = vmatpush2.bf16.msra.mxu0 0
      %2032 = vmatprep.subr.bf16.mxu0 0
      %2033 = vmatpush2.bf16.msra.mxu0 0
      %2034 = vmatprep.subr.bf16.mxu0 0
      %2035 = vmatpush2.bf16.msra.mxu0 0
      %2036 = vmatprep.subr.bf16.mxu0 0
      %2037 = vmatpush2.bf16.msra.mxu0 0
      %2038 = vmatprep.subr.bf16.mxu0 0
      %2039 = vmatpush2.bf16.msra.mxu0 0
      %2040 = vmatprep.subr.bf16.mxu0 0
      %2041 = vmatpush2.bf16.msra.mxu0 0
      %2042 = vmatprep.subr.bf16.mxu0 0
      %2043 = vmatpush2.bf16.msra.mxu0 0
      %2044 = vmatprep.subr.bf16.mxu0 0
      %2045 = vmatpush2.bf16.msra.mxu0 0
      %2046 = vmatprep.mubr.bf16.mxu0 0
      %2047 = vmatmul.mubr.bf16.gmra.mxu0 %v1892
      %v2048 = vpop.f32.mrf.mxu0
      %v2049 = vadd.f32 %v1889, %v2048
      %v2050 = vpop.f32.mrf.mxu0
      %v2051 = vpop.f32.mrf.mxu0
      %v2052 = vpop.f32.mrf.mxu0
      %2053 = vdwg.mxu0
      %v2054 = vpack.c.bf16 %v1929, %v1929
      %v2055 = vpack.c.bf16 %v1969, %v1969
      %v2056 = vpack.c.bf16 %v2009, %v2009
      %v2057 = vpack.c.bf16 %v2049, %v2049
      %2062 = vrot.lane.b32.xlu0 %v2054, 4
      %v2063 = vpop.permute.xlu0 %2062
      %2064 = vrot.lane.b32.xlu0 %v2055, 4
      %v2065 = vpop.permute.xlu0 %2064
      %2066 = vrot.lane.b32.xlu0 %v2056, 4
      %v2067 = vpop.permute.xlu0 %2066
      %2068 = vrot.lane.b32.xlu0 %v2057, 4
      %v2069 = vpop.permute.xlu0 %2068
      %v2071 = vsel %vm1153, 0, %v2063
      %v2073 = vsel %vm1153, 0, %v2065
      %v2075 = vsel %vm1153, 0, %v2067
      %v2077 = vsel %vm1153, 0, %v2069
      %v2078 = vsel %vm1163, %v2071, 0
      %v2079 = vsel %vm1163, %v2073, 0
      %v2080 = vsel %vm1163, %v2075, 0
      %v2081 = vsel %vm1163, %v2077, 0
      %v2086 = vrot.slane %v2078, 6
      %v2087 = vrot.slane %v2079, 6
      %v2088 = vrot.slane %v2080, 6
      %v2089 = vrot.slane %v2081, 6
      %2090 = vrot.lane.b32.xlu0 %v2086, 127
      %v2091 = vpop.permute.xlu0 %2090
      %2092 = vrot.lane.b32.xlu0 %v2087, 127
      %v2093 = vpop.permute.xlu0 %2092
      %2094 = vrot.lane.b32.xlu0 %v2088, 127
      %v2095 = vpop.permute.xlu0 %2094
      %2096 = vrot.lane.b32.xlu0 %v2089, 127
      %v2097 = vpop.permute.xlu0 %2096
      %v2098 = vrot.slane %v2078, 4
      %v2099 = vrot.slane %v2079, 4
      %v2100 = vrot.slane %v2080, 4
      %v2101 = vrot.slane %v2081, 4
      %2102 = vrot.lane.b32.xlu0 %v2098, 126
      %v2103 = vpop.permute.xlu0 %2102
      %2104 = vrot.lane.b32.xlu0 %v2099, 126
      %v2105 = vpop.permute.xlu0 %2104
      %2106 = vrot.lane.b32.xlu0 %v2100, 126
      %v2107 = vpop.permute.xlu0 %2106
      %2108 = vrot.lane.b32.xlu0 %v2101, 126
      %v2109 = vpop.permute.xlu0 %2108
      %v2110 = vrot.slane %v2078, 2
      %v2111 = vrot.slane %v2079, 2
      %v2112 = vrot.slane %v2080, 2
      %v2113 = vrot.slane %v2081, 2
      %2114 = vrot.lane.b32.xlu0 %v2110, 125
      %v2115 = vpop.permute.xlu0 %2114
      %2116 = vrot.lane.b32.xlu0 %v2111, 125
      %v2117 = vpop.permute.xlu0 %2116
      %2118 = vrot.lane.b32.xlu0 %v2112, 125
      %v2119 = vpop.permute.xlu0 %2118
      %2120 = vrot.lane.b32.xlu0 %v2113, 125
      %v2121 = vpop.permute.xlu0 %2120
      %2122 = vrot.lane.b32.xlu0 %v2078, 124
      %v2123 = vpop.permute.xlu0 %2122
      %2124 = vrot.lane.b32.xlu0 %v2079, 124
      %v2125 = vpop.permute.xlu0 %2124
      %2126 = vrot.lane.b32.xlu0 %v2080, 124
      %v2127 = vpop.permute.xlu0 %2126
      %2128 = vrot.lane.b32.xlu0 %v2081, 124
      %v2129 = vpop.permute.xlu0 %2128
      %2130 = vrot.lane.b32.xlu0 %v2086, 123
      %v2131 = vpop.permute.xlu0 %2130
      %2132 = vrot.lane.b32.xlu0 %v2087, 123
      %v2133 = vpop.permute.xlu0 %2132
      %2134 = vrot.lane.b32.xlu0 %v2088, 123
      %v2135 = vpop.permute.xlu0 %2134
      %2136 = vrot.lane.b32.xlu0 %v2089, 123
      %v2137 = vpop.permute.xlu0 %2136
      %2138 = vrot.lane.b32.xlu0 %v2098, 122
      %v2139 = vpop.permute.xlu0 %2138
      %2140 = vrot.lane.b32.xlu0 %v2099, 122
      %v2141 = vpop.permute.xlu0 %2140
      %2142 = vrot.lane.b32.xlu0 %v2100, 122
      %v2143 = vpop.permute.xlu0 %2142
      %2144 = vrot.lane.b32.xlu0 %v2101, 122
      %v2145 = vpop.permute.xlu0 %2144
      %2146 = vrot.lane.b32.xlu0 %v2110, 121
      %v2147 = vpop.permute.xlu0 %2146
      %2148 = vrot.lane.b32.xlu0 %v2111, 121
      %v2149 = vpop.permute.xlu0 %2148
      %2150 = vrot.lane.b32.xlu0 %v2112, 121
      %v2151 = vpop.permute.xlu0 %2150
      %2152 = vrot.lane.b32.xlu0 %v2113, 121
      %v2153 = vpop.permute.xlu0 %2152
      %2154 = vrot.lane.b32.xlu0 %v2078, 120
      %v2155 = vpop.permute.xlu0 %2154
      %2156 = vrot.lane.b32.xlu0 %v2079, 120
      %v2157 = vpop.permute.xlu0 %2156
      %2158 = vrot.lane.b32.xlu0 %v2080, 120
      %v2159 = vpop.permute.xlu0 %2158
      %2160 = vrot.lane.b32.xlu0 %v2081, 120
      %v2161 = vpop.permute.xlu0 %2160
      %v2163 = vsel %vm1323, %v2078, %v2091
      %v2165 = vsel %vm1323, %v2079, %v2093
      %v2167 = vsel %vm1323, %v2080, %v2095
      %v2169 = vsel %vm1323, %v2081, %v2097
      %v2171 = vsel %vm1371, %v2163, %v2103
      %v2173 = vsel %vm1371, %v2165, %v2105
      %v2175 = vsel %vm1371, %v2167, %v2107
      %v2177 = vsel %vm1371, %v2169, %v2109
      %v2179 = vsel %vm1684, %v2171, %v2115
      %v2182 = vsel %vm1684, %v2173, %v2117
      %v2185 = vsel %vm1684, %v2175, %v2119
      %v2188 = vsel %vm1684, %v2177, %v2121
      %v2192 = vsel %vm1323, %v2123, %v2131
      %v2195 = vsel %vm1323, %v2125, %v2133
      %v2198 = vsel %vm1323, %v2127, %v2135
      %v2201 = vsel %vm1323, %v2129, %v2137
      %v2203 = vsel %vm1371, %v2192, %v2139
      %v2205 = vsel %vm1371, %v2195, %v2141
      %v2207 = vsel %vm1371, %v2198, %v2143
      %v2209 = vsel %vm1371, %v2201, %v2145
      %v2211 = vsel %vm1684, %v2203, %v2147
      %v2214 = vsel %vm1684, %v2205, %v2149
      %v2217 = vsel %vm1684, %v2207, %v2151
      %v2220 = vsel %vm1684, %v2209, %v2153
      %v2222 = vld [vmem:[%s15] sm:$0x1]
      %v2223 = vld [vmem:[#allocation3] sm:$0x1]
      %2225 = vset.pattern.permute.xlu0 0
      %2226 = vperm.xlu0 %2225, %v2223
      %v2227 = vpop.permute.xlu0 %2226
      %v2229 = vlaneseq
      %v2230 = vshrl.u32 %v2229, 7
      %v2231 = vsub.s32 0, %v2230
      %v2232 = vrot.slane %v2227, %v2231
      %vm2233 = vcmask 293888
      %v2235 = vsel %vm2233, %v2222, 0
      %v2238 = vsel %vm1323, %v2155, 0
      %2240 = vmatprep.subr.bf16.mxu0 0
      %2241 = vmatpush1.bf16.msra.mxu0 0
      %2242 = vmatprep.subr.bf16.mxu0 0
      %2243 = vmatpush1.bf16.msra.mxu0 0
      %2244 = vmatprep.subr.bf16.mxu0 0
      %2245 = vmatpush1.bf16.msra.mxu0 0
      %2246 = vmatprep.subr.bf16.mxu0 0
      %2247 = vmatpush1.bf16.msra.mxu0 0
      %2248 = vmatprep.subr.bf16.mxu0 0
      %2249 = vmatpush1.bf16.msra.mxu0 0
      %2250 = vmatprep.subr.bf16.mxu0 0
      %2251 = vmatpush1.bf16.msra.mxu0 %v2238
      %2252 = vmatprep.subr.bf16.mxu0 0
      %2253 = vmatpush1.bf16.msra.mxu0 %v2211
      %2254 = vmatprep.subr.bf16.mxu0 0
      %2255 = vmatpush1.bf16.msra.mxu0 %v2179
      %2256 = vmatprep.subr.bf16.mxu0 0
      %2257 = vmatpush2.bf16.msra.mxu0 0
      %2258 = vmatprep.subr.bf16.mxu0 0
      %2259 = vmatpush2.bf16.msra.mxu0 0
      %2260 = vmatprep.subr.bf16.mxu0 0
      %2261 = vmatpush2.bf16.msra.mxu0 0
      %2262 = vmatprep.subr.bf16.mxu0 0
      %2263 = vmatpush2.bf16.msra.mxu0 0
      %2264 = vmatprep.subr.bf16.mxu0 0
      %2265 = vmatpush2.bf16.msra.mxu0 0
      %2266 = vmatprep.subr.bf16.mxu0 0
      %2267 = vmatpush2.bf16.msra.mxu0 0
      %2268 = vmatprep.subr.bf16.mxu0 0
      %2269 = vmatpush2.bf16.msra.mxu0 0
      %2270 = vmatprep.subr.bf16.mxu0 0
      %2271 = vmatpush2.bf16.msra.mxu0 0
      %2272 = vmatprep.mubr.bf16.mxu0 0
      %2273 = vmatmul.mubr.bf16.gmra.mxu0 %v2235
      %v2274 = vpop.f32.mrf.mxu0
      %v2275 = vadd.f32 %v2232, %v2274
      %v2276 = vpop.f32.mrf.mxu0
      %v2277 = vpop.f32.mrf.mxu0
      %v2278 = vpop.f32.mrf.mxu0
      %2279 = vdwg.mxu0
      %v2281 = vsel %vm1323, %v2157, 0
      %2283 = vmatprep.subr.bf16.mxu0 0
      %2284 = vmatpush1.bf16.msra.mxu0 0
      %2285 = vmatprep.subr.bf16.mxu0 0
      %2286 = vmatpush1.bf16.msra.mxu0 0
      %2287 = vmatprep.subr.bf16.mxu0 0
      %2288 = vmatpush1.bf16.msra.mxu0 0
      %2289 = vmatprep.subr.bf16.mxu0 0
      %2290 = vmatpush1.bf16.msra.mxu0 0
      %2291 = vmatprep.subr.bf16.mxu0 0
      %2292 = vmatpush1.bf16.msra.mxu0 0
      %2293 = vmatprep.subr.bf16.mxu0 0
      %2294 = vmatpush1.bf16.msra.mxu0 %v2281
      %2295 = vmatprep.subr.bf16.mxu0 0
      %2296 = vmatpush1.bf16.msra.mxu0 %v2214
      %2297 = vmatprep.subr.bf16.mxu0 0
      %2298 = vmatpush1.bf16.msra.mxu0 %v2182
      %2299 = vmatprep.subr.bf16.mxu0 0
      %2300 = vmatpush2.bf16.msra.mxu0 0
      %2301 = vmatprep.subr.bf16.mxu0 0
      %2302 = vmatpush2.bf16.msra.mxu0 0
      %2303 = vmatprep.subr.bf16.mxu0 0
      %2304 = vmatpush2.bf16.msra.mxu0 0
      %2305 = vmatprep.subr.bf16.mxu0 0
      %2306 = vmatpush2.bf16.msra.mxu0 0
      %2307 = vmatprep.subr.bf16.mxu0 0
      %2308 = vmatpush2.bf16.msra.mxu0 0
      %2309 = vmatprep.subr.bf16.mxu0 0
      %2310 = vmatpush2.bf16.msra.mxu0 0
      %2311 = vmatprep.subr.bf16.mxu0 0
      %2312 = vmatpush2.bf16.msra.mxu0 0
      %2313 = vmatprep.subr.bf16.mxu0 0
      %2314 = vmatpush2.bf16.msra.mxu0 0
      %2315 = vmatprep.mubr.bf16.mxu0 0
      %2316 = vmatmul.mubr.bf16.gmra.mxu0 %v2235
      %v2317 = vpop.f32.mrf.mxu0
      %v2318 = vadd.f32 %v2232, %v2317
      %v2319 = vpop.f32.mrf.mxu0
      %v2320 = vpop.f32.mrf.mxu0
      %v2321 = vpop.f32.mrf.mxu0
      %2322 = vdwg.mxu0
      %v2324 = vsel %vm1323, %v2159, 0
      %2326 = vmatprep.subr.bf16.mxu0 0
      %2327 = vmatpush1.bf16.msra.mxu0 0
      %2328 = vmatprep.subr.bf16.mxu0 0
      %2329 = vmatpush1.bf16.msra.mxu0 0
      %2330 = vmatprep.subr.bf16.mxu0 0
      %2331 = vmatpush1.bf16.msra.mxu0 0
      %2332 = vmatprep.subr.bf16.mxu0 0
      %2333 = vmatpush1.bf16.msra.mxu0 0
      %2334 = vmatprep.subr.bf16.mxu0 0
      %2335 = vmatpush1.bf16.msra.mxu0 0
      %2336 = vmatprep.subr.bf16.mxu0 0
      %2337 = vmatpush1.bf16.msra.mxu0 %v2324
      %2338 = vmatprep.subr.bf16.mxu0 0
      %2339 = vmatpush1.bf16.msra.mxu0 %v2217
      %2340 = vmatprep.subr.bf16.mxu0 0
      %2341 = vmatpush1.bf16.msra.mxu0 %v2185
      %2342 = vmatprep.subr.bf16.mxu0 0
      %2343 = vmatpush2.bf16.msra.mxu0 0
      %2344 = vmatprep.subr.bf16.mxu0 0
      %2345 = vmatpush2.bf16.msra.mxu0 0
      %2346 = vmatprep.subr.bf16.mxu0 0
      %2347 = vmatpush2.bf16.msra.mxu0 0
      %2348 = vmatprep.subr.bf16.mxu0 0
      %2349 = vmatpush2.bf16.msra.mxu0 0
      %2350 = vmatprep.subr.bf16.mxu0 0
      %2351 = vmatpush2.bf16.msra.mxu0 0
      %2352 = vmatprep.subr.bf16.mxu0 0
      %2353 = vmatpush2.bf16.msra.mxu0 0
      %2354 = vmatprep.subr.bf16.mxu0 0
      %2355 = vmatpush2.bf16.msra.mxu0 0
      %2356 = vmatprep.subr.bf16.mxu0 0
      %2357 = vmatpush2.bf16.msra.mxu0 0
      %2358 = vmatprep.mubr.bf16.mxu0 0
      %2359 = vmatmul.mubr.bf16.gmra.mxu0 %v2235
      %v2360 = vpop.f32.mrf.mxu0
      %v2361 = vadd.f32 %v2232, %v2360
      %v2362 = vpop.f32.mrf.mxu0
      %v2363 = vpop.f32.mrf.mxu0
      %v2364 = vpop.f32.mrf.mxu0
      %2365 = vdwg.mxu0
      %v2367 = vsel %vm1323, %v2161, 0
      %2369 = vmatprep.subr.bf16.mxu0 0
      %2370 = vmatpush1.bf16.msra.mxu0 0
      %2371 = vmatprep.subr.bf16.mxu0 0
      %2372 = vmatpush1.bf16.msra.mxu0 0
      %2373 = vmatprep.subr.bf16.mxu0 0
      %2374 = vmatpush1.bf16.msra.mxu0 0
      %2375 = vmatprep.subr.bf16.mxu0 0
      %2376 = vmatpush1.bf16.msra.mxu0 0
      %2377 = vmatprep.subr.bf16.mxu0 0
      %2378 = vmatpush1.bf16.msra.mxu0 0
      %2379 = vmatprep.subr.bf16.mxu0 0
      %2380 = vmatpush1.bf16.msra.mxu0 %v2367
      %2381 = vmatprep.subr.bf16.mxu0 0
      %2382 = vmatpush1.bf16.msra.mxu0 %v2220
      %2383 = vmatprep.subr.bf16.mxu0 0
      %2384 = vmatpush1.bf16.msra.mxu0 %v2188
      %2385 = vmatprep.subr.bf16.mxu0 0
      %2386 = vmatpush2.bf16.msra.mxu0 0
      %2387 = vmatprep.subr.bf16.mxu0 0
      %2388 = vmatpush2.bf16.msra.mxu0 0
      %2389 = vmatprep.subr.bf16.mxu0 0
      %2390 = vmatpush2.bf16.msra.mxu0 0
      %2391 = vmatprep.subr.bf16.mxu0 0
      %2392 = vmatpush2.bf16.msra.mxu0 0
      %2393 = vmatprep.subr.bf16.mxu0 0
      %2394 = vmatpush2.bf16.msra.mxu0 0
      %2395 = vmatprep.subr.bf16.mxu0 0
      %2396 = vmatpush2.bf16.msra.mxu0 0
      %2397 = vmatprep.subr.bf16.mxu0 0
      %2398 = vmatpush2.bf16.msra.mxu0 0
      %2399 = vmatprep.subr.bf16.mxu0 0
      %2400 = vmatpush2.bf16.msra.mxu0 0
      %2401 = vmatprep.mubr.bf16.mxu0 0
      %2402 = vmatmul.mubr.bf16.gmra.mxu0 %v2235
      %v2403 = vpop.f32.mrf.mxu0
      %v2404 = vadd.f32 %v2232, %v2403
      %v2405 = vpop.f32.mrf.mxu0
      %v2406 = vpop.f32.mrf.mxu0
      %v2407 = vpop.f32.mrf.mxu0
      %2408 = vdwg.mxu0
      %v2409 = vld [vmem:[%s19] sm:$0x3]
      %v2410 = vld [vmem:[%s21] sm:$0xf]
      %2412 = vset.pattern.permute.xlu0 0
      %2413 = vperm.xlu0 %2412, %v2410
      %v2414 = vpop.permute.xlu0 %2413
      %v2417 = vsel %vm1708, %v2409, 0
      %2419 = vmatprep.subr.bf16.mxu0 0
      %2420 = vmatpush1.bf16.msra.mxu0 0
      %2421 = vmatprep.subr.bf16.mxu0 0
      %2422 = vmatpush1.bf16.msra.mxu0 0
      %2423 = vmatprep.subr.bf16.mxu0 0
      %2424 = vmatpush1.bf16.msra.mxu0 0
      %2425 = vmatprep.subr.bf16.mxu0 0
      %2426 = vmatpush1.bf16.msra.mxu0 0
      %2427 = vmatprep.subr.bf16.mxu0 0
      %2428 = vmatpush1.bf16.msra.mxu0 0
      %2429 = vmatprep.subr.bf16.mxu0 0
      %2430 = vmatpush1.bf16.msra.mxu0 0
      %2431 = vmatprep.subr.bf16.mxu0 0
      %2432 = vmatpush1.bf16.msra.mxu0 %v1713
      %2433 = vmatprep.subr.bf16.mxu0 0
      %2434 = vmatpush1.bf16.msra.mxu0 %v1686
      %2435 = vmatprep.subr.bf16.mxu0 0
      %2436 = vmatpush2.bf16.msra.mxu0 0
      %2437 = vmatprep.subr.bf16.mxu0 0
      %2438 = vmatpush2.bf16.msra.mxu0 0
      %2439 = vmatprep.subr.bf16.mxu0 0
      %2440 = vmatpush2.bf16.msra.mxu0 0
      %2441 = vmatprep.subr.bf16.mxu0 0
      %2442 = vmatpush2.bf16.msra.mxu0 0
      %2443 = vmatprep.subr.bf16.mxu0 0
      %2444 = vmatpush2.bf16.msra.mxu0 0
      %2445 = vmatprep.subr.bf16.mxu0 0
      %2446 = vmatpush2.bf16.msra.mxu0 0
      %2447 = vmatprep.subr.bf16.mxu0 0
      %2448 = vmatpush2.bf16.msra.mxu0 0
      %2449 = vmatprep.subr.bf16.mxu0 0
      %2450 = vmatpush2.bf16.msra.mxu0 0
      %2451 = vmatprep.mubr.bf16.mxu0 0
      %2452 = vmatmul.mubr.bf16.gmra.mxu0 %v2417
      %v2453 = vpop.f32.mrf.mxu0
      %v2454 = vadd.f32 %v2414, %v2453
      %v2455 = vpop.f32.mrf.mxu0
      %v2456 = vpop.f32.mrf.mxu0
      %v2457 = vpop.f32.mrf.mxu0
      %2458 = vdwg.mxu0
      %2459 = vmatprep.subr.bf16.mxu0 0
      %2460 = vmatpush1.bf16.msra.mxu0 0
      %2461 = vmatprep.subr.bf16.mxu0 0
      %2462 = vmatpush1.bf16.msra.mxu0 0
      %2463 = vmatprep.subr.bf16.mxu0 0
      %2464 = vmatpush1.bf16.msra.mxu0 0
      %2465 = vmatprep.subr.bf16.mxu0 0
      %2466 = vmatpush1.bf16.msra.mxu0 0
      %2467 = vmatprep.subr.bf16.mxu0 0
      %2468 = vmatpush1.bf16.msra.mxu0 0
      %2469 = vmatprep.subr.bf16.mxu0 0
      %2470 = vmatpush1.bf16.msra.mxu0 0
      %2471 = vmatprep.subr.bf16.mxu0 0
      %2472 = vmatpush1.bf16.msra.mxu0 %v1756
      %2473 = vmatprep.subr.bf16.mxu0 0
      %2474 = vmatpush1.bf16.msra.mxu0 %v1689
      %2475 = vmatprep.subr.bf16.mxu0 0
      %2476 = vmatpush2.bf16.msra.mxu0 0
      %2477 = vmatprep.subr.bf16.mxu0 0
      %2478 = vmatpush2.bf16.msra.mxu0 0
      %2479 = vmatprep.subr.bf16.mxu0 0
      %2480 = vmatpush2.bf16.msra.mxu0 0
      %2481 = vmatprep.subr.bf16.mxu0 0
      %2482 = vmatpush2.bf16.msra.mxu0 0
      %2483 = vmatprep.subr.bf16.mxu0 0
      %2484 = vmatpush2.bf16.msra.mxu0 0
      %2485 = vmatprep.subr.bf16.mxu0 0
      %2486 = vmatpush2.bf16.msra.mxu0 0
      %2487 = vmatprep.subr.bf16.mxu0 0
      %2488 = vmatpush2.bf16.msra.mxu0 0
      %2489 = vmatprep.subr.bf16.mxu0 0
      %2490 = vmatpush2.bf16.msra.mxu0 0
      %2491 = vmatprep.mubr.bf16.mxu0 0
      %2492 = vmatmul.mubr.bf16.gmra.mxu0 %v2417
      %v2493 = vpop.f32.mrf.mxu0
      %v2494 = vadd.f32 %v2414, %v2493
      %v2495 = vpop.f32.mrf.mxu0
      %v2496 = vpop.f32.mrf.mxu0
      %v2497 = vpop.f32.mrf.mxu0
      %2498 = vdwg.mxu0
      %2499 = vmatprep.subr.bf16.mxu0 0
      %2500 = vmatpush1.bf16.msra.mxu0 0
      %2501 = vmatprep.subr.bf16.mxu0 0
      %2502 = vmatpush1.bf16.msra.mxu0 0
      %2503 = vmatprep.subr.bf16.mxu0 0
      %2504 = vmatpush1.bf16.msra.mxu0 0
      %2505 = vmatprep.subr.bf16.mxu0 0
      %2506 = vmatpush1.bf16.msra.mxu0 0
      %2507 = vmatprep.subr.bf16.mxu0 0
      %2508 = vmatpush1.bf16.msra.mxu0 0
      %2509 = vmatprep.subr.bf16.mxu0 0
      %2510 = vmatpush1.bf16.msra.mxu0 0
      %2511 = vmatprep.subr.bf16.mxu0 0
      %2512 = vmatpush1.bf16.msra.mxu0 %v1799
      %2513 = vmatprep.subr.bf16.mxu0 0
      %2514 = vmatpush1.bf16.msra.mxu0 %v1692
      %2515 = vmatprep.subr.bf16.mxu0 0
      %2516 = vmatpush2.bf16.msra.mxu0 0
      %2517 = vmatprep.subr.bf16.mxu0 0
      %2518 = vmatpush2.bf16.msra.mxu0 0
      %2519 = vmatprep.subr.bf16.mxu0 0
      %2520 = vmatpush2.bf16.msra.mxu0 0
      %2521 = vmatprep.subr.bf16.mxu0 0
      %2522 = vmatpush2.bf16.msra.mxu0 0
      %2523 = vmatprep.subr.bf16.mxu0 0
      %2524 = vmatpush2.bf16.msra.mxu0 0
      %2525 = vmatprep.subr.bf16.mxu0 0
      %2526 = vmatpush2.bf16.msra.mxu0 0
      %2527 = vmatprep.subr.bf16.mxu0 0
      %2528 = vmatpush2.bf16.msra.mxu0 0
      %2529 = vmatprep.subr.bf16.mxu0 0
      %2530 = vmatpush2.bf16.msra.mxu0 0
      %2531 = vmatprep.mubr.bf16.mxu0 0
      %2532 = vmatmul.mubr.bf16.gmra.mxu0 %v2417
      %v2533 = vpop.f32.mrf.mxu0
      %v2534 = vadd.f32 %v2414, %v2533
      %v2535 = vpop.f32.mrf.mxu0
      %v2536 = vpop.f32.mrf.mxu0
      %v2537 = vpop.f32.mrf.mxu0
      %2538 = vdwg.mxu0
      %2539 = vmatprep.subr.bf16.mxu0 0
      %2540 = vmatpush1.bf16.msra.mxu0 0
      %2541 = vmatprep.subr.bf16.mxu0 0
      %2542 = vmatpush1.bf16.msra.mxu0 0
      %2543 = vmatprep.subr.bf16.mxu0 0
      %2544 = vmatpush1.bf16.msra.mxu0 0
      %2545 = vmatprep.subr.bf16.mxu0 0
      %2546 = vmatpush1.bf16.msra.mxu0 0
      %2547 = vmatprep.subr.bf16.mxu0 0
      %2548 = vmatpush1.bf16.msra.mxu0 0
      %2549 = vmatprep.subr.bf16.mxu0 0
      %2550 = vmatpush1.bf16.msra.mxu0 0
      %2551 = vmatprep.subr.bf16.mxu0 0
      %2552 = vmatpush1.bf16.msra.mxu0 %v1842
      %2553 = vmatprep.subr.bf16.mxu0 0
      %2554 = vmatpush1.bf16.msra.mxu0 %v1695
      %2555 = vmatprep.subr.bf16.mxu0 0
      %2556 = vmatpush2.bf16.msra.mxu0 0
      %2557 = vmatprep.subr.bf16.mxu0 0
      %2558 = vmatpush2.bf16.msra.mxu0 0
      %2559 = vmatprep.subr.bf16.mxu0 0
      %2560 = vmatpush2.bf16.msra.mxu0 0
      %2561 = vmatprep.subr.bf16.mxu0 0
      %2562 = vmatpush2.bf16.msra.mxu0 0
      %2563 = vmatprep.subr.bf16.mxu0 0
      %2564 = vmatpush2.bf16.msra.mxu0 0
      %2565 = vmatprep.subr.bf16.mxu0 0
      %2566 = vmatpush2.bf16.msra.mxu0 0
      %2567 = vmatprep.subr.bf16.mxu0 0
      %2568 = vmatpush2.bf16.msra.mxu0 0
      %2569 = vmatprep.subr.bf16.mxu0 0
      %2570 = vmatpush2.bf16.msra.mxu0 0
      %2571 = vmatprep.mubr.bf16.mxu0 0
      %2572 = vmatmul.mubr.bf16.gmra.mxu0 %v2417
      %v2573 = vpop.f32.mrf.mxu0
      %v2574 = vadd.f32 %v2414, %v2573
      %v2575 = vpop.f32.mrf.mxu0
      %v2576 = vpop.f32.mrf.mxu0
      %v2577 = vpop.f32.mrf.mxu0
      %2578 = vdwg.mxu0
      %v2579 = vpack.c.bf16 %v2454, %v2454
      %v2580 = vpack.c.bf16 %v2494, %v2494
      %v2581 = vpack.c.bf16 %v2534, %v2534
      %v2582 = vpack.c.bf16 %v2574, %v2574
      %2587 = vrot.lane.b32.xlu0 %v2579, 3
      %v2588 = vpop.permute.xlu0 %2587
      %2589 = vrot.lane.b32.xlu0 %v2580, 3
      %v2590 = vpop.permute.xlu0 %2589
      %2591 = vrot.lane.b32.xlu0 %v2581, 3
      %v2592 = vpop.permute.xlu0 %2591
      %2593 = vrot.lane.b32.xlu0 %v2582, 3
      %v2594 = vpop.permute.xlu0 %2593
      %vm2595 = vcmask 23552
      %v2597 = vsel %vm2595, 0, %v2588
      %v2599 = vsel %vm2595, 0, %v2590
      %v2601 = vsel %vm2595, 0, %v2592
      %v2603 = vsel %vm2595, 0, %v2594
      %vm2604 = vcmask 547840
      %v2605 = vsel %vm2604, %v2597, 0
      %v2606 = vsel %vm2604, %v2599, 0
      %v2607 = vsel %vm2604, %v2601, 0
      %v2608 = vsel %vm2604, %v2603, 0
      %v2613 = vrot.slane %v2605, 6
      %v2614 = vrot.slane %v2606, 6
      %v2615 = vrot.slane %v2607, 6
      %v2616 = vrot.slane %v2608, 6
      %2617 = vrot.lane.b32.xlu0 %v2613, 127
      %v2618 = vpop.permute.xlu0 %2617
      %2619 = vrot.lane.b32.xlu0 %v2614, 127
      %v2620 = vpop.permute.xlu0 %2619
      %2621 = vrot.lane.b32.xlu0 %v2615, 127
      %v2622 = vpop.permute.xlu0 %2621
      %2623 = vrot.lane.b32.xlu0 %v2616, 127
      %v2624 = vpop.permute.xlu0 %2623
      %v2625 = vrot.slane %v2605, 4
      %v2626 = vrot.slane %v2606, 4
      %v2627 = vrot.slane %v2607, 4
      %v2628 = vrot.slane %v2608, 4
      %2629 = vrot.lane.b32.xlu0 %v2625, 126
      %v2630 = vpop.permute.xlu0 %2629
      %2631 = vrot.lane.b32.xlu0 %v2626, 126
      %v2632 = vpop.permute.xlu0 %2631
      %2633 = vrot.lane.b32.xlu0 %v2627, 126
      %v2634 = vpop.permute.xlu0 %2633
      %2635 = vrot.lane.b32.xlu0 %v2628, 126
      %v2636 = vpop.permute.xlu0 %2635
      %v2637 = vrot.slane %v2605, 2
      %v2638 = vrot.slane %v2606, 2
      %v2639 = vrot.slane %v2607, 2
      %v2640 = vrot.slane %v2608, 2
      %2641 = vrot.lane.b32.xlu0 %v2637, 125
      %v2642 = vpop.permute.xlu0 %2641
      %2643 = vrot.lane.b32.xlu0 %v2638, 125
      %v2644 = vpop.permute.xlu0 %2643
      %2645 = vrot.lane.b32.xlu0 %v2639, 125
      %v2646 = vpop.permute.xlu0 %2645
      %2647 = vrot.lane.b32.xlu0 %v2640, 125
      %v2648 = vpop.permute.xlu0 %2647
      %2649 = vrot.lane.b32.xlu0 %v2605, 124
      %v2650 = vpop.permute.xlu0 %2649
      %2651 = vrot.lane.b32.xlu0 %v2606, 124
      %v2652 = vpop.permute.xlu0 %2651
      %2653 = vrot.lane.b32.xlu0 %v2607, 124
      %v2654 = vpop.permute.xlu0 %2653
      %2655 = vrot.lane.b32.xlu0 %v2608, 124
      %v2656 = vpop.permute.xlu0 %2655
      %2657 = vrot.lane.b32.xlu0 %v2613, 123
      %v2658 = vpop.permute.xlu0 %2657
      %2659 = vrot.lane.b32.xlu0 %v2614, 123
      %v2660 = vpop.permute.xlu0 %2659
      %2661 = vrot.lane.b32.xlu0 %v2615, 123
      %v2662 = vpop.permute.xlu0 %2661
      %2663 = vrot.lane.b32.xlu0 %v2616, 123
      %v2664 = vpop.permute.xlu0 %2663
      %2665 = vrot.lane.b32.xlu0 %v2625, 122
      %v2666 = vpop.permute.xlu0 %2665
      %2667 = vrot.lane.b32.xlu0 %v2626, 122
      %v2668 = vpop.permute.xlu0 %2667
      %2669 = vrot.lane.b32.xlu0 %v2627, 122
      %v2670 = vpop.permute.xlu0 %2669
      %2671 = vrot.lane.b32.xlu0 %v2628, 122
      %v2672 = vpop.permute.xlu0 %2671
      %v2674 = vsel %vm1323, %v2605, %v2618
      %v2676 = vsel %vm1323, %v2606, %v2620
      %v2678 = vsel %vm1323, %v2607, %v2622
      %v2680 = vsel %vm1323, %v2608, %v2624
      %v2682 = vsel %vm1371, %v2674, %v2630
      %v2684 = vsel %vm1371, %v2676, %v2632
      %v2686 = vsel %vm1371, %v2678, %v2634
      %v2688 = vsel %vm1371, %v2680, %v2636
      %v2690 = vsel %vm1684, %v2682, %v2642
      %v2693 = vsel %vm1684, %v2684, %v2644
      %v2696 = vsel %vm1684, %v2686, %v2646
      %v2699 = vsel %vm1684, %v2688, %v2648
      %v2703 = vsel %vm1323, %v2650, %v2658
      %v2706 = vsel %vm1323, %v2652, %v2660
      %v2709 = vsel %vm1323, %v2654, %v2662
      %v2712 = vsel %vm1323, %v2656, %v2664
      %v2714 = vsel %vm1371, %v2703, %v2666
      %v2716 = vsel %vm1371, %v2706, %v2668
      %v2718 = vsel %vm1371, %v2709, %v2670
      %v2720 = vsel %vm1371, %v2712, %v2672
      %v2721 = vld [vmem:[%s23] sm:$0x1]
      %v2722 = vld [vmem:[#allocation4] sm:$0x1]
      %2724 = vset.pattern.permute.xlu0 0
      %2725 = vperm.xlu0 %2724, %v2722
      %v2726 = vpop.permute.xlu0 %2725
      %v2728 = vlaneseq
      %v2729 = vshrl.u32 %v2728, 7
      %v2730 = vsub.s32 0, %v2729
      %v2731 = vrot.slane %v2726, %v2730
      %vm2732 = vcmask 228352
      %v2734 = vsel %vm2732, %v2721, 0
      %v2736 = vsel %vm1684, %v2714, 0
      %2738 = vmatprep.subr.bf16.mxu0 0
      %2739 = vmatpush1.bf16.msra.mxu0 0
      %2740 = vmatprep.subr.bf16.mxu0 0
      %2741 = vmatpush1.bf16.msra.mxu0 0
      %2742 = vmatprep.subr.bf16.mxu0 0
      %2743 = vmatpush1.bf16.msra.mxu0 0
      %2744 = vmatprep.subr.bf16.mxu0 0
      %2745 = vmatpush1.bf16.msra.mxu0 0
      %2746 = vmatprep.subr.bf16.mxu0 0
      %2747 = vmatpush1.bf16.msra.mxu0 0
      %2748 = vmatprep.subr.bf16.mxu0 0
      %2749 = vmatpush1.bf16.msra.mxu0 0
      %2750 = vmatprep.subr.bf16.mxu0 0
      %2751 = vmatpush1.bf16.msra.mxu0 %v2736
      %2752 = vmatprep.subr.bf16.mxu0 0
      %2753 = vmatpush1.bf16.msra.mxu0 %v2690
      %2754 = vmatprep.subr.bf16.mxu0 0
      %2755 = vmatpush2.bf16.msra.mxu0 0
      %2756 = vmatprep.subr.bf16.mxu0 0
      %2757 = vmatpush2.bf16.msra.mxu0 0
      %2758 = vmatprep.subr.bf16.mxu0 0
      %2759 = vmatpush2.bf16.msra.mxu0 0
      %2760 = vmatprep.subr.bf16.mxu0 0
      %2761 = vmatpush2.bf16.msra.mxu0 0
      %2762 = vmatprep.subr.bf16.mxu0 0
      %2763 = vmatpush2.bf16.msra.mxu0 0
      %2764 = vmatprep.subr.bf16.mxu0 0
      %2765 = vmatpush2.bf16.msra.mxu0 0
      %2766 = vmatprep.subr.bf16.mxu0 0
      %2767 = vmatpush2.bf16.msra.mxu0 0
      %2768 = vmatprep.subr.bf16.mxu0 0
      %2769 = vmatpush2.bf16.msra.mxu0 0
      %2770 = vmatprep.mubr.bf16.mxu0 0
      %2771 = vmatmul.mubr.bf16.gmra.mxu0 %v2734
      %v2772 = vpop.f32.mrf.mxu0
      %v2773 = vadd.f32 %v2731, %v2772
      %v2774 = vpop.f32.mrf.mxu0
      %v2775 = vpop.f32.mrf.mxu0
      %v2776 = vpop.f32.mrf.mxu0
      %2777 = vdwg.mxu0
      %v2778 = vsel %vm1684, %v2716, 0
      %2780 = vmatprep.subr.bf16.mxu0 0
      %2781 = vmatpush1.bf16.msra.mxu0 0
      %2782 = vmatprep.subr.bf16.mxu0 0
      %2783 = vmatpush1.bf16.msra.mxu0 0
      %2784 = vmatprep.subr.bf16.mxu0 0
      %2785 = vmatpush1.bf16.msra.mxu0 0
      %2786 = vmatprep.subr.bf16.mxu0 0
      %2787 = vmatpush1.bf16.msra.mxu0 0
      %2788 = vmatprep.subr.bf16.mxu0 0
      %2789 = vmatpush1.bf16.msra.mxu0 0
      %2790 = vmatprep.subr.bf16.mxu0 0
      %2791 = vmatpush1.bf16.msra.mxu0 0
      %2792 = vmatprep.subr.bf16.mxu0 0
      %2793 = vmatpush1.bf16.msra.mxu0 %v2778
      %2794 = vmatprep.subr.bf16.mxu0 0
      %2795 = vmatpush1.bf16.msra.mxu0 %v2693
      %2796 = vmatprep.subr.bf16.mxu0 0
      %2797 = vmatpush2.bf16.msra.mxu0 0
      %2798 = vmatprep.subr.bf16.mxu0 0
      %2799 = vmatpush2.bf16.msra.mxu0 0
      %2800 = vmatprep.subr.bf16.mxu0 0
      %2801 = vmatpush2.bf16.msra.mxu0 0
      %2802 = vmatprep.subr.bf16.mxu0 0
      %2803 = vmatpush2.bf16.msra.mxu0 0
      %2804 = vmatprep.subr.bf16.mxu0 0
      %2805 = vmatpush2.bf16.msra.mxu0 0
      %2806 = vmatprep.subr.bf16.mxu0 0
      %2807 = vmatpush2.bf16.msra.mxu0 0
      %2808 = vmatprep.subr.bf16.mxu0 0
      %2809 = vmatpush2.bf16.msra.mxu0 0
      %2810 = vmatprep.subr.bf16.mxu0 0
      %2811 = vmatpush2.bf16.msra.mxu0 0
      %2812 = vmatprep.mubr.bf16.mxu0 0
      %2813 = vmatmul.mubr.bf16.gmra.mxu0 %v2734
      %v2814 = vpop.f32.mrf.mxu0
      %v2815 = vadd.f32 %v2731, %v2814
      %v2816 = vpop.f32.mrf.mxu0
      %v2817 = vpop.f32.mrf.mxu0
      %v2818 = vpop.f32.mrf.mxu0
      %2819 = vdwg.mxu0
      %v2820 = vsel %vm1684, %v2718, 0
      %2822 = vmatprep.subr.bf16.mxu0 0
      %2823 = vmatpush1.bf16.msra.mxu0 0
      %2824 = vmatprep.subr.bf16.mxu0 0
      %2825 = vmatpush1.bf16.msra.mxu0 0
      %2826 = vmatprep.subr.bf16.mxu0 0
      %2827 = vmatpush1.bf16.msra.mxu0 0
      %2828 = vmatprep.subr.bf16.mxu0 0
      %2829 = vmatpush1.bf16.msra.mxu0 0
      %2830 = vmatprep.subr.bf16.mxu0 0
      %2831 = vmatpush1.bf16.msra.mxu0 0
      %2832 = vmatprep.subr.bf16.mxu0 0
      %2833 = vmatpush1.bf16.msra.mxu0 0
      %2834 = vmatprep.subr.bf16.mxu0 0
      %2835 = vmatpush1.bf16.msra.mxu0 %v2820
      %2836 = vmatprep.subr.bf16.mxu0 0
      %2837 = vmatpush1.bf16.msra.mxu0 %v2696
      %2838 = vmatprep.subr.bf16.mxu0 0
      %2839 = vmatpush2.bf16.msra.mxu0 0
      %2840 = vmatprep.subr.bf16.mxu0 0
      %2841 = vmatpush2.bf16.msra.mxu0 0
      %2842 = vmatprep.subr.bf16.mxu0 0
      %2843 = vmatpush2.bf16.msra.mxu0 0
      %2844 = vmatprep.subr.bf16.mxu0 0
      %2845 = vmatpush2.bf16.msra.mxu0 0
      %2846 = vmatprep.subr.bf16.mxu0 0
      %2847 = vmatpush2.bf16.msra.mxu0 0
      %2848 = vmatprep.subr.bf16.mxu0 0
      %2849 = vmatpush2.bf16.msra.mxu0 0
      %2850 = vmatprep.subr.bf16.mxu0 0
      %2851 = vmatpush2.bf16.msra.mxu0 0
      %2852 = vmatprep.subr.bf16.mxu0 0
      %2853 = vmatpush2.bf16.msra.mxu0 0
      %2854 = vmatprep.mubr.bf16.mxu0 0
      %2855 = vmatmul.mubr.bf16.gmra.mxu0 %v2734
      %v2856 = vpop.f32.mrf.mxu0
      %v2857 = vadd.f32 %v2731, %v2856
      %v2858 = vpop.f32.mrf.mxu0
      %v2859 = vpop.f32.mrf.mxu0
      %v2860 = vpop.f32.mrf.mxu0
      %2861 = vdwg.mxu0
      %v2862 = vsel %vm1684, %v2720, 0
      %2864 = vmatprep.subr.bf16.mxu0 0
      %2865 = vmatpush1.bf16.msra.mxu0 0
      %2866 = vmatprep.subr.bf16.mxu0 0
      %2867 = vmatpush1.bf16.msra.mxu0 0
      %2868 = vmatprep.subr.bf16.mxu0 0
      %2869 = vmatpush1.bf16.msra.mxu0 0
      %2870 = vmatprep.subr.bf16.mxu0 0
      %2871 = vmatpush1.bf16.msra.mxu0 0
      %2872 = vmatprep.subr.bf16.mxu0 0
      %2873 = vmatpush1.bf16.msra.mxu0 0
      %2874 = vmatprep.subr.bf16.mxu0 0
      %2875 = vmatpush1.bf16.msra.mxu0 0
      %2876 = vmatprep.subr.bf16.mxu0 0
      %2877 = vmatpush1.bf16.msra.mxu0 %v2862
      %2878 = vmatprep.subr.bf16.mxu0 0
      %2879 = vmatpush1.bf16.msra.mxu0 %v2699
      %2880 = vmatprep.subr.bf16.mxu0 0
      %2881 = vmatpush2.bf16.msra.mxu0 0
      %2882 = vmatprep.subr.bf16.mxu0 0
      %2883 = vmatpush2.bf16.msra.mxu0 0
      %2884 = vmatprep.subr.bf16.mxu0 0
      %2885 = vmatpush2.bf16.msra.mxu0 0
      %2886 = vmatprep.subr.bf16.mxu0 0
      %2887 = vmatpush2.bf16.msra.mxu0 0
      %2888 = vmatprep.subr.bf16.mxu0 0
      %2889 = vmatpush2.bf16.msra.mxu0 0
      %2890 = vmatprep.subr.bf16.mxu0 0
      %2891 = vmatpush2.bf16.msra.mxu0 0
      %2892 = vmatprep.subr.bf16.mxu0 0
      %2893 = vmatpush2.bf16.msra.mxu0 0
      %2894 = vmatprep.subr.bf16.mxu0 0
      %2895 = vmatpush2.bf16.msra.mxu0 0
      %2896 = vmatprep.mubr.bf16.mxu0 0
      %2897 = vmatmul.mubr.bf16.gmra.mxu0 %v2734
      %v2898 = vpop.f32.mrf.mxu0
      %v2899 = vadd.f32 %v2731, %v2898
      %v2900 = vpop.f32.mrf.mxu0
      %v2901 = vpop.f32.mrf.mxu0
      %v2902 = vpop.f32.mrf.mxu0
      %2903 = vdwg.mxu0
      %v2904 = vpack.c.bf16 %v2773, %v2773
      %v2905 = vpack.c.bf16 %v2815, %v2815
      %v2906 = vpack.c.bf16 %v2857, %v2857
      %v2907 = vpack.c.bf16 %v2899, %v2899
      %2912 = vrot.lane.b32.xlu0 %v2904, 3
      %v2913 = vpop.permute.xlu0 %2912
      %2914 = vrot.lane.b32.xlu0 %v2905, 3
      %v2915 = vpop.permute.xlu0 %2914
      %2916 = vrot.lane.b32.xlu0 %v2906, 3
      %v2917 = vpop.permute.xlu0 %2916
      %2918 = vrot.lane.b32.xlu0 %v2907, 3
      %v2919 = vpop.permute.xlu0 %2918
      %v2921 = vsel %vm2595, 0, %v2913
      %v2923 = vsel %vm2595, 0, %v2915
      %v2925 = vsel %vm2595, 0, %v2917
      %v2927 = vsel %vm2595, 0, %v2919
      %v2928 = vsel %vm2604, %v2921, 0
      %v2930 = vsel %vm2604, %v2923, 0
      %v2932 = vsel %vm2604, %v2925, 0
      %v2934 = vsel %vm2604, %v2927, 0
      %v2936 = vshll.u32 %v2928, 16
      %v2938 = vshll.u32 %v2930, 16
      %v2940 = vshll.u32 %v2932, 16
      %v2942 = vshll.u32 %v2934, 16
      %2944 = vrot.lane.b32.xlu0 %v2936, 127
      %v2945 = vpop.permute.xlu0 %2944
      %2946 = vrot.lane.b32.xlu0 %v2938, 127
      %v2947 = vpop.permute.xlu0 %2946
      %2948 = vrot.lane.b32.xlu0 %v2940, 127
      %v2949 = vpop.permute.xlu0 %2948
      %2950 = vrot.lane.b32.xlu0 %v2942, 127
      %v2951 = vpop.permute.xlu0 %2950
      %v2960 = vrot.slane %v2928, 7
      %v2961 = vrot.slane %v2930, 7
      %v2962 = vrot.slane %v2932, 7
      %v2963 = vrot.slane %v2934, 7
      %2964 = vrot.lane.b32.xlu0 %v2960, 126
      %v2965 = vpop.permute.xlu0 %2964
      %2966 = vrot.lane.b32.xlu0 %v2961, 126
      %v2967 = vpop.permute.xlu0 %2966
      %2968 = vrot.lane.b32.xlu0 %v2962, 126
      %v2969 = vpop.permute.xlu0 %2968
      %2970 = vrot.lane.b32.xlu0 %v2963, 126
      %v2971 = vpop.permute.xlu0 %2970
      %v2972 = vrot.slane %v2936, 7
      %v2973 = vrot.slane %v2938, 7
      %v2974 = vrot.slane %v2940, 7
      %v2975 = vrot.slane %v2942, 7
      %2976 = vrot.lane.b32.xlu0 %v2972, 125
      %v2977 = vpop.permute.xlu0 %2976
      %2978 = vrot.lane.b32.xlu0 %v2973, 125
      %v2979 = vpop.permute.xlu0 %2978
      %2980 = vrot.lane.b32.xlu0 %v2974, 125
      %v2981 = vpop.permute.xlu0 %2980
      %2982 = vrot.lane.b32.xlu0 %v2975, 125
      %v2983 = vpop.permute.xlu0 %2982
      %v2988 = vrot.slane %v2928, 6
      %v2989 = vrot.slane %v2930, 6
      %v2990 = vrot.slane %v2932, 6
      %v2991 = vrot.slane %v2934, 6
      %2992 = vrot.lane.b32.xlu0 %v2988, 124
      %v2993 = vpop.permute.xlu0 %2992
      %2994 = vrot.lane.b32.xlu0 %v2989, 124
      %v2995 = vpop.permute.xlu0 %2994
      %2996 = vrot.lane.b32.xlu0 %v2990, 124
      %v2997 = vpop.permute.xlu0 %2996
      %2998 = vrot.lane.b32.xlu0 %v2991, 124
      %v2999 = vpop.permute.xlu0 %2998
      %v3000 = vrot.slane %v2936, 6
      %v3001 = vrot.slane %v2938, 6
      %v3002 = vrot.slane %v2940, 6
      %v3003 = vrot.slane %v2942, 6
      %3004 = vrot.lane.b32.xlu0 %v3000, 123
      %v3005 = vpop.permute.xlu0 %3004
      %3006 = vrot.lane.b32.xlu0 %v3001, 123
      %v3007 = vpop.permute.xlu0 %3006
      %3008 = vrot.lane.b32.xlu0 %v3002, 123
      %v3009 = vpop.permute.xlu0 %3008
      %3010 = vrot.lane.b32.xlu0 %v3003, 123
      %v3011 = vpop.permute.xlu0 %3010
      %v3016 = vrot.slane %v2928, 5
      %v3017 = vrot.slane %v2930, 5
      %v3018 = vrot.slane %v2932, 5
      %v3019 = vrot.slane %v2934, 5
      %3020 = vrot.lane.b32.xlu0 %v3016, 122
      %v3021 = vpop.permute.xlu0 %3020
      %3022 = vrot.lane.b32.xlu0 %v3017, 122
      %v3023 = vpop.permute.xlu0 %3022
      %3024 = vrot.lane.b32.xlu0 %v3018, 122
      %v3025 = vpop.permute.xlu0 %3024
      %3026 = vrot.lane.b32.xlu0 %v3019, 122
      %v3027 = vpop.permute.xlu0 %3026
      %v3028 = vsel %vm1294, %v2928, %v2945
      %v3029 = vsel %vm1294, %v2930, %v2947
      %v3030 = vsel %vm1294, %v2932, %v2949
      %v3031 = vsel %vm1294, %v2934, %v2951
      %v3034 = vsel %vm1299, %v3028, %v2965
      %v3038 = vsel %vm1299, %v3029, %v2967
      %v3042 = vsel %vm1299, %v3030, %v2969
      %v3046 = vsel %vm1299, %v3031, %v2971
      %v3048 = vsel %vm1318, %v3034, %v2977
      %v3049 = vsel %vm1318, %v3038, %v2979
      %v3050 = vsel %vm1318, %v3042, %v2981
      %v3051 = vsel %vm1318, %v3046, %v2983
      %v3054 = vsel %vm1323, %v3048, %v2993
      %v3058 = vsel %vm1323, %v3049, %v2995
      %v3062 = vsel %vm1323, %v3050, %v2997
      %v3066 = vsel %vm1323, %v3051, %v2999
      %v3068 = vsel %vm1342, %v3054, %v3005
      %v3069 = vsel %vm1342, %v3058, %v3007
      %v3070 = vsel %vm1342, %v3062, %v3009
      %v3071 = vsel %vm1342, %v3066, %v3011
      %v3074 = vsel %vm1347, %v3068, %v3021
      %v3077 = vsel %vm1347, %v3069, %v3023
      %v3080 = vsel %vm1347, %v3070, %v3025
      %v3083 = vsel %vm1347, %v3071, %v3027
      %v3084 = vld [vmem:[%s27] sm:$0x1]
      %v3085 = vld [vmem:[#allocation5] sm:$0x1]
      %3087 = vset.pattern.permute.xlu0 0
      %3088 = vperm.xlu0 %3087, %v3085
      %v3089 = vpop.permute.xlu0 %3088
      %v3091 = vlaneseq
      %v3092 = vshrl.u32 %v3091, 7
      %v3093 = vsub.s32 0, %v3092
      %v3094 = vrot.slane %v3089, %v3093
      %vm3095 = vcmask 56320
      %v3097 = vsel %vm3095, %v3084, 0
      %v3099 = vsel %vm1347, 4294967295, 65535
      %v3100 = vsel %vm1371, %v3099, 0
      %v3101 = vand.u32 %v3074, %v3100
      %3103 = vmatprep.subr.bf16.mxu0 0
      %3104 = vmatpush1.bf16.msra.mxu0 0
      %3105 = vmatprep.subr.bf16.mxu0 0
      %3106 = vmatpush1.bf16.msra.mxu0 0
      %3107 = vmatprep.subr.bf16.mxu0 0
      %3108 = vmatpush1.bf16.msra.mxu0 0
      %3109 = vmatprep.subr.bf16.mxu0 0
      %3110 = vmatpush1.bf16.msra.mxu0 0
      %3111 = vmatprep.subr.bf16.mxu0 0
      %3112 = vmatpush1.bf16.msra.mxu0 0
      %3113 = vmatprep.subr.bf16.mxu0 0
      %3114 = vmatpush1.bf16.msra.mxu0 0
      %3115 = vmatprep.subr.bf16.mxu0 0
      %3116 = vmatpush1.bf16.msra.mxu0 0
      %3117 = vmatprep.subr.bf16.mxu0 0
      %3118 = vmatpush1.bf16.msra.mxu0 %v3101
      %3119 = vmatprep.subr.bf16.mxu0 0
      %3120 = vmatpush2.bf16.msra.mxu0 0
      %3121 = vmatprep.subr.bf16.mxu0 0
      %3122 = vmatpush2.bf16.msra.mxu0 0
      %3123 = vmatprep.subr.bf16.mxu0 0
      %3124 = vmatpush2.bf16.msra.mxu0 0
      %3125 = vmatprep.subr.bf16.mxu0 0
      %3126 = vmatpush2.bf16.msra.mxu0 0
      %3127 = vmatprep.subr.bf16.mxu0 0
      %3128 = vmatpush2.bf16.msra.mxu0 0
      %3129 = vmatprep.subr.bf16.mxu0 0
      %3130 = vmatpush2.bf16.msra.mxu0 0
      %3131 = vmatprep.subr.bf16.mxu0 0
      %3132 = vmatpush2.bf16.msra.mxu0 0
      %3133 = vmatprep.subr.bf16.mxu0 0
      %3134 = vmatpush2.bf16.msra.mxu0 0
      %3135 = vmatprep.mubr.bf16.mxu0 0
      %3136 = vmatmul.mubr.bf16.gmra.mxu0 %v3097
      %v3137 = vpop.f32.mrf.mxu0
      %v3138 = vadd.f32 %v3094, %v3137
      %v3139 = vpop.f32.mrf.mxu0
      %v3140 = vpop.f32.mrf.mxu0
      %v3141 = vpop.f32.mrf.mxu0
      %3142 = vdwg.mxu0
      %v3143 = vand.u32 %v3077, %v3100
      %3145 = vmatprep.subr.bf16.mxu0 0
      %3146 = vmatpush1.bf16.msra.mxu0 0
      %3147 = vmatprep.subr.bf16.mxu0 0
      %3148 = vmatpush1.bf16.msra.mxu0 0
      %3149 = vmatprep.subr.bf16.mxu0 0
      %3150 = vmatpush1.bf16.msra.mxu0 0
      %3151 = vmatprep.subr.bf16.mxu0 0
      %3152 = vmatpush1.bf16.msra.mxu0 0
      %3153 = vmatprep.subr.bf16.mxu0 0
      %3154 = vmatpush1.bf16.msra.mxu0 0
      %3155 = vmatprep.subr.bf16.mxu0 0
      %3156 = vmatpush1.bf16.msra.mxu0 0
      %3157 = vmatprep.subr.bf16.mxu0 0
      %3158 = vmatpush1.bf16.msra.mxu0 0
      %3159 = vmatprep.subr.bf16.mxu0 0
      %3160 = vmatpush1.bf16.msra.mxu0 %v3143
      %3161 = vmatprep.subr.bf16.mxu0 0
      %3162 = vmatpush2.bf16.msra.mxu0 0
      %3163 = vmatprep.subr.bf16.mxu0 0
      %3164 = vmatpush2.bf16.msra.mxu0 0
      %3165 = vmatprep.subr.bf16.mxu0 0
      %3166 = vmatpush2.bf16.msra.mxu0 0
      %3167 = vmatprep.subr.bf16.mxu0 0
      %3168 = vmatpush2.bf16.msra.mxu0 0
      %3169 = vmatprep.subr.bf16.mxu0 0
      %3170 = vmatpush2.bf16.msra.mxu0 0
      %3171 = vmatprep.subr.bf16.mxu0 0
      %3172 = vmatpush2.bf16.msra.mxu0 0
      %3173 = vmatprep.subr.bf16.mxu0 0
      %3174 = vmatpush2.bf16.msra.mxu0 0
      %3175 = vmatprep.subr.bf16.mxu0 0
      %3176 = vmatpush2.bf16.msra.mxu0 0
      %3177 = vmatprep.mubr.bf16.mxu0 0
      %3178 = vmatmul.mubr.bf16.gmra.mxu0 %v3097
      %v3179 = vpop.f32.mrf.mxu0
      %v3180 = vadd.f32 %v3094, %v3179
      %v3181 = vpop.f32.mrf.mxu0
      %v3182 = vpop.f32.mrf.mxu0
      %v3183 = vpop.f32.mrf.mxu0
      %3184 = vdwg.mxu0
      %v3185 = vand.u32 %v3080, %v3100
      %3187 = vmatprep.subr.bf16.mxu0 0
      %3188 = vmatpush1.bf16.msra.mxu0 0
      %3189 = vmatprep.subr.bf16.mxu0 0
      %3190 = vmatpush1.bf16.msra.mxu0 0
      %3191 = vmatprep.subr.bf16.mxu0 0
      %3192 = vmatpush1.bf16.msra.mxu0 0
      %3193 = vmatprep.subr.bf16.mxu0 0
      %3194 = vmatpush1.bf16.msra.mxu0 0
      %3195 = vmatprep.subr.bf16.mxu0 0
      %3196 = vmatpush1.bf16.msra.mxu0 0
      %3197 = vmatprep.subr.bf16.mxu0 0
      %3198 = vmatpush1.bf16.msra.mxu0 0
      %3199 = vmatprep.subr.bf16.mxu0 0
      %3200 = vmatpush1.bf16.msra.mxu0 0
      %3201 = vmatprep.subr.bf16.mxu0 0
      %3202 = vmatpush1.bf16.msra.mxu0 %v3185
      %3203 = vmatprep.subr.bf16.mxu0 0
      %3204 = vmatpush2.bf16.msra.mxu0 0
      %3205 = vmatprep.subr.bf16.mxu0 0
      %3206 = vmatpush2.bf16.msra.mxu0 0
      %3207 = vmatprep.subr.bf16.mxu0 0
      %3208 = vmatpush2.bf16.msra.mxu0 0
      %3209 = vmatprep.subr.bf16.mxu0 0
      %3210 = vmatpush2.bf16.msra.mxu0 0
      %3211 = vmatprep.subr.bf16.mxu0 0
      %3212 = vmatpush2.bf16.msra.mxu0 0
      %3213 = vmatprep.subr.bf16.mxu0 0
      %3214 = vmatpush2.bf16.msra.mxu0 0
      %3215 = vmatprep.subr.bf16.mxu0 0
      %3216 = vmatpush2.bf16.msra.mxu0 0
      %3217 = vmatprep.subr.bf16.mxu0 0
      %3218 = vmatpush2.bf16.msra.mxu0 0
      %3219 = vmatprep.mubr.bf16.mxu0 0
      %3220 = vmatmul.mubr.bf16.gmra.mxu0 %v3097
      %v3221 = vpop.f32.mrf.mxu0
      %v3222 = vadd.f32 %v3094, %v3221
      %v3223 = vpop.f32.mrf.mxu0
      %v3224 = vpop.f32.mrf.mxu0
      %v3225 = vpop.f32.mrf.mxu0
      %3226 = vdwg.mxu0
      %v3227 = vand.u32 %v3083, %v3100
      %3229 = vmatprep.subr.bf16.mxu0 0
      %3230 = vmatpush1.bf16.msra.mxu0 0
      %3231 = vmatprep.subr.bf16.mxu0 0
      %3232 = vmatpush1.bf16.msra.mxu0 0
      %3233 = vmatprep.subr.bf16.mxu0 0
      %3234 = vmatpush1.bf16.msra.mxu0 0
      %3235 = vmatprep.subr.bf16.mxu0 0
      %3236 = vmatpush1.bf16.msra.mxu0 0
      %3237 = vmatprep.subr.bf16.mxu0 0
      %3238 = vmatpush1.bf16.msra.mxu0 0
      %3239 = vmatprep.subr.bf16.mxu0 0
      %3240 = vmatpush1.bf16.msra.mxu0 0
      %3241 = vmatprep.subr.bf16.mxu0 0
      %3242 = vmatpush1.bf16.msra.mxu0 0
      %3243 = vmatprep.subr.bf16.mxu0 0
      %3244 = vmatpush1.bf16.msra.mxu0 %v3227
      %3245 = vmatprep.subr.bf16.mxu0 0
      %3246 = vmatpush2.bf16.msra.mxu0 0
      %3247 = vmatprep.subr.bf16.mxu0 0
      %3248 = vmatpush2.bf16.msra.mxu0 0
      %3249 = vmatprep.subr.bf16.mxu0 0
      %3250 = vmatpush2.bf16.msra.mxu0 0
      %3251 = vmatprep.subr.bf16.mxu0 0
      %3252 = vmatpush2.bf16.msra.mxu0 0
      %3253 = vmatprep.subr.bf16.mxu0 0
      %3254 = vmatpush2.bf16.msra.mxu0 0
      %3255 = vmatprep.subr.bf16.mxu0 0
      %3256 = vmatpush2.bf16.msra.mxu0 0
      %3257 = vmatprep.subr.bf16.mxu0 0
      %3258 = vmatpush2.bf16.msra.mxu0 0
      %3259 = vmatprep.subr.bf16.mxu0 0
      %3260 = vmatpush2.bf16.msra.mxu0 0
      %3261 = vmatprep.mubr.bf16.mxu0 0
      %3262 = vmatmul.mubr.bf16.gmra.mxu0 %v3097
      %v3263 = vpop.f32.mrf.mxu0
      %v3264 = vadd.f32 %v3094, %v3263
      %v3265 = vpop.f32.mrf.mxu0
      %v3266 = vpop.f32.mrf.mxu0
      %v3267 = vpop.f32.mrf.mxu0
      %3268 = vdwg.mxu0
      %3273 = vrot.lane.b32.xlu0 %v1586, 3
      %v3274 = vpop.permute.xlu0 %3273
      %3275 = vrot.lane.b32.xlu0 %v1587, 3
      %v3276 = vpop.permute.xlu0 %3275
      %3277 = vrot.lane.b32.xlu0 %v1588, 3
      %v3278 = vpop.permute.xlu0 %3277
      %3279 = vrot.lane.b32.xlu0 %v1589, 3
      %v3280 = vpop.permute.xlu0 %3279
      %v3285 = vsel %vm2595, 0.0, %v3274
      %v3286 = vsel %vm2595, 0.0, %v3276
      %v3287 = vsel %vm2595, 0.0, %v3278
      %v3288 = vsel %vm2595, 0.0, %v3280
      %v3289 = vsel %vm2604, %v3285, 0.0
      %v3290 = vsel %vm2604, %v3286, 0.0
      %v3291 = vsel %vm2604, %v3287, 0.0
      %v3292 = vsel %vm2604, %v3288, 0.0
      %3297 = vrot.lane.b32.xlu0 %v3289, 127
      %v3298 = vpop.permute.xlu0 %3297
      %3299 = vrot.lane.b32.xlu0 %v3290, 127
      %v3300 = vpop.permute.xlu0 %3299
      %3301 = vrot.lane.b32.xlu0 %v3291, 127
      %v3302 = vpop.permute.xlu0 %3301
      %3303 = vrot.lane.b32.xlu0 %v3292, 127
      %v3304 = vpop.permute.xlu0 %3303
      %v3309 = vadd.f32 %v3289, %v3298
      %v3310 = vadd.f32 %v3290, %v3300
      %v3311 = vadd.f32 %v3291, %v3302
      %v3312 = vadd.f32 %v3292, %v3304
      %3313 = vrot.lane.b32.xlu0 %v3289, 126
      %v3314 = vpop.permute.xlu0 %3313
      %3315 = vrot.lane.b32.xlu0 %v3290, 126
      %v3316 = vpop.permute.xlu0 %3315
      %3317 = vrot.lane.b32.xlu0 %v3291, 126
      %v3318 = vpop.permute.xlu0 %3317
      %3319 = vrot.lane.b32.xlu0 %v3292, 126
      %v3320 = vpop.permute.xlu0 %3319
      %v3325 = vadd.f32 %v3309, %v3314
      %v3326 = vadd.f32 %v3310, %v3316
      %v3327 = vadd.f32 %v3311, %v3318
      %v3328 = vadd.f32 %v3312, %v3320
      %3329 = vrot.lane.b32.xlu0 %v3289, 125
      %v3330 = vpop.permute.xlu0 %3329
      %3331 = vrot.lane.b32.xlu0 %v3290, 125
      %v3332 = vpop.permute.xlu0 %3331
      %3333 = vrot.lane.b32.xlu0 %v3291, 125
      %v3334 = vpop.permute.xlu0 %3333
      %3335 = vrot.lane.b32.xlu0 %v3292, 125
      %v3336 = vpop.permute.xlu0 %3335
      %v3341 = vadd.f32 %v3325, %v3330
      %v3342 = vadd.f32 %v3326, %v3332
      %v3343 = vadd.f32 %v3327, %v3334
      %v3344 = vadd.f32 %v3328, %v3336
      %3345 = vrot.lane.b32.xlu0 %v3289, 124
      %v3346 = vpop.permute.xlu0 %3345
      %3347 = vrot.lane.b32.xlu0 %v3290, 124
      %v3348 = vpop.permute.xlu0 %3347
      %3349 = vrot.lane.b32.xlu0 %v3291, 124
      %v3350 = vpop.permute.xlu0 %3349
      %3351 = vrot.lane.b32.xlu0 %v3292, 124
      %v3352 = vpop.permute.xlu0 %3351
      %v3357 = vadd.f32 %v3341, %v3346
      %v3358 = vadd.f32 %v3342, %v3348
      %v3359 = vadd.f32 %v3343, %v3350
      %v3360 = vadd.f32 %v3344, %v3352
      %3361 = vrot.lane.b32.xlu0 %v3289, 123
      %v3362 = vpop.permute.xlu0 %3361
      %3363 = vrot.lane.b32.xlu0 %v3290, 123
      %v3364 = vpop.permute.xlu0 %3363
      %3365 = vrot.lane.b32.xlu0 %v3291, 123
      %v3366 = vpop.permute.xlu0 %3365
      %3367 = vrot.lane.b32.xlu0 %v3292, 123
      %v3368 = vpop.permute.xlu0 %3367
      %v3373 = vadd.f32 %v3357, %v3362
      %v3374 = vadd.f32 %v3358, %v3364
      %v3375 = vadd.f32 %v3359, %v3366
      %v3376 = vadd.f32 %v3360, %v3368
      %3377 = vrot.lane.b32.xlu0 %v3289, 122
      %v3378 = vpop.permute.xlu0 %3377
      %3379 = vrot.lane.b32.xlu0 %v3290, 122
      %v3380 = vpop.permute.xlu0 %3379
      %3381 = vrot.lane.b32.xlu0 %v3291, 122
      %v3382 = vpop.permute.xlu0 %3381
      %3383 = vrot.lane.b32.xlu0 %v3292, 122
      %v3384 = vpop.permute.xlu0 %3383
      %v3389 = vadd.f32 %v3373, %v3378
      %v3390 = vadd.f32 %v3374, %v3380
      %v3391 = vadd.f32 %v3375, %v3382
      %v3392 = vadd.f32 %v3376, %v3384
      %v3393 = vmul.f32 %v3389, 0.14285715
      %v3394 = vmul.f32 %v3390, 0.14285715
      %v3395 = vmul.f32 %v3391, 0.14285715
      %v3396 = vmul.f32 %v3392, 0.14285715
      %v3397 = vpack.c.bf16 %v3393, %v3393
      %v3398 = vpack.c.bf16 %v3394, %v3394
      %v3399 = vpack.c.bf16 %v3395, %v3395
      %v3400 = vpack.c.bf16 %v3396, %v3396
      %3405 = vrot.lane.b32.xlu0 %v3397, 2
      %v3406 = vpop.permute.xlu0 %3405
      %3407 = vrot.lane.b32.xlu0 %v3398, 2
      %v3408 = vpop.permute.xlu0 %3407
      %3409 = vrot.lane.b32.xlu0 %v3399, 2
      %v3410 = vpop.permute.xlu0 %3409
      %3411 = vrot.lane.b32.xlu0 %v3400, 2
      %v3412 = vpop.permute.xlu0 %3411
      %v3414 = vsel %vm1606, 0, %v3406
      %v3416 = vsel %vm1606, 0, %v3408
      %v3418 = vsel %vm1606, 0, %v3410
      %v3420 = vsel %vm1606, 0, %v3412
      %v3421 = vsel %vm1615, %v3414, 0
      %v3422 = vsel %vm1615, %v3416, 0
      %v3423 = vsel %vm1615, %v3418, 0
      %v3424 = vsel %vm1615, %v3420, 0
      %v3429 = vrot.slane %v3421, 6
      %v3430 = vrot.slane %v3422, 6
      %v3431 = vrot.slane %v3423, 6
      %v3432 = vrot.slane %v3424, 6
      %3433 = vrot.lane.b32.xlu0 %v3429, 127
      %v3434 = vpop.permute.xlu0 %3433
      %3435 = vrot.lane.b32.xlu0 %v3430, 127
      %v3436 = vpop.permute.xlu0 %3435
      %3437 = vrot.lane.b32.xlu0 %v3431, 127
      %v3438 = vpop.permute.xlu0 %3437
      %3439 = vrot.lane.b32.xlu0 %v3432, 127
      %v3440 = vpop.permute.xlu0 %3439
      %v3441 = vrot.slane %v3421, 4
      %v3442 = vrot.slane %v3422, 4
      %v3443 = vrot.slane %v3423, 4
      %v3444 = vrot.slane %v3424, 4
      %3445 = vrot.lane.b32.xlu0 %v3441, 126
      %v3446 = vpop.permute.xlu0 %3445
      %3447 = vrot.lane.b32.xlu0 %v3442, 126
      %v3448 = vpop.permute.xlu0 %3447
      %3449 = vrot.lane.b32.xlu0 %v3443, 126
      %v3450 = vpop.permute.xlu0 %3449
      %3451 = vrot.lane.b32.xlu0 %v3444, 126
      %v3452 = vpop.permute.xlu0 %3451
      %v3453 = vrot.slane %v3421, 2
      %v3454 = vrot.slane %v3422, 2
      %v3455 = vrot.slane %v3423, 2
      %v3456 = vrot.slane %v3424, 2
      %3457 = vrot.lane.b32.xlu0 %v3453, 125
      %v3458 = vpop.permute.xlu0 %3457
      %3459 = vrot.lane.b32.xlu0 %v3454, 125
      %v3460 = vpop.permute.xlu0 %3459
      %3461 = vrot.lane.b32.xlu0 %v3455, 125
      %v3462 = vpop.permute.xlu0 %3461
      %3463 = vrot.lane.b32.xlu0 %v3456, 125
      %v3464 = vpop.permute.xlu0 %3463
      %3465 = vrot.lane.b32.xlu0 %v3421, 124
      %v3466 = vpop.permute.xlu0 %3465
      %3467 = vrot.lane.b32.xlu0 %v3422, 124
      %v3468 = vpop.permute.xlu0 %3467
      %3469 = vrot.lane.b32.xlu0 %v3423, 124
      %v3470 = vpop.permute.xlu0 %3469
      %3471 = vrot.lane.b32.xlu0 %v3424, 124
      %v3472 = vpop.permute.xlu0 %3471
      %v3474 = vsel %vm1323, %v3421, %v3434
      %v3476 = vsel %vm1323, %v3422, %v3436
      %v3478 = vsel %vm1323, %v3423, %v3438
      %v3480 = vsel %vm1323, %v3424, %v3440
      %v3482 = vsel %vm1371, %v3474, %v3446
      %v3484 = vsel %vm1371, %v3476, %v3448
      %v3486 = vsel %vm1371, %v3478, %v3450
      %v3488 = vsel %vm1371, %v3480, %v3452
      %v3490 = vsel %vm1684, %v3482, %v3458
      %v3493 = vsel %vm1684, %v3484, %v3460
      %v3496 = vsel %vm1684, %v3486, %v3462
      %v3499 = vsel %vm1684, %v3488, %v3464
      %v3501 = vld [vmem:[%s31] sm:$0x1]
      %v3502 = vld [vmem:[#allocation6] sm:$0x1]
      %3504 = vset.pattern.permute.xlu0 0
      %3505 = vperm.xlu0 %3504, %v3502
      %v3506 = vpop.permute.xlu0 %3505
      %v3508 = vlaneseq
      %v3509 = vshrl.u32 %v3508, 7
      %v3510 = vsub.s32 0, %v3509
      %v3511 = vrot.slane %v3506, %v3510
      %v3513 = vsel %vm1708, %v3501, 0
      %v3516 = vsel %vm1323, %v3466, 0
      %3518 = vmatprep.subr.bf16.mxu0 0
      %3519 = vmatpush1.bf16.msra.mxu0 0
      %3520 = vmatprep.subr.bf16.mxu0 0
      %3521 = vmatpush1.bf16.msra.mxu0 0
      %3522 = vmatprep.subr.bf16.mxu0 0
      %3523 = vmatpush1.bf16.msra.mxu0 0
      %3524 = vmatprep.subr.bf16.mxu0 0
      %3525 = vmatpush1.bf16.msra.mxu0 0
      %3526 = vmatprep.subr.bf16.mxu0 0
      %3527 = vmatpush1.bf16.msra.mxu0 0
      %3528 = vmatprep.subr.bf16.mxu0 0
      %3529 = vmatpush1.bf16.msra.mxu0 0
      %3530 = vmatprep.subr.bf16.mxu0 0
      %3531 = vmatpush1.bf16.msra.mxu0 %v3516
      %3532 = vmatprep.subr.bf16.mxu0 0
      %3533 = vmatpush1.bf16.msra.mxu0 %v3490
      %3534 = vmatprep.subr.bf16.mxu0 0
      %3535 = vmatpush2.bf16.msra.mxu0 0
      %3536 = vmatprep.subr.bf16.mxu0 0
      %3537 = vmatpush2.bf16.msra.mxu0 0
      %3538 = vmatprep.subr.bf16.mxu0 0
      %3539 = vmatpush2.bf16.msra.mxu0 0
      %3540 = vmatprep.subr.bf16.mxu0 0
      %3541 = vmatpush2.bf16.msra.mxu0 0
      %3542 = vmatprep.subr.bf16.mxu0 0
      %3543 = vmatpush2.bf16.msra.mxu0 0
      %3544 = vmatprep.subr.bf16.mxu0 0
      %3545 = vmatpush2.bf16.msra.mxu0 0
      %3546 = vmatprep.subr.bf16.mxu0 0
      %3547 = vmatpush2.bf16.msra.mxu0 0
      %3548 = vmatprep.subr.bf16.mxu0 0
      %3549 = vmatpush2.bf16.msra.mxu0 0
      %3550 = vmatprep.mubr.bf16.mxu0 0
      %3551 = vmatmul.mubr.bf16.gmra.mxu0 %v3513
      %v3552 = vpop.f32.mrf.mxu0
      %v3553 = vadd.f32 %v3511, %v3552
      %v3554 = vpop.f32.mrf.mxu0
      %v3555 = vpop.f32.mrf.mxu0
      %v3556 = vpop.f32.mrf.mxu0
      %3557 = vdwg.mxu0
      %v3559 = vsel %vm1323, %v3468, 0
      %3561 = vmatprep.subr.bf16.mxu0 0
      %3562 = vmatpush1.bf16.msra.mxu0 0
      %3563 = vmatprep.subr.bf16.mxu0 0
      %3564 = vmatpush1.bf16.msra.mxu0 0
      %3565 = vmatprep.subr.bf16.mxu0 0
      %3566 = vmatpush1.bf16.msra.mxu0 0
      %3567 = vmatprep.subr.bf16.mxu0 0
      %3568 = vmatpush1.bf16.msra.mxu0 0
      %3569 = vmatprep.subr.bf16.mxu0 0
      %3570 = vmatpush1.bf16.msra.mxu0 0
      %3571 = vmatprep.subr.bf16.mxu0 0
      %3572 = vmatpush1.bf16.msra.mxu0 0
      %3573 = vmatprep.subr.bf16.mxu0 0
      %3574 = vmatpush1.bf16.msra.mxu0 %v3559
      %3575 = vmatprep.subr.bf16.mxu0 0
      %3576 = vmatpush1.bf16.msra.mxu0 %v3493
      %3577 = vmatprep.subr.bf16.mxu0 0
      %3578 = vmatpush2.bf16.msra.mxu0 0
      %3579 = vmatprep.subr.bf16.mxu0 0
      %3580 = vmatpush2.bf16.msra.mxu0 0
      %3581 = vmatprep.subr.bf16.mxu0 0
      %3582 = vmatpush2.bf16.msra.mxu0 0
      %3583 = vmatprep.subr.bf16.mxu0 0
      %3584 = vmatpush2.bf16.msra.mxu0 0
      %3585 = vmatprep.subr.bf16.mxu0 0
      %3586 = vmatpush2.bf16.msra.mxu0 0
      %3587 = vmatprep.subr.bf16.mxu0 0
      %3588 = vmatpush2.bf16.msra.mxu0 0
      %3589 = vmatprep.subr.bf16.mxu0 0
      %3590 = vmatpush2.bf16.msra.mxu0 0
      %3591 = vmatprep.subr.bf16.mxu0 0
      %3592 = vmatpush2.bf16.msra.mxu0 0
      %3593 = vmatprep.mubr.bf16.mxu0 0
      %3594 = vmatmul.mubr.bf16.gmra.mxu0 %v3513
      %v3595 = vpop.f32.mrf.mxu0
      %v3596 = vadd.f32 %v3511, %v3595
      %v3597 = vpop.f32.mrf.mxu0
      %v3598 = vpop.f32.mrf.mxu0
      %v3599 = vpop.f32.mrf.mxu0
      %3600 = vdwg.mxu0
      %v3602 = vsel %vm1323, %v3470, 0
      %3604 = vmatprep.subr.bf16.mxu0 0
      %3605 = vmatpush1.bf16.msra.mxu0 0
      %3606 = vmatprep.subr.bf16.mxu0 0
      %3607 = vmatpush1.bf16.msra.mxu0 0
      %3608 = vmatprep.subr.bf16.mxu0 0
      %3609 = vmatpush1.bf16.msra.mxu0 0
      %3610 = vmatprep.subr.bf16.mxu0 0
      %3611 = vmatpush1.bf16.msra.mxu0 0
      %3612 = vmatprep.subr.bf16.mxu0 0
      %3613 = vmatpush1.bf16.msra.mxu0 0
      %3614 = vmatprep.subr.bf16.mxu0 0
      %3615 = vmatpush1.bf16.msra.mxu0 0
      %3616 = vmatprep.subr.bf16.mxu0 0
      %3617 = vmatpush1.bf16.msra.mxu0 %v3602
      %3618 = vmatprep.subr.bf16.mxu0 0
      %3619 = vmatpush1.bf16.msra.mxu0 %v3496
      %3620 = vmatprep.subr.bf16.mxu0 0
      %3621 = vmatpush2.bf16.msra.mxu0 0
      %3622 = vmatprep.subr.bf16.mxu0 0
      %3623 = vmatpush2.bf16.msra.mxu0 0
      %3624 = vmatprep.subr.bf16.mxu0 0
      %3625 = vmatpush2.bf16.msra.mxu0 0
      %3626 = vmatprep.subr.bf16.mxu0 0
      %3627 = vmatpush2.bf16.msra.mxu0 0
      %3628 = vmatprep.subr.bf16.mxu0 0
      %3629 = vmatpush2.bf16.msra.mxu0 0
      %3630 = vmatprep.subr.bf16.mxu0 0
      %3631 = vmatpush2.bf16.msra.mxu0 0
      %3632 = vmatprep.subr.bf16.mxu0 0
      %3633 = vmatpush2.bf16.msra.mxu0 0
      %3634 = vmatprep.subr.bf16.mxu0 0
      %3635 = vmatpush2.bf16.msra.mxu0 0
      %3636 = vmatprep.mubr.bf16.mxu0 0
      %3637 = vmatmul.mubr.bf16.gmra.mxu0 %v3513
      %v3638 = vpop.f32.mrf.mxu0
      %v3639 = vadd.f32 %v3511, %v3638
      %v3640 = vpop.f32.mrf.mxu0
      %v3641 = vpop.f32.mrf.mxu0
      %v3642 = vpop.f32.mrf.mxu0
      %3643 = vdwg.mxu0
      %v3645 = vsel %vm1323, %v3472, 0
      %3647 = vmatprep.subr.bf16.mxu0 0
      %3648 = vmatpush1.bf16.msra.mxu0 0
      %3649 = vmatprep.subr.bf16.mxu0 0
      %3650 = vmatpush1.bf16.msra.mxu0 0
      %3651 = vmatprep.subr.bf16.mxu0 0
      %3652 = vmatpush1.bf16.msra.mxu0 0
      %3653 = vmatprep.subr.bf16.mxu0 0
      %3654 = vmatpush1.bf16.msra.mxu0 0
      %3655 = vmatprep.subr.bf16.mxu0 0
      %3656 = vmatpush1.bf16.msra.mxu0 0
      %3657 = vmatprep.subr.bf16.mxu0 0
      %3658 = vmatpush1.bf16.msra.mxu0 0
      %3659 = vmatprep.subr.bf16.mxu0 0
      %3660 = vmatpush1.bf16.msra.mxu0 %v3645
      %3661 = vmatprep.subr.bf16.mxu0 0
      %3662 = vmatpush1.bf16.msra.mxu0 %v3499
      %3663 = vmatprep.subr.bf16.mxu0 0
      %3664 = vmatpush2.bf16.msra.mxu0 0
      %3665 = vmatprep.subr.bf16.mxu0 0
      %3666 = vmatpush2.bf16.msra.mxu0 0
      %3667 = vmatprep.subr.bf16.mxu0 0
      %3668 = vmatpush2.bf16.msra.mxu0 0
      %3669 = vmatprep.subr.bf16.mxu0 0
      %3670 = vmatpush2.bf16.msra.mxu0 0
      %3671 = vmatprep.subr.bf16.mxu0 0
      %3672 = vmatpush2.bf16.msra.mxu0 0
      %3673 = vmatprep.subr.bf16.mxu0 0
      %3674 = vmatpush2.bf16.msra.mxu0 0
      %3675 = vmatprep.subr.bf16.mxu0 0
      %3676 = vmatpush2.bf16.msra.mxu0 0
      %3677 = vmatprep.subr.bf16.mxu0 0
      %3678 = vmatpush2.bf16.msra.mxu0 0
      %3679 = vmatprep.mubr.bf16.mxu0 0
      %3680 = vmatmul.mubr.bf16.gmra.mxu0 %v3513
      %v3681 = vpop.f32.mrf.mxu0
      %v3682 = vadd.f32 %v3511, %v3681
      %v3683 = vpop.f32.mrf.mxu0
      %v3684 = vpop.f32.mrf.mxu0
      %v3685 = vpop.f32.mrf.mxu0
      %3686 = vdwg.mxu0
      %v3691 = vrot.slane %v1750, 7
      %v3692 = vrot.slane %v1793, 7
      %v3693 = vrot.slane %v1836, 7
      %v3694 = vrot.slane %v1879, 7
      %v3703 = vrot.slane %v2275, 6
      %v3704 = vrot.slane %v2318, 6
      %v3705 = vrot.slane %v2361, 6
      %v3706 = vrot.slane %v2404, 6
      %v3715 = vrot.slane %v3138, 5
      %v3716 = vrot.slane %v3180, 5
      %v3717 = vrot.slane %v3222, 5
      %v3718 = vrot.slane %v3264, 5
      %v3723 = vsel %vm1299, %v3553, %v3691
      %v3724 = vsel %vm1299, %v3596, %v3692
      %v3725 = vsel %vm1299, %v3639, %v3693
      %v3726 = vsel %vm1299, %v3682, %v3694
      %v3727 = vsel %vm1323, %v3723, %v3703
      %v3728 = vsel %vm1323, %v3724, %v3704
      %v3729 = vsel %vm1323, %v3725, %v3705
      %v3730 = vsel %vm1323, %v3726, %v3706
      %v3731 = vsel %vm1347, %v3727, %v3715
      %v3732 = vsel %vm1347, %v3728, %v3716
      %v3733 = vsel %vm1347, %v3729, %v3717
      %v3734 = vsel %vm1347, %v3730, %v3718
      %v3735 = vadd.f32 %v3731, %v1586
      %v3736 = vadd.f32 %v3732, %v1587
      %v3737 = vadd.f32 %v3733, %v1588
      %v3738 = vadd.f32 %v3734, %v1589
      %v3739 = vmax.f32 %v3735, 0.0
      %v3740 = vmax.f32 %v3736, 0.0
      %v3741 = vmax.f32 %v3737, 0.0
      %v3742 = vmax.f32 %v3738, 0.0
      %v3743 = vpack.c.bf16 %v3739, %v3739
      %v3744 = vpack.c.bf16 %v3740, %v3740
      %v3745 = vpack.c.bf16 %v3741, %v3741
      %v3746 = vpack.c.bf16 %v3742, %v3742
      %v3747 = vld [vmem:[%s35] sm:$0x3]
      %s3748 = scalar_lea.vmem %s35, 2
      %v3749 = vld [vmem:[%s3748] sm:$0x3]
      %v3751 = vsel %vm1153, %v3749, 0
      %v3754 = vsel %vm1323, %v3744, 0
      %3756 = vmatprep.subr.bf16.mxu0 0
      %3757 = vmatpush1.bf16.msra.mxu0 0
      %3758 = vmatprep.subr.bf16.mxu0 0
      %3759 = vmatpush1.bf16.msra.mxu0 0
      %3760 = vmatprep.subr.bf16.mxu0 0
      %3761 = vmatpush1.bf16.msra.mxu0 0
      %3762 = vmatprep.subr.bf16.mxu0 0
      %3763 = vmatpush1.bf16.msra.mxu0 0
      %3764 = vmatprep.subr.bf16.mxu0 0
      %3765 = vmatpush1.bf16.msra.mxu0 0
      %3766 = vmatprep.subr.bf16.mxu0 0
      %3767 = vmatpush1.bf16.msra.mxu0 0
      %3768 = vmatprep.subr.bf16.mxu0 0
      %3769 = vmatpush1.bf16.msra.mxu0 0
      %3770 = vmatprep.subr.bf16.mxu0 0
      %3771 = vmatpush1.bf16.msra.mxu0 %v3754
      %3772 = vmatprep.subr.bf16.mxu0 0
      %3773 = vmatpush2.bf16.msra.mxu0 0
      %3774 = vmatprep.subr.bf16.mxu0 0
      %3775 = vmatpush2.bf16.msra.mxu0 0
      %3776 = vmatprep.subr.bf16.mxu0 0
      %3777 = vmatpush2.bf16.msra.mxu0 0
      %3778 = vmatprep.subr.bf16.mxu0 0
      %3779 = vmatpush2.bf16.msra.mxu0 0
      %3780 = vmatprep.subr.bf16.mxu0 0
      %3781 = vmatpush2.bf16.msra.mxu0 0
      %3782 = vmatprep.subr.bf16.mxu0 0
      %3783 = vmatpush2.bf16.msra.mxu0 0
      %3784 = vmatprep.subr.bf16.mxu0 0
      %3785 = vmatpush2.bf16.msra.mxu0 0
      %3786 = vmatprep.subr.bf16.mxu0 0
      %3787 = vmatpush2.bf16.msra.mxu0 0
      %3788 = vmatprep.mubr.bf16.mxu0 0
      %3789 = vmatmul.mubr.bf16.gmra.mxu0 %v3751
      %v3790 = vpop.f32.mrf.mxu0
      %v3791 = vadd.f32 0.0, %v3790
      %v3792 = vpop.f32.mrf.mxu0
      %v3793 = vpop.f32.mrf.mxu0
      %v3794 = vpop.f32.mrf.mxu0
      %3795 = vdwg.mxu0
      %v3797 = vsel %vm1153, %v3747, 0
      %v3800 = vsel %vm1323, %v3743, 0
      %3802 = vmatprep.subr.bf16.mxu0 0
      %3803 = vmatpush1.bf16.msra.mxu0 0
      %3804 = vmatprep.subr.bf16.mxu0 0
      %3805 = vmatpush1.bf16.msra.mxu0 0
      %3806 = vmatprep.subr.bf16.mxu0 0
      %3807 = vmatpush1.bf16.msra.mxu0 0
      %3808 = vmatprep.subr.bf16.mxu0 0
      %3809 = vmatpush1.bf16.msra.mxu0 0
      %3810 = vmatprep.subr.bf16.mxu0 0
      %3811 = vmatpush1.bf16.msra.mxu0 0
      %3812 = vmatprep.subr.bf16.mxu0 0
      %3813 = vmatpush1.bf16.msra.mxu0 0
      %3814 = vmatprep.subr.bf16.mxu0 0
      %3815 = vmatpush1.bf16.msra.mxu0 0
      %3816 = vmatprep.subr.bf16.mxu0 0
      %3817 = vmatpush1.bf16.msra.mxu0 %v3800
      %3818 = vmatprep.subr.bf16.mxu0 0
      %3819 = vmatpush2.bf16.msra.mxu0 0
      %3820 = vmatprep.subr.bf16.mxu0 0
      %3821 = vmatpush2.bf16.msra.mxu0 0
      %3822 = vmatprep.subr.bf16.mxu0 0
      %3823 = vmatpush2.bf16.msra.mxu0 0
      %3824 = vmatprep.subr.bf16.mxu0 0
      %3825 = vmatpush2.bf16.msra.mxu0 0
      %3826 = vmatprep.subr.bf16.mxu0 0
      %3827 = vmatpush2.bf16.msra.mxu0 0
      %3828 = vmatprep.subr.bf16.mxu0 0
      %3829 = vmatpush2.bf16.msra.mxu0 0
      %3830 = vmatprep.subr.bf16.mxu0 0
      %3831 = vmatpush2.bf16.msra.mxu0 0
      %3832 = vmatprep.subr.bf16.mxu0 0
      %3833 = vmatpush2.bf16.msra.mxu0 0
      %3834 = vmatprep.mubr.bf16.mxu0 0
      %3835 = vmatmul.mubr.bf16.gmra.mxu0 %v3797
      %v3836 = vpop.f32.mrf.mxu0
      %v3837 = vadd.f32 %v3791, %v3836
      %v3838 = vpop.f32.mrf.mxu0
      %v3839 = vpop.f32.mrf.mxu0
      %v3840 = vpop.f32.mrf.mxu0
      %3841 = vdwg.mxu0
      %s3842 = scalar_lea.vmem %s35, 4
      %v3843 = vld [vmem:[%s3842] sm:$0x3]
      %v3845 = vsel %vm1153, %v3843, 0
      %v3848 = vsel %vm1323, %v3745, 0
      %3850 = vmatprep.subr.bf16.mxu0 0
      %3851 = vmatpush1.bf16.msra.mxu0 0
      %3852 = vmatprep.subr.bf16.mxu0 0
      %3853 = vmatpush1.bf16.msra.mxu0 0
      %3854 = vmatprep.subr.bf16.mxu0 0
      %3855 = vmatpush1.bf16.msra.mxu0 0
      %3856 = vmatprep.subr.bf16.mxu0 0
      %3857 = vmatpush1.bf16.msra.mxu0 0
      %3858 = vmatprep.subr.bf16.mxu0 0
      %3859 = vmatpush1.bf16.msra.mxu0 0
      %3860 = vmatprep.subr.bf16.mxu0 0
      %3861 = vmatpush1.bf16.msra.mxu0 0
      %3862 = vmatprep.subr.bf16.mxu0 0
      %3863 = vmatpush1.bf16.msra.mxu0 0
      %3864 = vmatprep.subr.bf16.mxu0 0
      %3865 = vmatpush1.bf16.msra.mxu0 %v3848
      %3866 = vmatprep.subr.bf16.mxu0 0
      %3867 = vmatpush2.bf16.msra.mxu0 0
      %3868 = vmatprep.subr.bf16.mxu0 0
      %3869 = vmatpush2.bf16.msra.mxu0 0
      %3870 = vmatprep.subr.bf16.mxu0 0
      %3871 = vmatpush2.bf16.msra.mxu0 0
      %3872 = vmatprep.subr.bf16.mxu0 0
      %3873 = vmatpush2.bf16.msra.mxu0 0
      %3874 = vmatprep.subr.bf16.mxu0 0
      %3875 = vmatpush2.bf16.msra.mxu0 0
      %3876 = vmatprep.subr.bf16.mxu0 0
      %3877 = vmatpush2.bf16.msra.mxu0 0
      %3878 = vmatprep.subr.bf16.mxu0 0
      %3879 = vmatpush2.bf16.msra.mxu0 0
      %3880 = vmatprep.subr.bf16.mxu0 0
      %3881 = vmatpush2.bf16.msra.mxu0 0
      %3882 = vmatprep.mubr.bf16.mxu0 0
      %3883 = vmatmul.mubr.bf16.gmra.mxu0 %v3845
      %v3884 = vpop.f32.mrf.mxu0
      %v3885 = vadd.f32 0.0, %v3884
      %v3886 = vpop.f32.mrf.mxu0
      %v3887 = vpop.f32.mrf.mxu0
      %v3888 = vpop.f32.mrf.mxu0
      %3889 = vdwg.mxu0
      %v3890 = vadd.f32 %v3837, %v3885
      %s3891 = scalar_lea.vmem %s35, 6
      %v3892 = vld [vmem:[%s3891] sm:$0x3]
      %v3894 = vsel %vm1153, %v3892, 0
      %v3897 = vsel %vm1323, %v3746, 0
      %3899 = vmatprep.subr.bf16.mxu0 0
      %3900 = vmatpush1.bf16.msra.mxu0 0
      %3901 = vmatprep.subr.bf16.mxu0 0
      %3902 = vmatpush1.bf16.msra.mxu0 0
      %3903 = vmatprep.subr.bf16.mxu0 0
      %3904 = vmatpush1.bf16.msra.mxu0 0
      %3905 = vmatprep.subr.bf16.mxu0 0
      %3906 = vmatpush1.bf16.msra.mxu0 0
      %3907 = vmatprep.subr.bf16.mxu0 0
      %3908 = vmatpush1.bf16.msra.mxu0 0
      %3909 = vmatprep.subr.bf16.mxu0 0
      %3910 = vmatpush1.bf16.msra.mxu0 0
      %3911 = vmatprep.subr.bf16.mxu0 0
      %3912 = vmatpush1.bf16.msra.mxu0 0
      %3913 = vmatprep.subr.bf16.mxu0 0
      %3914 = vmatpush1.bf16.msra.mxu0 %v3897
      %3915 = vmatprep.subr.bf16.mxu0 0
      %3916 = vmatpush2.bf16.msra.mxu0 0
      %3917 = vmatprep.subr.bf16.mxu0 0
      %3918 = vmatpush2.bf16.msra.mxu0 0
      %3919 = vmatprep.subr.bf16.mxu0 0
      %3920 = vmatpush2.bf16.msra.mxu0 0
      %3921 = vmatprep.subr.bf16.mxu0 0
      %3922 = vmatpush2.bf16.msra.mxu0 0
      %3923 = vmatprep.subr.bf16.mxu0 0
      %3924 = vmatpush2.bf16.msra.mxu0 0
      %3925 = vmatprep.subr.bf16.mxu0 0
      %3926 = vmatpush2.bf16.msra.mxu0 0
      %3927 = vmatprep.subr.bf16.mxu0 0
      %3928 = vmatpush2.bf16.msra.mxu0 0
      %3929 = vmatprep.subr.bf16.mxu0 0
      %3930 = vmatpush2.bf16.msra.mxu0 0
      %3931 = vmatprep.mubr.bf16.mxu0 0
      %3932 = vmatmul.mubr.bf16.gmra.mxu0 %v3894
      %v3933 = vpop.f32.mrf.mxu0
      %v3934 = vadd.f32 0.0, %v3933
      %v3935 = vpop.f32.mrf.mxu0
      %v3936 = vpop.f32.mrf.mxu0
      %v3937 = vpop.f32.mrf.mxu0
      %3938 = vdwg.mxu0
      %v3939 = vadd.f32 %v3890, %v3934
      %v3940 = vld [vmem:[%s37] sm:$0xf]
      %3942 = vset.pattern.permute.xlu0 0
      %3943 = vperm.xlu0 %3942, %v3940
      %v3944 = vpop.permute.xlu0 %3943
      %v3946 = vadd.f32 %v3939, %v3944
      %vm3947 = vcmp.gt.f32.partialorder %v3946, 0.0
      %v3948 = vmin.f32 %v3946, 0.0
      %v3949 = vmul.f32 %v3948, 1.442695
      %v3950 = vpow.pop %v3949
      %v3951 = vsub.f32 %v3950, 1.0
      %v3952 = vsel %vm3947, %v3946, %v3951
      %v3953 = vpack.c.bf16 %v3952, %v3952
      %3955 = vrot.lane.b32.xlu0 %v3953, 8
      %v3956 = vpop.permute.xlu0 %3955
      %vm3957 = vcmask 64512
      %v3959 = vsel %vm3957, 0, %v3956
      %vm3960 = vcmask 588800
      %v3961 = vsel %vm3960, %v3959, 0
      %v3963 = vrot.slane %v3961, 6
      %3964 = vrot.lane.b32.xlu0 %v3963, 124
      %v3965 = vpop.permute.xlu0 %3964
      %v3966 = vrot.slane %v3961, 4
      %3967 = vrot.lane.b32.xlu0 %v3966, 120
      %v3968 = vpop.permute.xlu0 %3967
      %v3969 = vrot.slane %v3961, 2
      %3970 = vrot.lane.b32.xlu0 %v3969, 116
      %v3971 = vpop.permute.xlu0 %3970
      %3972 = vrot.lane.b32.xlu0 %v3961, 112
      %v3973 = vpop.permute.xlu0 %3972
      %v3975 = vsel %vm1323, %v3961, %v3965
      %v3977 = vsel %vm1371, %v3975, %v3968
      %v3979 = vsel %vm1684, %v3977, %v3971
      %v3981 = vld [vmem:[%s39] sm:$0xf]
      %v3982 = vld [vmem:[%s41] sm:$0xff]
      %3984 = vset.pattern.permute.xlu0 0
      %3985 = vperm.xlu0 %3984, %v3982
      %v3986 = vpop.permute.xlu0 %3985
      %v3989 = vsel %vm1708, %v3981, 0
      %v3992 = vsel %vm1323, %v3973, 0
      %3994 = vmatprep.subr.bf16.mxu0 0
      %3995 = vmatpush1.bf16.msra.mxu0 0
      %3996 = vmatprep.subr.bf16.mxu0 0
      %3997 = vmatpush1.bf16.msra.mxu0 0
      %3998 = vmatprep.subr.bf16.mxu0 0
      %3999 = vmatpush1.bf16.msra.mxu0 0
      %4000 = vmatprep.subr.bf16.mxu0 0
      %4001 = vmatpush1.bf16.msra.mxu0 0
      %4002 = vmatprep.subr.bf16.mxu0 0
      %4003 = vmatpush1.bf16.msra.mxu0 0
      %4004 = vmatprep.subr.bf16.mxu0 0
      %4005 = vmatpush1.bf16.msra.mxu0 0
      %4006 = vmatprep.subr.bf16.mxu0 0
      %4007 = vmatpush1.bf16.msra.mxu0 %v3992
      %4008 = vmatprep.subr.bf16.mxu0 0
      %4009 = vmatpush1.bf16.msra.mxu0 %v3979
      %4010 = vmatprep.subr.bf16.mxu0 0
      %4011 = vmatpush2.bf16.msra.mxu0 0
      %4012 = vmatprep.subr.bf16.mxu0 0
      %4013 = vmatpush2.bf16.msra.mxu0 0
      %4014 = vmatprep.subr.bf16.mxu0 0
      %4015 = vmatpush2.bf16.msra.mxu0 0
      %4016 = vmatprep.subr.bf16.mxu0 0
      %4017 = vmatpush2.bf16.msra.mxu0 0
      %4018 = vmatprep.subr.bf16.mxu0 0
      %4019 = vmatpush2.bf16.msra.mxu0 0
      %4020 = vmatprep.subr.bf16.mxu0 0
      %4021 = vmatpush2.bf16.msra.mxu0 0
      %4022 = vmatprep.subr.bf16.mxu0 0
      %4023 = vmatpush2.bf16.msra.mxu0 0
      %4024 = vmatprep.subr.bf16.mxu0 0
      %4025 = vmatpush2.bf16.msra.mxu0 0
      %4026 = vmatprep.mubr.bf16.mxu0 0
      %4027 = vmatmul.mubr.bf16.gmra.mxu0 %v3989
      %v4028 = vpop.f32.mrf.mxu0
      %v4029 = vadd.f32 %v3986, %v4028
      %v4030 = vpop.f32.mrf.mxu0
      %v4031 = vpop.f32.mrf.mxu0
      %v4032 = vpop.f32.mrf.mxu0
      %4033 = vdwg.mxu0
      %vm4034 = vcmp.gt.f32.partialorder %v4029, 0.0
      %v4035 = vmin.f32 %v4029, 0.0
      %v4036 = vmul.f32 %v4035, 1.442695
      %v4037 = vpow.pop %v4036
      %v4038 = vsub.f32 %v4037, 1.0
      %v4039 = vsel %vm4034, %v4029, %v4038
      %v4040 = vpack.c.bf16 %v4039, %v4039
      %4042 = vrot.lane.b32.xlu0 %v4040, 2
      %v4043 = vpop.permute.xlu0 %4042
      %v4045 = vsel %vm1606, 0, %v4043
      %v4046 = vsel %vm1615, %v4045, 0
      %v4048 = vrot.slane %v4046, 4
      %4049 = vrot.lane.b32.xlu0 %v4048, 127
      %v4050 = vpop.permute.xlu0 %4049
      %4051 = vrot.lane.b32.xlu0 %v4046, 126
      %v4052 = vpop.permute.xlu0 %4051
      %4053 = vrot.lane.b32.xlu0 %v4048, 125
      %v4054 = vpop.permute.xlu0 %4053
      %4055 = vrot.lane.b32.xlu0 %v4046, 124
      %v4056 = vpop.permute.xlu0 %4055
      %v4058 = vsel %vm1371, %v4046, %v4050
      %v4062 = vsel %vm1371, %v4052, %v4054
      %v4064 = vld [vmem:[%s43] sm:$0x1]
      %v4065 = vld [vmem:[%s45] sm:$0x3]
      %4067 = vset.pattern.permute.xlu0 0
      %4068 = vperm.xlu0 %4067, %v4065
      %v4069 = vpop.permute.xlu0 %4068
      %vm4071 = vcmask 326656
      %v4073 = vsel %vm4071, %v4064, 0
      %v4076 = vsel %vm1371, %v4056, 0
      %4078 = vmatprep.subr.bf16.mxu0 0
      %4079 = vmatpush1.bf16.msra.mxu0 0
      %4080 = vmatprep.subr.bf16.mxu0 0
      %4081 = vmatpush1.bf16.msra.mxu0 0
      %4082 = vmatprep.subr.bf16.mxu0 0
      %4083 = vmatpush1.bf16.msra.mxu0 0
      %4084 = vmatprep.subr.bf16.mxu0 0
      %4085 = vmatpush1.bf16.msra.mxu0 0
      %4086 = vmatprep.subr.bf16.mxu0 0
      %4087 = vmatpush1.bf16.msra.mxu0 0
      %4088 = vmatprep.subr.bf16.mxu0 0
      %4089 = vmatpush1.bf16.msra.mxu0 %v4076
      %4090 = vmatprep.subr.bf16.mxu0 0
      %4091 = vmatpush1.bf16.msra.mxu0 %v4062
      %4092 = vmatprep.subr.bf16.mxu0 0
      %4093 = vmatpush1.bf16.msra.mxu0 %v4058
      %4094 = vmatprep.subr.bf16.mxu0 0
      %4095 = vmatpush2.bf16.msra.mxu0 0
      %4096 = vmatprep.subr.bf16.mxu0 0
      %4097 = vmatpush2.bf16.msra.mxu0 0
      %4098 = vmatprep.subr.bf16.mxu0 0
      %4099 = vmatpush2.bf16.msra.mxu0 0
      %4100 = vmatprep.subr.bf16.mxu0 0
      %4101 = vmatpush2.bf16.msra.mxu0 0
      %4102 = vmatprep.subr.bf16.mxu0 0
      %4103 = vmatpush2.bf16.msra.mxu0 0
      %4104 = vmatprep.subr.bf16.mxu0 0
      %4105 = vmatpush2.bf16.msra.mxu0 0
      %4106 = vmatprep.subr.bf16.mxu0 0
      %4107 = vmatpush2.bf16.msra.mxu0 0
      %4108 = vmatprep.subr.bf16.mxu0 0
      %4109 = vmatpush2.bf16.msra.mxu0 0
      %4110 = vmatprep.mubr.bf16.mxu0 0
      %4111 = vmatmul.mubr.bf16.gmra.mxu0 %v4073
      %v4112 = vpop.f32.mrf.mxu0
      %v4113 = vadd.f32 %v4069, %v4112
      %v4114 = vpop.f32.mrf.mxu0
      %v4115 = vpop.f32.mrf.mxu0
      %v4116 = vpop.f32.mrf.mxu0
      %4117 = vdwg.mxu0
      %v4118 = vld [vmem:[%s47] sm:$0xf]
      %v4119 = vld [vmem:[%s49] sm:$0xff]
      %4121 = vset.pattern.permute.xlu0 0
      %4122 = vperm.xlu0 %4121, %v4119
      %v4123 = vpop.permute.xlu0 %4122
      %v4126 = vsel %vm4071, %v4118, 0
      %4128 = vmatprep.subr.bf16.mxu0 0
      %4129 = vmatpush1.bf16.msra.mxu0 0
      %4130 = vmatprep.subr.bf16.mxu0 0
      %4131 = vmatpush1.bf16.msra.mxu0 0
      %4132 = vmatprep.subr.bf16.mxu0 0
      %4133 = vmatpush1.bf16.msra.mxu0 0
      %4134 = vmatprep.subr.bf16.mxu0 0
      %4135 = vmatpush1.bf16.msra.mxu0 0
      %4136 = vmatprep.subr.bf16.mxu0 0
      %4137 = vmatpush1.bf16.msra.mxu0 0
      %4138 = vmatprep.subr.bf16.mxu0 0
      %4139 = vmatpush1.bf16.msra.mxu0 %v4076
      %4140 = vmatprep.subr.bf16.mxu0 0
      %4141 = vmatpush1.bf16.msra.mxu0 %v4062
      %4142 = vmatprep.subr.bf16.mxu0 0
      %4143 = vmatpush1.bf16.msra.mxu0 %v4058
      %4144 = vmatprep.subr.bf16.mxu0 0
      %4145 = vmatpush2.bf16.msra.mxu0 0
      %4146 = vmatprep.subr.bf16.mxu0 0
      %4147 = vmatpush2.bf16.msra.mxu0 0
      %4148 = vmatprep.subr.bf16.mxu0 0
      %4149 = vmatpush2.bf16.msra.mxu0 0
      %4150 = vmatprep.subr.bf16.mxu0 0
      %4151 = vmatpush2.bf16.msra.mxu0 0
      %4152 = vmatprep.subr.bf16.mxu0 0
      %4153 = vmatpush2.bf16.msra.mxu0 0
      %4154 = vmatprep.subr.bf16.mxu0 0
      %4155 = vmatpush2.bf16.msra.mxu0 0
      %4156 = vmatprep.subr.bf16.mxu0 0
      %4157 = vmatpush2.bf16.msra.mxu0 0
      %4158 = vmatprep.subr.bf16.mxu0 0
      %4159 = vmatpush2.bf16.msra.mxu0 0
      %4160 = vmatprep.mubr.bf16.mxu0 0
      %4161 = vmatmul.mubr.bf16.gmra.mxu0 %v4126
      %v4162 = vpop.f32.mrf.mxu0
      %v4163 = vadd.f32 %v4123, %v4162
      %v4164 = vpop.f32.mrf.mxu0
      %v4165 = vpop.f32.mrf.mxu0
      %v4166 = vpop.f32.mrf.mxu0
      %4167 = vdwg.mxu0
      %v4168 = vpack.c.bf16 %v4163, %v4163
      %4170 = vrot.lane.b32.xlu0 %v4168, 4
      %v4171 = vpop.permute.xlu0 %4170
      %v4173 = vsel %vm1153, 0, %v4171
      %v4174 = vsel %vm1163, %v4173, 0
      %v4176 = vrot.slane %v4174, 4
      %4177 = vrot.lane.b32.xlu0 %v4176, 127
      %v4178 = vpop.permute.xlu0 %4177
      %4179 = vrot.lane.b32.xlu0 %v4174, 126
      %v4180 = vpop.permute.xlu0 %4179
      %4181 = vrot.lane.b32.xlu0 %v4176, 125
      %v4182 = vpop.permute.xlu0 %4181
      %4183 = vrot.lane.b32.xlu0 %v4174, 124
      %v4184 = vpop.permute.xlu0 %4183
      %4185 = vrot.lane.b32.xlu0 %v4176, 123
      %v4186 = vpop.permute.xlu0 %4185
      %4187 = vrot.lane.b32.xlu0 %v4174, 122
      %v4188 = vpop.permute.xlu0 %4187
      %4189 = vrot.lane.b32.xlu0 %v4176, 121
      %v4190 = vpop.permute.xlu0 %4189
      %4191 = vrot.lane.b32.xlu0 %v4174, 120
      %v4192 = vpop.permute.xlu0 %4191
      %v4194 = vsel %vm1371, %v4174, %v4178
      %v4198 = vsel %vm1371, %v4180, %v4182
      %v4202 = vsel %vm1371, %v4184, %v4186
      %v4206 = vsel %vm1371, %v4188, %v4190
      %v4208 = vld [vmem:[%s51] sm:$0x1]
      %v4209 = vld [vmem:[%s53] sm:$0x3]
      %4211 = vset.pattern.permute.xlu0 0
      %4212 = vperm.xlu0 %4211, %v4209
      %v4213 = vpop.permute.xlu0 %4212
      %v4216 = vsel %vm3960, %v4208, 0
      %v4219 = vsel %vm1371, %v4192, 0
      %4221 = vmatprep.subr.bf16.mxu0 0
      %4222 = vmatpush1.bf16.msra.mxu0 0
      %4223 = vmatprep.subr.bf16.mxu0 0
      %4224 = vmatpush1.bf16.msra.mxu0 0
      %4225 = vmatprep.subr.bf16.mxu0 0
      %4226 = vmatpush1.bf16.msra.mxu0 0
      %4227 = vmatprep.subr.bf16.mxu0 0
      %4228 = vmatpush1.bf16.msra.mxu0 %v4219
      %4229 = vmatprep.subr.bf16.mxu0 0
      %4230 = vmatpush1.bf16.msra.mxu0 %v4206
      %4231 = vmatprep.subr.bf16.mxu0 0
      %4232 = vmatpush1.bf16.msra.mxu0 %v4202
      %4233 = vmatprep.subr.bf16.mxu0 0
      %4234 = vmatpush1.bf16.msra.mxu0 %v4198
      %4235 = vmatprep.subr.bf16.mxu0 0
      %4236 = vmatpush1.bf16.msra.mxu0 %v4194
      %4237 = vmatprep.subr.bf16.mxu0 0
      %4238 = vmatpush2.bf16.msra.mxu0 0
      %4239 = vmatprep.subr.bf16.mxu0 0
      %4240 = vmatpush2.bf16.msra.mxu0 0
      %4241 = vmatprep.subr.bf16.mxu0 0
      %4242 = vmatpush2.bf16.msra.mxu0 0
      %4243 = vmatprep.subr.bf16.mxu0 0
      %4244 = vmatpush2.bf16.msra.mxu0 0
      %4245 = vmatprep.subr.bf16.mxu0 0
      %4246 = vmatpush2.bf16.msra.mxu0 0
      %4247 = vmatprep.subr.bf16.mxu0 0
      %4248 = vmatpush2.bf16.msra.mxu0 0
      %4249 = vmatprep.subr.bf16.mxu0 0
      %4250 = vmatpush2.bf16.msra.mxu0 0
      %4251 = vmatprep.subr.bf16.mxu0 0
      %4252 = vmatpush2.bf16.msra.mxu0 0
      %4253 = vmatprep.mubr.bf16.mxu0 0
      %4254 = vmatmul.mubr.bf16.gmra.mxu0 %v4216
      %v4255 = vpop.f32.mrf.mxu0
      %v4256 = vadd.f32 %v4213, %v4255
      %v4257 = vpop.f32.mrf.mxu0
      %v4258 = vpop.f32.mrf.mxu0
      %v4259 = vpop.f32.mrf.mxu0
      %4260 = vdwg.mxu0
      %v4261 = vld [vmem:[%s55] sm:$0xf]
      %v4262 = vld [vmem:[%s57] sm:$0xff]
      %4264 = vset.pattern.permute.xlu0 0
      %4265 = vperm.xlu0 %4264, %v4262
      %v4266 = vpop.permute.xlu0 %4265
      %v4269 = vsel %vm4071, %v4261, 0
      %4271 = vmatprep.subr.bf16.mxu0 0
      %4272 = vmatpush1.bf16.msra.mxu0 0
      %4273 = vmatprep.subr.bf16.mxu0 0
      %4274 = vmatpush1.bf16.msra.mxu0 0
      %4275 = vmatprep.subr.bf16.mxu0 0
      %4276 = vmatpush1.bf16.msra.mxu0 0
      %4277 = vmatprep.subr.bf16.mxu0 0
      %4278 = vmatpush1.bf16.msra.mxu0 0
      %4279 = vmatprep.subr.bf16.mxu0 0
      %4280 = vmatpush1.bf16.msra.mxu0 0
      %4281 = vmatprep.subr.bf16.mxu0 0
      %4282 = vmatpush1.bf16.msra.mxu0 %v4076
      %4283 = vmatprep.subr.bf16.mxu0 0
      %4284 = vmatpush1.bf16.msra.mxu0 %v4062
      %4285 = vmatprep.subr.bf16.mxu0 0
      %4286 = vmatpush1.bf16.msra.mxu0 %v4058
      %4287 = vmatprep.subr.bf16.mxu0 0
      %4288 = vmatpush2.bf16.msra.mxu0 0
      %4289 = vmatprep.subr.bf16.mxu0 0
      %4290 = vmatpush2.bf16.msra.mxu0 0
      %4291 = vmatprep.subr.bf16.mxu0 0
      %4292 = vmatpush2.bf16.msra.mxu0 0
      %4293 = vmatprep.subr.bf16.mxu0 0
      %4294 = vmatpush2.bf16.msra.mxu0 0
      %4295 = vmatprep.subr.bf16.mxu0 0
      %4296 = vmatpush2.bf16.msra.mxu0 0
      %4297 = vmatprep.subr.bf16.mxu0 0
      %4298 = vmatpush2.bf16.msra.mxu0 0
      %4299 = vmatprep.subr.bf16.mxu0 0
      %4300 = vmatpush2.bf16.msra.mxu0 0
      %4301 = vmatprep.subr.bf16.mxu0 0
      %4302 = vmatpush2.bf16.msra.mxu0 0
      %4303 = vmatprep.mubr.bf16.mxu0 0
      %4304 = vmatmul.mubr.bf16.gmra.mxu0 %v4269
      %v4305 = vpop.f32.mrf.mxu0
      %v4306 = vadd.f32 %v4266, %v4305
      %v4307 = vpop.f32.mrf.mxu0
      %v4308 = vpop.f32.mrf.mxu0
      %v4309 = vpop.f32.mrf.mxu0
      %4310 = vdwg.mxu0
      %v4311 = vpack.c.bf16 %v4306, %v4306
      %4313 = vrot.lane.b32.xlu0 %v4311, 3
      %v4314 = vpop.permute.xlu0 %4313
      %v4316 = vsel %vm2595, 0, %v4314
      %v4317 = vsel %vm2604, %v4316, 0
      %v4319 = vrot.slane %v4317, 4
      %4320 = vrot.lane.b32.xlu0 %v4319, 127
      %v4321 = vpop.permute.xlu0 %4320
      %4322 = vrot.lane.b32.xlu0 %v4317, 126
      %v4323 = vpop.permute.xlu0 %4322
      %4324 = vrot.lane.b32.xlu0 %v4319, 125
      %v4325 = vpop.permute.xlu0 %4324
      %4326 = vrot.lane.b32.xlu0 %v4317, 124
      %v4327 = vpop.permute.xlu0 %4326
      %4328 = vrot.lane.b32.xlu0 %v4319, 123
      %v4329 = vpop.permute.xlu0 %4328
      %4330 = vrot.lane.b32.xlu0 %v4317, 122
      %v4331 = vpop.permute.xlu0 %4330
      %v4333 = vsel %vm1371, %v4317, %v4321
      %v4337 = vsel %vm1371, %v4323, %v4325
      %v4341 = vsel %vm1371, %v4327, %v4329
      %v4343 = vld [vmem:[%s59] sm:$0x1]
      %v4344 = vld [vmem:[%s61] sm:$0x3]
      %4346 = vset.pattern.permute.xlu0 0
      %4347 = vperm.xlu0 %4346, %v4344
      %v4348 = vpop.permute.xlu0 %4347
      %vm4350 = vcmask 457728
      %v4352 = vsel %vm4350, %v4343, 0
      %v4355 = vsel %vm1371, %v4331, 0
      %4357 = vmatprep.subr.bf16.mxu0 0
      %4358 = vmatpush1.bf16.msra.mxu0 0
      %4359 = vmatprep.subr.bf16.mxu0 0
      %4360 = vmatpush1.bf16.msra.mxu0 0
      %4361 = vmatprep.subr.bf16.mxu0 0
      %4362 = vmatpush1.bf16.msra.mxu0 0
      %4363 = vmatprep.subr.bf16.mxu0 0
      %4364 = vmatpush1.bf16.msra.mxu0 0
      %4365 = vmatprep.subr.bf16.mxu0 0
      %4366 = vmatpush1.bf16.msra.mxu0 %v4355
      %4367 = vmatprep.subr.bf16.mxu0 0
      %4368 = vmatpush1.bf16.msra.mxu0 %v4341
      %4369 = vmatprep.subr.bf16.mxu0 0
      %4370 = vmatpush1.bf16.msra.mxu0 %v4337
      %4371 = vmatprep.subr.bf16.mxu0 0
      %4372 = vmatpush1.bf16.msra.mxu0 %v4333
      %4373 = vmatprep.subr.bf16.mxu0 0
      %4374 = vmatpush2.bf16.msra.mxu0 0
      %4375 = vmatprep.subr.bf16.mxu0 0
      %4376 = vmatpush2.bf16.msra.mxu0 0
      %4377 = vmatprep.subr.bf16.mxu0 0
      %4378 = vmatpush2.bf16.msra.mxu0 0
      %4379 = vmatprep.subr.bf16.mxu0 0
      %4380 = vmatpush2.bf16.msra.mxu0 0
      %4381 = vmatprep.subr.bf16.mxu0 0
      %4382 = vmatpush2.bf16.msra.mxu0 0
      %4383 = vmatprep.subr.bf16.mxu0 0
      %4384 = vmatpush2.bf16.msra.mxu0 0
      %4385 = vmatprep.subr.bf16.mxu0 0
      %4386 = vmatpush2.bf16.msra.mxu0 0
      %4387 = vmatprep.subr.bf16.mxu0 0
      %4388 = vmatpush2.bf16.msra.mxu0 0
      %4389 = vmatprep.mubr.bf16.mxu0 0
      %4390 = vmatmul.mubr.bf16.gmra.mxu0 %v4352
      %v4391 = vpop.f32.mrf.mxu0
      %v4392 = vadd.f32 %v4348, %v4391
      %v4393 = vpop.f32.mrf.mxu0
      %v4394 = vpop.f32.mrf.mxu0
      %v4395 = vpop.f32.mrf.mxu0
      %4396 = vdwg.mxu0
      %v4397 = vpack.c.bf16 %v4392, %v4392
      %4399 = vrot.lane.b32.xlu0 %v4397, 3
      %v4400 = vpop.permute.xlu0 %4399
      %v4402 = vsel %vm2595, 0, %v4400
      %v4403 = vsel %vm2604, %v4402, 0
      %v4405 = vrot.slane %v4403, 7
      %4406 = vrot.lane.b32.xlu0 %v4405, 127
      %v4407 = vpop.permute.xlu0 %4406
      %v4408 = vrot.slane %v4403, 6
      %4409 = vrot.lane.b32.xlu0 %v4408, 126
      %v4410 = vpop.permute.xlu0 %4409
      %v4411 = vrot.slane %v4403, 5
      %4412 = vrot.lane.b32.xlu0 %v4411, 125
      %v4413 = vpop.permute.xlu0 %4412
      %v4414 = vrot.slane %v4403, 4
      %4415 = vrot.lane.b32.xlu0 %v4414, 124
      %v4416 = vpop.permute.xlu0 %4415
      %v4417 = vrot.slane %v4403, 3
      %4418 = vrot.lane.b32.xlu0 %v4417, 123
      %v4419 = vpop.permute.xlu0 %4418
      %v4420 = vrot.slane %v4403, 2
      %4421 = vrot.lane.b32.xlu0 %v4420, 122
      %v4422 = vpop.permute.xlu0 %4421
      %v4424 = vsel %vm1299, %v4403, %v4407
      %v4426 = vsel %vm1323, %v4424, %v4410
      %v4428 = vsel %vm1347, %v4426, %v4413
      %v4430 = vsel %vm1371, %v4428, %v4416
      %v4432 = vsel %vm1395, %v4430, %v4419
      %v4434 = vsel %vm1684, %v4432, %v4422
      %v4435 = vld [vmem:[%s63] sm:$0x1]
      %v4436 = vld [vmem:[%s65] sm:$0x3]
      %4438 = vset.pattern.permute.xlu0 0
      %4439 = vperm.xlu0 %4438, %v4436
      %v4440 = vpop.permute.xlu0 %4439
      %vm4442 = vcmask 113664
      %v4444 = vsel %vm4442, %v4435, 0
      %vm4446 = vcmask 1046528
      %v4447 = vsel %vm4446, %v4434, 0
      %4449 = vmatprep.subr.bf16.mxu0 0
      %4450 = vmatpush1.bf16.msra.mxu0 0
      %4451 = vmatprep.subr.bf16.mxu0 0
      %4452 = vmatpush1.bf16.msra.mxu0 0
      %4453 = vmatprep.subr.bf16.mxu0 0
      %4454 = vmatpush1.bf16.msra.mxu0 0
      %4455 = vmatprep.subr.bf16.mxu0 0
      %4456 = vmatpush1.bf16.msra.mxu0 0
      %4457 = vmatprep.subr.bf16.mxu0 0
      %4458 = vmatpush1.bf16.msra.mxu0 0
      %4459 = vmatprep.subr.bf16.mxu0 0
      %4460 = vmatpush1.bf16.msra.mxu0 0
      %4461 = vmatprep.subr.bf16.mxu0 0
      %4462 = vmatpush1.bf16.msra.mxu0 0
      %4463 = vmatprep.subr.bf16.mxu0 0
      %4464 = vmatpush1.bf16.msra.mxu0 %v4447
      %4465 = vmatprep.subr.bf16.mxu0 0
      %4466 = vmatpush2.bf16.msra.mxu0 0
      %4467 = vmatprep.subr.bf16.mxu0 0
      %4468 = vmatpush2.bf16.msra.mxu0 0
      %4469 = vmatprep.subr.bf16.mxu0 0
      %4470 = vmatpush2.bf16.msra.mxu0 0
      %4471 = vmatprep.subr.bf16.mxu0 0
      %4472 = vmatpush2.bf16.msra.mxu0 0
      %4473 = vmatprep.subr.bf16.mxu0 0
      %4474 = vmatpush2.bf16.msra.mxu0 0
      %4475 = vmatprep.subr.bf16.mxu0 0
      %4476 = vmatpush2.bf16.msra.mxu0 0
      %4477 = vmatprep.subr.bf16.mxu0 0
      %4478 = vmatpush2.bf16.msra.mxu0 0
      %4479 = vmatprep.subr.bf16.mxu0 0
      %4480 = vmatpush2.bf16.msra.mxu0 0
      %4481 = vmatprep.mubr.bf16.mxu0 0
      %4482 = vmatmul.mubr.bf16.gmra.mxu0 %v4444
      %v4483 = vpop.f32.mrf.mxu0
      %v4484 = vadd.f32 %v4440, %v4483
      %v4485 = vpop.f32.mrf.mxu0
      %v4486 = vpop.f32.mrf.mxu0
      %v4487 = vpop.f32.mrf.mxu0
      %4488 = vdwg.mxu0
      %4490 = vrot.lane.b32.xlu0 %v4039, 3
      %v4491 = vpop.permute.xlu0 %4490
      %v4493 = vsel %vm2595, 0.0, %v4491
      %v4494 = vsel %vm2604, %v4493, 0.0
      %4496 = vrot.lane.b32.xlu0 %v4494, 127
      %v4497 = vpop.permute.xlu0 %4496
      %v4499 = vadd.f32 %v4494, %v4497
      %4500 = vrot.lane.b32.xlu0 %v4494, 126
      %v4501 = vpop.permute.xlu0 %4500
      %v4503 = vadd.f32 %v4499, %v4501
      %4504 = vrot.lane.b32.xlu0 %v4494, 125
      %v4505 = vpop.permute.xlu0 %4504
      %v4507 = vadd.f32 %v4503, %v4505
      %4508 = vrot.lane.b32.xlu0 %v4494, 124
      %v4509 = vpop.permute.xlu0 %4508
      %v4511 = vadd.f32 %v4507, %v4509
      %4512 = vrot.lane.b32.xlu0 %v4494, 123
      %v4513 = vpop.permute.xlu0 %4512
      %v4515 = vadd.f32 %v4511, %v4513
      %4516 = vrot.lane.b32.xlu0 %v4494, 122
      %v4517 = vpop.permute.xlu0 %4516
      %v4519 = vadd.f32 %v4515, %v4517
      %v4520 = vmul.f32 %v4519, 0.14285715
      %v4521 = vpack.c.bf16 %v4520, %v4520
      %4523 = vrot.lane.b32.xlu0 %v4521, 2
      %v4524 = vpop.permute.xlu0 %4523
      %v4526 = vsel %vm1606, 0, %v4524
      %v4527 = vsel %vm1615, %v4526, 0
      %v4529 = vrot.slane %v4527, 4
      %4530 = vrot.lane.b32.xlu0 %v4529, 127
      %v4531 = vpop.permute.xlu0 %4530
      %4532 = vrot.lane.b32.xlu0 %v4527, 126
      %v4533 = vpop.permute.xlu0 %4532
      %4534 = vrot.lane.b32.xlu0 %v4529, 125
      %v4535 = vpop.permute.xlu0 %4534
      %4536 = vrot.lane.b32.xlu0 %v4527, 124
      %v4537 = vpop.permute.xlu0 %4536
      %v4539 = vsel %vm1371, %v4527, %v4531
      %v4543 = vsel %vm1371, %v4533, %v4535
      %v4545 = vld [vmem:[%s67] sm:$0x1]
      %v4546 = vld [vmem:[%s69] sm:$0x3]
      %4548 = vset.pattern.permute.xlu0 0
      %4549 = vperm.xlu0 %4548, %v4546
      %v4550 = vpop.permute.xlu0 %4549
      %v4553 = vsel %vm4071, %v4545, 0
      %v4556 = vsel %vm1371, %v4537, 0
      %4558 = vmatprep.subr.bf16.mxu0 0
      %4559 = vmatpush1.bf16.msra.mxu0 0
      %4560 = vmatprep.subr.bf16.mxu0 0
      %4561 = vmatpush1.bf16.msra.mxu0 0
      %4562 = vmatprep.subr.bf16.mxu0 0
      %4563 = vmatpush1.bf16.msra.mxu0 0
      %4564 = vmatprep.subr.bf16.mxu0 0
      %4565 = vmatpush1.bf16.msra.mxu0 0
      %4566 = vmatprep.subr.bf16.mxu0 0
      %4567 = vmatpush1.bf16.msra.mxu0 0
      %4568 = vmatprep.subr.bf16.mxu0 0
      %4569 = vmatpush1.bf16.msra.mxu0 %v4556
      %4570 = vmatprep.subr.bf16.mxu0 0
      %4571 = vmatpush1.bf16.msra.mxu0 %v4543
      %4572 = vmatprep.subr.bf16.mxu0 0
      %4573 = vmatpush1.bf16.msra.mxu0 %v4539
      %4574 = vmatprep.subr.bf16.mxu0 0
      %4575 = vmatpush2.bf16.msra.mxu0 0
      %4576 = vmatprep.subr.bf16.mxu0 0
      %4577 = vmatpush2.bf16.msra.mxu0 0
      %4578 = vmatprep.subr.bf16.mxu0 0
      %4579 = vmatpush2.bf16.msra.mxu0 0
      %4580 = vmatprep.subr.bf16.mxu0 0
      %4581 = vmatpush2.bf16.msra.mxu0 0
      %4582 = vmatprep.subr.bf16.mxu0 0
      %4583 = vmatpush2.bf16.msra.mxu0 0
      %4584 = vmatprep.subr.bf16.mxu0 0
      %4585 = vmatpush2.bf16.msra.mxu0 0
      %4586 = vmatprep.subr.bf16.mxu0 0
      %4587 = vmatpush2.bf16.msra.mxu0 0
      %4588 = vmatprep.subr.bf16.mxu0 0
      %4589 = vmatpush2.bf16.msra.mxu0 0
      %4590 = vmatprep.mubr.bf16.mxu0 0
      %4591 = vmatmul.mubr.bf16.gmra.mxu0 %v4553
      %v4592 = vpop.f32.mrf.mxu0
      %v4593 = vadd.f32 %v4550, %v4592
      %v4594 = vpop.f32.mrf.mxu0
      %v4595 = vpop.f32.mrf.mxu0
      %v4596 = vpop.f32.mrf.mxu0
      %4597 = vdwg.mxu0
      %v4599 = vrot.slane %v4113, 6
      %v4602 = vrot.slane %v4256, 4
      %v4605 = vrot.slane %v4484, 2
      %v4607 = vsel %vm1323, %v4593, %v4599
      %v4608 = vsel %vm1371, %v4607, %v4602
      %v4609 = vsel %vm1684, %v4608, %v4605
      %v4610 = vadd.f32 %v4609, %v4039
      %v4611 = vmax.f32 %v4610, 0.0
      %v4612 = vlaneseq
      %v4613 = vshrl.u32 %v4612, 7
      %v4614 = vadd.s32 %v4613, 8
      %v4615 = vadd.s32 %v4613, 16
      %v4616 = vadd.s32 %v4613, 24
      %v4617 = vadd.s32 %v4613, 32
      %v4618 = vadd.s32 %v4613, 40
      %v4619 = vadd.s32 %v4613, 48
      %v4620 = vadd.s32 %v4613, 56
      %v4621 = vlaneseq
      %v4622 = vand.u32 %v4621, 127
      %v4623 = vmul.u32 %v4622, 2
      %vm4624 = vcmp.eq.s32.totalorder %v4613, %v4623
      %vm4625 = vcmp.eq.s32.totalorder %v4614, %v4623
      %vm4626 = vcmp.eq.s32.totalorder %v4615, %v4623
      %vm4627 = vcmp.eq.s32.totalorder %v4616, %v4623
      %vm4628 = vcmp.eq.s32.totalorder %v4617, %v4623
      %vm4629 = vcmp.eq.s32.totalorder %v4618, %v4623
      %vm4630 = vcmp.eq.s32.totalorder %v4619, %v4623
      %vm4631 = vcmp.eq.s32.totalorder %v4620, %v4623
      %v4632 = vsel %vm4624, 1, 0
      %v4633 = vsel %vm4625, 1, 0
      %v4634 = vsel %vm4626, 1, 0
      %v4635 = vsel %vm4627, 1, 0
      %v4636 = vsel %vm4628, 1, 0
      %v4637 = vsel %vm4629, 1, 0
      %v4638 = vsel %vm4630, 1, 0
      %v4639 = vsel %vm4631, 1, 0
      %v4640 = vcvt.s32.f32 %v4632
      %v4641 = vcvt.s32.f32 %v4633
      %v4642 = vcvt.s32.f32 %v4634
      %v4643 = vcvt.s32.f32 %v4635
      %v4644 = vcvt.s32.f32 %v4636
      %v4645 = vcvt.s32.f32 %v4637
      %v4646 = vcvt.s32.f32 %v4638
      %v4647 = vcvt.s32.f32 %v4639
      %v4648 = vpack.c.bf16 %v4641, %v4640
      %v4649 = vpack.c.bf16 %v4643, %v4642
      %v4650 = vpack.c.bf16 %v4645, %v4644
      %v4651 = vpack.c.bf16 %v4647, %v4646
      %v4652 = vadd.s32 %v4623, 1
      %vm4653 = vcmp.eq.s32.totalorder %v4613, %v4652
      %vm4654 = vcmp.eq.s32.totalorder %v4614, %v4652
      %vm4655 = vcmp.eq.s32.totalorder %v4615, %v4652
      %vm4656 = vcmp.eq.s32.totalorder %v4616, %v4652
      %vm4657 = vcmp.eq.s32.totalorder %v4617, %v4652
      %vm4658 = vcmp.eq.s32.totalorder %v4618, %v4652
      %vm4659 = vcmp.eq.s32.totalorder %v4619, %v4652
      %vm4660 = vcmp.eq.s32.totalorder %v4620, %v4652
      %v4661 = vsel %vm4653, 1, 0
      %v4662 = vsel %vm4654, 1, 0
      %v4663 = vsel %vm4655, 1, 0
      %v4664 = vsel %vm4656, 1, 0
      %v4665 = vsel %vm4657, 1, 0
      %v4666 = vsel %vm4658, 1, 0
      %v4667 = vsel %vm4659, 1, 0
      %v4668 = vsel %vm4660, 1, 0
      %v4669 = vcvt.s32.f32 %v4661
      %v4670 = vcvt.s32.f32 %v4662
      %v4671 = vcvt.s32.f32 %v4663
      %v4672 = vcvt.s32.f32 %v4664
      %v4673 = vcvt.s32.f32 %v4665
      %v4674 = vcvt.s32.f32 %v4666
      %v4675 = vcvt.s32.f32 %v4667
      %v4676 = vcvt.s32.f32 %v4668
      %v4677 = vpack.c.bf16 %v4670, %v4669
      %v4678 = vpack.c.bf16 %v4672, %v4671
      %v4679 = vpack.c.bf16 %v4674, %v4673
      %v4680 = vpack.c.bf16 %v4676, %v4675
      %v4681 = vpack.c.bf16 %v4611, %v4611
      %vm4682 = vcmask 523264
      %v4684 = vsel %vm4682, %v4681, 0
      %4686 = vmatprep.subr.bf16.mxu0 0
      %4687 = vmatpush1.bf16.msra.mxu0 0
      %4688 = vmatprep.subr.bf16.mxu0 0
      %4689 = vmatpush1.bf16.msra.mxu0 0
      %4690 = vmatprep.subr.bf16.mxu0 0
      %4691 = vmatpush1.bf16.msra.mxu0 0
      %4692 = vmatprep.subr.bf16.mxu0 0
      %4693 = vmatpush1.bf16.msra.mxu0 0
      %4694 = vmatprep.subr.bf16.mxu0 0
      %4695 = vmatpush1.bf16.msra.mxu0 %v4651
      %4696 = vmatprep.subr.bf16.mxu0 0
      %4697 = vmatpush1.bf16.msra.mxu0 %v4650
      %4698 = vmatprep.subr.bf16.mxu0 0
      %4699 = vmatpush1.bf16.msra.mxu0 %v4649
      %4700 = vmatprep.subr.bf16.mxu0 0
      %4701 = vmatpush1.bf16.msra.mxu0 %v4648
      %4702 = vmatprep.subr.bf16.mxu0 0
      %4703 = vmatpush2.bf16.msra.mxu0 0
      %4704 = vmatprep.subr.bf16.mxu0 0
      %4705 = vmatpush2.bf16.msra.mxu0 0
      %4706 = vmatprep.subr.bf16.mxu0 0
      %4707 = vmatpush2.bf16.msra.mxu0 0
      %4708 = vmatprep.subr.bf16.mxu0 0
      %4709 = vmatpush2.bf16.msra.mxu0 0
      %4710 = vmatprep.subr.bf16.mxu0 0
      %4711 = vmatpush2.bf16.msra.mxu0 0
      %4712 = vmatprep.subr.bf16.mxu0 0
      %4713 = vmatpush2.bf16.msra.mxu0 0
      %4714 = vmatprep.subr.bf16.mxu0 0
      %4715 = vmatpush2.bf16.msra.mxu0 0
      %4716 = vmatprep.subr.bf16.mxu0 0
      %4717 = vmatpush2.bf16.msra.mxu0 0
      %4718 = vmatprep.mubr.bf16.mxu0 0
      %4719 = vmatmul.mubr.bf16.gmra.mxu0 %v4684
      %v4720 = vpop.f32.mrf.mxu0
      %v4721 = vadd.f32 0.0, %v4720
      %v4722 = vpop.f32.mrf.mxu0
      %v4723 = vpop.f32.mrf.mxu0
      %v4724 = vpop.f32.mrf.mxu0
      %4725 = vdwg.mxu0
      %4726 = vmatprep.subr.bf16.mxu0 0
      %4727 = vmatpush1.bf16.msra.mxu0 0
      %4728 = vmatprep.subr.bf16.mxu0 0
      %4729 = vmatpush1.bf16.msra.mxu0 0
      %4730 = vmatprep.subr.bf16.mxu0 0
      %4731 = vmatpush1.bf16.msra.mxu0 0
      %4732 = vmatprep.subr.bf16.mxu0 0
      %4733 = vmatpush1.bf16.msra.mxu0 0
      %4734 = vmatprep.subr.bf16.mxu0 0
      %4735 = vmatpush1.bf16.msra.mxu0 %v4680
      %4736 = vmatprep.subr.bf16.mxu0 0
      %4737 = vmatpush1.bf16.msra.mxu0 %v4679
      %4738 = vmatprep.subr.bf16.mxu0 0
      %4739 = vmatpush1.bf16.msra.mxu0 %v4678
      %4740 = vmatprep.subr.bf16.mxu0 0
      %4741 = vmatpush1.bf16.msra.mxu0 %v4677
      %4742 = vmatprep.subr.bf16.mxu0 0
      %4743 = vmatpush2.bf16.msra.mxu0 0
      %4744 = vmatprep.subr.bf16.mxu0 0
      %4745 = vmatpush2.bf16.msra.mxu0 0
      %4746 = vmatprep.subr.bf16.mxu0 0
      %4747 = vmatpush2.bf16.msra.mxu0 0
      %4748 = vmatprep.subr.bf16.mxu0 0
      %4749 = vmatpush2.bf16.msra.mxu0 0
      %4750 = vmatprep.subr.bf16.mxu0 0
      %4751 = vmatpush2.bf16.msra.mxu0 0
      %4752 = vmatprep.subr.bf16.mxu0 0
      %4753 = vmatpush2.bf16.msra.mxu0 0
      %4754 = vmatprep.subr.bf16.mxu0 0
      %4755 = vmatpush2.bf16.msra.mxu0 0
      %4756 = vmatprep.subr.bf16.mxu0 0
      %4757 = vmatpush2.bf16.msra.mxu0 0
      %4758 = vmatprep.mubr.bf16.mxu0 0
      %4759 = vmatmul.mubr.bf16.gmra.mxu0 %v4684
      %v4760 = vpop.f32.mrf.mxu0
      %v4761 = vadd.f32 0.0, %v4760
      %v4762 = vpop.f32.mrf.mxu0
      %v4763 = vpop.f32.mrf.mxu0
      %v4764 = vpop.f32.mrf.mxu0
      %4765 = vdwg.mxu0
      %v4766 = vmax.f32 %v4721, %v4761
      %v4767 = vpack.c.bf16 %v4766, %v4766
      %4769 = vrot.lane.b32.xlu0 %v4767, 8
      %v4770 = vpop.permute.xlu0 %4769
      %v4772 = vsel %vm3957, 0, %v4770
      %v4773 = vsel %vm4071, %v4772, 0
      %v4775 = vrot.slane %v4773, 4
      %4776 = vrot.lane.b32.xlu0 %v4775, 124
      %v4777 = vpop.permute.xlu0 %4776
      %4778 = vrot.lane.b32.xlu0 %v4773, 120
      %v4779 = vpop.permute.xlu0 %4778
      %4780 = vrot.lane.b32.xlu0 %v4775, 116
      %v4781 = vpop.permute.xlu0 %4780
      %4782 = vrot.lane.b32.xlu0 %v4773, 112
      %v4783 = vpop.permute.xlu0 %4782
      %v4785 = vsel %vm1371, %v4773, %v4777
      %v4789 = vsel %vm1371, %v4779, %v4781
      %v4791 = vld [vmem:[%s71] sm:$0xf]
      %v4792 = vld [vmem:[%s73] sm:$0xff]
      %4794 = vset.pattern.permute.xlu0 0
      %4795 = vperm.xlu0 %4794, %v4792
      %v4796 = vpop.permute.xlu0 %4795
      %v4799 = vsel %vm4071, %v4791, 0
      %v4802 = vsel %vm1371, %v4783, 0
      %4804 = vmatprep.subr.bf16.mxu0 0
      %4805 = vmatpush1.bf16.msra.mxu0 0
      %4806 = vmatprep.subr.bf16.mxu0 0
      %4807 = vmatpush1.bf16.msra.mxu0 0
      %4808 = vmatprep.subr.bf16.mxu0 0
      %4809 = vmatpush1.bf16.msra.mxu0 0
      %4810 = vmatprep.subr.bf16.mxu0 0
      %4811 = vmatpush1.bf16.msra.mxu0 0
      %4812 = vmatprep.subr.bf16.mxu0 0
      %4813 = vmatpush1.bf16.msra.mxu0 0
      %4814 = vmatprep.subr.bf16.mxu0 0
      %4815 = vmatpush1.bf16.msra.mxu0 %v4802
      %4816 = vmatprep.subr.bf16.mxu0 0
      %4817 = vmatpush1.bf16.msra.mxu0 %v4789
      %4818 = vmatprep.subr.bf16.mxu0 0
      %4819 = vmatpush1.bf16.msra.mxu0 %v4785
      %4820 = vmatprep.subr.bf16.mxu0 0
      %4821 = vmatpush2.bf16.msra.mxu0 0
      %4822 = vmatprep.subr.bf16.mxu0 0
      %4823 = vmatpush2.bf16.msra.mxu0 0
      %4824 = vmatprep.subr.bf16.mxu0 0
      %4825 = vmatpush2.bf16.msra.mxu0 0
      %4826 = vmatprep.subr.bf16.mxu0 0
      %4827 = vmatpush2.bf16.msra.mxu0 0
      %4828 = vmatprep.subr.bf16.mxu0 0
      %4829 = vmatpush2.bf16.msra.mxu0 0
      %4830 = vmatprep.subr.bf16.mxu0 0
      %4831 = vmatpush2.bf16.msra.mxu0 0
      %4832 = vmatprep.subr.bf16.mxu0 0
      %4833 = vmatpush2.bf16.msra.mxu0 0
      %4834 = vmatprep.subr.bf16.mxu0 0
      %4835 = vmatpush2.bf16.msra.mxu0 0
      %4836 = vmatprep.mubr.bf16.mxu0 0
      %4837 = vmatmul.mubr.bf16.gmra.mxu0 %v4799
      %v4838 = vpop.f32.mrf.mxu0
      %v4839 = vadd.f32 %v4796, %v4838
      %v4840 = vpop.f32.mrf.mxu0
      %v4841 = vpop.f32.mrf.mxu0
      %v4842 = vpop.f32.mrf.mxu0
      %4843 = vdwg.mxu0
      %vm4844 = vcmp.gt.f32.partialorder %v4839, 0.0
      %v4845 = vmin.f32 %v4839, 0.0
      %v4846 = vmul.f32 %v4845, 1.442695
      %v4847 = vpow.pop %v4846
      %v4848 = vsub.f32 %v4847, 1.0
      %v4849 = vsel %vm4844, %v4839, %v4848
      %vm4850 = vcmask 261120
      %4851 = vst.msk [vmem:[%s1131] sm:$0xff] %vm4850, %v4849
      %p4852 = scmp.lt.s32.totalorder %s96, 1
      %s4853 = scalar_select %p4852, %s96, 1
      %s4854 = smul.addr %s4853, 8
      %s4855 = scalar_lea.vmem %s75, %s4854
      // Predicated region
      $region169: #{_lambda_.2} parent=167 // pred_check
        %p4856 = pneg %p896
      $region170: #{_lambda_.2} parent=167 // pred_check_branch
        %4858 = sbr.rel (%p4856) target = $region172
      $region171: #{_lambda_.2} parent=167 // pred_region
        _
      $region172: #{_lambda_.2} parent=167 // pred_fallthru
        _
    $region168: #{_lambda_.2} parent=5 // pred_fallthru
      _
    %p4859 = scmp.le.s32.totalorder 2, %s91
    // Predicated region
    $region173: #{_lambda_.2} parent=5 // pred_check
      %p4860 = pneg %p4859
    $region174: #{_lambda_.2} parent=5 // pred_check_branch
      %4862 = sbr.rel (%p4860) target = $region176
    $region175: #{_lambda_.2} parent=5 // pred_region
      %s4863 = ssub.s32 %s91, 2
      // Predicated region
      $region177: #{_lambda_.2} parent=175 // pred_check
        %p4864 = pneg %p902
      $region178: #{_lambda_.2} parent=175 // pred_check_branch
        %4866 = sbr.rel (%p4864) target = $region180
      $region179: #{_lambda_.2} parent=175 // pred_region
        %p4867 = scmp.lt.s32.totalorder %s97, 1
        %s4868 = scalar_select %p4867, %s97, 1
        %s4869 = smul.addr %s4868, 8
        %s4870 = scalar_lea.vmem %s75, %s4869
      $region180: #{_lambda_.2} parent=175 // pred_fallthru
        _
    $region176: #{_lambda_.2} parent=5 // pred_fallthru
      _
  $region6: #{_lambda_.2} parent=0 // loop_footer
    %s95 = sadd.s32 1, %s91
  $region7: #{_lambda_.2} parent=0 // loop_footer_branch
    %90 = sbr.rel target = $region3
  $region8: #{_lambda_.2} parent=0 // loop_exit
    _

</llo_original>
